<compile_context>
chip_gen: v7x
topology: tpu7x:2x2x1
jax: 0.10.0
libtpu: 0.0.40
codegen_flags: <defaults>
</compile_context>

<pallas_src>
import functools

import jax
import jax.numpy as jnp
from jax.experimental import pallas as pl
from jax.experimental.pallas import tpu as pltpu

GROUP1 = 8  # pixel-grouping factor for conv1 (lane-dense output trick)


# ----------------------------------------------------------------------------
# Pallas kernel: fused (X @ W + b) -> ReLU   (bf16 in, f32 accumulate, bf16 out)
# ----------------------------------------------------------------------------
def _mm_bias_relu_kernel(x_ref, w_ref, b_ref, o_ref):
    acc = jnp.dot(x_ref[...], w_ref[...], preferred_element_type=jnp.float32)
    acc = acc + b_ref[...]                       # (tm, tn) + (1, tn) broadcast
    o_ref[...] = jnp.maximum(acc, 0.0).astype(o_ref.dtype)


def _pick_tm(M, cap):
    """Largest divisor of M that is a multiple of 8 (or == M), capped."""
    cap = min(cap, M)
    for t in range(cap, 0, -1):
        if M % t == 0 and (t % 8 == 0 or t == M):
            return t
    return M


def matmul_bias_relu(x, w, b2d, *, tm_cap=512, out_dtype=jnp.bfloat16):
    """x: (M, K) bf16, w: (K, N) bf16, b2d: (1, N) f32 -> (M, N) out_dtype."""
    M, K = x.shape
    K2, N = w.shape
    assert K == K2 and b2d.shape == (1, N)
    tm = _pick_tm(M, tm_cap)
    tn = 128 if (N % 128 == 0 and N > 128) else N
    grid = (M // tm, N // tn)
    return pl.pallas_call(
        _mm_bias_relu_kernel,
        out_shape=jax.ShapeDtypeStruct((M, N), out_dtype),
        grid_spec=pltpu.PrefetchScalarGridSpec(
            num_scalar_prefetch=0,
            grid=grid,
            in_specs=[
                pl.BlockSpec((tm, K), lambda i, j: (i, 0)),
                pl.BlockSpec((K, tn), lambda i, j: (0, j)),
                pl.BlockSpec((1, tn), lambda i, j: (0, j)),
            ],
            out_specs=pl.BlockSpec((tm, tn), lambda i, j: (i, j)),
        ),
        compiler_params=pltpu.CompilerParams(
            dimension_semantics=("parallel", "parallel")),
    )(x, w, b2d)


# ----------------------------------------------------------------------------
# Pallas kernel: fully-connected head (N=1) as a VPU reduction + stable sigmoid
# ----------------------------------------------------------------------------
def _fc_sigmoid_kernel(x_ref, w_ref, b_ref, o_ref):
    x = x_ref[...].astype(jnp.float32)                     # (B, K)
    w = w_ref[...].astype(jnp.float32)                     # (1, K)
    s = jnp.sum(x * w, axis=-1, keepdims=True) + b_ref[...]  # (B, 1)
    z = jnp.exp(-jnp.abs(s))                               # stable sigmoid
    o_ref[...] = jnp.where(s >= 0.0, 1.0 / (1.0 + z), z / (1.0 + z))


def fc_sigmoid(x, w, b):
    """x: (B, K) bf16, w: (1, K) f32, b: (1, 1) f32 -> (B, 1) f32."""
    B, K = x.shape
    return pl.pallas_call(
        _fc_sigmoid_kernel,
        out_shape=jax.ShapeDtypeStruct((B, 1), jnp.float32),
        grid_spec=pltpu.PrefetchScalarGridSpec(
            num_scalar_prefetch=0,
            grid=(1,),
            in_specs=[
                pl.BlockSpec((B, K), lambda i: (0, 0)),
                pl.BlockSpec((1, K), lambda i: (0, 0)),
                pl.BlockSpec((1, 1), lambda i: (0, 0)),
            ],
            out_specs=pl.BlockSpec((B, 1), lambda i: (0, 0)),
        ),
        compiler_params=pltpu.CompilerParams(
            dimension_semantics=("arbitrary",)),
    )(x, w, b)


# ----------------------------------------------------------------------------
# im2col glue (plain JAX, NHWC): (B, H, W, C) -> (B*Ho*Wo, k*k*C), ordering
# (kh, kw, c) with c fastest — matches w.transpose(0,2,3,1).reshape(O,-1).T.
# No transposes: concat along last axis + row-major reshape only.
# ----------------------------------------------------------------------------
def im2col_nhwc(x, k, stride, pad):
    B, H, W, C = x.shape
    xp = jnp.pad(x, ((0, 0), (pad, pad), (pad, pad), (0, 0)))
    Ho = (H + 2 * pad - k) // stride + 1
    Wo = (W + 2 * pad - k) // stride + 1
    cols = []
    for i in range(k):
        for j in range(k):
            cols.append(xp[:, i:i + Ho * stride:stride,
                           j:j + Wo * stride:stride, :])
    patches = jnp.concatenate(cols, axis=-1)          # (B, Ho, Wo, k*k*C)
    return patches.reshape(B * Ho * Wo, k * k * C), Ho, Wo


def conv2d_relu_nhwc(x, w_mat, b, out_ch, *, k=4, stride=2, pad=1,
                     group=1, tm_cap=512):
    """x: (B,H,W,C) bf16; w_mat: (group*k*k*C, group*out_ch) bf16;
    b: (group*out_ch,) f32. Returns (B, Ho, Wo, out_ch) bf16 (NHWC)."""
    B = x.shape[0]
    patches, Ho, Wo = im2col_nhwc(x, k, stride, pad)  # (B*Ho*Wo, k*k*C)
    M = B * Ho * Wo
    assert M % group == 0
    patches = patches.reshape(M // group, group * patches.shape[1])
    out = matmul_bias_relu(patches, w_mat, b.reshape(1, -1), tm_cap=tm_cap)
    return out.reshape(B, Ho, Wo, out_ch)             # row-major ungrouping


# ----------------------------------------------------------------------------
# Parameter preparation: torch-layout f32 params -> kernel-ready (NHWC, bf16)
# ----------------------------------------------------------------------------
def prepare_params(p):
    def conv_w(w):  # (O, Cin, kh, kw) -> (kh*kw*Cin, O), (kh, kw, c) ordering
        O = w.shape[0]
        return jnp.transpose(w, (0, 2, 3, 1)).reshape(O, -1).T

    # conv1: pack GROUP1 output pixels per row via a block-diagonal weight.
    w1m = conv_w(p["w1"])                                        # (16, 64)
    w1g = jnp.kron(jnp.eye(GROUP1, dtype=w1m.dtype), w1m)        # (128, 512)
    b1g = jnp.tile(p["b1"], GROUP1)                              # (512,)

    # fc: permute columns once so it consumes the NHWC (h, w, c) flatten.
    wfc = p["wfc"].reshape(1, 256, 8, 8)
    wfc = jnp.transpose(wfc, (0, 2, 3, 1)).reshape(1, 8 * 8 * 256)

    return {
        "w1": w1g.astype(jnp.bfloat16), "b1": b1g.astype(jnp.float32),
        "w2": conv_w(p["w2"]).astype(jnp.bfloat16), "b2": p["b2"].astype(jnp.float32),
        "w3": conv_w(p["w3"]).astype(jnp.bfloat16), "b3": p["b3"].astype(jnp.float32),
        "wfc": wfc.astype(jnp.float32),
        "bfc": p["bfc"].reshape(1, 1).astype(jnp.float32),
    }


# ----------------------------------------------------------------------------
# Full Discriminator forward (input NCHW like the PyTorch module)
# ----------------------------------------------------------------------------
def discriminator_forward(x, kp):
    B = x.shape[0]
    x = jnp.transpose(x, (0, 2, 3, 1)).astype(jnp.bfloat16)       # NHWC bf16
    x = conv2d_relu_nhwc(x, kp["w1"], kp["b1"], 64,
                         group=GROUP1, tm_cap=1024)               # (B,32,32,64)
    x = conv2d_relu_nhwc(x, kp["w2"], kp["b2"], 128, tm_cap=512)  # (B,16,16,128)
    x = conv2d_relu_nhwc(x, kp["w3"], kp["b3"], 256, tm_cap=512)  # (B, 8, 8,256)
    x = x.reshape(B, -1)                       # NHWC flatten; wfc permuted to match
    return fc_sigmoid(x, kp["wfc"], kp["bfc"])                    # (B, 1) f32


# ----------------------------------------------------------------------------
# torch-style initialization (same layout as nn.Conv2d / nn.Linear)
# ----------------------------------------------------------------------------
def init_params(key):
    ks = jax.random.split(key, 8)
    def u(k, shape, fan_in):
        bound = 1.0 / jnp.sqrt(fan_in)
        return jax.random.uniform(k, shape, jnp.float32, -bound, bound)
    return {
        "w1": u(ks[0], (64, 1, 4, 4), 1 * 16),
        "b1": u(ks[1], (64,), 1 * 16),
        "w2": u(ks[2], (128, 64, 4, 4), 64 * 16),
        "b2": u(ks[3], (128,), 64 * 16),
        "w3": u(ks[4], (256, 128, 4, 4), 128 * 16),
        "b3": u(ks[5], (256,), 128 * 16),
        "wfc": u(ks[6], (1, 256 * 8 * 8), 256 * 8 * 8),
        "bfc": u(ks[7], (1,), 256 * 8 * 8),
    }


# ----------------------------------------------------------------------------
# Pure-JAX reference (f32) for a sanity check
# ----------------------------------------------------------------------------
def reference_forward(x, p):
    def conv(x, w, b):
        y = jax.lax.conv_general_dilated(
            x, w, window_strides=(2, 2), padding=((1, 1), (1, 1)),
            dimension_numbers=("NCHW", "OIHW", "NCHW"))
        return jax.nn.relu(y + b[None, :, None, None])
    x = conv(x, p["w1"], p["b1"])
    x = conv(x, p["w2"], p["b2"])
    x = conv(x, p["w3"], p["b3"])
    x = x.reshape(x.shape[0], -1)
    return jax.nn.sigmoid(x @ p["wfc"].T + p["bfc"])


if __name__ == "__main__":
    key = jax.random.PRNGKey(0)
    k_x, k_p = jax.random.split(key)
    # fc expects 256*8*8 features -> input spatial must be 64x64 (1 channel).
    x = jax.random.normal(k_x, (2, 1, 64, 64), jnp.float32)
    params = init_params(k_p)
    kparams = prepare_params(params)

    fwd = jax.jit(discriminator_forward)
    out = jax.block_until_ready(fwd(x, kparams))
    assert out.shape == (2, 1) and bool(jnp.all(jnp.isfinite(out)))

    ref = jax.block_until_ready(reference_forward(x, params))
    assert jnp.allclose(out, ref, atol=3e-2, rtol=3e-2), (out, ref)

    print("KERNEL_OK")
</pallas_src>

<mosaic_0001>
module attributes {stable_mosaic.version = 11 : i64} {
  func.func @_mm_bias_relu_kernel(%arg0: i32, %arg1: i32, %arg2: memref<256x128xbf16, #tpu.memory_space<vmem>>, %arg3: memref<128x128xbf16, #tpu.memory_space<vmem>>, %arg4: memref<1x128xf32, #tpu.memory_space<vmem>>, %arg5: memref<256x128xbf16, #tpu.memory_space<vmem>>) attributes {dimension_semantics = [#tpu.dimension_semantics<parallel>, #tpu.dimension_semantics<parallel>], iteration_bounds = array<i64: 1, 4>, scalar_prefetch = 0 : i64, scratch_operands = 0 : i64, tpu.core_type = #tpu.core_type<tc>, window_params = [{transform_indices = @transform_0, window_bounds = array<i64: 256, 128>}, {transform_indices = @transform_1, window_bounds = array<i64: 128, 128>}, {transform_indices = @transform_2, window_bounds = array<i64: 1, 128>}, {transform_indices = @transform_3, window_bounds = array<i64: 256, 128>}]} {
    %c0 = arith.constant 0 : index
    %c0_0 = arith.constant 0 : index
    %0 = vector.load %arg2[%c0, %c0_0] : memref<256x128xbf16, #tpu.memory_space<vmem>>, vector<256x128xbf16>
    %c0_1 = arith.constant 0 : index
    %c0_2 = arith.constant 0 : index
    %1 = vector.load %arg3[%c0_1, %c0_2] : memref<128x128xbf16, #tpu.memory_space<vmem>>, vector<128x128xbf16>
    %cst = arith.constant dense<0.000000e+00> : vector<256x128xf32>
    %2 = tpu.matmul %0, %1, %cst {dimension_numbers = #tpu.dot_dimension_numbers<[1], [0], [0], [1], [0, 0, 1, 1], [], []>} : vector<256x128xbf16>, vector<128x128xbf16>, vector<256x128xf32> -> vector<256x128xf32>
    %c0_3 = arith.constant 0 : index
    %c0_4 = arith.constant 0 : index
    %3 = vector.load %arg4[%c0_3, %c0_4] : memref<1x128xf32, #tpu.memory_space<vmem>>, vector<1x128xf32>
    %4 = vector.broadcast %3 : vector<1x128xf32> to vector<256x128xf32>
    %5 = arith.addf %2, %4 : vector<256x128xf32>
    %cst_5 = arith.constant 0.000000e+00 : f32
    %6 = vector.broadcast %cst_5 : f32 to vector<256x128xf32>
    %7 = arith.maximumf %5, %6 : vector<256x128xf32>
    %8 = arith.truncf %7 : vector<256x128xf32> to vector<256x128xbf16>
    %c0_6 = arith.constant 0 : index
    %c0_7 = arith.constant 0 : index
    %9 = vector.load %arg5[%c0_6, %c0_7] : memref<256x128xbf16, #tpu.memory_space<vmem>>, vector<256x128xbf16>
    tpu.vector_store %arg5[%c0_6, %c0_7], %8 {strides = array<i32>} : memref<256x128xbf16, #tpu.memory_space<vmem>>, vector<256x128xbf16>,
    return
  }
  func.func @transform_0(%arg0: i32, %arg1: i32) -> (i32, i32) {
    %c0_i32 = arith.constant 0 : i32
    %c0_i32_0 = arith.constant 0 : i32
    return %arg0, %c0_i32 : i32, i32
  }
  func.func @transform_1(%arg0: i32, %arg1: i32) -> (i32, i32) {
    %c0_i32 = arith.constant 0 : i32
    %c0_i32_0 = arith.constant 0 : i32
    return %c0_i32, %arg1 : i32, i32
  }
  func.func @transform_2(%arg0: i32, %arg1: i32) -> (i32, i32) {
    %c0_i32 = arith.constant 0 : i32
    %c0_i32_0 = arith.constant 0 : i32
    return %c0_i32, %arg1 : i32, i32
  }
  func.func @transform_3(%arg0: i32, %arg1: i32) -> (i32, i32) {
    %c0_i32 = arith.constant 0 : i32
    return %arg0, %arg1 : i32, i32
  }
}

module attributes {stable_mosaic.version = 11 : i64} {
  func.func @_mm_bias_relu_kernel(%arg0: i32, %arg1: i32, %arg2: memref<512x1024xbf16, #tpu.memory_space<vmem>>, %arg3: memref<1024x128xbf16, #tpu.memory_space<vmem>>, %arg4: memref<1x128xf32, #tpu.memory_space<vmem>>, %arg5: memref<512x128xbf16, #tpu.memory_space<vmem>>) attributes {dimension_semantics = [#tpu.dimension_semantics<parallel>, #tpu.dimension_semantics<parallel>], iteration_bounds = array<i64: 1, 1>, scalar_prefetch = 0 : i64, scratch_operands = 0 : i64, tpu.core_type = #tpu.core_type<tc>, window_params = [{transform_indices = @transform_0, window_bounds = array<i64: 512, 1024>}, {transform_indices = @transform_1, window_bounds = array<i64: 1024, 128>}, {transform_indices = @transform_2, window_bounds = array<i64: 1, 128>}, {transform_indices = @transform_3, window_bounds = array<i64: 512, 128>}]} {
    %c0 = arith.constant 0 : index
    %c0_0 = arith.constant 0 : index
    %0 = vector.load %arg2[%c0, %c0_0] : memref<512x1024xbf16, #tpu.memory_space<vmem>>, vector<512x1024xbf16>
    %c0_1 = arith.constant 0 : index
    %c0_2 = arith.constant 0 : index
    %1 = vector.load %arg3[%c0_1, %c0_2] : memref<1024x128xbf16, #tpu.memory_space<vmem>>, vector<1024x128xbf16>
    %cst = arith.constant dense<0.000000e+00> : vector<512x128xf32>
    %2 = tpu.matmul %0, %1, %cst {dimension_numbers = #tpu.dot_dimension_numbers<[1], [0], [0], [1], [0, 0, 1, 1], [], []>} : vector<512x1024xbf16>, vector<1024x128xbf16>, vector<512x128xf32> -> vector<512x128xf32>
    %c0_3 = arith.constant 0 : index
    %c0_4 = arith.constant 0 : index
    %3 = vector.load %arg4[%c0_3, %c0_4] : memref<1x128xf32, #tpu.memory_space<vmem>>, vector<1x128xf32>
    %4 = vector.broadcast %3 : vector<1x128xf32> to vector<512x128xf32>
    %5 = arith.addf %2, %4 : vector<512x128xf32>
    %cst_5 = arith.constant 0.000000e+00 : f32
    %6 = vector.broadcast %cst_5 : f32 to vector<512x128xf32>
    %7 = arith.maximumf %5, %6 : vector<512x128xf32>
    %8 = arith.truncf %7 : vector<512x128xf32> to vector<512x128xbf16>
    %c0_6 = arith.constant 0 : index
    %c0_7 = arith.constant 0 : index
    %9 = vector.load %arg5[%c0_6, %c0_7] : memref<512x128xbf16, #tpu.memory_space<vmem>>, vector<512x128xbf16>
    tpu.vector_store %arg5[%c0_6, %c0_7], %8 {strides = array<i32>} : memref<512x128xbf16, #tpu.memory_space<vmem>>, vector<512x128xbf16>,
    return
  }
  func.func @transform_0(%arg0: i32, %arg1: i32) -> (i32, i32) {
    %c0_i32 = arith.constant 0 : i32
    %c0_i32_0 = arith.constant 0 : i32
    return %arg0, %c0_i32 : i32, i32
  }
  func.func @transform_1(%arg0: i32, %arg1: i32) -> (i32, i32) {
    %c0_i32 = arith.constant 0 : i32
    %c0_i32_0 = arith.constant 0 : i32
    return %c0_i32, %arg1 : i32, i32
  }
  func.func @transform_2(%arg0: i32, %arg1: i32) -> (i32, i32) {
    %c0_i32 = arith.constant 0 : i32
    %c0_i32_0 = arith.constant 0 : i32
    return %c0_i32, %arg1 : i32, i32
  }
  func.func @transform_3(%arg0: i32, %arg1: i32) -> (i32, i32) {
    %c0_i32 = arith.constant 0 : i32
    return %arg0, %arg1 : i32, i32
  }
}

module attributes {stable_mosaic.version = 11 : i64} {
  func.func @_mm_bias_relu_kernel(%arg0: i32, %arg1: i32, %arg2: memref<128x2048xbf16, #tpu.memory_space<vmem>>, %arg3: memref<2048x128xbf16, #tpu.memory_space<vmem>>, %arg4: memref<1x128xf32, #tpu.memory_space<vmem>>, %arg5: memref<128x128xbf16, #tpu.memory_space<vmem>>) attributes {dimension_semantics = [#tpu.dimension_semantics<parallel>, #tpu.dimension_semantics<parallel>], iteration_bounds = array<i64: 1, 2>, scalar_prefetch = 0 : i64, scratch_operands = 0 : i64, tpu.core_type = #tpu.core_type<tc>, window_params = [{transform_indices = @transform_0, window_bounds = array<i64: 128, 2048>}, {transform_indices = @transform_1, window_bounds = array<i64: 2048, 128>}, {transform_indices = @transform_2, window_bounds = array<i64: 1, 128>}, {transform_indices = @transform_3, window_bounds = array<i64: 128, 128>}]} {
    %c0 = arith.constant 0 : index
    %c0_0 = arith.constant 0 : index
    %0 = vector.load %arg2[%c0, %c0_0] : memref<128x2048xbf16, #tpu.memory_space<vmem>>, vector<128x2048xbf16>
    %c0_1 = arith.constant 0 : index
    %c0_2 = arith.constant 0 : index
    %1 = vector.load %arg3[%c0_1, %c0_2] : memref<2048x128xbf16, #tpu.memory_space<vmem>>, vector<2048x128xbf16>
    %cst = arith.constant dense<0.000000e+00> : vector<128x128xf32>
    %2 = tpu.matmul %0, %1, %cst {dimension_numbers = #tpu.dot_dimension_numbers<[1], [0], [0], [1], [0, 0, 1, 1], [], []>} : vector<128x2048xbf16>, vector<2048x128xbf16>, vector<128x128xf32> -> vector<128x128xf32>
    %c0_3 = arith.constant 0 : index
    %c0_4 = arith.constant 0 : index
    %3 = vector.load %arg4[%c0_3, %c0_4] : memref<1x128xf32, #tpu.memory_space<vmem>>, vector<1x128xf32>
    %4 = vector.broadcast %3 : vector<1x128xf32> to vector<128x128xf32>
    %5 = arith.addf %2, %4 : vector<128x128xf32>
    %cst_5 = arith.constant 0.000000e+00 : f32
    %6 = vector.broadcast %cst_5 : f32 to vector<128x128xf32>
    %7 = arith.maximumf %5, %6 : vector<128x128xf32>
    %8 = arith.truncf %7 : vector<128x128xf32> to vector<128x128xbf16>
    %c0_6 = arith.constant 0 : index
    %c0_7 = arith.constant 0 : index
    %9 = vector.load %arg5[%c0_6, %c0_7] : memref<128x128xbf16, #tpu.memory_space<vmem>>, vector<128x128xbf16>
    tpu.vector_store %arg5[%c0_6, %c0_7], %8 {strides = array<i32>} : memref<128x128xbf16, #tpu.memory_space<vmem>>, vector<128x128xbf16>,
    return
  }
  func.func @transform_0(%arg0: i32, %arg1: i32) -> (i32, i32) {
    %c0_i32 = arith.constant 0 : i32
    %c0_i32_0 = arith.constant 0 : i32
    return %arg0, %c0_i32 : i32, i32
  }
  func.func @transform_1(%arg0: i32, %arg1: i32) -> (i32, i32) {
    %c0_i32 = arith.constant 0 : i32
    %c0_i32_0 = arith.constant 0 : i32
    return %c0_i32, %arg1 : i32, i32
  }
  func.func @transform_2(%arg0: i32, %arg1: i32) -> (i32, i32) {
    %c0_i32 = arith.constant 0 : i32
    %c0_i32_0 = arith.constant 0 : i32
    return %c0_i32, %arg1 : i32, i32
  }
  func.func @transform_3(%arg0: i32, %arg1: i32) -> (i32, i32) {
    %c0_i32 = arith.constant 0 : i32
    return %arg0, %arg1 : i32, i32
  }
}

module attributes {stable_mosaic.version = 11 : i64} {
  func.func @_fc_sigmoid_kernel(%arg0: i32, %arg1: memref<2x16384xbf16, #tpu.memory_space<vmem>>, %arg2: memref<1x16384xf32, #tpu.memory_space<vmem>>, %arg3: memref<1x1xf32, #tpu.memory_space<vmem>>, %arg4: memref<2x1xf32, #tpu.memory_space<vmem>>) attributes {dimension_semantics = [#tpu.dimension_semantics<arbitrary>], iteration_bounds = array<i64: 1>, scalar_prefetch = 0 : i64, scratch_operands = 0 : i64, tpu.core_type = #tpu.core_type<tc>, window_params = [{pipeline_mode = #tpu.pipeline_mode<synchronous>, transform_indices = @transform_0, window_bounds = array<i64: 2, 16384>}, {pipeline_mode = #tpu.pipeline_mode<synchronous>, transform_indices = @transform_1, window_bounds = array<i64: 1, 16384>}, {pipeline_mode = #tpu.pipeline_mode<synchronous>, transform_indices = @transform_2, window_bounds = array<i64: 1, 1>}, {pipeline_mode = #tpu.pipeline_mode<synchronous>, transform_indices = @transform_3, window_bounds = array<i64: 2, 1>}]} {
    %c0 = arith.constant 0 : index
    %c0_0 = arith.constant 0 : index
    %0 = vector.load %arg1[%c0, %c0_0] : memref<2x16384xbf16, #tpu.memory_space<vmem>>, vector<2x16384xbf16>
    %1 = arith.extf %0 : vector<2x16384xbf16> to vector<2x16384xf32>
    %c0_1 = arith.constant 0 : index
    %c0_2 = arith.constant 0 : index
    %2 = vector.load %arg2[%c0_1, %c0_2] : memref<1x16384xf32, #tpu.memory_space<vmem>>, vector<1x16384xf32>
    %3 = vector.broadcast %2 : vector<1x16384xf32> to vector<2x16384xf32>
    %4 = arith.mulf %1, %3 : vector<2x16384xf32>
    %cst = arith.constant dense<0.000000e+00> : vector<2xf32>
    %5 = vector.multi_reduction <add>, %4, %cst [1] : vector<2x16384xf32> to vector<2xf32>
    %6 = vector.shape_cast %5 : vector<2xf32> to vector<2x1xf32>
    %c0_3 = arith.constant 0 : index
    %c0_4 = arith.constant 0 : index
    %7 = vector.load %arg3[%c0_3, %c0_4] : memref<1x1xf32, #tpu.memory_space<vmem>>, vector<1x1xf32>
    %8 = vector.broadcast %7 : vector<1x1xf32> to vector<2x1xf32>
    %9 = arith.addf %6, %8 : vector<2x1xf32>
    %10 = math.absf %9 : vector<2x1xf32>
    %cst_5 = arith.constant 0.000000e+00 : f32
    %11 = vector.broadcast %cst_5 : f32 to vector<2x1xf32>
    %12 = arith.subf %11, %10 : vector<2x1xf32>
    %13 = math.exp %12 : vector<2x1xf32>
    %cst_6 = arith.constant 0.000000e+00 : f32
    %14 = vector.broadcast %cst_6 : f32 to vector<2x1xf32>
    %15 = arith.cmpf oge, %9, %14 : vector<2x1xf32>
    %cst_7 = arith.constant 1.000000e+00 : f32
    %16 = vector.broadcast %cst_7 : f32 to vector<2x1xf32>
    %17 = arith.addf %16, %13 : vector<2x1xf32>
    %cst_8 = arith.constant 1.000000e+00 : f32
    %18 = vector.broadcast %cst_8 : f32 to vector<2x1xf32>
    %19 = arith.divf %18, %17 : vector<2x1xf32>
    %cst_9 = arith.constant 1.000000e+00 : f32
    %20 = vector.broadcast %cst_9 : f32 to vector<2x1xf32>
    %21 = arith.addf %20, %13 : vector<2x1xf32>
    %22 = arith.divf %13, %21 : vector<2x1xf32>
    %23 = arith.select %15, %19, %22 : vector<2x1xi1>, vector<2x1xf32>
    %c0_10 = arith.constant 0 : index
    %c0_11 = arith.constant 0 : index
    %24 = vector.load %arg4[%c0_10, %c0_11] : memref<2x1xf32, #tpu.memory_space<vmem>>, vector<2x1xf32>
    tpu.vector_store %arg4[%c0_10, %c0_11], %23 {strides = array<i32>} : memref<2x1xf32, #tpu.memory_space<vmem>>, vector<2x1xf32>,
    return
  }
  func.func @transform_0(%arg0: i32) -> (i32, i32) {
    %c0_i32 = arith.constant 0 : i32
    %c0_i32_0 = arith.constant 0 : i32
    %c0_i32_1 = arith.constant 0 : i32
    return %c0_i32, %c0_i32_0 : i32, i32
  }
  func.func @transform_1(%arg0: i32) -> (i32, i32) {
    %c0_i32 = arith.constant 0 : i32
    %c0_i32_0 = arith.constant 0 : i32
    %c0_i32_1 = arith.constant 0 : i32
    return %c0_i32, %c0_i32_0 : i32, i32
  }
  func.func @transform_2(%arg0: i32) -> (i32, i32) {
    %c0_i32 = arith.constant 0 : i32
    %c0_i32_0 = arith.constant 0 : i32
    %c0_i32_1 = arith.constant 0 : i32
    return %c0_i32, %c0_i32_0 : i32, i32
  }
  func.func @transform_3(%arg0: i32) -> (i32, i32) {
    %c0_i32 = arith.constant 0 : i32
    %c0_i32_0 = arith.constant 0 : i32
    %c0_i32_1 = arith.constant 0 : i32
    return %c0_i32, %c0_i32_0 : i32, i32
  }
}

</mosaic_0001>

<llo_original>
// kernel: discriminator_forward.4
$region0: #{discriminator_forward.4}
  #allocation0 [shape = 'u32[]', space=smem, size = 0x4, offset = 0x4, fixed_abs, tag = 'smem constant byte address 0x4 - core index']
  #allocation1 [shape = 'u32[144,128]{1,0:T(1,128)}', space=vmem, size = 0x12000, scoped, tag = 'internal scratch']
  %s0 = inlined_call_operand.vmem [shape: bf16[256,128], index: 0, kind: input, shape index: {}]
  %s1 = inlined_call_operand.vmem [shape: bf16[128,512], index: 1, kind: input, shape index: {}]
  %s2 = inlined_call_operand.vmem [shape: f32[1,512], index: 2, kind: input, shape index: {}]
  %s3 = inlined_call_operand.vmem [shape: bf16[256,512], index: 3, kind: output, shape index: {}]
  %s4 = sld [smem:[#allocation0]]
  $region123: #{discriminator_forward.4} parent=0
    _
  %s6 = ssub.s32 1, %s4
  %s7 = scalar_select 0, %s6, %s4
  $region1: #{discriminator_forward.4} parent=0
    #allocation2 [shape = 'u8[65536]{0}', space=vmem, size = 0x10000, scoped, tag = 'input window, operand 1']
    #allocation3 [shape = 'u8[131072]{0}', space=vmem, size = 0x20000, scoped, tag = 'output window, operand 0']
    loop: start=0, step=1, limit=6
    $region2: #{discriminator_forward.4} parent=1 // loop_pre_header
      _
    $region3: #{discriminator_forward.4} parent=1 // loop_header
      %s9 = sphi 0, %s13
      %p10 = scmp.ge.s32.totalorder %s9, 6
      %s16 = sphi 0, %s28
      %s17 = sphi 0, %s24
      %s18 = sphi 0, %s16
      %s19 = sphi 0, %s17
      %s20 = sphi 0, %s18
      %s21 = sphi 0, %s19
      %s31 = sphi 0, %s33
      %s34 = sphi 0, %s31
      %s35 = sphi 0, %s34
      %s51 = sphi 0, %s35
      %s57 = sphi 0, %s59
      %s60 = sphi 0, %s57
      %s61 = sphi 0, %s60
      %s77 = sphi 0, %s61
      %s83 = sphi 0, %s85
      %s86 = sphi 0, %s83
      %s87 = sphi 0, %s86
      %s103 = sphi 0, %s87
      %s111 = sphi 0, %s113
      %s114 = sphi 0, %s111
      %s115 = sphi 0, %s114
      %s131 = sphi 0, %s115
    $region4: #{discriminator_forward.4} parent=1 // loop_header_branch
      %12 = sbr.rel (%p10) target = $region8
    $region5: #{discriminator_forward.4} parent=1 // loop_body
      %s14 = ssub.s32 %s9, 1
      %s15 = ssub.s32 %s9, 2
      %s22 = sadd.s32 1, %s17
      %p23 = scmp.ge.s32.totalorder %s22, 4
      %s24 = scalar_select %p23, 0, %s22
      %s25 = sadd.s32 1, %s16
      %s26 = scalar_select %p23, %s25, %s16
      %p27 = scmp.ge.s32.totalorder %s26, 1
      %s28 = scalar_select %p27, 0, %s26
      %s29 = ssub.s32 %s16, %s28
      %p30 = scmp.eq.s32.totalorder %s29, 0
      %s32 = sadd.s32 %s31, 1
      %s33 = scalar_select %p30, %s31, %s32
      %p36 = pneg %p30
      %p37 = scmp.eq.s32.totalorder %s9, 3
      %p38 = por %p36, %p37
      %p39 = scmp.ne.s32.totalorder %s31, %s34
      %p40 = scmp.eq.s32.totalorder %s9, 0
      %p41 = por %p39, %p40
      %p42 = scmp.ne.s32.totalorder %s31, %s34
      %p43 = scmp.eq.s32.totalorder %s14, 3
      %p44 = por %p42, %p43
      %p45 = scmp.ne.s32.totalorder %s34, %s35
      %p46 = scmp.eq.s32.totalorder %s14, 0
      %p47 = por %p45, %p46
      %p48 = scmp.ne.s32.totalorder %s34, %s35
      %p49 = scmp.eq.s32.totalorder %s15, 3
      %p50 = por %p48, %p49
      %p52 = scmp.ne.s32.totalorder %s35, %s51
      %p53 = scmp.eq.s32.totalorder %s15, 0
      %p54 = por %p52, %p53
      %s55 = ssub.s32 %s17, %s24
      %p56 = scmp.eq.s32.totalorder %s55, 0
      %s58 = sadd.s32 %s57, 1
      %s59 = scalar_select %p56, %s57, %s58
      %p62 = pneg %p56
      %p63 = scmp.eq.s32.totalorder %s9, 3
      %p64 = por %p62, %p63
      %p65 = scmp.ne.s32.totalorder %s57, %s60
      %p66 = scmp.eq.s32.totalorder %s9, 0
      %p67 = por %p65, %p66
      %p68 = scmp.ne.s32.totalorder %s57, %s60
      %p69 = scmp.eq.s32.totalorder %s14, 3
      %p70 = por %p68, %p69
      %p71 = scmp.ne.s32.totalorder %s60, %s61
      %p72 = scmp.eq.s32.totalorder %s14, 0
      %p73 = por %p71, %p72
      %p74 = scmp.ne.s32.totalorder %s60, %s61
      %p75 = scmp.eq.s32.totalorder %s15, 3
      %p76 = por %p74, %p75
      %p78 = scmp.ne.s32.totalorder %s61, %s77
      %p79 = scmp.eq.s32.totalorder %s15, 0
      %p80 = por %p78, %p79
      %s81 = ssub.s32 %s17, %s24
      %p82 = scmp.eq.s32.totalorder %s81, 0
      %s84 = sadd.s32 %s83, 1
      %s85 = scalar_select %p82, %s83, %s84
      %p88 = pneg %p82
      %p89 = scmp.eq.s32.totalorder %s9, 3
      %p90 = por %p88, %p89
      %p91 = scmp.ne.s32.totalorder %s83, %s86
      %p92 = scmp.eq.s32.totalorder %s9, 0
      %p93 = por %p91, %p92
      %p94 = scmp.ne.s32.totalorder %s83, %s86
      %p95 = scmp.eq.s32.totalorder %s14, 3
      %p96 = por %p94, %p95
      %p97 = scmp.ne.s32.totalorder %s86, %s87
      %p98 = scmp.eq.s32.totalorder %s14, 0
      %p99 = por %p97, %p98
      %p100 = scmp.ne.s32.totalorder %s86, %s87
      %p101 = scmp.eq.s32.totalorder %s15, 3
      %p102 = por %p100, %p101
      %p104 = scmp.ne.s32.totalorder %s87, %s103
      %p105 = scmp.eq.s32.totalorder %s15, 0
      %p106 = por %p104, %p105
      %s107 = ssub.s32 %s16, %s28
      %s108 = ssub.s32 %s17, %s24
      %s109 = sor.u32 %s107, %s108
      %p110 = scmp.eq.s32.totalorder %s109, 0
      %s112 = sadd.s32 %s111, 1
      %s113 = scalar_select %p110, %s111, %s112
      %p116 = pneg %p110
      %p117 = scmp.eq.s32.totalorder %s9, 3
      %p118 = por %p116, %p117
      %p119 = scmp.ne.s32.totalorder %s111, %s114
      %p120 = scmp.eq.s32.totalorder %s9, 0
      %p121 = por %p119, %p120
      %p122 = scmp.ne.s32.totalorder %s111, %s114
      %p123 = scmp.eq.s32.totalorder %s14, 3
      %p124 = por %p122, %p123
      %p125 = scmp.ne.s32.totalorder %s114, %s115
      %p126 = scmp.eq.s32.totalorder %s14, 0
      %p127 = por %p125, %p126
      %p128 = scmp.ne.s32.totalorder %s114, %s115
      %p129 = scmp.eq.s32.totalorder %s15, 3
      %p130 = por %p128, %p129
      %p132 = scmp.ne.s32.totalorder %s115, %s131
      %p133 = scmp.eq.s32.totalorder %s15, 0
      %p134 = por %p132, %p133
      %p135 = scmp.le.s32.totalorder 1, %s9
      %p136 = scmp.lt.s32.totalorder %s9, 5
      %p137 = pnand %p135, %p136
      %p138 = pneg %p137
      // Predicated region
      $region9: #{discriminator_forward.4} parent=5 // pred_check
        _
      $region10: #{discriminator_forward.4} parent=5 // pred_check_branch
        %140 = sbr.rel (%p137) target = $region12
      $region11: #{discriminator_forward.4} parent=5 // pred_region
        %s141 = ssub.s32 %s9, 1
        // Predicated region
        $region13: #{discriminator_forward.4} parent=11 // pred_check
          %p142 = pneg %p47
        $region14: #{discriminator_forward.4} parent=11 // pred_check_branch
          %144 = sbr.rel (%p142) target = $region16
        $region15: #{discriminator_forward.4} parent=11 // pred_region
          %s145 = smul.u32 32, %s18
          %p146 = scmp.lt.s32.totalorder %s145, 31
          %s147 = scalar_select %p146, %s145, 31
          %s148 = smul.addr %s147, 4
          %s149 = scalar_lea.vmem %s0, %s148
          %s150 = smul.u32 32, %s18
        $region16: #{discriminator_forward.4} parent=11 // pred_fallthru
          _
      $region12: #{discriminator_forward.4} parent=5 // pred_fallthru
        _
      %p151 = scmp.lt.s32.totalorder %s9, 4
      // Predicated region
      $region17: #{discriminator_forward.4} parent=5 // pred_check
        %p152 = pneg %p151
      $region18: #{discriminator_forward.4} parent=5 // pred_check_branch
        %154 = sbr.rel (%p152) target = $region20
      $region19: #{discriminator_forward.4} parent=5 // pred_region
        // Predicated region
        $region21: #{discriminator_forward.4} parent=19 // pred_check
          %p155 = pneg %p67
        $region22: #{discriminator_forward.4} parent=19 // pred_check_branch
          %157 = sbr.rel (%p155) target = $region24
        $region23: #{discriminator_forward.4} parent=19 // pred_region
          %s158 = sand.u32 %s57, 1
          %s159 = sand.u32 %s57, 1
          %s160 = smul.addr %s159, 64
          %s161 = scalar_lea.vmem [#allocation2], %s160
          %s162 = smul.addr %s17, 4
          %s163 = scalar_lea.vmem %s1, %s162
          // Predicated region
          $region25: #{discriminator_forward.4} parent=23 // pred_check
            _
          $region26: #{discriminator_forward.4} parent=23 // pred_check_branch
            %165 = sbr.rel (0) target = $region28
          $region27: #{discriminator_forward.4} parent=23 // pred_region
            // Predicated region
            $region29: #{discriminator_forward.4} parent=27 // pred_check
              _
            $region30: #{discriminator_forward.4} parent=27 // pred_check_branch
              %167 = sbr.rel target = $region32
            $region31: #{discriminator_forward.4} parent=27 // pred_region
              // Predicated region
              $region44: #{discriminator_forward.4} parent=31 // pred_check
                _
              $region45: #{discriminator_forward.4} parent=31 // pred_check_branch
                %212 = sbr.rel (0) target = $region47
              $region46: #{discriminator_forward.4} parent=31 // pred_region
                loop: start=0, step=1, limit=1
                $region48: #{discriminator_forward.4} parent=46 // loop_pre_header
                  _
                $region49: #{discriminator_forward.4} parent=46 // loop_header
                  %s214 = sphi 0, %s218
                  %p215 = scmp.ge.s32.totalorder %s214, 1
                  %s219 = sphi %s163, %s163
                  %s220 = sphi %s161, %s161
                $region50: #{discriminator_forward.4} parent=46 // loop_header_branch
                  %217 = sbr.rel (%p215) target = $region54
                $region51: #{discriminator_forward.4} parent=46 // loop_body
                  _
                $region52: #{discriminator_forward.4} parent=46 // loop_footer
                  %s218 = sadd.s32 1, %s214
                $region53: #{discriminator_forward.4} parent=46 // loop_footer_branch
                  %213 = sbr.rel target = $region49
                $region54: #{discriminator_forward.4} parent=46 // loop_exit
                  _
                loop: start=0, step=1, limit=1
                $region55: #{discriminator_forward.4} parent=46 // loop_pre_header
                  _
                $region56: #{discriminator_forward.4} parent=46 // loop_header
                  %s223 = sphi 0, %s227
                  %p224 = scmp.ge.s32.totalorder %s223, 1
                  %s228 = sphi %s163, %s163
                  %s229 = sphi %s161, %s161
                $region57: #{discriminator_forward.4} parent=46 // loop_header_branch
                  %226 = sbr.rel (%p224) target = $region61
                $region58: #{discriminator_forward.4} parent=46 // loop_body
                  %v230 = vld [vmem:[%s228] sm:$0xf]
                  %231 = vst [vmem:[%s229] sm:$0xf] %v230
                  %v232 = vld [vmem:[%s228 + $0x10] sm:$0xf]
                  %233 = vst [vmem:[%s229 + $0x4] sm:$0xf] %v232
                  %v234 = vld [vmem:[%s228 + $0x20] sm:$0xf]
                  %235 = vst [vmem:[%s229 + $0x8] sm:$0xf] %v234
                  %v236 = vld [vmem:[%s228 + $0x30] sm:$0xf]
                  %237 = vst [vmem:[%s229 + $0xc] sm:$0xf] %v236
                  %v238 = vld [vmem:[%s228 + $0x40] sm:$0xf]
                  %239 = vst [vmem:[%s229 + $0x10] sm:$0xf] %v238
                  %v240 = vld [vmem:[%s228 + $0x50] sm:$0xf]
                  %241 = vst [vmem:[%s229 + $0x14] sm:$0xf] %v240
                  %v242 = vld [vmem:[%s228 + $0x60] sm:$0xf]
                  %243 = vst [vmem:[%s229 + $0x18] sm:$0xf] %v242
                  %v244 = vld [vmem:[%s228 + $0x70] sm:$0xf]
                  %245 = vst [vmem:[%s229 + $0x1c] sm:$0xf] %v244
                  %v246 = vld [vmem:[%s228 + $0x80] sm:$0xf]
                  %247 = vst [vmem:[%s229 + $0x20] sm:$0xf] %v246
                  %v248 = vld [vmem:[%s228 + $0x90] sm:$0xf]
                  %249 = vst [vmem:[%s229 + $0x24] sm:$0xf] %v248
                  %v250 = vld [vmem:[%s228 + $0xa0] sm:$0xf]
                  %251 = vst [vmem:[%s229 + $0x28] sm:$0xf] %v250
                  %v252 = vld [vmem:[%s228 + $0xb0] sm:$0xf]
                  %253 = vst [vmem:[%s229 + $0x2c] sm:$0xf] %v252
                  %v254 = vld [vmem:[%s228 + $0xc0] sm:$0xf]
                  %255 = vst [vmem:[%s229 + $0x30] sm:$0xf] %v254
                  %v256 = vld [vmem:[%s228 + $0xd0] sm:$0xf]
                  %257 = vst [vmem:[%s229 + $0x34] sm:$0xf] %v256
                  %v258 = vld [vmem:[%s228 + $0xe0] sm:$0xf]
                  %259 = vst [vmem:[%s229 + $0x38] sm:$0xf] %v258
                  %v260 = vld [vmem:[%s228 + $0xf0] sm:$0xf]
                  %261 = vst [vmem:[%s229 + $0x3c] sm:$0xf] %v260
                $region59: #{discriminator_forward.4} parent=46 // loop_footer
                  %s227 = sadd.s32 1, %s223
                $region60: #{discriminator_forward.4} parent=46 // loop_footer_branch
                  %222 = sbr.rel target = $region56
                $region61: #{discriminator_forward.4} parent=46 // loop_exit
                  _
              $region47: #{discriminator_forward.4} parent=31 // pred_fallthru
                _
            $region32: #{discriminator_forward.4} parent=27 // pred_fallthru
              _
            // Predicated region
            $region33: #{discriminator_forward.4} parent=27 // pred_check
              _
            $region34: #{discriminator_forward.4} parent=27 // pred_check_branch
              %169 = sbr.rel (0) target = $region36
            $region35: #{discriminator_forward.4} parent=27 // pred_region
              loop: start=0, step=1, limit=1
              $region37: #{discriminator_forward.4} parent=35 // loop_pre_header
                _
              $region38: #{discriminator_forward.4} parent=35 // loop_header
                %s172 = sphi 0, %s176
                %p173 = scmp.ge.s32.totalorder %s172, 1
                %s177 = sphi %s163, %s163
                %s178 = sphi %s161, %s161
              $region39: #{discriminator_forward.4} parent=35 // loop_header_branch
                %175 = sbr.rel (%p173) target = $region43
              $region40: #{discriminator_forward.4} parent=35 // loop_body
                %v179 = vld [vmem:[%s177] sm:$0xf]
                %180 = vst [vmem:[%s178] sm:$0xf] %v179
                %v181 = vld [vmem:[%s177 + $0x10] sm:$0xf]
                %182 = vst [vmem:[%s178 + $0x4] sm:$0xf] %v181
                %v183 = vld [vmem:[%s177 + $0x20] sm:$0xf]
                %184 = vst [vmem:[%s178 + $0x8] sm:$0xf] %v183
                %v185 = vld [vmem:[%s177 + $0x30] sm:$0xf]
                %186 = vst [vmem:[%s178 + $0xc] sm:$0xf] %v185
                %v187 = vld [vmem:[%s177 + $0x40] sm:$0xf]
                %188 = vst [vmem:[%s178 + $0x10] sm:$0xf] %v187
                %v189 = vld [vmem:[%s177 + $0x50] sm:$0xf]
                %190 = vst [vmem:[%s178 + $0x14] sm:$0xf] %v189
                %v191 = vld [vmem:[%s177 + $0x60] sm:$0xf]
                %192 = vst [vmem:[%s178 + $0x18] sm:$0xf] %v191
                %v193 = vld [vmem:[%s177 + $0x70] sm:$0xf]
                %194 = vst [vmem:[%s178 + $0x1c] sm:$0xf] %v193
                %v195 = vld [vmem:[%s177 + $0x80] sm:$0xf]
                %196 = vst [vmem:[%s178 + $0x20] sm:$0xf] %v195
                %v197 = vld [vmem:[%s177 + $0x90] sm:$0xf]
                %198 = vst [vmem:[%s178 + $0x24] sm:$0xf] %v197
                %v199 = vld [vmem:[%s177 + $0xa0] sm:$0xf]
                %200 = vst [vmem:[%s178 + $0x28] sm:$0xf] %v199
                %v201 = vld [vmem:[%s177 + $0xb0] sm:$0xf]
                %202 = vst [vmem:[%s178 + $0x2c] sm:$0xf] %v201
                %v203 = vld [vmem:[%s177 + $0xc0] sm:$0xf]
                %204 = vst [vmem:[%s178 + $0x30] sm:$0xf] %v203
                %v205 = vld [vmem:[%s177 + $0xd0] sm:$0xf]
                %206 = vst [vmem:[%s178 + $0x34] sm:$0xf] %v205
                %v207 = vld [vmem:[%s177 + $0xe0] sm:$0xf]
                %208 = vst [vmem:[%s178 + $0x38] sm:$0xf] %v207
                %v209 = vld [vmem:[%s177 + $0xf0] sm:$0xf]
                %210 = vst [vmem:[%s178 + $0x3c] sm:$0xf] %v209
              $region41: #{discriminator_forward.4} parent=35 // loop_footer
                %s176 = sadd.s32 1, %s172
              $region42: #{discriminator_forward.4} parent=35 // loop_footer_branch
                %171 = sbr.rel target = $region38
              $region43: #{discriminator_forward.4} parent=35 // loop_exit
                _
            $region36: #{discriminator_forward.4} parent=27 // pred_fallthru
              _
          $region28: #{discriminator_forward.4} parent=23 // pred_fallthru
            _
          %262 = vnop
        $region24: #{discriminator_forward.4} parent=19 // pred_fallthru
          _
        // Predicated region
        $region62: #{discriminator_forward.4} parent=19 // pred_check
          %p263 = pneg %p93
        $region63: #{discriminator_forward.4} parent=19 // pred_check_branch
          %265 = sbr.rel (%p263) target = $region65
        $region64: #{discriminator_forward.4} parent=19 // pred_region
          %p266 = scmp.lt.s32.totalorder %s17, 3
          %s267 = scalar_select %p266, %s17, 3
          %s268 = scalar_lea.vmem %s2, %s267
        $region65: #{discriminator_forward.4} parent=19 // pred_fallthru
          _
      $region20: #{discriminator_forward.4} parent=5 // pred_fallthru
        _
      %p269 = scmp.le.s32.totalorder 1, %s9
      %p270 = scmp.lt.s32.totalorder %s9, 5
      %p271 = pnand %p269, %p270
      %p272 = pneg %p271
      // Predicated region
      $region66: #{discriminator_forward.4} parent=5 // pred_check
        _
      $region67: #{discriminator_forward.4} parent=5 // pred_check_branch
        %274 = sbr.rel (%p271) target = $region69
      $region68: #{discriminator_forward.4} parent=5 // pred_region
        %s275 = ssub.s32 %s9, 1
        %s276 = sand.u32 %s60, 1
        %s277 = sand.u32 %s60, 1
        %s278 = smul.addr %s277, 64
        %s279 = scalar_lea.vmem [#allocation2], %s278
        // Predicated region
        $region70: #{discriminator_forward.4} parent=68 // pred_check
          %p280 = pneg %p73
        $region71: #{discriminator_forward.4} parent=68 // pred_check_branch
          %282 = sbr.rel (%p280) target = $region73
        $region72: #{discriminator_forward.4} parent=68 // pred_region
          _
        $region73: #{discriminator_forward.4} parent=68 // pred_fallthru
          _
        %s283 = smul.u32 32, %s18
        %p284 = scmp.lt.s32.totalorder %s283, 31
        %s285 = scalar_select %p284, %s283, 31
        %s286 = smul.addr %s285, 4
        %s287 = scalar_lea.vmem %s0, %s286
        %p288 = pneg %p47
        %p289 = pneg %p44
        %s290 = sand.u32 %s60, 1
        %s291 = sand.u32 %s60, 1
        %s292 = smul.addr %s291, 64
        %s293 = scalar_lea.vmem [#allocation2], %s292
        %p294 = pneg %p73
        %p295 = pneg %p70
        %p296 = scmp.lt.s32.totalorder %s19, 3
        %s297 = scalar_select %p296, %s19, 3
        %s298 = scalar_lea.vmem %s2, %s297
        %p299 = pneg %p99
        %p300 = pneg %p96
        %p301 = pneg %p127
        %p302 = pneg %p124
        %s303 = sand.u32 %s114, 1
        %s304 = sand.u32 %s114, 1
        %s305 = smul.addr %s304, 128
        %s306 = scalar_lea.vmem [#allocation3], %s305
        %s307 = smul.u32 32, %s18
        %p308 = scmp.lt.s32.totalorder %s307, 31
        %s309 = scalar_select %p308, %s307, 31
        %s310 = smul.addr %s309, 4
        %s311 = scalar_lea.vmem %s0, %s310
        %s312 = smul.u32 32, %s18
        %p313 = scmp.lt.s32.totalorder %s19, 3
        %s314 = scalar_select %p313, %s19, 3
        %s315 = scalar_lea.vmem %s2, %s314
        %s316 = smul.u32 32, %s18
        %v318 = vld [vmem:[%s311] sm:$0xf]
        %v319 = vld [vmem:[%s311 + $0x4] sm:$0xf]
        %v320 = vld [vmem:[%s311 + $0x8] sm:$0xf]
        %v321 = vld [vmem:[%s311 + $0xc] sm:$0xf]
        %v322 = vld [vmem:[%s311 + $0x10] sm:$0xf]
        %v323 = vld [vmem:[%s311 + $0x14] sm:$0xf]
        %v324 = vld [vmem:[%s311 + $0x18] sm:$0xf]
        %v325 = vld [vmem:[%s311 + $0x1c] sm:$0xf]
        %v326 = vld [vmem:[%s311 + $0x20] sm:$0xf]
        %v327 = vld [vmem:[%s311 + $0x24] sm:$0xf]
        %v328 = vld [vmem:[%s311 + $0x28] sm:$0xf]
        %v329 = vld [vmem:[%s311 + $0x2c] sm:$0xf]
        %v330 = vld [vmem:[%s311 + $0x30] sm:$0xf]
        %v331 = vld [vmem:[%s311 + $0x34] sm:$0xf]
        %v332 = vld [vmem:[%s311 + $0x38] sm:$0xf]
        %v333 = vld [vmem:[%s311 + $0x3c] sm:$0xf]
        %v334 = vld [vmem:[%s311 + $0x40] sm:$0xf]
        %v335 = vld [vmem:[%s311 + $0x44] sm:$0xf]
        %v336 = vld [vmem:[%s311 + $0x48] sm:$0xf]
        %v337 = vld [vmem:[%s311 + $0x4c] sm:$0xf]
        %v338 = vld [vmem:[%s311 + $0x50] sm:$0xf]
        %v339 = vld [vmem:[%s311 + $0x54] sm:$0xf]
        %v340 = vld [vmem:[%s311 + $0x58] sm:$0xf]
        %v341 = vld [vmem:[%s311 + $0x5c] sm:$0xf]
        %v342 = vld [vmem:[%s311 + $0x60] sm:$0xf]
        %v343 = vld [vmem:[%s311 + $0x64] sm:$0xf]
        %v344 = vld [vmem:[%s311 + $0x68] sm:$0xf]
        %v345 = vld [vmem:[%s311 + $0x6c] sm:$0xf]
        %v346 = vld [vmem:[%s311 + $0x70] sm:$0xf]
        %v347 = vld [vmem:[%s311 + $0x74] sm:$0xf]
        %v348 = vld [vmem:[%s311 + $0x78] sm:$0xf]
        %v349 = vld [vmem:[%s311 + $0x7c] sm:$0xf]
        %v350 = vld [vmem:[%s279] sm:$0xf]
        %v351 = vld [vmem:[%s279 + $0x4] sm:$0xf]
        %v352 = vld [vmem:[%s279 + $0x8] sm:$0xf]
        %v353 = vld [vmem:[%s279 + $0xc] sm:$0xf]
        %v354 = vld [vmem:[%s279 + $0x10] sm:$0xf]
        %v355 = vld [vmem:[%s279 + $0x14] sm:$0xf]
        %v356 = vld [vmem:[%s279 + $0x18] sm:$0xf]
        %v357 = vld [vmem:[%s279 + $0x1c] sm:$0xf]
        %v358 = vld [vmem:[%s279 + $0x20] sm:$0xf]
        %v359 = vld [vmem:[%s279 + $0x24] sm:$0xf]
        %v360 = vld [vmem:[%s279 + $0x28] sm:$0xf]
        %v361 = vld [vmem:[%s279 + $0x2c] sm:$0xf]
        %v362 = vld [vmem:[%s279 + $0x30] sm:$0xf]
        %v363 = vld [vmem:[%s279 + $0x34] sm:$0xf]
        %v364 = vld [vmem:[%s279 + $0x38] sm:$0xf]
        %v365 = vld [vmem:[%s279 + $0x3c] sm:$0xf]
        %v366 = vld [vmem:[%s315] sm:$0x1]
        %v368 = vlaneseq
        %v369 = vshrl.u32 %v368, 7
        %v370 = vsub.s32 0, %v369
        %v371 = vrot.slane %v366, %v370
        %v405 = vunpack.c.l.b16 %v318
        %v406 = vunpack.c.l.b16 %v319
        %v407 = vunpack.c.l.b16 %v320
        %v408 = vunpack.c.l.b16 %v321
        %v409 = vunpack.c.l.b16 %v322
        %v410 = vunpack.c.l.b16 %v323
        %v411 = vunpack.c.l.b16 %v324
        %v412 = vunpack.c.l.b16 %v325
        %v413 = vunpack.c.l.b16 %v326
        %v414 = vunpack.c.l.b16 %v327
        %v415 = vunpack.c.l.b16 %v328
        %v416 = vunpack.c.l.b16 %v329
        %v417 = vunpack.c.l.b16 %v330
        %v418 = vunpack.c.l.b16 %v331
        %v419 = vunpack.c.l.b16 %v332
        %v420 = vunpack.c.l.b16 %v333
        %v421 = vunpack.c.l.b16 %v334
        %v422 = vunpack.c.l.b16 %v335
        %v423 = vunpack.c.l.b16 %v336
        %v424 = vunpack.c.l.b16 %v337
        %v425 = vunpack.c.l.b16 %v338
        %v426 = vunpack.c.l.b16 %v339
        %v427 = vunpack.c.l.b16 %v340
        %v428 = vunpack.c.l.b16 %v341
        %v429 = vunpack.c.l.b16 %v342
        %v430 = vunpack.c.l.b16 %v343
        %v431 = vunpack.c.l.b16 %v344
        %v432 = vunpack.c.l.b16 %v345
        %v433 = vunpack.c.l.b16 %v346
        %v434 = vunpack.c.l.b16 %v347
        %v435 = vunpack.c.l.b16 %v348
        %v436 = vunpack.c.l.b16 %v349
        %v437 = vpack.c.b16 %v406, %v405
        %v438 = vpack.c.b16 %v408, %v407
        %v439 = vpack.c.b16 %v410, %v409
        %v440 = vpack.c.b16 %v412, %v411
        %v441 = vpack.c.b16 %v414, %v413
        %v442 = vpack.c.b16 %v416, %v415
        %v443 = vpack.c.b16 %v418, %v417
        %v444 = vpack.c.b16 %v420, %v419
        %v445 = vpack.c.b16 %v422, %v421
        %v446 = vpack.c.b16 %v424, %v423
        %v447 = vpack.c.b16 %v426, %v425
        %v448 = vpack.c.b16 %v428, %v427
        %v449 = vpack.c.b16 %v430, %v429
        %v450 = vpack.c.b16 %v432, %v431
        %v451 = vpack.c.b16 %v434, %v433
        %v452 = vpack.c.b16 %v436, %v435
        %v485 = vunpack.c.l.b16 %v350
        %v486 = vunpack.c.l.b16 %v351
        %v487 = vunpack.c.l.b16 %v352
        %v488 = vunpack.c.l.b16 %v353
        %v489 = vunpack.c.l.b16 %v354
        %v490 = vunpack.c.l.b16 %v355
        %v491 = vunpack.c.l.b16 %v356
        %v492 = vunpack.c.l.b16 %v357
        %v493 = vunpack.c.l.b16 %v358
        %v494 = vunpack.c.l.b16 %v359
        %v495 = vunpack.c.l.b16 %v360
        %v496 = vunpack.c.l.b16 %v361
        %v497 = vunpack.c.l.b16 %v362
        %v498 = vunpack.c.l.b16 %v363
        %v499 = vunpack.c.l.b16 %v364
        %v500 = vunpack.c.l.b16 %v365
        %v501 = vpack.c.b16 %v486, %v485
        %v502 = vpack.c.b16 %v488, %v487
        %v503 = vpack.c.b16 %v490, %v489
        %v504 = vpack.c.b16 %v492, %v491
        %v505 = vpack.c.b16 %v494, %v493
        %v506 = vpack.c.b16 %v496, %v495
        %v507 = vpack.c.b16 %v498, %v497
        %v508 = vpack.c.b16 %v500, %v499
        %517 = vmatprep.subr.bf16.mxu0 0
        %518 = vmatpush1.bf16.msra.mxu0 %v501
        %519 = vmatprep.subr.bf16.mxu0 0
        %520 = vmatpush1.bf16.msra.mxu0 %v502
        %521 = vmatprep.subr.bf16.mxu0 0
        %522 = vmatpush1.bf16.msra.mxu0 %v503
        %523 = vmatprep.subr.bf16.mxu0 0
        %524 = vmatpush1.bf16.msra.mxu0 %v504
        %525 = vmatprep.subr.bf16.mxu0 0
        %526 = vmatpush1.bf16.msra.mxu0 %v505
        %527 = vmatprep.subr.bf16.mxu0 0
        %528 = vmatpush1.bf16.msra.mxu0 %v506
        %529 = vmatprep.subr.bf16.mxu0 0
        %530 = vmatpush1.bf16.msra.mxu0 %v507
        %531 = vmatprep.subr.bf16.mxu0 0
        %532 = vmatpush1.bf16.msra.mxu0 %v508
        %533 = vmatprep.subr.bf16.mxu0 0
        %534 = vmatpush1.bf16.msra.mxu0 0
        %535 = vmatprep.subr.bf16.mxu0 0
        %536 = vmatpush1.bf16.msra.mxu0 0
        %537 = vmatprep.subr.bf16.mxu0 0
        %538 = vmatpush1.bf16.msra.mxu0 0
        %539 = vmatprep.subr.bf16.mxu0 0
        %540 = vmatpush1.bf16.msra.mxu0 0
        %541 = vmatprep.subr.bf16.mxu0 0
        %542 = vmatpush1.bf16.msra.mxu0 0
        %543 = vmatprep.subr.bf16.mxu0 0
        %544 = vmatpush1.bf16.msra.mxu0 0
        %545 = vmatprep.subr.bf16.mxu0 0
        %546 = vmatpush1.bf16.msra.mxu0 0
        %547 = vmatprep.subr.bf16.mxu0 0
        %548 = vmatpush1.bf16.msra.mxu0 0
        %549 = vmatprep.mubr.bf16.mxu0 0
        %550 = vmatmul.mubr.bf16.gmra.mrb[0].mxu0 %v437
        %v551 = vpop.f32.mrb[0].mxu0
        %v552 = vadd.f32 %v371, %v551
        %v553 = vpop.f32.mrb[0].mxu0
        %v554 = vpop.f32.mrb[0].mxu0
        %v555 = vadd.f32 %v371, %v554
        %v556 = vpop.f32.mrb[0].mxu0
        %557 = vmatprep.mubr.bf16.mxu0 0
        %558 = vmatmul.mubr.bf16.gmra.mrb[0].mxu0 %v438
        %v559 = vpop.f32.mrb[0].mxu0
        %v560 = vadd.f32 %v371, %v559
        %v561 = vpop.f32.mrb[0].mxu0
        %v562 = vpop.f32.mrb[0].mxu0
        %v563 = vadd.f32 %v371, %v562
        %v564 = vpop.f32.mrb[0].mxu0
        %565 = vmatprep.mubr.bf16.mxu0 0
        %566 = vmatmul.mubr.bf16.gmra.mrb[0].mxu0 %v439
        %v567 = vpop.f32.mrb[0].mxu0
        %v568 = vadd.f32 %v371, %v567
        %v569 = vpop.f32.mrb[0].mxu0
        %v570 = vpop.f32.mrb[0].mxu0
        %v571 = vadd.f32 %v371, %v570
        %v572 = vpop.f32.mrb[0].mxu0
        %573 = vmatprep.mubr.bf16.mxu0 0
        %574 = vmatmul.mubr.bf16.gmra.mrb[0].mxu0 %v440
        %v575 = vpop.f32.mrb[0].mxu0
        %v576 = vadd.f32 %v371, %v575
        %v577 = vpop.f32.mrb[0].mxu0
        %v578 = vpop.f32.mrb[0].mxu0
        %v579 = vadd.f32 %v371, %v578
        %v580 = vpop.f32.mrb[0].mxu0
        %581 = vmatprep.mubr.bf16.mxu0 0
        %582 = vmatmul.mubr.bf16.gmra.mrb[0].mxu0 %v441
        %v583 = vpop.f32.mrb[0].mxu0
        %v584 = vadd.f32 %v371, %v583
        %v585 = vpop.f32.mrb[0].mxu0
        %v586 = vpop.f32.mrb[0].mxu0
        %v587 = vadd.f32 %v371, %v586
        %v588 = vpop.f32.mrb[0].mxu0
        %589 = vmatprep.mubr.bf16.mxu0 0
        %590 = vmatmul.mubr.bf16.gmra.mrb[0].mxu0 %v442
        %v591 = vpop.f32.mrb[0].mxu0
        %v592 = vadd.f32 %v371, %v591
        %v593 = vpop.f32.mrb[0].mxu0
        %v594 = vpop.f32.mrb[0].mxu0
        %v595 = vadd.f32 %v371, %v594
        %v596 = vpop.f32.mrb[0].mxu0
        %597 = vmatprep.mubr.bf16.mxu0 0
        %598 = vmatmul.mubr.bf16.gmra.mrb[0].mxu0 %v443
        %v599 = vpop.f32.mrb[0].mxu0
        %v600 = vadd.f32 %v371, %v599
        %v601 = vpop.f32.mrb[0].mxu0
        %v602 = vpop.f32.mrb[0].mxu0
        %v603 = vadd.f32 %v371, %v602
        %v604 = vpop.f32.mrb[0].mxu0
        %605 = vmatprep.mubr.bf16.mxu0 0
        %606 = vmatmul.mubr.bf16.gmra.mrb[0].mxu0 %v444
        %v607 = vpop.f32.mrb[0].mxu0
        %v608 = vadd.f32 %v371, %v607
        %v609 = vpop.f32.mrb[0].mxu0
        %v610 = vpop.f32.mrb[0].mxu0
        %v611 = vadd.f32 %v371, %v610
        %v612 = vpop.f32.mrb[0].mxu0
        %613 = vmatprep.mubr.bf16.mxu0 0
        %614 = vmatmul.mubr.bf16.gmra.mrb[0].mxu0 %v445
        %v615 = vpop.f32.mrb[0].mxu0
        %v616 = vadd.f32 %v371, %v615
        %v617 = vpop.f32.mrb[0].mxu0
        %v618 = vpop.f32.mrb[0].mxu0
        %v619 = vadd.f32 %v371, %v618
        %v620 = vpop.f32.mrb[0].mxu0
        %621 = vmatprep.mubr.bf16.mxu0 0
        %622 = vmatmul.mubr.bf16.gmra.mrb[0].mxu0 %v446
        %v623 = vpop.f32.mrb[0].mxu0
        %v624 = vadd.f32 %v371, %v623
        %v625 = vpop.f32.mrb[0].mxu0
        %v626 = vpop.f32.mrb[0].mxu0
        %v627 = vadd.f32 %v371, %v626
        %v628 = vpop.f32.mrb[0].mxu0
        %629 = vmatprep.mubr.bf16.mxu0 0
        %630 = vmatmul.mubr.bf16.gmra.mrb[0].mxu0 %v447
        %v631 = vpop.f32.mrb[0].mxu0
        %v632 = vadd.f32 %v371, %v631
        %v633 = vpop.f32.mrb[0].mxu0
        %v634 = vpop.f32.mrb[0].mxu0
        %v635 = vadd.f32 %v371, %v634
        %v636 = vpop.f32.mrb[0].mxu0
        %637 = vmatprep.mubr.bf16.mxu0 0
        %638 = vmatmul.mubr.bf16.gmra.mrb[0].mxu0 %v448
        %v639 = vpop.f32.mrb[0].mxu0
        %v640 = vadd.f32 %v371, %v639
        %v641 = vpop.f32.mrb[0].mxu0
        %v642 = vpop.f32.mrb[0].mxu0
        %v643 = vadd.f32 %v371, %v642
        %v644 = vpop.f32.mrb[0].mxu0
        %645 = vmatprep.mubr.bf16.mxu0 0
        %646 = vmatmul.mubr.bf16.gmra.mrb[0].mxu0 %v449
        %v647 = vpop.f32.mrb[0].mxu0
        %v648 = vadd.f32 %v371, %v647
        %v649 = vpop.f32.mrb[0].mxu0
        %v650 = vpop.f32.mrb[0].mxu0
        %v651 = vadd.f32 %v371, %v650
        %v652 = vpop.f32.mrb[0].mxu0
        %653 = vmatprep.mubr.bf16.mxu0 0
        %654 = vmatmul.mubr.bf16.gmra.mrb[0].mxu0 %v450
        %v655 = vpop.f32.mrb[0].mxu0
        %v656 = vadd.f32 %v371, %v655
        %v657 = vpop.f32.mrb[0].mxu0
        %v658 = vpop.f32.mrb[0].mxu0
        %v659 = vadd.f32 %v371, %v658
        %v660 = vpop.f32.mrb[0].mxu0
        %661 = vmatprep.mubr.bf16.mxu0 0
        %662 = vmatmul.mubr.bf16.gmra.mrb[0].mxu0 %v451
        %v663 = vpop.f32.mrb[0].mxu0
        %v664 = vadd.f32 %v371, %v663
        %v665 = vpop.f32.mrb[0].mxu0
        %v666 = vpop.f32.mrb[0].mxu0
        %v667 = vadd.f32 %v371, %v666
        %v668 = vpop.f32.mrb[0].mxu0
        %669 = vmatprep.mubr.bf16.mxu0 0
        %670 = vmatmul.mubr.bf16.gmra.mrb[0].mxu0 %v452
        %v671 = vpop.f32.mrb[0].mxu0
        %v672 = vadd.f32 %v371, %v671
        %v673 = vpop.f32.mrb[0].mxu0
        %v674 = vpop.f32.mrb[0].mxu0
        %v675 = vadd.f32 %v371, %v674
        %v676 = vpop.f32.mrb[0].mxu0
        %677 = vdwg.mxu0
        %v678 = vmax.f32 %v552, 0.0
        %v679 = vmax.f32 %v555, 0.0
        %v680 = vmax.f32 %v560, 0.0
        %v681 = vmax.f32 %v563, 0.0
        %v682 = vmax.f32 %v568, 0.0
        %v683 = vmax.f32 %v571, 0.0
        %v684 = vmax.f32 %v576, 0.0
        %v685 = vmax.f32 %v579, 0.0
        %v686 = vmax.f32 %v584, 0.0
        %v687 = vmax.f32 %v587, 0.0
        %v688 = vmax.f32 %v592, 0.0
        %v689 = vmax.f32 %v595, 0.0
        %v690 = vmax.f32 %v600, 0.0
        %v691 = vmax.f32 %v603, 0.0
        %v692 = vmax.f32 %v608, 0.0
        %v693 = vmax.f32 %v611, 0.0
        %v694 = vmax.f32 %v616, 0.0
        %v695 = vmax.f32 %v619, 0.0
        %v696 = vmax.f32 %v624, 0.0
        %v697 = vmax.f32 %v627, 0.0
        %v698 = vmax.f32 %v632, 0.0
        %v699 = vmax.f32 %v635, 0.0
        %v700 = vmax.f32 %v640, 0.0
        %v701 = vmax.f32 %v643, 0.0
        %v702 = vmax.f32 %v648, 0.0
        %v703 = vmax.f32 %v651, 0.0
        %v704 = vmax.f32 %v656, 0.0
        %v705 = vmax.f32 %v659, 0.0
        %v706 = vmax.f32 %v664, 0.0
        %v707 = vmax.f32 %v667, 0.0
        %v708 = vmax.f32 %v672, 0.0
        %v709 = vmax.f32 %v675, 0.0
        %v710 = vpack.c.bf16 %v679, %v678
        %v711 = vpack.c.bf16 %v681, %v680
        %v712 = vpack.c.bf16 %v683, %v682
        %v713 = vpack.c.bf16 %v685, %v684
        %v714 = vpack.c.bf16 %v687, %v686
        %v715 = vpack.c.bf16 %v689, %v688
        %v716 = vpack.c.bf16 %v691, %v690
        %v717 = vpack.c.bf16 %v693, %v692
        %v718 = vpack.c.bf16 %v695, %v694
        %v719 = vpack.c.bf16 %v697, %v696
        %v720 = vpack.c.bf16 %v699, %v698
        %v721 = vpack.c.bf16 %v701, %v700
        %v722 = vpack.c.bf16 %v703, %v702
        %v723 = vpack.c.bf16 %v705, %v704
        %v724 = vpack.c.bf16 %v707, %v706
        %v725 = vpack.c.bf16 %v709, %v708
        %v742 = vunpack.c.l.b16 %v710
        %v743 = vunpack.c.h.b16 %v710
        %v744 = vunpack.c.l.b16 %v711
        %v745 = vunpack.c.h.b16 %v711
        %v746 = vunpack.c.l.b16 %v712
        %v747 = vunpack.c.h.b16 %v712
        %v748 = vunpack.c.l.b16 %v713
        %v749 = vunpack.c.h.b16 %v713
        %v750 = vunpack.c.l.b16 %v714
        %v751 = vunpack.c.h.b16 %v714
        %v752 = vunpack.c.l.b16 %v715
        %v753 = vunpack.c.h.b16 %v715
        %v754 = vunpack.c.l.b16 %v716
        %v755 = vunpack.c.h.b16 %v716
        %v756 = vunpack.c.l.b16 %v717
        %v757 = vunpack.c.h.b16 %v717
        %v758 = vunpack.c.l.b16 %v718
        %v759 = vunpack.c.h.b16 %v718
        %v760 = vunpack.c.l.b16 %v719
        %v761 = vunpack.c.h.b16 %v719
        %v762 = vunpack.c.l.b16 %v720
        %v763 = vunpack.c.h.b16 %v720
        %v764 = vunpack.c.l.b16 %v721
        %v765 = vunpack.c.h.b16 %v721
        %v766 = vunpack.c.l.b16 %v722
        %v767 = vunpack.c.h.b16 %v722
        %v768 = vunpack.c.l.b16 %v723
        %v769 = vunpack.c.h.b16 %v723
        %v770 = vunpack.c.l.b16 %v724
        %v771 = vunpack.c.h.b16 %v724
        %v772 = vunpack.c.l.b16 %v725
        %v773 = vunpack.c.h.b16 %v725
        %v774 = vpack.c.b16 %v742, %v742
        %v775 = vpack.c.b16 %v743, %v743
        %v776 = vpack.c.b16 %v744, %v744
        %v777 = vpack.c.b16 %v745, %v745
        %v778 = vpack.c.b16 %v746, %v746
        %v779 = vpack.c.b16 %v747, %v747
        %v780 = vpack.c.b16 %v748, %v748
        %v781 = vpack.c.b16 %v749, %v749
        %v782 = vpack.c.b16 %v750, %v750
        %v783 = vpack.c.b16 %v751, %v751
        %v784 = vpack.c.b16 %v752, %v752
        %v785 = vpack.c.b16 %v753, %v753
        %v786 = vpack.c.b16 %v754, %v754
        %v787 = vpack.c.b16 %v755, %v755
        %v788 = vpack.c.b16 %v756, %v756
        %v789 = vpack.c.b16 %v757, %v757
        %v790 = vpack.c.b16 %v758, %v758
        %v791 = vpack.c.b16 %v759, %v759
        %v792 = vpack.c.b16 %v760, %v760
        %v793 = vpack.c.b16 %v761, %v761
        %v794 = vpack.c.b16 %v762, %v762
        %v795 = vpack.c.b16 %v763, %v763
        %v796 = vpack.c.b16 %v764, %v764
        %v797 = vpack.c.b16 %v765, %v765
        %v798 = vpack.c.b16 %v766, %v766
        %v799 = vpack.c.b16 %v767, %v767
        %v800 = vpack.c.b16 %v768, %v768
        %v801 = vpack.c.b16 %v769, %v769
        %v802 = vpack.c.b16 %v770, %v770
        %v803 = vpack.c.b16 %v771, %v771
        %v804 = vpack.c.b16 %v772, %v772
        %v805 = vpack.c.b16 %v773, %v773
        %838 = vst [vmem:[%s306] sm:$0xf] %v774
        %839 = vst [vmem:[%s306 + $0x4] sm:$0xf] %v775
        %840 = vst [vmem:[%s306 + $0x8] sm:$0xf] %v776
        %841 = vst [vmem:[%s306 + $0xc] sm:$0xf] %v777
        %842 = vst [vmem:[%s306 + $0x10] sm:$0xf] %v778
        %843 = vst [vmem:[%s306 + $0x14] sm:$0xf] %v779
        %844 = vst [vmem:[%s306 + $0x18] sm:$0xf] %v780
        %845 = vst [vmem:[%s306 + $0x1c] sm:$0xf] %v781
        %846 = vst [vmem:[%s306 + $0x20] sm:$0xf] %v782
        %847 = vst [vmem:[%s306 + $0x24] sm:$0xf] %v783
        %848 = vst [vmem:[%s306 + $0x28] sm:$0xf] %v784
        %849 = vst [vmem:[%s306 + $0x2c] sm:$0xf] %v785
        %850 = vst [vmem:[%s306 + $0x30] sm:$0xf] %v786
        %851 = vst [vmem:[%s306 + $0x34] sm:$0xf] %v787
        %852 = vst [vmem:[%s306 + $0x38] sm:$0xf] %v788
        %853 = vst [vmem:[%s306 + $0x3c] sm:$0xf] %v789
        %854 = vst [vmem:[%s306 + $0x40] sm:$0xf] %v790
        %855 = vst [vmem:[%s306 + $0x44] sm:$0xf] %v791
        %856 = vst [vmem:[%s306 + $0x48] sm:$0xf] %v792
        %857 = vst [vmem:[%s306 + $0x4c] sm:$0xf] %v793
        %858 = vst [vmem:[%s306 + $0x50] sm:$0xf] %v794
        %859 = vst [vmem:[%s306 + $0x54] sm:$0xf] %v795
        %860 = vst [vmem:[%s306 + $0x58] sm:$0xf] %v796
        %861 = vst [vmem:[%s306 + $0x5c] sm:$0xf] %v797
        %862 = vst [vmem:[%s306 + $0x60] sm:$0xf] %v798
        %863 = vst [vmem:[%s306 + $0x64] sm:$0xf] %v799
        %864 = vst [vmem:[%s306 + $0x68] sm:$0xf] %v800
        %865 = vst [vmem:[%s306 + $0x6c] sm:$0xf] %v801
        %866 = vst [vmem:[%s306 + $0x70] sm:$0xf] %v802
        %867 = vst [vmem:[%s306 + $0x74] sm:$0xf] %v803
        %868 = vst [vmem:[%s306 + $0x78] sm:$0xf] %v804
        %869 = vst [vmem:[%s306 + $0x7c] sm:$0xf] %v805
        %s870 = sand.u32 %s114, 1
        %s871 = sand.u32 %s114, 1
        %s872 = smul.addr %s871, 128
        %s873 = scalar_lea.vmem [#allocation3], %s872
        // Predicated region
        $region74: #{discriminator_forward.4} parent=68 // pred_check
          %p874 = pneg %p124
        $region75: #{discriminator_forward.4} parent=68 // pred_check_branch
          %876 = sbr.rel (%p874) target = $region77
        $region76: #{discriminator_forward.4} parent=68 // pred_region
          %s877 = smul.u32 32, %s18
          %s878 = smul.addr %s877, 4
          %s879 = sadd.s32 %s19, %s878
          %s880 = smul.addr %s879, 4
          %s881 = scalar_lea.vmem %s3, %s880
          // Predicated region
          $region78: #{discriminator_forward.4} parent=76 // pred_check
            _
          $region79: #{discriminator_forward.4} parent=76 // pred_check_branch
            %883 = sbr.rel (0) target = $region81
          $region80: #{discriminator_forward.4} parent=76 // pred_region
            // Predicated region
            $region82: #{discriminator_forward.4} parent=80 // pred_check
              _
            $region83: #{discriminator_forward.4} parent=80 // pred_check_branch
              %885 = sbr.rel target = $region85
            $region84: #{discriminator_forward.4} parent=80 // pred_region
              // Predicated region
              $region97: #{discriminator_forward.4} parent=84 // pred_check
                _
              $region98: #{discriminator_forward.4} parent=84 // pred_check_branch
                %962 = sbr.rel (0) target = $region100
              $region99: #{discriminator_forward.4} parent=84 // pred_region
                loop: start=0, step=1, limit=1
                $region101: #{discriminator_forward.4} parent=99 // loop_pre_header
                  _
                $region102: #{discriminator_forward.4} parent=99 // loop_header
                  %s964 = sphi 0, %s968
                  %p965 = scmp.ge.s32.totalorder %s964, 1
                  %s969 = sphi %s873, %s873
                  %s970 = sphi %s881, %s881
                $region103: #{discriminator_forward.4} parent=99 // loop_header_branch
                  %967 = sbr.rel (%p965) target = $region107
                $region104: #{discriminator_forward.4} parent=99 // loop_body
                  _
                $region105: #{discriminator_forward.4} parent=99 // loop_footer
                  %s968 = sadd.s32 1, %s964
                $region106: #{discriminator_forward.4} parent=99 // loop_footer_branch
                  %963 = sbr.rel target = $region102
                $region107: #{discriminator_forward.4} parent=99 // loop_exit
                  _
                loop: start=0, step=1, limit=1
                $region108: #{discriminator_forward.4} parent=99 // loop_pre_header
                  _
                $region109: #{discriminator_forward.4} parent=99 // loop_header
                  %s973 = sphi 0, %s977
                  %p974 = scmp.ge.s32.totalorder %s973, 1
                  %s978 = sphi %s873, %s873
                  %s979 = sphi %s881, %s881
                $region110: #{discriminator_forward.4} parent=99 // loop_header_branch
                  %976 = sbr.rel (%p974) target = $region114
                $region111: #{discriminator_forward.4} parent=99 // loop_body
                  %v980 = vld [vmem:[%s978] sm:$0xf]
                  %981 = vst [vmem:[%s979] sm:$0xf] %v980
                  %v982 = vld [vmem:[%s978 + $0x4] sm:$0xf]
                  %983 = vst [vmem:[%s979 + $0x10] sm:$0xf] %v982
                  %v984 = vld [vmem:[%s978 + $0x8] sm:$0xf]
                  %985 = vst [vmem:[%s979 + $0x20] sm:$0xf] %v984
                  %v986 = vld [vmem:[%s978 + $0xc] sm:$0xf]
                  %987 = vst [vmem:[%s979 + $0x30] sm:$0xf] %v986
                  %v988 = vld [vmem:[%s978 + $0x10] sm:$0xf]
                  %989 = vst [vmem:[%s979 + $0x40] sm:$0xf] %v988
                  %v990 = vld [vmem:[%s978 + $0x14] sm:$0xf]
                  %991 = vst [vmem:[%s979 + $0x50] sm:$0xf] %v990
                  %v992 = vld [vmem:[%s978 + $0x18] sm:$0xf]
                  %993 = vst [vmem:[%s979 + $0x60] sm:$0xf] %v992
                  %v994 = vld [vmem:[%s978 + $0x1c] sm:$0xf]
                  %995 = vst [vmem:[%s979 + $0x70] sm:$0xf] %v994
                  %v996 = vld [vmem:[%s978 + $0x20] sm:$0xf]
                  %997 = vst [vmem:[%s979 + $0x80] sm:$0xf] %v996
                  %v998 = vld [vmem:[%s978 + $0x24] sm:$0xf]
                  %999 = vst [vmem:[%s979 + $0x90] sm:$0xf] %v998
                  %v1000 = vld [vmem:[%s978 + $0x28] sm:$0xf]
                  %1001 = vst [vmem:[%s979 + $0xa0] sm:$0xf] %v1000
                  %v1002 = vld [vmem:[%s978 + $0x2c] sm:$0xf]
                  %1003 = vst [vmem:[%s979 + $0xb0] sm:$0xf] %v1002
                  %v1004 = vld [vmem:[%s978 + $0x30] sm:$0xf]
                  %1005 = vst [vmem:[%s979 + $0xc0] sm:$0xf] %v1004
                  %v1006 = vld [vmem:[%s978 + $0x34] sm:$0xf]
                  %1007 = vst [vmem:[%s979 + $0xd0] sm:$0xf] %v1006
                  %v1008 = vld [vmem:[%s978 + $0x38] sm:$0xf]
                  %1009 = vst [vmem:[%s979 + $0xe0] sm:$0xf] %v1008
                  %v1010 = vld [vmem:[%s978 + $0x3c] sm:$0xf]
                  %1011 = vst [vmem:[%s979 + $0xf0] sm:$0xf] %v1010
                  %v1012 = vld [vmem:[%s978 + $0x40] sm:$0xf]
                  %1013 = vst [vmem:[%s979 + $0x100] sm:$0xf] %v1012
                  %v1014 = vld [vmem:[%s978 + $0x44] sm:$0xf]
                  %1015 = vst [vmem:[%s979 + $0x110] sm:$0xf] %v1014
                  %v1016 = vld [vmem:[%s978 + $0x48] sm:$0xf]
                  %1017 = vst [vmem:[%s979 + $0x120] sm:$0xf] %v1016
                  %v1018 = vld [vmem:[%s978 + $0x4c] sm:$0xf]
                  %1019 = vst [vmem:[%s979 + $0x130] sm:$0xf] %v1018
                  %v1020 = vld [vmem:[%s978 + $0x50] sm:$0xf]
                  %1021 = vst [vmem:[%s979 + $0x140] sm:$0xf] %v1020
                  %v1022 = vld [vmem:[%s978 + $0x54] sm:$0xf]
                  %1023 = vst [vmem:[%s979 + $0x150] sm:$0xf] %v1022
                  %v1024 = vld [vmem:[%s978 + $0x58] sm:$0xf]
                  %1025 = vst [vmem:[%s979 + $0x160] sm:$0xf] %v1024
                  %v1026 = vld [vmem:[%s978 + $0x5c] sm:$0xf]
                  %1027 = vst [vmem:[%s979 + $0x170] sm:$0xf] %v1026
                  %v1028 = vld [vmem:[%s978 + $0x60] sm:$0xf]
                  %1029 = vst [vmem:[%s979 + $0x180] sm:$0xf] %v1028
                  %v1030 = vld [vmem:[%s978 + $0x64] sm:$0xf]
                  %1031 = vst [vmem:[%s979 + $0x190] sm:$0xf] %v1030
                  %v1032 = vld [vmem:[%s978 + $0x68] sm:$0xf]
                  %1033 = vst [vmem:[%s979 + $0x1a0] sm:$0xf] %v1032
                  %v1034 = vld [vmem:[%s978 + $0x6c] sm:$0xf]
                  %1035 = vst [vmem:[%s979 + $0x1b0] sm:$0xf] %v1034
                  %v1036 = vld [vmem:[%s978 + $0x70] sm:$0xf]
                  %1037 = vst [vmem:[%s979 + $0x1c0] sm:$0xf] %v1036
                  %v1038 = vld [vmem:[%s978 + $0x74] sm:$0xf]
                  %1039 = vst [vmem:[%s979 + $0x1d0] sm:$0xf] %v1038
                  %v1040 = vld [vmem:[%s978 + $0x78] sm:$0xf]
                  %1041 = vst [vmem:[%s979 + $0x1e0] sm:$0xf] %v1040
                  %v1042 = vld [vmem:[%s978 + $0x7c] sm:$0xf]
                  %1043 = vst [vmem:[%s979 + $0x1f0] sm:$0xf] %v1042
                $region112: #{discriminator_forward.4} parent=99 // loop_footer
                  %s977 = sadd.s32 1, %s973
                $region113: #{discriminator_forward.4} parent=99 // loop_footer_branch
                  %972 = sbr.rel target = $region109
                $region114: #{discriminator_forward.4} parent=99 // loop_exit
                  _
              $region100: #{discriminator_forward.4} parent=84 // pred_fallthru
                _
            $region85: #{discriminator_forward.4} parent=80 // pred_fallthru
              _
            // Predicated region
            $region86: #{discriminator_forward.4} parent=80 // pred_check
              _
            $region87: #{discriminator_forward.4} parent=80 // pred_check_branch
              %887 = sbr.rel (0) target = $region89
            $region88: #{discriminator_forward.4} parent=80 // pred_region
              loop: start=0, step=1, limit=1
              $region90: #{discriminator_forward.4} parent=88 // loop_pre_header
                _
              $region91: #{discriminator_forward.4} parent=88 // loop_header
                %s890 = sphi 0, %s894
                %p891 = scmp.ge.s32.totalorder %s890, 1
                %s895 = sphi %s873, %s873
                %s896 = sphi %s881, %s881
              $region92: #{discriminator_forward.4} parent=88 // loop_header_branch
                %893 = sbr.rel (%p891) target = $region96
              $region93: #{discriminator_forward.4} parent=88 // loop_body
                %v897 = vld [vmem:[%s895] sm:$0xf]
                %898 = vst [vmem:[%s896] sm:$0xf] %v897
                %v899 = vld [vmem:[%s895 + $0x4] sm:$0xf]
                %900 = vst [vmem:[%s896 + $0x10] sm:$0xf] %v899
                %v901 = vld [vmem:[%s895 + $0x8] sm:$0xf]
                %902 = vst [vmem:[%s896 + $0x20] sm:$0xf] %v901
                %v903 = vld [vmem:[%s895 + $0xc] sm:$0xf]
                %904 = vst [vmem:[%s896 + $0x30] sm:$0xf] %v903
                %v905 = vld [vmem:[%s895 + $0x10] sm:$0xf]
                %906 = vst [vmem:[%s896 + $0x40] sm:$0xf] %v905
                %v907 = vld [vmem:[%s895 + $0x14] sm:$0xf]
                %908 = vst [vmem:[%s896 + $0x50] sm:$0xf] %v907
                %v909 = vld [vmem:[%s895 + $0x18] sm:$0xf]
                %910 = vst [vmem:[%s896 + $0x60] sm:$0xf] %v909
                %v911 = vld [vmem:[%s895 + $0x1c] sm:$0xf]
                %912 = vst [vmem:[%s896 + $0x70] sm:$0xf] %v911
                %v913 = vld [vmem:[%s895 + $0x20] sm:$0xf]
                %914 = vst [vmem:[%s896 + $0x80] sm:$0xf] %v913
                %v915 = vld [vmem:[%s895 + $0x24] sm:$0xf]
                %916 = vst [vmem:[%s896 + $0x90] sm:$0xf] %v915
                %v917 = vld [vmem:[%s895 + $0x28] sm:$0xf]
                %918 = vst [vmem:[%s896 + $0xa0] sm:$0xf] %v917
                %v919 = vld [vmem:[%s895 + $0x2c] sm:$0xf]
                %920 = vst [vmem:[%s896 + $0xb0] sm:$0xf] %v919
                %v921 = vld [vmem:[%s895 + $0x30] sm:$0xf]
                %922 = vst [vmem:[%s896 + $0xc0] sm:$0xf] %v921
                %v923 = vld [vmem:[%s895 + $0x34] sm:$0xf]
                %924 = vst [vmem:[%s896 + $0xd0] sm:$0xf] %v923
                %v925 = vld [vmem:[%s895 + $0x38] sm:$0xf]
                %926 = vst [vmem:[%s896 + $0xe0] sm:$0xf] %v925
                %v927 = vld [vmem:[%s895 + $0x3c] sm:$0xf]
                %928 = vst [vmem:[%s896 + $0xf0] sm:$0xf] %v927
                %v929 = vld [vmem:[%s895 + $0x40] sm:$0xf]
                %930 = vst [vmem:[%s896 + $0x100] sm:$0xf] %v929
                %v931 = vld [vmem:[%s895 + $0x44] sm:$0xf]
                %932 = vst [vmem:[%s896 + $0x110] sm:$0xf] %v931
                %v933 = vld [vmem:[%s895 + $0x48] sm:$0xf]
                %934 = vst [vmem:[%s896 + $0x120] sm:$0xf] %v933
                %v935 = vld [vmem:[%s895 + $0x4c] sm:$0xf]
                %936 = vst [vmem:[%s896 + $0x130] sm:$0xf] %v935
                %v937 = vld [vmem:[%s895 + $0x50] sm:$0xf]
                %938 = vst [vmem:[%s896 + $0x140] sm:$0xf] %v937
                %v939 = vld [vmem:[%s895 + $0x54] sm:$0xf]
                %940 = vst [vmem:[%s896 + $0x150] sm:$0xf] %v939
                %v941 = vld [vmem:[%s895 + $0x58] sm:$0xf]
                %942 = vst [vmem:[%s896 + $0x160] sm:$0xf] %v941
                %v943 = vld [vmem:[%s895 + $0x5c] sm:$0xf]
                %944 = vst [vmem:[%s896 + $0x170] sm:$0xf] %v943
                %v945 = vld [vmem:[%s895 + $0x60] sm:$0xf]
                %946 = vst [vmem:[%s896 + $0x180] sm:$0xf] %v945
                %v947 = vld [vmem:[%s895 + $0x64] sm:$0xf]
                %948 = vst [vmem:[%s896 + $0x190] sm:$0xf] %v947
                %v949 = vld [vmem:[%s895 + $0x68] sm:$0xf]
                %950 = vst [vmem:[%s896 + $0x1a0] sm:$0xf] %v949
                %v951 = vld [vmem:[%s895 + $0x6c] sm:$0xf]
                %952 = vst [vmem:[%s896 + $0x1b0] sm:$0xf] %v951
                %v953 = vld [vmem:[%s895 + $0x70] sm:$0xf]
                %954 = vst [vmem:[%s896 + $0x1c0] sm:$0xf] %v953
                %v955 = vld [vmem:[%s895 + $0x74] sm:$0xf]
                %956 = vst [vmem:[%s896 + $0x1d0] sm:$0xf] %v955
                %v957 = vld [vmem:[%s895 + $0x78] sm:$0xf]
                %958 = vst [vmem:[%s896 + $0x1e0] sm:$0xf] %v957
                %v959 = vld [vmem:[%s895 + $0x7c] sm:$0xf]
                %960 = vst [vmem:[%s896 + $0x1f0] sm:$0xf] %v959
              $region94: #{discriminator_forward.4} parent=88 // loop_footer
                %s894 = sadd.s32 1, %s890
              $region95: #{discriminator_forward.4} parent=88 // loop_footer_branch
                %889 = sbr.rel target = $region91
              $region96: #{discriminator_forward.4} parent=88 // loop_exit
                _
            $region89: #{discriminator_forward.4} parent=80 // pred_fallthru
              _
          $region81: #{discriminator_forward.4} parent=76 // pred_fallthru
            _
          %1044 = vnop
        $region77: #{discriminator_forward.4} parent=68 // pred_fallthru
          _
      $region69: #{discriminator_forward.4} parent=5 // pred_fallthru
        _
      %p1045 = scmp.le.s32.totalorder 2, %s9
      // Predicated region
      $region115: #{discriminator_forward.4} parent=5 // pred_check
        %p1046 = pneg %p1045
      $region116: #{discriminator_forward.4} parent=5 // pred_check_branch
        %1048 = sbr.rel (%p1046) target = $region118
      $region117: #{discriminator_forward.4} parent=5 // pred_region
        %s1049 = ssub.s32 %s9, 2
        // Predicated region
        $region119: #{discriminator_forward.4} parent=117 // pred_check
          %p1050 = pneg %p130
        $region120: #{discriminator_forward.4} parent=117 // pred_check_branch
          %1052 = sbr.rel (%p1050) target = $region122
        $region121: #{discriminator_forward.4} parent=117 // pred_region
          %s1053 = sand.u32 %s115, 1
          %s1054 = sand.u32 %s115, 1
          %s1055 = smul.addr %s1054, 128
          %s1056 = scalar_lea.vmem [#allocation3], %s1055
        $region122: #{discriminator_forward.4} parent=117 // pred_fallthru
          _
      $region118: #{discriminator_forward.4} parent=5 // pred_fallthru
        _
    $region6: #{discriminator_forward.4} parent=1 // loop_footer
      %s13 = sadd.s32 1, %s9
    $region7: #{discriminator_forward.4} parent=1 // loop_footer_branch
      %8 = sbr.rel target = $region3
    $region8: #{discriminator_forward.4} parent=1 // loop_exit
      _

// kernel: discriminator_forward.5
$region0: #{discriminator_forward.5}
  #allocation0 [shape = 'u32[]', space=smem, size = 0x4, offset = 0x4, fixed_abs, tag = 'smem constant byte address 0x4 - core index']
  #allocation1 [shape = 'u32[144,128]{1,0:T(1,128)}', space=vmem, size = 0x12000, scoped, tag = 'internal scratch']
  %s0 = inlined_call_operand.vmem [shape: bf16[512,1024], index: 0, kind: input, shape index: {}]
  %s1 = inlined_call_operand.vmem [shape: bf16[1024,128], index: 1, kind: input, shape index: {}]
  %s2 = inlined_call_operand.vmem [shape: f32[1,128], index: 2, kind: input, shape index: {}]
  %s3 = inlined_call_operand.vmem [shape: bf16[512,128], index: 3, kind: output, shape index: {}]
  %s4 = sld [smem:[#allocation0]]
  $region22: #{discriminator_forward.5} parent=0
    _
  %s6 = ssub.s32 1, %s4
  %s7 = scalar_select 0, %s6, %s4
  // Predicated region
  $region2: #{discriminator_forward.5} parent=0 // pred_check
    _
  $region3: #{discriminator_forward.5} parent=0 // pred_check_branch
    %9 = sbr.rel (0) target = $region5
  $region4: #{discriminator_forward.5} parent=0 // pred_region
    _
  $region5: #{discriminator_forward.5} parent=0 // pred_fallthru
    _
  // Predicated region
  $region6: #{discriminator_forward.5} parent=0 // pred_check
    _
  $region7: #{discriminator_forward.5} parent=0 // pred_check_branch
    %11 = sbr.rel (0) target = $region9
  $region8: #{discriminator_forward.5} parent=0 // pred_region
    _
  $region9: #{discriminator_forward.5} parent=0 // pred_fallthru
    _
  // Predicated region
  $region10: #{discriminator_forward.5} parent=0 // pred_check
    _
  $region11: #{discriminator_forward.5} parent=0 // pred_check_branch
    %13 = sbr.rel (0) target = $region13
  $region12: #{discriminator_forward.5} parent=0 // pred_region
    _
  $region13: #{discriminator_forward.5} parent=0 // pred_fallthru
    _
  %v15 = vld [vmem:[%s0] sm:$0xff]
  %v16 = vld [vmem:[%s0 + $0x8] sm:$0xff]
  %v17 = vld [vmem:[%s0 + $0x10] sm:$0xff]
  %v18 = vld [vmem:[%s0 + $0x18] sm:$0xff]
  %v19 = vld [vmem:[%s0 + $0x20] sm:$0xff]
  %v20 = vld [vmem:[%s0 + $0x28] sm:$0xff]
  %v21 = vld [vmem:[%s0 + $0x30] sm:$0xff]
  %v22 = vld [vmem:[%s0 + $0x38] sm:$0xff]
  %v23 = vld [vmem:[%s0 + $0x40] sm:$0xff]
  %v24 = vld [vmem:[%s0 + $0x48] sm:$0xff]
  %v25 = vld [vmem:[%s0 + $0x50] sm:$0xff]
  %v26 = vld [vmem:[%s0 + $0x58] sm:$0xff]
  %v27 = vld [vmem:[%s0 + $0x60] sm:$0xff]
  %v28 = vld [vmem:[%s0 + $0x68] sm:$0xff]
  %v29 = vld [vmem:[%s0 + $0x70] sm:$0xff]
  %v30 = vld [vmem:[%s0 + $0x78] sm:$0xff]
  %v31 = vld [vmem:[%s0 + $0x80] sm:$0xff]
  %v32 = vld [vmem:[%s0 + $0x88] sm:$0xff]
  %v33 = vld [vmem:[%s0 + $0x90] sm:$0xff]
  %v34 = vld [vmem:[%s0 + $0x98] sm:$0xff]
  %v35 = vld [vmem:[%s0 + $0xa0] sm:$0xff]
  %v36 = vld [vmem:[%s0 + $0xa8] sm:$0xff]
  %v37 = vld [vmem:[%s0 + $0xb0] sm:$0xff]
  %v38 = vld [vmem:[%s0 + $0xb8] sm:$0xff]
  %v39 = vld [vmem:[%s0 + $0xc0] sm:$0xff]
  %v40 = vld [vmem:[%s0 + $0xc8] sm:$0xff]
  %v41 = vld [vmem:[%s0 + $0xd0] sm:$0xff]
  %v42 = vld [vmem:[%s0 + $0xd8] sm:$0xff]
  %v43 = vld [vmem:[%s0 + $0xe0] sm:$0xff]
  %v44 = vld [vmem:[%s0 + $0xe8] sm:$0xff]
  %v45 = vld [vmem:[%s0 + $0xf0] sm:$0xff]
  %v46 = vld [vmem:[%s0 + $0xf8] sm:$0xff]
  %v47 = vld [vmem:[%s0 + $0x100] sm:$0xff]
  %v48 = vld [vmem:[%s0 + $0x108] sm:$0xff]
  %v49 = vld [vmem:[%s0 + $0x110] sm:$0xff]
  %v50 = vld [vmem:[%s0 + $0x118] sm:$0xff]
  %v51 = vld [vmem:[%s0 + $0x120] sm:$0xff]
  %v52 = vld [vmem:[%s0 + $0x128] sm:$0xff]
  %v53 = vld [vmem:[%s0 + $0x130] sm:$0xff]
  %v54 = vld [vmem:[%s0 + $0x138] sm:$0xff]
  %v55 = vld [vmem:[%s0 + $0x140] sm:$0xff]
  %v56 = vld [vmem:[%s0 + $0x148] sm:$0xff]
  %v57 = vld [vmem:[%s0 + $0x150] sm:$0xff]
  %v58 = vld [vmem:[%s0 + $0x158] sm:$0xff]
  %v59 = vld [vmem:[%s0 + $0x160] sm:$0xff]
  %v60 = vld [vmem:[%s0 + $0x168] sm:$0xff]
  %v61 = vld [vmem:[%s0 + $0x170] sm:$0xff]
  %v62 = vld [vmem:[%s0 + $0x178] sm:$0xff]
  %v63 = vld [vmem:[%s0 + $0x180] sm:$0xff]
  %v64 = vld [vmem:[%s0 + $0x188] sm:$0xff]
  %v65 = vld [vmem:[%s0 + $0x190] sm:$0xff]
  %v66 = vld [vmem:[%s0 + $0x198] sm:$0xff]
  %v67 = vld [vmem:[%s0 + $0x1a0] sm:$0xff]
  %v68 = vld [vmem:[%s0 + $0x1a8] sm:$0xff]
  %v69 = vld [vmem:[%s0 + $0x1b0] sm:$0xff]
  %v70 = vld [vmem:[%s0 + $0x1b8] sm:$0xff]
  %v71 = vld [vmem:[%s0 + $0x1c0] sm:$0xff]
  %v72 = vld [vmem:[%s0 + $0x1c8] sm:$0xff]
  %v73 = vld [vmem:[%s0 + $0x1d0] sm:$0xff]
  %v74 = vld [vmem:[%s0 + $0x1d8] sm:$0xff]
  %v75 = vld [vmem:[%s0 + $0x1e0] sm:$0xff]
  %v76 = vld [vmem:[%s0 + $0x1e8] sm:$0xff]
  %v77 = vld [vmem:[%s0 + $0x1f0] sm:$0xff]
  %v78 = vld [vmem:[%s0 + $0x1f8] sm:$0xff]
  %v79 = vld [vmem:[%s0 + $0x200] sm:$0xff]
  %v80 = vld [vmem:[%s0 + $0x208] sm:$0xff]
  %v81 = vld [vmem:[%s0 + $0x210] sm:$0xff]
  %v82 = vld [vmem:[%s0 + $0x218] sm:$0xff]
  %v83 = vld [vmem:[%s0 + $0x220] sm:$0xff]
  %v84 = vld [vmem:[%s0 + $0x228] sm:$0xff]
  %v85 = vld [vmem:[%s0 + $0x230] sm:$0xff]
  %v86 = vld [vmem:[%s0 + $0x238] sm:$0xff]
  %v87 = vld [vmem:[%s0 + $0x240] sm:$0xff]
  %v88 = vld [vmem:[%s0 + $0x248] sm:$0xff]
  %v89 = vld [vmem:[%s0 + $0x250] sm:$0xff]
  %v90 = vld [vmem:[%s0 + $0x258] sm:$0xff]
  %v91 = vld [vmem:[%s0 + $0x260] sm:$0xff]
  %v92 = vld [vmem:[%s0 + $0x268] sm:$0xff]
  %v93 = vld [vmem:[%s0 + $0x270] sm:$0xff]
  %v94 = vld [vmem:[%s0 + $0x278] sm:$0xff]
  %v95 = vld [vmem:[%s0 + $0x280] sm:$0xff]
  %v96 = vld [vmem:[%s0 + $0x288] sm:$0xff]
  %v97 = vld [vmem:[%s0 + $0x290] sm:$0xff]
  %v98 = vld [vmem:[%s0 + $0x298] sm:$0xff]
  %v99 = vld [vmem:[%s0 + $0x2a0] sm:$0xff]
  %v100 = vld [vmem:[%s0 + $0x2a8] sm:$0xff]
  %v101 = vld [vmem:[%s0 + $0x2b0] sm:$0xff]
  %v102 = vld [vmem:[%s0 + $0x2b8] sm:$0xff]
  %v103 = vld [vmem:[%s0 + $0x2c0] sm:$0xff]
  %v104 = vld [vmem:[%s0 + $0x2c8] sm:$0xff]
  %v105 = vld [vmem:[%s0 + $0x2d0] sm:$0xff]
  %v106 = vld [vmem:[%s0 + $0x2d8] sm:$0xff]
  %v107 = vld [vmem:[%s0 + $0x2e0] sm:$0xff]
  %v108 = vld [vmem:[%s0 + $0x2e8] sm:$0xff]
  %v109 = vld [vmem:[%s0 + $0x2f0] sm:$0xff]
  %v110 = vld [vmem:[%s0 + $0x2f8] sm:$0xff]
  %v111 = vld [vmem:[%s0 + $0x300] sm:$0xff]
  %v112 = vld [vmem:[%s0 + $0x308] sm:$0xff]
  %v113 = vld [vmem:[%s0 + $0x310] sm:$0xff]
  %v114 = vld [vmem:[%s0 + $0x318] sm:$0xff]
  %v115 = vld [vmem:[%s0 + $0x320] sm:$0xff]
  %v116 = vld [vmem:[%s0 + $0x328] sm:$0xff]
  %v117 = vld [vmem:[%s0 + $0x330] sm:$0xff]
  %v118 = vld [vmem:[%s0 + $0x338] sm:$0xff]
  %v119 = vld [vmem:[%s0 + $0x340] sm:$0xff]
  %v120 = vld [vmem:[%s0 + $0x348] sm:$0xff]
  %v121 = vld [vmem:[%s0 + $0x350] sm:$0xff]
  %v122 = vld [vmem:[%s0 + $0x358] sm:$0xff]
  %v123 = vld [vmem:[%s0 + $0x360] sm:$0xff]
  %v124 = vld [vmem:[%s0 + $0x368] sm:$0xff]
  %v125 = vld [vmem:[%s0 + $0x370] sm:$0xff]
  %v126 = vld [vmem:[%s0 + $0x378] sm:$0xff]
  %v127 = vld [vmem:[%s0 + $0x380] sm:$0xff]
  %v128 = vld [vmem:[%s0 + $0x388] sm:$0xff]
  %v129 = vld [vmem:[%s0 + $0x390] sm:$0xff]
  %v130 = vld [vmem:[%s0 + $0x398] sm:$0xff]
  %v131 = vld [vmem:[%s0 + $0x3a0] sm:$0xff]
  %v132 = vld [vmem:[%s0 + $0x3a8] sm:$0xff]
  %v133 = vld [vmem:[%s0 + $0x3b0] sm:$0xff]
  %v134 = vld [vmem:[%s0 + $0x3b8] sm:$0xff]
  %v135 = vld [vmem:[%s0 + $0x3c0] sm:$0xff]
  %v136 = vld [vmem:[%s0 + $0x3c8] sm:$0xff]
  %v137 = vld [vmem:[%s0 + $0x3d0] sm:$0xff]
  %v138 = vld [vmem:[%s0 + $0x3d8] sm:$0xff]
  %v139 = vld [vmem:[%s0 + $0x3e0] sm:$0xff]
  %v140 = vld [vmem:[%s0 + $0x3e8] sm:$0xff]
  %v141 = vld [vmem:[%s0 + $0x3f0] sm:$0xff]
  %v142 = vld [vmem:[%s0 + $0x3f8] sm:$0xff]
  %v143 = vld [vmem:[%s0 + $0x400] sm:$0xff]
  %v144 = vld [vmem:[%s0 + $0x408] sm:$0xff]
  %v145 = vld [vmem:[%s0 + $0x410] sm:$0xff]
  %v146 = vld [vmem:[%s0 + $0x418] sm:$0xff]
  %v147 = vld [vmem:[%s0 + $0x420] sm:$0xff]
  %v148 = vld [vmem:[%s0 + $0x428] sm:$0xff]
  %v149 = vld [vmem:[%s0 + $0x430] sm:$0xff]
  %v150 = vld [vmem:[%s0 + $0x438] sm:$0xff]
  %v151 = vld [vmem:[%s0 + $0x440] sm:$0xff]
  %v152 = vld [vmem:[%s0 + $0x448] sm:$0xff]
  %v153 = vld [vmem:[%s0 + $0x450] sm:$0xff]
  %v154 = vld [vmem:[%s0 + $0x458] sm:$0xff]
  %v155 = vld [vmem:[%s0 + $0x460] sm:$0xff]
  %v156 = vld [vmem:[%s0 + $0x468] sm:$0xff]
  %v157 = vld [vmem:[%s0 + $0x470] sm:$0xff]
  %v158 = vld [vmem:[%s0 + $0x478] sm:$0xff]
  %v159 = vld [vmem:[%s0 + $0x480] sm:$0xff]
  %v160 = vld [vmem:[%s0 + $0x488] sm:$0xff]
  %v161 = vld [vmem:[%s0 + $0x490] sm:$0xff]
  %v162 = vld [vmem:[%s0 + $0x498] sm:$0xff]
  %v163 = vld [vmem:[%s0 + $0x4a0] sm:$0xff]
  %v164 = vld [vmem:[%s0 + $0x4a8] sm:$0xff]
  %v165 = vld [vmem:[%s0 + $0x4b0] sm:$0xff]
  %v166 = vld [vmem:[%s0 + $0x4b8] sm:$0xff]
  %v167 = vld [vmem:[%s0 + $0x4c0] sm:$0xff]
  %v168 = vld [vmem:[%s0 + $0x4c8] sm:$0xff]
  %v169 = vld [vmem:[%s0 + $0x4d0] sm:$0xff]
  %v170 = vld [vmem:[%s0 + $0x4d8] sm:$0xff]
  %v171 = vld [vmem:[%s0 + $0x4e0] sm:$0xff]
  %v172 = vld [vmem:[%s0 + $0x4e8] sm:$0xff]
  %v173 = vld [vmem:[%s0 + $0x4f0] sm:$0xff]
  %v174 = vld [vmem:[%s0 + $0x4f8] sm:$0xff]
  %v175 = vld [vmem:[%s0 + $0x500] sm:$0xff]
  %v176 = vld [vmem:[%s0 + $0x508] sm:$0xff]
  %v177 = vld [vmem:[%s0 + $0x510] sm:$0xff]
  %v178 = vld [vmem:[%s0 + $0x518] sm:$0xff]
  %v179 = vld [vmem:[%s0 + $0x520] sm:$0xff]
  %v180 = vld [vmem:[%s0 + $0x528] sm:$0xff]
  %v181 = vld [vmem:[%s0 + $0x530] sm:$0xff]
  %v182 = vld [vmem:[%s0 + $0x538] sm:$0xff]
  %v183 = vld [vmem:[%s0 + $0x540] sm:$0xff]
  %v184 = vld [vmem:[%s0 + $0x548] sm:$0xff]
  %v185 = vld [vmem:[%s0 + $0x550] sm:$0xff]
  %v186 = vld [vmem:[%s0 + $0x558] sm:$0xff]
  %v187 = vld [vmem:[%s0 + $0x560] sm:$0xff]
  %v188 = vld [vmem:[%s0 + $0x568] sm:$0xff]
  %v189 = vld [vmem:[%s0 + $0x570] sm:$0xff]
  %v190 = vld [vmem:[%s0 + $0x578] sm:$0xff]
  %v191 = vld [vmem:[%s0 + $0x580] sm:$0xff]
  %v192 = vld [vmem:[%s0 + $0x588] sm:$0xff]
  %v193 = vld [vmem:[%s0 + $0x590] sm:$0xff]
  %v194 = vld [vmem:[%s0 + $0x598] sm:$0xff]
  %v195 = vld [vmem:[%s0 + $0x5a0] sm:$0xff]
  %v196 = vld [vmem:[%s0 + $0x5a8] sm:$0xff]
  %v197 = vld [vmem:[%s0 + $0x5b0] sm:$0xff]
  %v198 = vld [vmem:[%s0 + $0x5b8] sm:$0xff]
  %v199 = vld [vmem:[%s0 + $0x5c0] sm:$0xff]
  %v200 = vld [vmem:[%s0 + $0x5c8] sm:$0xff]
  %v201 = vld [vmem:[%s0 + $0x5d0] sm:$0xff]
  %v202 = vld [vmem:[%s0 + $0x5d8] sm:$0xff]
  %v203 = vld [vmem:[%s0 + $0x5e0] sm:$0xff]
  %v204 = vld [vmem:[%s0 + $0x5e8] sm:$0xff]
  %v205 = vld [vmem:[%s0 + $0x5f0] sm:$0xff]
  %v206 = vld [vmem:[%s0 + $0x5f8] sm:$0xff]
  %v207 = vld [vmem:[%s0 + $0x600] sm:$0xff]
  %v208 = vld [vmem:[%s0 + $0x608] sm:$0xff]
  %v209 = vld [vmem:[%s0 + $0x610] sm:$0xff]
  %v210 = vld [vmem:[%s0 + $0x618] sm:$0xff]
  %v211 = vld [vmem:[%s0 + $0x620] sm:$0xff]
  %v212 = vld [vmem:[%s0 + $0x628] sm:$0xff]
  %v213 = vld [vmem:[%s0 + $0x630] sm:$0xff]
  %v214 = vld [vmem:[%s0 + $0x638] sm:$0xff]
  %v215 = vld [vmem:[%s0 + $0x640] sm:$0xff]
  %v216 = vld [vmem:[%s0 + $0x648] sm:$0xff]
  %v217 = vld [vmem:[%s0 + $0x650] sm:$0xff]
  %v218 = vld [vmem:[%s0 + $0x658] sm:$0xff]
  %v219 = vld [vmem:[%s0 + $0x660] sm:$0xff]
  %v220 = vld [vmem:[%s0 + $0x668] sm:$0xff]
  %v221 = vld [vmem:[%s0 + $0x670] sm:$0xff]
  %v222 = vld [vmem:[%s0 + $0x678] sm:$0xff]
  %v223 = vld [vmem:[%s0 + $0x680] sm:$0xff]
  %v224 = vld [vmem:[%s0 + $0x688] sm:$0xff]
  %v225 = vld [vmem:[%s0 + $0x690] sm:$0xff]
  %v226 = vld [vmem:[%s0 + $0x698] sm:$0xff]
  %v227 = vld [vmem:[%s0 + $0x6a0] sm:$0xff]
  %v228 = vld [vmem:[%s0 + $0x6a8] sm:$0xff]
  %v229 = vld [vmem:[%s0 + $0x6b0] sm:$0xff]
  %v230 = vld [vmem:[%s0 + $0x6b8] sm:$0xff]
  %v231 = vld [vmem:[%s0 + $0x6c0] sm:$0xff]
  %v232 = vld [vmem:[%s0 + $0x6c8] sm:$0xff]
  %v233 = vld [vmem:[%s0 + $0x6d0] sm:$0xff]
  %v234 = vld [vmem:[%s0 + $0x6d8] sm:$0xff]
  %v235 = vld [vmem:[%s0 + $0x6e0] sm:$0xff]
  %v236 = vld [vmem:[%s0 + $0x6e8] sm:$0xff]
  %v237 = vld [vmem:[%s0 + $0x6f0] sm:$0xff]
  %v238 = vld [vmem:[%s0 + $0x6f8] sm:$0xff]
  %v239 = vld [vmem:[%s0 + $0x700] sm:$0xff]
  %v240 = vld [vmem:[%s0 + $0x708] sm:$0xff]
  %v241 = vld [vmem:[%s0 + $0x710] sm:$0xff]
  %v242 = vld [vmem:[%s0 + $0x718] sm:$0xff]
  %v243 = vld [vmem:[%s0 + $0x720] sm:$0xff]
  %v244 = vld [vmem:[%s0 + $0x728] sm:$0xff]
  %v245 = vld [vmem:[%s0 + $0x730] sm:$0xff]
  %v246 = vld [vmem:[%s0 + $0x738] sm:$0xff]
  %v247 = vld [vmem:[%s0 + $0x740] sm:$0xff]
  %v248 = vld [vmem:[%s0 + $0x748] sm:$0xff]
  %v249 = vld [vmem:[%s0 + $0x750] sm:$0xff]
  %v250 = vld [vmem:[%s0 + $0x758] sm:$0xff]
  %v251 = vld [vmem:[%s0 + $0x760] sm:$0xff]
  %v252 = vld [vmem:[%s0 + $0x768] sm:$0xff]
  %v253 = vld [vmem:[%s0 + $0x770] sm:$0xff]
  %v254 = vld [vmem:[%s0 + $0x778] sm:$0xff]
  %v255 = vld [vmem:[%s0 + $0x780] sm:$0xff]
  %v256 = vld [vmem:[%s0 + $0x788] sm:$0xff]
  %v257 = vld [vmem:[%s0 + $0x790] sm:$0xff]
  %v258 = vld [vmem:[%s0 + $0x798] sm:$0xff]
  %v259 = vld [vmem:[%s0 + $0x7a0] sm:$0xff]
  %v260 = vld [vmem:[%s0 + $0x7a8] sm:$0xff]
  %v261 = vld [vmem:[%s0 + $0x7b0] sm:$0xff]
  %v262 = vld [vmem:[%s0 + $0x7b8] sm:$0xff]
  %v263 = vld [vmem:[%s0 + $0x7c0] sm:$0xff]
  %v264 = vld [vmem:[%s0 + $0x7c8] sm:$0xff]
  %v265 = vld [vmem:[%s0 + $0x7d0] sm:$0xff]
  %v266 = vld [vmem:[%s0 + $0x7d8] sm:$0xff]
  %v267 = vld [vmem:[%s0 + $0x7e0] sm:$0xff]
  %v268 = vld [vmem:[%s0 + $0x7e8] sm:$0xff]
  %v269 = vld [vmem:[%s0 + $0x7f0] sm:$0xff]
  %v270 = vld [vmem:[%s0 + $0x7f8] sm:$0xff]
  %v271 = vld [vmem:[%s1] sm:$0xf]
  %v272 = vld [vmem:[%s1 + $0x4] sm:$0xf]
  %v273 = vld [vmem:[%s1 + $0x8] sm:$0xf]
  %v274 = vld [vmem:[%s1 + $0xc] sm:$0xf]
  %v275 = vld [vmem:[%s1 + $0x10] sm:$0xf]
  %v276 = vld [vmem:[%s1 + $0x14] sm:$0xf]
  %v277 = vld [vmem:[%s1 + $0x18] sm:$0xf]
  %v278 = vld [vmem:[%s1 + $0x1c] sm:$0xf]
  %v279 = vld [vmem:[%s1 + $0x20] sm:$0xf]
  %v280 = vld [vmem:[%s1 + $0x24] sm:$0xf]
  %v281 = vld [vmem:[%s1 + $0x28] sm:$0xf]
  %v282 = vld [vmem:[%s1 + $0x2c] sm:$0xf]
  %v283 = vld [vmem:[%s1 + $0x30] sm:$0xf]
  %v284 = vld [vmem:[%s1 + $0x34] sm:$0xf]
  %v285 = vld [vmem:[%s1 + $0x38] sm:$0xf]
  %v286 = vld [vmem:[%s1 + $0x3c] sm:$0xf]
  %v287 = vld [vmem:[%s1 + $0x40] sm:$0xf]
  %v288 = vld [vmem:[%s1 + $0x44] sm:$0xf]
  %v289 = vld [vmem:[%s1 + $0x48] sm:$0xf]
  %v290 = vld [vmem:[%s1 + $0x4c] sm:$0xf]
  %v291 = vld [vmem:[%s1 + $0x50] sm:$0xf]
  %v292 = vld [vmem:[%s1 + $0x54] sm:$0xf]
  %v293 = vld [vmem:[%s1 + $0x58] sm:$0xf]
  %v294 = vld [vmem:[%s1 + $0x5c] sm:$0xf]
  %v295 = vld [vmem:[%s1 + $0x60] sm:$0xf]
  %v296 = vld [vmem:[%s1 + $0x64] sm:$0xf]
  %v297 = vld [vmem:[%s1 + $0x68] sm:$0xf]
  %v298 = vld [vmem:[%s1 + $0x6c] sm:$0xf]
  %v299 = vld [vmem:[%s1 + $0x70] sm:$0xf]
  %v300 = vld [vmem:[%s1 + $0x74] sm:$0xf]
  %v301 = vld [vmem:[%s1 + $0x78] sm:$0xf]
  %v302 = vld [vmem:[%s1 + $0x7c] sm:$0xf]
  %v303 = vld [vmem:[%s1 + $0x80] sm:$0xf]
  %v304 = vld [vmem:[%s1 + $0x84] sm:$0xf]
  %v305 = vld [vmem:[%s1 + $0x88] sm:$0xf]
  %v306 = vld [vmem:[%s1 + $0x8c] sm:$0xf]
  %v307 = vld [vmem:[%s1 + $0x90] sm:$0xf]
  %v308 = vld [vmem:[%s1 + $0x94] sm:$0xf]
  %v309 = vld [vmem:[%s1 + $0x98] sm:$0xf]
  %v310 = vld [vmem:[%s1 + $0x9c] sm:$0xf]
  %v311 = vld [vmem:[%s1 + $0xa0] sm:$0xf]
  %v312 = vld [vmem:[%s1 + $0xa4] sm:$0xf]
  %v313 = vld [vmem:[%s1 + $0xa8] sm:$0xf]
  %v314 = vld [vmem:[%s1 + $0xac] sm:$0xf]
  %v315 = vld [vmem:[%s1 + $0xb0] sm:$0xf]
  %v316 = vld [vmem:[%s1 + $0xb4] sm:$0xf]
  %v317 = vld [vmem:[%s1 + $0xb8] sm:$0xf]
  %v318 = vld [vmem:[%s1 + $0xbc] sm:$0xf]
  %v319 = vld [vmem:[%s1 + $0xc0] sm:$0xf]
  %v320 = vld [vmem:[%s1 + $0xc4] sm:$0xf]
  %v321 = vld [vmem:[%s1 + $0xc8] sm:$0xf]
  %v322 = vld [vmem:[%s1 + $0xcc] sm:$0xf]
  %v323 = vld [vmem:[%s1 + $0xd0] sm:$0xf]
  %v324 = vld [vmem:[%s1 + $0xd4] sm:$0xf]
  %v325 = vld [vmem:[%s1 + $0xd8] sm:$0xf]
  %v326 = vld [vmem:[%s1 + $0xdc] sm:$0xf]
  %v327 = vld [vmem:[%s1 + $0xe0] sm:$0xf]
  %v328 = vld [vmem:[%s1 + $0xe4] sm:$0xf]
  %v329 = vld [vmem:[%s1 + $0xe8] sm:$0xf]
  %v330 = vld [vmem:[%s1 + $0xec] sm:$0xf]
  %v331 = vld [vmem:[%s1 + $0xf0] sm:$0xf]
  %v332 = vld [vmem:[%s1 + $0xf4] sm:$0xf]
  %v333 = vld [vmem:[%s1 + $0xf8] sm:$0xf]
  %v334 = vld [vmem:[%s1 + $0xfc] sm:$0xf]
  %v335 = vld [vmem:[%s1 + $0x100] sm:$0xf]
  %v336 = vld [vmem:[%s1 + $0x104] sm:$0xf]
  %v337 = vld [vmem:[%s1 + $0x108] sm:$0xf]
  %v338 = vld [vmem:[%s1 + $0x10c] sm:$0xf]
  %v339 = vld [vmem:[%s1 + $0x110] sm:$0xf]
  %v340 = vld [vmem:[%s1 + $0x114] sm:$0xf]
  %v341 = vld [vmem:[%s1 + $0x118] sm:$0xf]
  %v342 = vld [vmem:[%s1 + $0x11c] sm:$0xf]
  %v343 = vld [vmem:[%s1 + $0x120] sm:$0xf]
  %v344 = vld [vmem:[%s1 + $0x124] sm:$0xf]
  %v345 = vld [vmem:[%s1 + $0x128] sm:$0xf]
  %v346 = vld [vmem:[%s1 + $0x12c] sm:$0xf]
  %v347 = vld [vmem:[%s1 + $0x130] sm:$0xf]
  %v348 = vld [vmem:[%s1 + $0x134] sm:$0xf]
  %v349 = vld [vmem:[%s1 + $0x138] sm:$0xf]
  %v350 = vld [vmem:[%s1 + $0x13c] sm:$0xf]
  %v351 = vld [vmem:[%s1 + $0x140] sm:$0xf]
  %v352 = vld [vmem:[%s1 + $0x144] sm:$0xf]
  %v353 = vld [vmem:[%s1 + $0x148] sm:$0xf]
  %v354 = vld [vmem:[%s1 + $0x14c] sm:$0xf]
  %v355 = vld [vmem:[%s1 + $0x150] sm:$0xf]
  %v356 = vld [vmem:[%s1 + $0x154] sm:$0xf]
  %v357 = vld [vmem:[%s1 + $0x158] sm:$0xf]
  %v358 = vld [vmem:[%s1 + $0x15c] sm:$0xf]
  %v359 = vld [vmem:[%s1 + $0x160] sm:$0xf]
  %v360 = vld [vmem:[%s1 + $0x164] sm:$0xf]
  %v361 = vld [vmem:[%s1 + $0x168] sm:$0xf]
  %v362 = vld [vmem:[%s1 + $0x16c] sm:$0xf]
  %v363 = vld [vmem:[%s1 + $0x170] sm:$0xf]
  %v364 = vld [vmem:[%s1 + $0x174] sm:$0xf]
  %v365 = vld [vmem:[%s1 + $0x178] sm:$0xf]
  %v366 = vld [vmem:[%s1 + $0x17c] sm:$0xf]
  %v367 = vld [vmem:[%s1 + $0x180] sm:$0xf]
  %v368 = vld [vmem:[%s1 + $0x184] sm:$0xf]
  %v369 = vld [vmem:[%s1 + $0x188] sm:$0xf]
  %v370 = vld [vmem:[%s1 + $0x18c] sm:$0xf]
  %v371 = vld [vmem:[%s1 + $0x190] sm:$0xf]
  %v372 = vld [vmem:[%s1 + $0x194] sm:$0xf]
  %v373 = vld [vmem:[%s1 + $0x198] sm:$0xf]
  %v374 = vld [vmem:[%s1 + $0x19c] sm:$0xf]
  %v375 = vld [vmem:[%s1 + $0x1a0] sm:$0xf]
  %v376 = vld [vmem:[%s1 + $0x1a4] sm:$0xf]
  %v377 = vld [vmem:[%s1 + $0x1a8] sm:$0xf]
  %v378 = vld [vmem:[%s1 + $0x1ac] sm:$0xf]
  %v379 = vld [vmem:[%s1 + $0x1b0] sm:$0xf]
  %v380 = vld [vmem:[%s1 + $0x1b4] sm:$0xf]
  %v381 = vld [vmem:[%s1 + $0x1b8] sm:$0xf]
  %v382 = vld [vmem:[%s1 + $0x1bc] sm:$0xf]
  %v383 = vld [vmem:[%s1 + $0x1c0] sm:$0xf]
  %v384 = vld [vmem:[%s1 + $0x1c4] sm:$0xf]
  %v385 = vld [vmem:[%s1 + $0x1c8] sm:$0xf]
  %v386 = vld [vmem:[%s1 + $0x1cc] sm:$0xf]
  %v387 = vld [vmem:[%s1 + $0x1d0] sm:$0xf]
  %v388 = vld [vmem:[%s1 + $0x1d4] sm:$0xf]
  %v389 = vld [vmem:[%s1 + $0x1d8] sm:$0xf]
  %v390 = vld [vmem:[%s1 + $0x1dc] sm:$0xf]
  %v391 = vld [vmem:[%s1 + $0x1e0] sm:$0xf]
  %v392 = vld [vmem:[%s1 + $0x1e4] sm:$0xf]
  %v393 = vld [vmem:[%s1 + $0x1e8] sm:$0xf]
  %v394 = vld [vmem:[%s1 + $0x1ec] sm:$0xf]
  %v395 = vld [vmem:[%s1 + $0x1f0] sm:$0xf]
  %v396 = vld [vmem:[%s1 + $0x1f4] sm:$0xf]
  %v397 = vld [vmem:[%s1 + $0x1f8] sm:$0xf]
  %v398 = vld [vmem:[%s1 + $0x1fc] sm:$0xf]
  %v399 = vld [vmem:[%s2] sm:$0x1]
  %v401 = vlaneseq
  %v402 = vshrl.u32 %v401, 7
  %v403 = vsub.s32 0, %v402
  %v404 = vrot.slane %v399, %v403
  %v662 = vunpack.c.l.b16 %v15
  %v663 = vunpack.c.h.b16 %v15
  %v664 = vunpack.c.l.b16 %v16
  %v665 = vunpack.c.h.b16 %v16
  %v666 = vunpack.c.l.b16 %v17
  %v667 = vunpack.c.h.b16 %v17
  %v668 = vunpack.c.l.b16 %v18
  %v669 = vunpack.c.h.b16 %v18
  %v670 = vunpack.c.l.b16 %v19
  %v671 = vunpack.c.h.b16 %v19
  %v672 = vunpack.c.l.b16 %v20
  %v673 = vunpack.c.h.b16 %v20
  %v674 = vunpack.c.l.b16 %v21
  %v675 = vunpack.c.h.b16 %v21
  %v676 = vunpack.c.l.b16 %v22
  %v677 = vunpack.c.h.b16 %v22
  %v678 = vunpack.c.l.b16 %v23
  %v679 = vunpack.c.h.b16 %v23
  %v680 = vunpack.c.l.b16 %v24
  %v681 = vunpack.c.h.b16 %v24
  %v682 = vunpack.c.l.b16 %v25
  %v683 = vunpack.c.h.b16 %v25
  %v684 = vunpack.c.l.b16 %v26
  %v685 = vunpack.c.h.b16 %v26
  %v686 = vunpack.c.l.b16 %v27
  %v687 = vunpack.c.h.b16 %v27
  %v688 = vunpack.c.l.b16 %v28
  %v689 = vunpack.c.h.b16 %v28
  %v690 = vunpack.c.l.b16 %v29
  %v691 = vunpack.c.h.b16 %v29
  %v692 = vunpack.c.l.b16 %v30
  %v693 = vunpack.c.h.b16 %v30
  %v694 = vunpack.c.l.b16 %v31
  %v695 = vunpack.c.h.b16 %v31
  %v696 = vunpack.c.l.b16 %v32
  %v697 = vunpack.c.h.b16 %v32
  %v698 = vunpack.c.l.b16 %v33
  %v699 = vunpack.c.h.b16 %v33
  %v700 = vunpack.c.l.b16 %v34
  %v701 = vunpack.c.h.b16 %v34
  %v702 = vunpack.c.l.b16 %v35
  %v703 = vunpack.c.h.b16 %v35
  %v704 = vunpack.c.l.b16 %v36
  %v705 = vunpack.c.h.b16 %v36
  %v706 = vunpack.c.l.b16 %v37
  %v707 = vunpack.c.h.b16 %v37
  %v708 = vunpack.c.l.b16 %v38
  %v709 = vunpack.c.h.b16 %v38
  %v710 = vunpack.c.l.b16 %v39
  %v711 = vunpack.c.h.b16 %v39
  %v712 = vunpack.c.l.b16 %v40
  %v713 = vunpack.c.h.b16 %v40
  %v714 = vunpack.c.l.b16 %v41
  %v715 = vunpack.c.h.b16 %v41
  %v716 = vunpack.c.l.b16 %v42
  %v717 = vunpack.c.h.b16 %v42
  %v718 = vunpack.c.l.b16 %v43
  %v719 = vunpack.c.h.b16 %v43
  %v720 = vunpack.c.l.b16 %v44
  %v721 = vunpack.c.h.b16 %v44
  %v722 = vunpack.c.l.b16 %v45
  %v723 = vunpack.c.h.b16 %v45
  %v724 = vunpack.c.l.b16 %v46
  %v725 = vunpack.c.h.b16 %v46
  %v726 = vunpack.c.l.b16 %v47
  %v727 = vunpack.c.h.b16 %v47
  %v728 = vunpack.c.l.b16 %v48
  %v729 = vunpack.c.h.b16 %v48
  %v730 = vunpack.c.l.b16 %v49
  %v731 = vunpack.c.h.b16 %v49
  %v732 = vunpack.c.l.b16 %v50
  %v733 = vunpack.c.h.b16 %v50
  %v734 = vunpack.c.l.b16 %v51
  %v735 = vunpack.c.h.b16 %v51
  %v736 = vunpack.c.l.b16 %v52
  %v737 = vunpack.c.h.b16 %v52
  %v738 = vunpack.c.l.b16 %v53
  %v739 = vunpack.c.h.b16 %v53
  %v740 = vunpack.c.l.b16 %v54
  %v741 = vunpack.c.h.b16 %v54
  %v742 = vunpack.c.l.b16 %v55
  %v743 = vunpack.c.h.b16 %v55
  %v744 = vunpack.c.l.b16 %v56
  %v745 = vunpack.c.h.b16 %v56
  %v746 = vunpack.c.l.b16 %v57
  %v747 = vunpack.c.h.b16 %v57
  %v748 = vunpack.c.l.b16 %v58
  %v749 = vunpack.c.h.b16 %v58
  %v750 = vunpack.c.l.b16 %v59
  %v751 = vunpack.c.h.b16 %v59
  %v752 = vunpack.c.l.b16 %v60
  %v753 = vunpack.c.h.b16 %v60
  %v754 = vunpack.c.l.b16 %v61
  %v755 = vunpack.c.h.b16 %v61
  %v756 = vunpack.c.l.b16 %v62
  %v757 = vunpack.c.h.b16 %v62
  %v758 = vunpack.c.l.b16 %v63
  %v759 = vunpack.c.h.b16 %v63
  %v760 = vunpack.c.l.b16 %v64
  %v761 = vunpack.c.h.b16 %v64
  %v762 = vunpack.c.l.b16 %v65
  %v763 = vunpack.c.h.b16 %v65
  %v764 = vunpack.c.l.b16 %v66
  %v765 = vunpack.c.h.b16 %v66
  %v766 = vunpack.c.l.b16 %v67
  %v767 = vunpack.c.h.b16 %v67
  %v768 = vunpack.c.l.b16 %v68
  %v769 = vunpack.c.h.b16 %v68
  %v770 = vunpack.c.l.b16 %v69
  %v771 = vunpack.c.h.b16 %v69
  %v772 = vunpack.c.l.b16 %v70
  %v773 = vunpack.c.h.b16 %v70
  %v774 = vunpack.c.l.b16 %v71
  %v775 = vunpack.c.h.b16 %v71
  %v776 = vunpack.c.l.b16 %v72
  %v777 = vunpack.c.h.b16 %v72
  %v778 = vunpack.c.l.b16 %v73
  %v779 = vunpack.c.h.b16 %v73
  %v780 = vunpack.c.l.b16 %v74
  %v781 = vunpack.c.h.b16 %v74
  %v782 = vunpack.c.l.b16 %v75
  %v783 = vunpack.c.h.b16 %v75
  %v784 = vunpack.c.l.b16 %v76
  %v785 = vunpack.c.h.b16 %v76
  %v786 = vunpack.c.l.b16 %v77
  %v787 = vunpack.c.h.b16 %v77
  %v788 = vunpack.c.l.b16 %v78
  %v789 = vunpack.c.h.b16 %v78
  %v790 = vunpack.c.l.b16 %v79
  %v791 = vunpack.c.h.b16 %v79
  %v792 = vunpack.c.l.b16 %v80
  %v793 = vunpack.c.h.b16 %v80
  %v794 = vunpack.c.l.b16 %v81
  %v795 = vunpack.c.h.b16 %v81
  %v796 = vunpack.c.l.b16 %v82
  %v797 = vunpack.c.h.b16 %v82
  %v798 = vunpack.c.l.b16 %v83
  %v799 = vunpack.c.h.b16 %v83
  %v800 = vunpack.c.l.b16 %v84
  %v801 = vunpack.c.h.b16 %v84
  %v802 = vunpack.c.l.b16 %v85
  %v803 = vunpack.c.h.b16 %v85
  %v804 = vunpack.c.l.b16 %v86
  %v805 = vunpack.c.h.b16 %v86
  %v806 = vunpack.c.l.b16 %v87
  %v807 = vunpack.c.h.b16 %v87
  %v808 = vunpack.c.l.b16 %v88
  %v809 = vunpack.c.h.b16 %v88
  %v810 = vunpack.c.l.b16 %v89
  %v811 = vunpack.c.h.b16 %v89
  %v812 = vunpack.c.l.b16 %v90
  %v813 = vunpack.c.h.b16 %v90
  %v814 = vunpack.c.l.b16 %v91
  %v815 = vunpack.c.h.b16 %v91
  %v816 = vunpack.c.l.b16 %v92
  %v817 = vunpack.c.h.b16 %v92
  %v818 = vunpack.c.l.b16 %v93
  %v819 = vunpack.c.h.b16 %v93
  %v820 = vunpack.c.l.b16 %v94
  %v821 = vunpack.c.h.b16 %v94
  %v822 = vunpack.c.l.b16 %v95
  %v823 = vunpack.c.h.b16 %v95
  %v824 = vunpack.c.l.b16 %v96
  %v825 = vunpack.c.h.b16 %v96
  %v826 = vunpack.c.l.b16 %v97
  %v827 = vunpack.c.h.b16 %v97
  %v828 = vunpack.c.l.b16 %v98
  %v829 = vunpack.c.h.b16 %v98
  %v830 = vunpack.c.l.b16 %v99
  %v831 = vunpack.c.h.b16 %v99
  %v832 = vunpack.c.l.b16 %v100
  %v833 = vunpack.c.h.b16 %v100
  %v834 = vunpack.c.l.b16 %v101
  %v835 = vunpack.c.h.b16 %v101
  %v836 = vunpack.c.l.b16 %v102
  %v837 = vunpack.c.h.b16 %v102
  %v838 = vunpack.c.l.b16 %v103
  %v839 = vunpack.c.h.b16 %v103
  %v840 = vunpack.c.l.b16 %v104
  %v841 = vunpack.c.h.b16 %v104
  %v842 = vunpack.c.l.b16 %v105
  %v843 = vunpack.c.h.b16 %v105
  %v844 = vunpack.c.l.b16 %v106
  %v845 = vunpack.c.h.b16 %v106
  %v846 = vunpack.c.l.b16 %v107
  %v847 = vunpack.c.h.b16 %v107
  %v848 = vunpack.c.l.b16 %v108
  %v849 = vunpack.c.h.b16 %v108
  %v850 = vunpack.c.l.b16 %v109
  %v851 = vunpack.c.h.b16 %v109
  %v852 = vunpack.c.l.b16 %v110
  %v853 = vunpack.c.h.b16 %v110
  %v854 = vunpack.c.l.b16 %v111
  %v855 = vunpack.c.h.b16 %v111
  %v856 = vunpack.c.l.b16 %v112
  %v857 = vunpack.c.h.b16 %v112
  %v858 = vunpack.c.l.b16 %v113
  %v859 = vunpack.c.h.b16 %v113
  %v860 = vunpack.c.l.b16 %v114
  %v861 = vunpack.c.h.b16 %v114
  %v862 = vunpack.c.l.b16 %v115
  %v863 = vunpack.c.h.b16 %v115
  %v864 = vunpack.c.l.b16 %v116
  %v865 = vunpack.c.h.b16 %v116
  %v866 = vunpack.c.l.b16 %v117
  %v867 = vunpack.c.h.b16 %v117
  %v868 = vunpack.c.l.b16 %v118
  %v869 = vunpack.c.h.b16 %v118
  %v870 = vunpack.c.l.b16 %v119
  %v871 = vunpack.c.h.b16 %v119
  %v872 = vunpack.c.l.b16 %v120
  %v873 = vunpack.c.h.b16 %v120
  %v874 = vunpack.c.l.b16 %v121
  %v875 = vunpack.c.h.b16 %v121
  %v876 = vunpack.c.l.b16 %v122
  %v877 = vunpack.c.h.b16 %v122
  %v878 = vunpack.c.l.b16 %v123
  %v879 = vunpack.c.h.b16 %v123
  %v880 = vunpack.c.l.b16 %v124
  %v881 = vunpack.c.h.b16 %v124
  %v882 = vunpack.c.l.b16 %v125
  %v883 = vunpack.c.h.b16 %v125
  %v884 = vunpack.c.l.b16 %v126
  %v885 = vunpack.c.h.b16 %v126
  %v886 = vunpack.c.l.b16 %v127
  %v887 = vunpack.c.h.b16 %v127
  %v888 = vunpack.c.l.b16 %v128
  %v889 = vunpack.c.h.b16 %v128
  %v890 = vunpack.c.l.b16 %v129
  %v891 = vunpack.c.h.b16 %v129
  %v892 = vunpack.c.l.b16 %v130
  %v893 = vunpack.c.h.b16 %v130
  %v894 = vunpack.c.l.b16 %v131
  %v895 = vunpack.c.h.b16 %v131
  %v896 = vunpack.c.l.b16 %v132
  %v897 = vunpack.c.h.b16 %v132
  %v898 = vunpack.c.l.b16 %v133
  %v899 = vunpack.c.h.b16 %v133
  %v900 = vunpack.c.l.b16 %v134
  %v901 = vunpack.c.h.b16 %v134
  %v902 = vunpack.c.l.b16 %v135
  %v903 = vunpack.c.h.b16 %v135
  %v904 = vunpack.c.l.b16 %v136
  %v905 = vunpack.c.h.b16 %v136
  %v906 = vunpack.c.l.b16 %v137
  %v907 = vunpack.c.h.b16 %v137
  %v908 = vunpack.c.l.b16 %v138
  %v909 = vunpack.c.h.b16 %v138
  %v910 = vunpack.c.l.b16 %v139
  %v911 = vunpack.c.h.b16 %v139
  %v912 = vunpack.c.l.b16 %v140
  %v913 = vunpack.c.h.b16 %v140
  %v914 = vunpack.c.l.b16 %v141
  %v915 = vunpack.c.h.b16 %v141
  %v916 = vunpack.c.l.b16 %v142
  %v917 = vunpack.c.h.b16 %v142
  %v918 = vunpack.c.l.b16 %v143
  %v919 = vunpack.c.h.b16 %v143
  %v920 = vunpack.c.l.b16 %v144
  %v921 = vunpack.c.h.b16 %v144
  %v922 = vunpack.c.l.b16 %v145
  %v923 = vunpack.c.h.b16 %v145
  %v924 = vunpack.c.l.b16 %v146
  %v925 = vunpack.c.h.b16 %v146
  %v926 = vunpack.c.l.b16 %v147
  %v927 = vunpack.c.h.b16 %v147
  %v928 = vunpack.c.l.b16 %v148
  %v929 = vunpack.c.h.b16 %v148
  %v930 = vunpack.c.l.b16 %v149
  %v931 = vunpack.c.h.b16 %v149
  %v932 = vunpack.c.l.b16 %v150
  %v933 = vunpack.c.h.b16 %v150
  %v934 = vunpack.c.l.b16 %v151
  %v935 = vunpack.c.h.b16 %v151
  %v936 = vunpack.c.l.b16 %v152
  %v937 = vunpack.c.h.b16 %v152
  %v938 = vunpack.c.l.b16 %v153
  %v939 = vunpack.c.h.b16 %v153
  %v940 = vunpack.c.l.b16 %v154
  %v941 = vunpack.c.h.b16 %v154
  %v942 = vunpack.c.l.b16 %v155
  %v943 = vunpack.c.h.b16 %v155
  %v944 = vunpack.c.l.b16 %v156
  %v945 = vunpack.c.h.b16 %v156
  %v946 = vunpack.c.l.b16 %v157
  %v947 = vunpack.c.h.b16 %v157
  %v948 = vunpack.c.l.b16 %v158
  %v949 = vunpack.c.h.b16 %v158
  %v950 = vunpack.c.l.b16 %v159
  %v951 = vunpack.c.h.b16 %v159
  %v952 = vunpack.c.l.b16 %v160
  %v953 = vunpack.c.h.b16 %v160
  %v954 = vunpack.c.l.b16 %v161
  %v955 = vunpack.c.h.b16 %v161
  %v956 = vunpack.c.l.b16 %v162
  %v957 = vunpack.c.h.b16 %v162
  %v958 = vunpack.c.l.b16 %v163
  %v959 = vunpack.c.h.b16 %v163
  %v960 = vunpack.c.l.b16 %v164
  %v961 = vunpack.c.h.b16 %v164
  %v962 = vunpack.c.l.b16 %v165
  %v963 = vunpack.c.h.b16 %v165
  %v964 = vunpack.c.l.b16 %v166
  %v965 = vunpack.c.h.b16 %v166
  %v966 = vunpack.c.l.b16 %v167
  %v967 = vunpack.c.h.b16 %v167
  %v968 = vunpack.c.l.b16 %v168
  %v969 = vunpack.c.h.b16 %v168
  %v970 = vunpack.c.l.b16 %v169
  %v971 = vunpack.c.h.b16 %v169
  %v972 = vunpack.c.l.b16 %v170
  %v973 = vunpack.c.h.b16 %v170
  %v974 = vunpack.c.l.b16 %v171
  %v975 = vunpack.c.h.b16 %v171
  %v976 = vunpack.c.l.b16 %v172
  %v977 = vunpack.c.h.b16 %v172
  %v978 = vunpack.c.l.b16 %v173
  %v979 = vunpack.c.h.b16 %v173
  %v980 = vunpack.c.l.b16 %v174
  %v981 = vunpack.c.h.b16 %v174
  %v982 = vunpack.c.l.b16 %v175
  %v983 = vunpack.c.h.b16 %v175
  %v984 = vunpack.c.l.b16 %v176
  %v985 = vunpack.c.h.b16 %v176
  %v986 = vunpack.c.l.b16 %v177
  %v987 = vunpack.c.h.b16 %v177
  %v988 = vunpack.c.l.b16 %v178
  %v989 = vunpack.c.h.b16 %v178
  %v990 = vunpack.c.l.b16 %v179
  %v991 = vunpack.c.h.b16 %v179
  %v992 = vunpack.c.l.b16 %v180
  %v993 = vunpack.c.h.b16 %v180
  %v994 = vunpack.c.l.b16 %v181
  %v995 = vunpack.c.h.b16 %v181
  %v996 = vunpack.c.l.b16 %v182
  %v997 = vunpack.c.h.b16 %v182
  %v998 = vunpack.c.l.b16 %v183
  %v999 = vunpack.c.h.b16 %v183
  %v1000 = vunpack.c.l.b16 %v184
  %v1001 = vunpack.c.h.b16 %v184
  %v1002 = vunpack.c.l.b16 %v185
  %v1003 = vunpack.c.h.b16 %v185
  %v1004 = vunpack.c.l.b16 %v186
  %v1005 = vunpack.c.h.b16 %v186
  %v1006 = vunpack.c.l.b16 %v187
  %v1007 = vunpack.c.h.b16 %v187
  %v1008 = vunpack.c.l.b16 %v188
  %v1009 = vunpack.c.h.b16 %v188
  %v1010 = vunpack.c.l.b16 %v189
  %v1011 = vunpack.c.h.b16 %v189
  %v1012 = vunpack.c.l.b16 %v190
  %v1013 = vunpack.c.h.b16 %v190
  %v1014 = vunpack.c.l.b16 %v191
  %v1015 = vunpack.c.h.b16 %v191
  %v1016 = vunpack.c.l.b16 %v192
  %v1017 = vunpack.c.h.b16 %v192
  %v1018 = vunpack.c.l.b16 %v193
  %v1019 = vunpack.c.h.b16 %v193
  %v1020 = vunpack.c.l.b16 %v194
  %v1021 = vunpack.c.h.b16 %v194
  %v1022 = vunpack.c.l.b16 %v195
  %v1023 = vunpack.c.h.b16 %v195
  %v1024 = vunpack.c.l.b16 %v196
  %v1025 = vunpack.c.h.b16 %v196
  %v1026 = vunpack.c.l.b16 %v197
  %v1027 = vunpack.c.h.b16 %v197
  %v1028 = vunpack.c.l.b16 %v198
  %v1029 = vunpack.c.h.b16 %v198
  %v1030 = vunpack.c.l.b16 %v199
  %v1031 = vunpack.c.h.b16 %v199
  %v1032 = vunpack.c.l.b16 %v200
  %v1033 = vunpack.c.h.b16 %v200
  %v1034 = vunpack.c.l.b16 %v201
  %v1035 = vunpack.c.h.b16 %v201
  %v1036 = vunpack.c.l.b16 %v202
  %v1037 = vunpack.c.h.b16 %v202
  %v1038 = vunpack.c.l.b16 %v203
  %v1039 = vunpack.c.h.b16 %v203
  %v1040 = vunpack.c.l.b16 %v204
  %v1041 = vunpack.c.h.b16 %v204
  %v1042 = vunpack.c.l.b16 %v205
  %v1043 = vunpack.c.h.b16 %v205
  %v1044 = vunpack.c.l.b16 %v206
  %v1045 = vunpack.c.h.b16 %v206
  %v1046 = vunpack.c.l.b16 %v207
  %v1047 = vunpack.c.h.b16 %v207
  %v1048 = vunpack.c.l.b16 %v208
  %v1049 = vunpack.c.h.b16 %v208
  %v1050 = vunpack.c.l.b16 %v209
  %v1051 = vunpack.c.h.b16 %v209
  %v1052 = vunpack.c.l.b16 %v210
  %v1053 = vunpack.c.h.b16 %v210
  %v1054 = vunpack.c.l.b16 %v211
  %v1055 = vunpack.c.h.b16 %v211
  %v1056 = vunpack.c.l.b16 %v212
  %v1057 = vunpack.c.h.b16 %v212
  %v1058 = vunpack.c.l.b16 %v213
  %v1059 = vunpack.c.h.b16 %v213
  %v1060 = vunpack.c.l.b16 %v214
  %v1061 = vunpack.c.h.b16 %v214
  %v1062 = vunpack.c.l.b16 %v215
  %v1063 = vunpack.c.h.b16 %v215
  %v1064 = vunpack.c.l.b16 %v216
  %v1065 = vunpack.c.h.b16 %v216
  %v1066 = vunpack.c.l.b16 %v217
  %v1067 = vunpack.c.h.b16 %v217
  %v1068 = vunpack.c.l.b16 %v218
  %v1069 = vunpack.c.h.b16 %v218
  %v1070 = vunpack.c.l.b16 %v219
  %v1071 = vunpack.c.h.b16 %v219
  %v1072 = vunpack.c.l.b16 %v220
  %v1073 = vunpack.c.h.b16 %v220
  %v1074 = vunpack.c.l.b16 %v221
  %v1075 = vunpack.c.h.b16 %v221
  %v1076 = vunpack.c.l.b16 %v222
  %v1077 = vunpack.c.h.b16 %v222
  %v1078 = vunpack.c.l.b16 %v223
  %v1079 = vunpack.c.h.b16 %v223
  %v1080 = vunpack.c.l.b16 %v224
  %v1081 = vunpack.c.h.b16 %v224
  %v1082 = vunpack.c.l.b16 %v225
  %v1083 = vunpack.c.h.b16 %v225
  %v1084 = vunpack.c.l.b16 %v226
  %v1085 = vunpack.c.h.b16 %v226
  %v1086 = vunpack.c.l.b16 %v227
  %v1087 = vunpack.c.h.b16 %v227
  %v1088 = vunpack.c.l.b16 %v228
  %v1089 = vunpack.c.h.b16 %v228
  %v1090 = vunpack.c.l.b16 %v229
  %v1091 = vunpack.c.h.b16 %v229
  %v1092 = vunpack.c.l.b16 %v230
  %v1093 = vunpack.c.h.b16 %v230
  %v1094 = vunpack.c.l.b16 %v231
  %v1095 = vunpack.c.h.b16 %v231
  %v1096 = vunpack.c.l.b16 %v232
  %v1097 = vunpack.c.h.b16 %v232
  %v1098 = vunpack.c.l.b16 %v233
  %v1099 = vunpack.c.h.b16 %v233
  %v1100 = vunpack.c.l.b16 %v234
  %v1101 = vunpack.c.h.b16 %v234
  %v1102 = vunpack.c.l.b16 %v235
  %v1103 = vunpack.c.h.b16 %v235
  %v1104 = vunpack.c.l.b16 %v236
  %v1105 = vunpack.c.h.b16 %v236
  %v1106 = vunpack.c.l.b16 %v237
  %v1107 = vunpack.c.h.b16 %v237
  %v1108 = vunpack.c.l.b16 %v238
  %v1109 = vunpack.c.h.b16 %v238
  %v1110 = vunpack.c.l.b16 %v239
  %v1111 = vunpack.c.h.b16 %v239
  %v1112 = vunpack.c.l.b16 %v240
  %v1113 = vunpack.c.h.b16 %v240
  %v1114 = vunpack.c.l.b16 %v241
  %v1115 = vunpack.c.h.b16 %v241
  %v1116 = vunpack.c.l.b16 %v242
  %v1117 = vunpack.c.h.b16 %v242
  %v1118 = vunpack.c.l.b16 %v243
  %v1119 = vunpack.c.h.b16 %v243
  %v1120 = vunpack.c.l.b16 %v244
  %v1121 = vunpack.c.h.b16 %v244
  %v1122 = vunpack.c.l.b16 %v245
  %v1123 = vunpack.c.h.b16 %v245
  %v1124 = vunpack.c.l.b16 %v246
  %v1125 = vunpack.c.h.b16 %v246
  %v1126 = vunpack.c.l.b16 %v247
  %v1127 = vunpack.c.h.b16 %v247
  %v1128 = vunpack.c.l.b16 %v248
  %v1129 = vunpack.c.h.b16 %v248
  %v1130 = vunpack.c.l.b16 %v249
  %v1131 = vunpack.c.h.b16 %v249
  %v1132 = vunpack.c.l.b16 %v250
  %v1133 = vunpack.c.h.b16 %v250
  %v1134 = vunpack.c.l.b16 %v251
  %v1135 = vunpack.c.h.b16 %v251
  %v1136 = vunpack.c.l.b16 %v252
  %v1137 = vunpack.c.h.b16 %v252
  %v1138 = vunpack.c.l.b16 %v253
  %v1139 = vunpack.c.h.b16 %v253
  %v1140 = vunpack.c.l.b16 %v254
  %v1141 = vunpack.c.h.b16 %v254
  %v1142 = vunpack.c.l.b16 %v255
  %v1143 = vunpack.c.h.b16 %v255
  %v1144 = vunpack.c.l.b16 %v256
  %v1145 = vunpack.c.h.b16 %v256
  %v1146 = vunpack.c.l.b16 %v257
  %v1147 = vunpack.c.h.b16 %v257
  %v1148 = vunpack.c.l.b16 %v258
  %v1149 = vunpack.c.h.b16 %v258
  %v1150 = vunpack.c.l.b16 %v259
  %v1151 = vunpack.c.h.b16 %v259
  %v1152 = vunpack.c.l.b16 %v260
  %v1153 = vunpack.c.h.b16 %v260
  %v1154 = vunpack.c.l.b16 %v261
  %v1155 = vunpack.c.h.b16 %v261
  %v1156 = vunpack.c.l.b16 %v262
  %v1157 = vunpack.c.h.b16 %v262
  %v1158 = vunpack.c.l.b16 %v263
  %v1159 = vunpack.c.h.b16 %v263
  %v1160 = vunpack.c.l.b16 %v264
  %v1161 = vunpack.c.h.b16 %v264
  %v1162 = vunpack.c.l.b16 %v265
  %v1163 = vunpack.c.h.b16 %v265
  %v1164 = vunpack.c.l.b16 %v266
  %v1165 = vunpack.c.h.b16 %v266
  %v1166 = vunpack.c.l.b16 %v267
  %v1167 = vunpack.c.h.b16 %v267
  %v1168 = vunpack.c.l.b16 %v268
  %v1169 = vunpack.c.h.b16 %v268
  %v1170 = vunpack.c.l.b16 %v269
  %v1171 = vunpack.c.h.b16 %v269
  %v1172 = vunpack.c.l.b16 %v270
  %v1173 = vunpack.c.h.b16 %v270
  %v1174 = vpack.c.b16 %v670, %v662
  %v1175 = vpack.c.b16 %v671, %v663
  %v1176 = vpack.c.b16 %v672, %v664
  %v1177 = vpack.c.b16 %v673, %v665
  %v1178 = vpack.c.b16 %v674, %v666
  %v1179 = vpack.c.b16 %v675, %v667
  %v1180 = vpack.c.b16 %v676, %v668
  %v1181 = vpack.c.b16 %v677, %v669
  %v1182 = vpack.c.b16 %v686, %v678
  %v1183 = vpack.c.b16 %v687, %v679
  %v1184 = vpack.c.b16 %v688, %v680
  %v1185 = vpack.c.b16 %v689, %v681
  %v1186 = vpack.c.b16 %v690, %v682
  %v1187 = vpack.c.b16 %v691, %v683
  %v1188 = vpack.c.b16 %v692, %v684
  %v1189 = vpack.c.b16 %v693, %v685
  %v1190 = vpack.c.b16 %v702, %v694
  %v1191 = vpack.c.b16 %v703, %v695
  %v1192 = vpack.c.b16 %v704, %v696
  %v1193 = vpack.c.b16 %v705, %v697
  %v1194 = vpack.c.b16 %v706, %v698
  %v1195 = vpack.c.b16 %v707, %v699
  %v1196 = vpack.c.b16 %v708, %v700
  %v1197 = vpack.c.b16 %v709, %v701
  %v1198 = vpack.c.b16 %v718, %v710
  %v1199 = vpack.c.b16 %v719, %v711
  %v1200 = vpack.c.b16 %v720, %v712
  %v1201 = vpack.c.b16 %v721, %v713
  %v1202 = vpack.c.b16 %v722, %v714
  %v1203 = vpack.c.b16 %v723, %v715
  %v1204 = vpack.c.b16 %v724, %v716
  %v1205 = vpack.c.b16 %v725, %v717
  %v1206 = vpack.c.b16 %v734, %v726
  %v1207 = vpack.c.b16 %v735, %v727
  %v1208 = vpack.c.b16 %v736, %v728
  %v1209 = vpack.c.b16 %v737, %v729
  %v1210 = vpack.c.b16 %v738, %v730
  %v1211 = vpack.c.b16 %v739, %v731
  %v1212 = vpack.c.b16 %v740, %v732
  %v1213 = vpack.c.b16 %v741, %v733
  %v1214 = vpack.c.b16 %v750, %v742
  %v1215 = vpack.c.b16 %v751, %v743
  %v1216 = vpack.c.b16 %v752, %v744
  %v1217 = vpack.c.b16 %v753, %v745
  %v1218 = vpack.c.b16 %v754, %v746
  %v1219 = vpack.c.b16 %v755, %v747
  %v1220 = vpack.c.b16 %v756, %v748
  %v1221 = vpack.c.b16 %v757, %v749
  %v1222 = vpack.c.b16 %v766, %v758
  %v1223 = vpack.c.b16 %v767, %v759
  %v1224 = vpack.c.b16 %v768, %v760
  %v1225 = vpack.c.b16 %v769, %v761
  %v1226 = vpack.c.b16 %v770, %v762
  %v1227 = vpack.c.b16 %v771, %v763
  %v1228 = vpack.c.b16 %v772, %v764
  %v1229 = vpack.c.b16 %v773, %v765
  %v1230 = vpack.c.b16 %v782, %v774
  %v1231 = vpack.c.b16 %v783, %v775
  %v1232 = vpack.c.b16 %v784, %v776
  %v1233 = vpack.c.b16 %v785, %v777
  %v1234 = vpack.c.b16 %v786, %v778
  %v1235 = vpack.c.b16 %v787, %v779
  %v1236 = vpack.c.b16 %v788, %v780
  %v1237 = vpack.c.b16 %v789, %v781
  %v1238 = vpack.c.b16 %v798, %v790
  %v1239 = vpack.c.b16 %v799, %v791
  %v1240 = vpack.c.b16 %v800, %v792
  %v1241 = vpack.c.b16 %v801, %v793
  %v1242 = vpack.c.b16 %v802, %v794
  %v1243 = vpack.c.b16 %v803, %v795
  %v1244 = vpack.c.b16 %v804, %v796
  %v1245 = vpack.c.b16 %v805, %v797
  %v1246 = vpack.c.b16 %v814, %v806
  %v1247 = vpack.c.b16 %v815, %v807
  %v1248 = vpack.c.b16 %v816, %v808
  %v1249 = vpack.c.b16 %v817, %v809
  %v1250 = vpack.c.b16 %v818, %v810
  %v1251 = vpack.c.b16 %v819, %v811
  %v1252 = vpack.c.b16 %v820, %v812
  %v1253 = vpack.c.b16 %v821, %v813
  %v1254 = vpack.c.b16 %v830, %v822
  %v1255 = vpack.c.b16 %v831, %v823
  %v1256 = vpack.c.b16 %v832, %v824
  %v1257 = vpack.c.b16 %v833, %v825
  %v1258 = vpack.c.b16 %v834, %v826
  %v1259 = vpack.c.b16 %v835, %v827
  %v1260 = vpack.c.b16 %v836, %v828
  %v1261 = vpack.c.b16 %v837, %v829
  %v1262 = vpack.c.b16 %v846, %v838
  %v1263 = vpack.c.b16 %v847, %v839
  %v1264 = vpack.c.b16 %v848, %v840
  %v1265 = vpack.c.b16 %v849, %v841
  %v1266 = vpack.c.b16 %v850, %v842
  %v1267 = vpack.c.b16 %v851, %v843
  %v1268 = vpack.c.b16 %v852, %v844
  %v1269 = vpack.c.b16 %v853, %v845
  %v1270 = vpack.c.b16 %v862, %v854
  %v1271 = vpack.c.b16 %v863, %v855
  %v1272 = vpack.c.b16 %v864, %v856
  %v1273 = vpack.c.b16 %v865, %v857
  %v1274 = vpack.c.b16 %v866, %v858
  %v1275 = vpack.c.b16 %v867, %v859
  %v1276 = vpack.c.b16 %v868, %v860
  %v1277 = vpack.c.b16 %v869, %v861
  %v1278 = vpack.c.b16 %v878, %v870
  %v1279 = vpack.c.b16 %v879, %v871
  %v1280 = vpack.c.b16 %v880, %v872
  %v1281 = vpack.c.b16 %v881, %v873
  %v1282 = vpack.c.b16 %v882, %v874
  %v1283 = vpack.c.b16 %v883, %v875
  %v1284 = vpack.c.b16 %v884, %v876
  %v1285 = vpack.c.b16 %v885, %v877
  %v1286 = vpack.c.b16 %v894, %v886
  %v1287 = vpack.c.b16 %v895, %v887
  %v1288 = vpack.c.b16 %v896, %v888
  %v1289 = vpack.c.b16 %v897, %v889
  %v1290 = vpack.c.b16 %v898, %v890
  %v1291 = vpack.c.b16 %v899, %v891
  %v1292 = vpack.c.b16 %v900, %v892
  %v1293 = vpack.c.b16 %v901, %v893
  %v1294 = vpack.c.b16 %v910, %v902
  %v1295 = vpack.c.b16 %v911, %v903
  %v1296 = vpack.c.b16 %v912, %v904
  %v1297 = vpack.c.b16 %v913, %v905
  %v1298 = vpack.c.b16 %v914, %v906
  %v1299 = vpack.c.b16 %v915, %v907
  %v1300 = vpack.c.b16 %v916, %v908
  %v1301 = vpack.c.b16 %v917, %v909
  %v1302 = vpack.c.b16 %v926, %v918
  %v1303 = vpack.c.b16 %v927, %v919
  %v1304 = vpack.c.b16 %v928, %v920
  %v1305 = vpack.c.b16 %v929, %v921
  %v1306 = vpack.c.b16 %v930, %v922
  %v1307 = vpack.c.b16 %v931, %v923
  %v1308 = vpack.c.b16 %v932, %v924
  %v1309 = vpack.c.b16 %v933, %v925
  %v1310 = vpack.c.b16 %v942, %v934
  %v1311 = vpack.c.b16 %v943, %v935
  %v1312 = vpack.c.b16 %v944, %v936
  %v1313 = vpack.c.b16 %v945, %v937
  %v1314 = vpack.c.b16 %v946, %v938
  %v1315 = vpack.c.b16 %v947, %v939
  %v1316 = vpack.c.b16 %v948, %v940
  %v1317 = vpack.c.b16 %v949, %v941
  %v1318 = vpack.c.b16 %v958, %v950
  %v1319 = vpack.c.b16 %v959, %v951
  %v1320 = vpack.c.b16 %v960, %v952
  %v1321 = vpack.c.b16 %v961, %v953
  %v1322 = vpack.c.b16 %v962, %v954
  %v1323 = vpack.c.b16 %v963, %v955
  %v1324 = vpack.c.b16 %v964, %v956
  %v1325 = vpack.c.b16 %v965, %v957
  %v1326 = vpack.c.b16 %v974, %v966
  %v1327 = vpack.c.b16 %v975, %v967
  %v1328 = vpack.c.b16 %v976, %v968
  %v1329 = vpack.c.b16 %v977, %v969
  %v1330 = vpack.c.b16 %v978, %v970
  %v1331 = vpack.c.b16 %v979, %v971
  %v1332 = vpack.c.b16 %v980, %v972
  %v1333 = vpack.c.b16 %v981, %v973
  %v1334 = vpack.c.b16 %v990, %v982
  %v1335 = vpack.c.b16 %v991, %v983
  %v1336 = vpack.c.b16 %v992, %v984
  %v1337 = vpack.c.b16 %v993, %v985
  %v1338 = vpack.c.b16 %v994, %v986
  %v1339 = vpack.c.b16 %v995, %v987
  %v1340 = vpack.c.b16 %v996, %v988
  %v1341 = vpack.c.b16 %v997, %v989
  %v1342 = vpack.c.b16 %v1006, %v998
  %v1343 = vpack.c.b16 %v1007, %v999
  %v1344 = vpack.c.b16 %v1008, %v1000
  %v1345 = vpack.c.b16 %v1009, %v1001
  %v1346 = vpack.c.b16 %v1010, %v1002
  %v1347 = vpack.c.b16 %v1011, %v1003
  %v1348 = vpack.c.b16 %v1012, %v1004
  %v1349 = vpack.c.b16 %v1013, %v1005
  %v1350 = vpack.c.b16 %v1022, %v1014
  %v1351 = vpack.c.b16 %v1023, %v1015
  %v1352 = vpack.c.b16 %v1024, %v1016
  %v1353 = vpack.c.b16 %v1025, %v1017
  %v1354 = vpack.c.b16 %v1026, %v1018
  %v1355 = vpack.c.b16 %v1027, %v1019
  %v1356 = vpack.c.b16 %v1028, %v1020
  %v1357 = vpack.c.b16 %v1029, %v1021
  %v1358 = vpack.c.b16 %v1038, %v1030
  %v1359 = vpack.c.b16 %v1039, %v1031
  %v1360 = vpack.c.b16 %v1040, %v1032
  %v1361 = vpack.c.b16 %v1041, %v1033
  %v1362 = vpack.c.b16 %v1042, %v1034
  %v1363 = vpack.c.b16 %v1043, %v1035
  %v1364 = vpack.c.b16 %v1044, %v1036
  %v1365 = vpack.c.b16 %v1045, %v1037
  %v1366 = vpack.c.b16 %v1054, %v1046
  %v1367 = vpack.c.b16 %v1055, %v1047
  %v1368 = vpack.c.b16 %v1056, %v1048
  %v1369 = vpack.c.b16 %v1057, %v1049
  %v1370 = vpack.c.b16 %v1058, %v1050
  %v1371 = vpack.c.b16 %v1059, %v1051
  %v1372 = vpack.c.b16 %v1060, %v1052
  %v1373 = vpack.c.b16 %v1061, %v1053
  %v1374 = vpack.c.b16 %v1070, %v1062
  %v1375 = vpack.c.b16 %v1071, %v1063
  %v1376 = vpack.c.b16 %v1072, %v1064
  %v1377 = vpack.c.b16 %v1073, %v1065
  %v1378 = vpack.c.b16 %v1074, %v1066
  %v1379 = vpack.c.b16 %v1075, %v1067
  %v1380 = vpack.c.b16 %v1076, %v1068
  %v1381 = vpack.c.b16 %v1077, %v1069
  %v1382 = vpack.c.b16 %v1086, %v1078
  %v1383 = vpack.c.b16 %v1087, %v1079
  %v1384 = vpack.c.b16 %v1088, %v1080
  %v1385 = vpack.c.b16 %v1089, %v1081
  %v1386 = vpack.c.b16 %v1090, %v1082
  %v1387 = vpack.c.b16 %v1091, %v1083
  %v1388 = vpack.c.b16 %v1092, %v1084
  %v1389 = vpack.c.b16 %v1093, %v1085
  %v1390 = vpack.c.b16 %v1102, %v1094
  %v1391 = vpack.c.b16 %v1103, %v1095
  %v1392 = vpack.c.b16 %v1104, %v1096
  %v1393 = vpack.c.b16 %v1105, %v1097
  %v1394 = vpack.c.b16 %v1106, %v1098
  %v1395 = vpack.c.b16 %v1107, %v1099
  %v1396 = vpack.c.b16 %v1108, %v1100
  %v1397 = vpack.c.b16 %v1109, %v1101
  %v1398 = vpack.c.b16 %v1118, %v1110
  %v1399 = vpack.c.b16 %v1119, %v1111
  %v1400 = vpack.c.b16 %v1120, %v1112
  %v1401 = vpack.c.b16 %v1121, %v1113
  %v1402 = vpack.c.b16 %v1122, %v1114
  %v1403 = vpack.c.b16 %v1123, %v1115
  %v1404 = vpack.c.b16 %v1124, %v1116
  %v1405 = vpack.c.b16 %v1125, %v1117
  %v1406 = vpack.c.b16 %v1134, %v1126
  %v1407 = vpack.c.b16 %v1135, %v1127
  %v1408 = vpack.c.b16 %v1136, %v1128
  %v1409 = vpack.c.b16 %v1137, %v1129
  %v1410 = vpack.c.b16 %v1138, %v1130
  %v1411 = vpack.c.b16 %v1139, %v1131
  %v1412 = vpack.c.b16 %v1140, %v1132
  %v1413 = vpack.c.b16 %v1141, %v1133
  %v1414 = vpack.c.b16 %v1150, %v1142
  %v1415 = vpack.c.b16 %v1151, %v1143
  %v1416 = vpack.c.b16 %v1152, %v1144
  %v1417 = vpack.c.b16 %v1153, %v1145
  %v1418 = vpack.c.b16 %v1154, %v1146
  %v1419 = vpack.c.b16 %v1155, %v1147
  %v1420 = vpack.c.b16 %v1156, %v1148
  %v1421 = vpack.c.b16 %v1157, %v1149
  %v1422 = vpack.c.b16 %v1166, %v1158
  %v1423 = vpack.c.b16 %v1167, %v1159
  %v1424 = vpack.c.b16 %v1168, %v1160
  %v1425 = vpack.c.b16 %v1169, %v1161
  %v1426 = vpack.c.b16 %v1170, %v1162
  %v1427 = vpack.c.b16 %v1171, %v1163
  %v1428 = vpack.c.b16 %v1172, %v1164
  %v1429 = vpack.c.b16 %v1173, %v1165
  %v1814 = vunpack.c.l.b16 %v271
  %v1815 = vunpack.c.l.b16 %v272
  %v1816 = vunpack.c.l.b16 %v273
  %v1817 = vunpack.c.l.b16 %v274
  %v1818 = vunpack.c.l.b16 %v275
  %v1819 = vunpack.c.l.b16 %v276
  %v1820 = vunpack.c.l.b16 %v277
  %v1821 = vunpack.c.l.b16 %v278
  %v1822 = vunpack.c.l.b16 %v279
  %v1823 = vunpack.c.l.b16 %v280
  %v1824 = vunpack.c.l.b16 %v281
  %v1825 = vunpack.c.l.b16 %v282
  %v1826 = vunpack.c.l.b16 %v283
  %v1827 = vunpack.c.l.b16 %v284
  %v1828 = vunpack.c.l.b16 %v285
  %v1829 = vunpack.c.l.b16 %v286
  %v1830 = vunpack.c.l.b16 %v287
  %v1831 = vunpack.c.l.b16 %v288
  %v1832 = vunpack.c.l.b16 %v289
  %v1833 = vunpack.c.l.b16 %v290
  %v1834 = vunpack.c.l.b16 %v291
  %v1835 = vunpack.c.l.b16 %v292
  %v1836 = vunpack.c.l.b16 %v293
  %v1837 = vunpack.c.l.b16 %v294
  %v1838 = vunpack.c.l.b16 %v295
  %v1839 = vunpack.c.l.b16 %v296
  %v1840 = vunpack.c.l.b16 %v297
  %v1841 = vunpack.c.l.b16 %v298
  %v1842 = vunpack.c.l.b16 %v299
  %v1843 = vunpack.c.l.b16 %v300
  %v1844 = vunpack.c.l.b16 %v301
  %v1845 = vunpack.c.l.b16 %v302
  %v1846 = vunpack.c.l.b16 %v303
  %v1847 = vunpack.c.l.b16 %v304
  %v1848 = vunpack.c.l.b16 %v305
  %v1849 = vunpack.c.l.b16 %v306
  %v1850 = vunpack.c.l.b16 %v307
  %v1851 = vunpack.c.l.b16 %v308
  %v1852 = vunpack.c.l.b16 %v309
  %v1853 = vunpack.c.l.b16 %v310
  %v1854 = vunpack.c.l.b16 %v311
  %v1855 = vunpack.c.l.b16 %v312
  %v1856 = vunpack.c.l.b16 %v313
  %v1857 = vunpack.c.l.b16 %v314
  %v1858 = vunpack.c.l.b16 %v315
  %v1859 = vunpack.c.l.b16 %v316
  %v1860 = vunpack.c.l.b16 %v317
  %v1861 = vunpack.c.l.b16 %v318
  %v1862 = vunpack.c.l.b16 %v319
  %v1863 = vunpack.c.l.b16 %v320
  %v1864 = vunpack.c.l.b16 %v321
  %v1865 = vunpack.c.l.b16 %v322
  %v1866 = vunpack.c.l.b16 %v323
  %v1867 = vunpack.c.l.b16 %v324
  %v1868 = vunpack.c.l.b16 %v325
  %v1869 = vunpack.c.l.b16 %v326
  %v1870 = vunpack.c.l.b16 %v327
  %v1871 = vunpack.c.l.b16 %v328
  %v1872 = vunpack.c.l.b16 %v329
  %v1873 = vunpack.c.l.b16 %v330
  %v1874 = vunpack.c.l.b16 %v331
  %v1875 = vunpack.c.l.b16 %v332
  %v1876 = vunpack.c.l.b16 %v333
  %v1877 = vunpack.c.l.b16 %v334
  %v1878 = vunpack.c.l.b16 %v335
  %v1879 = vunpack.c.l.b16 %v336
  %v1880 = vunpack.c.l.b16 %v337
  %v1881 = vunpack.c.l.b16 %v338
  %v1882 = vunpack.c.l.b16 %v339
  %v1883 = vunpack.c.l.b16 %v340
  %v1884 = vunpack.c.l.b16 %v341
  %v1885 = vunpack.c.l.b16 %v342
  %v1886 = vunpack.c.l.b16 %v343
  %v1887 = vunpack.c.l.b16 %v344
  %v1888 = vunpack.c.l.b16 %v345
  %v1889 = vunpack.c.l.b16 %v346
  %v1890 = vunpack.c.l.b16 %v347
  %v1891 = vunpack.c.l.b16 %v348
  %v1892 = vunpack.c.l.b16 %v349
  %v1893 = vunpack.c.l.b16 %v350
  %v1894 = vunpack.c.l.b16 %v351
  %v1895 = vunpack.c.l.b16 %v352
  %v1896 = vunpack.c.l.b16 %v353
  %v1897 = vunpack.c.l.b16 %v354
  %v1898 = vunpack.c.l.b16 %v355
  %v1899 = vunpack.c.l.b16 %v356
  %v1900 = vunpack.c.l.b16 %v357
  %v1901 = vunpack.c.l.b16 %v358
  %v1902 = vunpack.c.l.b16 %v359
  %v1903 = vunpack.c.l.b16 %v360
  %v1904 = vunpack.c.l.b16 %v361
  %v1905 = vunpack.c.l.b16 %v362
  %v1906 = vunpack.c.l.b16 %v363
  %v1907 = vunpack.c.l.b16 %v364
  %v1908 = vunpack.c.l.b16 %v365
  %v1909 = vunpack.c.l.b16 %v366
  %v1910 = vunpack.c.l.b16 %v367
  %v1911 = vunpack.c.l.b16 %v368
  %v1912 = vunpack.c.l.b16 %v369
  %v1913 = vunpack.c.l.b16 %v370
  %v1914 = vunpack.c.l.b16 %v371
  %v1915 = vunpack.c.l.b16 %v372
  %v1916 = vunpack.c.l.b16 %v373
  %v1917 = vunpack.c.l.b16 %v374
  %v1918 = vunpack.c.l.b16 %v375
  %v1919 = vunpack.c.l.b16 %v376
  %v1920 = vunpack.c.l.b16 %v377
  %v1921 = vunpack.c.l.b16 %v378
  %v1922 = vunpack.c.l.b16 %v379
  %v1923 = vunpack.c.l.b16 %v380
  %v1924 = vunpack.c.l.b16 %v381
  %v1925 = vunpack.c.l.b16 %v382
  %v1926 = vunpack.c.l.b16 %v383
  %v1927 = vunpack.c.l.b16 %v384
  %v1928 = vunpack.c.l.b16 %v385
  %v1929 = vunpack.c.l.b16 %v386
  %v1930 = vunpack.c.l.b16 %v387
  %v1931 = vunpack.c.l.b16 %v388
  %v1932 = vunpack.c.l.b16 %v389
  %v1933 = vunpack.c.l.b16 %v390
  %v1934 = vunpack.c.l.b16 %v391
  %v1935 = vunpack.c.l.b16 %v392
  %v1936 = vunpack.c.l.b16 %v393
  %v1937 = vunpack.c.l.b16 %v394
  %v1938 = vunpack.c.l.b16 %v395
  %v1939 = vunpack.c.l.b16 %v396
  %v1940 = vunpack.c.l.b16 %v397
  %v1941 = vunpack.c.l.b16 %v398
  %v1942 = vpack.c.b16 %v1815, %v1814
  %v1943 = vpack.c.b16 %v1817, %v1816
  %v1944 = vpack.c.b16 %v1819, %v1818
  %v1945 = vpack.c.b16 %v1821, %v1820
  %v1946 = vpack.c.b16 %v1823, %v1822
  %v1947 = vpack.c.b16 %v1825, %v1824
  %v1948 = vpack.c.b16 %v1827, %v1826
  %v1949 = vpack.c.b16 %v1829, %v1828
  %v1950 = vpack.c.b16 %v1831, %v1830
  %v1951 = vpack.c.b16 %v1833, %v1832
  %v1952 = vpack.c.b16 %v1835, %v1834
  %v1953 = vpack.c.b16 %v1837, %v1836
  %v1954 = vpack.c.b16 %v1839, %v1838
  %v1955 = vpack.c.b16 %v1841, %v1840
  %v1956 = vpack.c.b16 %v1843, %v1842
  %v1957 = vpack.c.b16 %v1845, %v1844
  %v1958 = vpack.c.b16 %v1847, %v1846
  %v1959 = vpack.c.b16 %v1849, %v1848
  %v1960 = vpack.c.b16 %v1851, %v1850
  %v1961 = vpack.c.b16 %v1853, %v1852
  %v1962 = vpack.c.b16 %v1855, %v1854
  %v1963 = vpack.c.b16 %v1857, %v1856
  %v1964 = vpack.c.b16 %v1859, %v1858
  %v1965 = vpack.c.b16 %v1861, %v1860
  %v1966 = vpack.c.b16 %v1863, %v1862
  %v1967 = vpack.c.b16 %v1865, %v1864
  %v1968 = vpack.c.b16 %v1867, %v1866
  %v1969 = vpack.c.b16 %v1869, %v1868
  %v1970 = vpack.c.b16 %v1871, %v1870
  %v1971 = vpack.c.b16 %v1873, %v1872
  %v1972 = vpack.c.b16 %v1875, %v1874
  %v1973 = vpack.c.b16 %v1877, %v1876
  %v1974 = vpack.c.b16 %v1879, %v1878
  %v1975 = vpack.c.b16 %v1881, %v1880
  %v1976 = vpack.c.b16 %v1883, %v1882
  %v1977 = vpack.c.b16 %v1885, %v1884
  %v1978 = vpack.c.b16 %v1887, %v1886
  %v1979 = vpack.c.b16 %v1889, %v1888
  %v1980 = vpack.c.b16 %v1891, %v1890
  %v1981 = vpack.c.b16 %v1893, %v1892
  %v1982 = vpack.c.b16 %v1895, %v1894
  %v1983 = vpack.c.b16 %v1897, %v1896
  %v1984 = vpack.c.b16 %v1899, %v1898
  %v1985 = vpack.c.b16 %v1901, %v1900
  %v1986 = vpack.c.b16 %v1903, %v1902
  %v1987 = vpack.c.b16 %v1905, %v1904
  %v1988 = vpack.c.b16 %v1907, %v1906
  %v1989 = vpack.c.b16 %v1909, %v1908
  %v1990 = vpack.c.b16 %v1911, %v1910
  %v1991 = vpack.c.b16 %v1913, %v1912
  %v1992 = vpack.c.b16 %v1915, %v1914
  %v1993 = vpack.c.b16 %v1917, %v1916
  %v1994 = vpack.c.b16 %v1919, %v1918
  %v1995 = vpack.c.b16 %v1921, %v1920
  %v1996 = vpack.c.b16 %v1923, %v1922
  %v1997 = vpack.c.b16 %v1925, %v1924
  %v1998 = vpack.c.b16 %v1927, %v1926
  %v1999 = vpack.c.b16 %v1929, %v1928
  %v2000 = vpack.c.b16 %v1931, %v1930
  %v2001 = vpack.c.b16 %v1933, %v1932
  %v2002 = vpack.c.b16 %v1935, %v1934
  %v2003 = vpack.c.b16 %v1937, %v1936
  %v2004 = vpack.c.b16 %v1939, %v1938
  %v2005 = vpack.c.b16 %v1941, %v1940
  %2070 = vmatprep.subr.bf16.mxu0 0
  %2071 = vmatpush1.bf16.msra.mxu0 %v1942
  %2072 = vmatprep.subr.bf16.mxu0 0
  %2073 = vmatpush1.bf16.msra.mxu0 %v1943
  %2074 = vmatprep.subr.bf16.mxu0 0
  %2075 = vmatpush1.bf16.msra.mxu0 %v1944
  %2076 = vmatprep.subr.bf16.mxu0 0
  %2077 = vmatpush1.bf16.msra.mxu0 %v1945
  %2078 = vmatprep.subr.bf16.mxu0 0
  %2079 = vmatpush1.bf16.msra.mxu0 %v1946
  %2080 = vmatprep.subr.bf16.mxu0 0
  %2081 = vmatpush1.bf16.msra.mxu0 %v1947
  %2082 = vmatprep.subr.bf16.mxu0 0
  %2083 = vmatpush1.bf16.msra.mxu0 %v1948
  %2084 = vmatprep.subr.bf16.mxu0 0
  %2085 = vmatpush1.bf16.msra.mxu0 %v1949
  %2086 = vmatprep.subr.bf16.mxu0 0
  %2087 = vmatpush1.bf16.msra.mxu0 %v1950
  %2088 = vmatprep.subr.bf16.mxu0 0
  %2089 = vmatpush1.bf16.msra.mxu0 %v1951
  %2090 = vmatprep.subr.bf16.mxu0 0
  %2091 = vmatpush1.bf16.msra.mxu0 %v1952
  %2092 = vmatprep.subr.bf16.mxu0 0
  %2093 = vmatpush1.bf16.msra.mxu0 %v1953
  %2094 = vmatprep.subr.bf16.mxu0 0
  %2095 = vmatpush1.bf16.msra.mxu0 %v1954
  %2096 = vmatprep.subr.bf16.mxu0 0
  %2097 = vmatpush1.bf16.msra.mxu0 %v1955
  %2098 = vmatprep.subr.bf16.mxu0 0
  %2099 = vmatpush1.bf16.msra.mxu0 %v1956
  %2100 = vmatprep.subr.bf16.mxu0 0
  %2101 = vmatpush1.bf16.msra.mxu0 %v1957
  %2102 = vmatprep.mubr.bf16.mxu0 %v1175
  %2103 = vmatmul.mubr.bf16.gmra.mrb[0].mxu0 %v1174
  %v2104 = vpop.f32.mrb[0].mxu0
  %v2105 = vadd.f32 %v404, %v2104
  %v2106 = vpop.f32.mrb[0].mxu0
  %v2107 = vpop.f32.mrb[0].mxu0
  %v2108 = vadd.f32 %v404, %v2107
  %v2109 = vpop.f32.mrb[0].mxu0
  %2110 = vmatprep.mubr.bf16.mxu0 %v1183
  %2111 = vmatmul.mubr.bf16.gmra.mrb[0].mxu0 %v1182
  %v2112 = vpop.f32.mrb[0].mxu0
  %v2113 = vadd.f32 %v404, %v2112
  %v2114 = vpop.f32.mrb[0].mxu0
  %v2115 = vpop.f32.mrb[0].mxu0
  %v2116 = vadd.f32 %v404, %v2115
  %v2117 = vpop.f32.mrb[0].mxu0
  %2118 = vmatprep.mubr.bf16.mxu0 %v1191
  %2119 = vmatmul.mubr.bf16.gmra.mrb[0].mxu0 %v1190
  %v2120 = vpop.f32.mrb[0].mxu0
  %v2121 = vadd.f32 %v404, %v2120
  %v2122 = vpop.f32.mrb[0].mxu0
  %v2123 = vpop.f32.mrb[0].mxu0
  %v2124 = vadd.f32 %v404, %v2123
  %v2125 = vpop.f32.mrb[0].mxu0
  %2126 = vmatprep.mubr.bf16.mxu0 %v1199
  %2127 = vmatmul.mubr.bf16.gmra.mrb[0].mxu0 %v1198
  %v2128 = vpop.f32.mrb[0].mxu0
  %v2129 = vadd.f32 %v404, %v2128
  %v2130 = vpop.f32.mrb[0].mxu0
  %v2131 = vpop.f32.mrb[0].mxu0
  %v2132 = vadd.f32 %v404, %v2131
  %v2133 = vpop.f32.mrb[0].mxu0
  %2134 = vmatprep.mubr.bf16.mxu0 %v1207
  %2135 = vmatmul.mubr.bf16.gmra.mrb[0].mxu0 %v1206
  %v2136 = vpop.f32.mrb[0].mxu0
  %v2137 = vadd.f32 %v404, %v2136
  %v2138 = vpop.f32.mrb[0].mxu0
  %v2139 = vpop.f32.mrb[0].mxu0
  %v2140 = vadd.f32 %v404, %v2139
  %v2141 = vpop.f32.mrb[0].mxu0
  %2142 = vmatprep.mubr.bf16.mxu0 %v1215
  %2143 = vmatmul.mubr.bf16.gmra.mrb[0].mxu0 %v1214
  %v2144 = vpop.f32.mrb[0].mxu0
  %v2145 = vadd.f32 %v404, %v2144
  %v2146 = vpop.f32.mrb[0].mxu0
  %v2147 = vpop.f32.mrb[0].mxu0
  %v2148 = vadd.f32 %v404, %v2147
  %v2149 = vpop.f32.mrb[0].mxu0
  %2150 = vmatprep.mubr.bf16.mxu0 %v1223
  %2151 = vmatmul.mubr.bf16.gmra.mrb[0].mxu0 %v1222
  %v2152 = vpop.f32.mrb[0].mxu0
  %v2153 = vadd.f32 %v404, %v2152
  %v2154 = vpop.f32.mrb[0].mxu0
  %v2155 = vpop.f32.mrb[0].mxu0
  %v2156 = vadd.f32 %v404, %v2155
  %v2157 = vpop.f32.mrb[0].mxu0
  %2158 = vmatprep.mubr.bf16.mxu0 %v1231
  %2159 = vmatmul.mubr.bf16.gmra.mrb[0].mxu0 %v1230
  %v2160 = vpop.f32.mrb[0].mxu0
  %v2161 = vadd.f32 %v404, %v2160
  %v2162 = vpop.f32.mrb[0].mxu0
  %v2163 = vpop.f32.mrb[0].mxu0
  %v2164 = vadd.f32 %v404, %v2163
  %v2165 = vpop.f32.mrb[0].mxu0
  %2166 = vmatprep.mubr.bf16.mxu0 %v1239
  %2167 = vmatmul.mubr.bf16.gmra.mrb[0].mxu0 %v1238
  %v2168 = vpop.f32.mrb[0].mxu0
  %v2169 = vadd.f32 %v404, %v2168
  %v2170 = vpop.f32.mrb[0].mxu0
  %v2171 = vpop.f32.mrb[0].mxu0
  %v2172 = vadd.f32 %v404, %v2171
  %v2173 = vpop.f32.mrb[0].mxu0
  %2174 = vmatprep.mubr.bf16.mxu0 %v1247
  %2175 = vmatmul.mubr.bf16.gmra.mrb[0].mxu0 %v1246
  %v2176 = vpop.f32.mrb[0].mxu0
  %v2177 = vadd.f32 %v404, %v2176
  %v2178 = vpop.f32.mrb[0].mxu0
  %v2179 = vpop.f32.mrb[0].mxu0
  %v2180 = vadd.f32 %v404, %v2179
  %v2181 = vpop.f32.mrb[0].mxu0
  %2182 = vmatprep.mubr.bf16.mxu0 %v1255
  %2183 = vmatmul.mubr.bf16.gmra.mrb[0].mxu0 %v1254
  %v2184 = vpop.f32.mrb[0].mxu0
  %v2185 = vadd.f32 %v404, %v2184
  %v2186 = vpop.f32.mrb[0].mxu0
  %v2187 = vpop.f32.mrb[0].mxu0
  %v2188 = vadd.f32 %v404, %v2187
  %v2189 = vpop.f32.mrb[0].mxu0
  %2190 = vmatprep.mubr.bf16.mxu0 %v1263
  %2191 = vmatmul.mubr.bf16.gmra.mrb[0].mxu0 %v1262
  %v2192 = vpop.f32.mrb[0].mxu0
  %v2193 = vadd.f32 %v404, %v2192
  %v2194 = vpop.f32.mrb[0].mxu0
  %v2195 = vpop.f32.mrb[0].mxu0
  %v2196 = vadd.f32 %v404, %v2195
  %v2197 = vpop.f32.mrb[0].mxu0
  %2198 = vmatprep.mubr.bf16.mxu0 %v1271
  %2199 = vmatmul.mubr.bf16.gmra.mrb[0].mxu0 %v1270
  %v2200 = vpop.f32.mrb[0].mxu0
  %v2201 = vadd.f32 %v404, %v2200
  %v2202 = vpop.f32.mrb[0].mxu0
  %v2203 = vpop.f32.mrb[0].mxu0
  %v2204 = vadd.f32 %v404, %v2203
  %v2205 = vpop.f32.mrb[0].mxu0
  %2206 = vmatprep.mubr.bf16.mxu0 %v1279
  %2207 = vmatmul.mubr.bf16.gmra.mrb[0].mxu0 %v1278
  %v2208 = vpop.f32.mrb[0].mxu0
  %v2209 = vadd.f32 %v404, %v2208
  %v2210 = vpop.f32.mrb[0].mxu0
  %v2211 = vpop.f32.mrb[0].mxu0
  %v2212 = vadd.f32 %v404, %v2211
  %v2213 = vpop.f32.mrb[0].mxu0
  %2214 = vmatprep.mubr.bf16.mxu0 %v1287
  %2215 = vmatmul.mubr.bf16.gmra.mrb[0].mxu0 %v1286
  %v2216 = vpop.f32.mrb[0].mxu0
  %v2217 = vadd.f32 %v404, %v2216
  %v2218 = vpop.f32.mrb[0].mxu0
  %v2219 = vpop.f32.mrb[0].mxu0
  %v2220 = vadd.f32 %v404, %v2219
  %v2221 = vpop.f32.mrb[0].mxu0
  %2222 = vmatprep.mubr.bf16.mxu0 %v1295
  %2223 = vmatmul.mubr.bf16.gmra.mrb[0].mxu0 %v1294
  %v2224 = vpop.f32.mrb[0].mxu0
  %v2225 = vadd.f32 %v404, %v2224
  %v2226 = vpop.f32.mrb[0].mxu0
  %v2227 = vpop.f32.mrb[0].mxu0
  %v2228 = vadd.f32 %v404, %v2227
  %v2229 = vpop.f32.mrb[0].mxu0
  %2230 = vmatprep.mubr.bf16.mxu0 %v1303
  %2231 = vmatmul.mubr.bf16.gmra.mrb[0].mxu0 %v1302
  %v2232 = vpop.f32.mrb[0].mxu0
  %v2233 = vadd.f32 %v404, %v2232
  %v2234 = vpop.f32.mrb[0].mxu0
  %v2235 = vpop.f32.mrb[0].mxu0
  %v2236 = vadd.f32 %v404, %v2235
  %v2237 = vpop.f32.mrb[0].mxu0
  %2238 = vmatprep.mubr.bf16.mxu0 %v1311
  %2239 = vmatmul.mubr.bf16.gmra.mrb[0].mxu0 %v1310
  %v2240 = vpop.f32.mrb[0].mxu0
  %v2241 = vadd.f32 %v404, %v2240
  %v2242 = vpop.f32.mrb[0].mxu0
  %v2243 = vpop.f32.mrb[0].mxu0
  %v2244 = vadd.f32 %v404, %v2243
  %v2245 = vpop.f32.mrb[0].mxu0
  %2246 = vmatprep.mubr.bf16.mxu0 %v1319
  %2247 = vmatmul.mubr.bf16.gmra.mrb[0].mxu0 %v1318
  %v2248 = vpop.f32.mrb[0].mxu0
  %v2249 = vadd.f32 %v404, %v2248
  %v2250 = vpop.f32.mrb[0].mxu0
  %v2251 = vpop.f32.mrb[0].mxu0
  %v2252 = vadd.f32 %v404, %v2251
  %v2253 = vpop.f32.mrb[0].mxu0
  %2254 = vmatprep.mubr.bf16.mxu0 %v1327
  %2255 = vmatmul.mubr.bf16.gmra.mrb[0].mxu0 %v1326
  %v2256 = vpop.f32.mrb[0].mxu0
  %v2257 = vadd.f32 %v404, %v2256
  %v2258 = vpop.f32.mrb[0].mxu0
  %v2259 = vpop.f32.mrb[0].mxu0
  %v2260 = vadd.f32 %v404, %v2259
  %v2261 = vpop.f32.mrb[0].mxu0
  %2262 = vmatprep.mubr.bf16.mxu0 %v1335
  %2263 = vmatmul.mubr.bf16.gmra.mrb[0].mxu0 %v1334
  %v2264 = vpop.f32.mrb[0].mxu0
  %v2265 = vadd.f32 %v404, %v2264
  %v2266 = vpop.f32.mrb[0].mxu0
  %v2267 = vpop.f32.mrb[0].mxu0
  %v2268 = vadd.f32 %v404, %v2267
  %v2269 = vpop.f32.mrb[0].mxu0
  %2270 = vmatprep.mubr.bf16.mxu0 %v1343
  %2271 = vmatmul.mubr.bf16.gmra.mrb[0].mxu0 %v1342
  %v2272 = vpop.f32.mrb[0].mxu0
  %v2273 = vadd.f32 %v404, %v2272
  %v2274 = vpop.f32.mrb[0].mxu0
  %v2275 = vpop.f32.mrb[0].mxu0
  %v2276 = vadd.f32 %v404, %v2275
  %v2277 = vpop.f32.mrb[0].mxu0
  %2278 = vmatprep.mubr.bf16.mxu0 %v1351
  %2279 = vmatmul.mubr.bf16.gmra.mrb[0].mxu0 %v1350
  %v2280 = vpop.f32.mrb[0].mxu0
  %v2281 = vadd.f32 %v404, %v2280
  %v2282 = vpop.f32.mrb[0].mxu0
  %v2283 = vpop.f32.mrb[0].mxu0
  %v2284 = vadd.f32 %v404, %v2283
  %v2285 = vpop.f32.mrb[0].mxu0
  %2286 = vmatprep.mubr.bf16.mxu0 %v1359
  %2287 = vmatmul.mubr.bf16.gmra.mrb[0].mxu0 %v1358
  %v2288 = vpop.f32.mrb[0].mxu0
  %v2289 = vadd.f32 %v404, %v2288
  %v2290 = vpop.f32.mrb[0].mxu0
  %v2291 = vpop.f32.mrb[0].mxu0
  %v2292 = vadd.f32 %v404, %v2291
  %v2293 = vpop.f32.mrb[0].mxu0
  %2294 = vmatprep.mubr.bf16.mxu0 %v1367
  %2295 = vmatmul.mubr.bf16.gmra.mrb[0].mxu0 %v1366
  %v2296 = vpop.f32.mrb[0].mxu0
  %v2297 = vadd.f32 %v404, %v2296
  %v2298 = vpop.f32.mrb[0].mxu0
  %v2299 = vpop.f32.mrb[0].mxu0
  %v2300 = vadd.f32 %v404, %v2299
  %v2301 = vpop.f32.mrb[0].mxu0
  %2302 = vmatprep.mubr.bf16.mxu0 %v1375
  %2303 = vmatmul.mubr.bf16.gmra.mrb[0].mxu0 %v1374
  %v2304 = vpop.f32.mrb[0].mxu0
  %v2305 = vadd.f32 %v404, %v2304
  %v2306 = vpop.f32.mrb[0].mxu0
  %v2307 = vpop.f32.mrb[0].mxu0
  %v2308 = vadd.f32 %v404, %v2307
  %v2309 = vpop.f32.mrb[0].mxu0
  %2310 = vmatprep.mubr.bf16.mxu0 %v1383
  %2311 = vmatmul.mubr.bf16.gmra.mrb[0].mxu0 %v1382
  %v2312 = vpop.f32.mrb[0].mxu0
  %v2313 = vadd.f32 %v404, %v2312
  %v2314 = vpop.f32.mrb[0].mxu0
  %v2315 = vpop.f32.mrb[0].mxu0
  %v2316 = vadd.f32 %v404, %v2315
  %v2317 = vpop.f32.mrb[0].mxu0
  %2318 = vmatprep.mubr.bf16.mxu0 %v1391
  %2319 = vmatmul.mubr.bf16.gmra.mrb[0].mxu0 %v1390
  %v2320 = vpop.f32.mrb[0].mxu0
  %v2321 = vadd.f32 %v404, %v2320
  %v2322 = vpop.f32.mrb[0].mxu0
  %v2323 = vpop.f32.mrb[0].mxu0
  %v2324 = vadd.f32 %v404, %v2323
  %v2325 = vpop.f32.mrb[0].mxu0
  %2326 = vmatprep.mubr.bf16.mxu0 %v1399
  %2327 = vmatmul.mubr.bf16.gmra.mrb[0].mxu0 %v1398
  %v2328 = vpop.f32.mrb[0].mxu0
  %v2329 = vadd.f32 %v404, %v2328
  %v2330 = vpop.f32.mrb[0].mxu0
  %v2331 = vpop.f32.mrb[0].mxu0
  %v2332 = vadd.f32 %v404, %v2331
  %v2333 = vpop.f32.mrb[0].mxu0
  %2334 = vmatprep.mubr.bf16.mxu0 %v1407
  %2335 = vmatmul.mubr.bf16.gmra.mrb[0].mxu0 %v1406
  %v2336 = vpop.f32.mrb[0].mxu0
  %v2337 = vadd.f32 %v404, %v2336
  %v2338 = vpop.f32.mrb[0].mxu0
  %v2339 = vpop.f32.mrb[0].mxu0
  %v2340 = vadd.f32 %v404, %v2339
  %v2341 = vpop.f32.mrb[0].mxu0
  %2342 = vmatprep.mubr.bf16.mxu0 %v1415
  %2343 = vmatmul.mubr.bf16.gmra.mrb[0].mxu0 %v1414
  %v2344 = vpop.f32.mrb[0].mxu0
  %v2345 = vadd.f32 %v404, %v2344
  %v2346 = vpop.f32.mrb[0].mxu0
  %v2347 = vpop.f32.mrb[0].mxu0
  %v2348 = vadd.f32 %v404, %v2347
  %v2349 = vpop.f32.mrb[0].mxu0
  %2350 = vmatprep.mubr.bf16.mxu0 %v1423
  %2351 = vmatmul.mubr.bf16.gmra.mrb[0].mxu0 %v1422
  %v2352 = vpop.f32.mrb[0].mxu0
  %v2353 = vadd.f32 %v404, %v2352
  %v2354 = vpop.f32.mrb[0].mxu0
  %v2355 = vpop.f32.mrb[0].mxu0
  %v2356 = vadd.f32 %v404, %v2355
  %v2357 = vpop.f32.mrb[0].mxu0
  %2358 = vdwg.mxu0
  %2359 = vmatprep.subr.bf16.mxu0 0
  %2360 = vmatpush1.bf16.msra.mxu0 %v1958
  %2361 = vmatprep.subr.bf16.mxu0 0
  %2362 = vmatpush1.bf16.msra.mxu0 %v1959
  %2363 = vmatprep.subr.bf16.mxu0 0
  %2364 = vmatpush1.bf16.msra.mxu0 %v1960
  %2365 = vmatprep.subr.bf16.mxu0 0
  %2366 = vmatpush1.bf16.msra.mxu0 %v1961
  %2367 = vmatprep.subr.bf16.mxu0 0
  %2368 = vmatpush1.bf16.msra.mxu0 %v1962
  %2369 = vmatprep.subr.bf16.mxu0 0
  %2370 = vmatpush1.bf16.msra.mxu0 %v1963
  %2371 = vmatprep.subr.bf16.mxu0 0
  %2372 = vmatpush1.bf16.msra.mxu0 %v1964
  %2373 = vmatprep.subr.bf16.mxu0 0
  %2374 = vmatpush1.bf16.msra.mxu0 %v1965
  %2375 = vmatprep.subr.bf16.mxu0 0
  %2376 = vmatpush1.bf16.msra.mxu0 %v1966
  %2377 = vmatprep.subr.bf16.mxu0 0
  %2378 = vmatpush1.bf16.msra.mxu0 %v1967
  %2379 = vmatprep.subr.bf16.mxu0 0
  %2380 = vmatpush1.bf16.msra.mxu0 %v1968
  %2381 = vmatprep.subr.bf16.mxu0 0
  %2382 = vmatpush1.bf16.msra.mxu0 %v1969
  %2383 = vmatprep.subr.bf16.mxu0 0
  %2384 = vmatpush1.bf16.msra.mxu0 %v1970
  %2385 = vmatprep.subr.bf16.mxu0 0
  %2386 = vmatpush1.bf16.msra.mxu0 %v1971
  %2387 = vmatprep.subr.bf16.mxu0 0
  %2388 = vmatpush1.bf16.msra.mxu0 %v1972
  %2389 = vmatprep.subr.bf16.mxu0 0
  %2390 = vmatpush1.bf16.msra.mxu0 %v1973
  %2391 = vmatprep.mubr.bf16.mxu0 %v1177
  %2392 = vmatmul.mubr.bf16.gmra.mrb[0].mxu0 %v1176
  %v2393 = vpop.f32.mrb[0].mxu0
  %v2394 = vadd.f32 %v2105, %v2393
  %v2395 = vpop.f32.mrb[0].mxu0
  %v2396 = vpop.f32.mrb[0].mxu0
  %v2397 = vadd.f32 %v2108, %v2396
  %v2398 = vpop.f32.mrb[0].mxu0
  %2399 = vmatprep.mubr.bf16.mxu0 %v1185
  %2400 = vmatmul.mubr.bf16.gmra.mrb[0].mxu0 %v1184
  %v2401 = vpop.f32.mrb[0].mxu0
  %v2402 = vadd.f32 %v2113, %v2401
  %v2403 = vpop.f32.mrb[0].mxu0
  %v2404 = vpop.f32.mrb[0].mxu0
  %v2405 = vadd.f32 %v2116, %v2404
  %v2406 = vpop.f32.mrb[0].mxu0
  %2407 = vmatprep.mubr.bf16.mxu0 %v1193
  %2408 = vmatmul.mubr.bf16.gmra.mrb[0].mxu0 %v1192
  %v2409 = vpop.f32.mrb[0].mxu0
  %v2410 = vadd.f32 %v2121, %v2409
  %v2411 = vpop.f32.mrb[0].mxu0
  %v2412 = vpop.f32.mrb[0].mxu0
  %v2413 = vadd.f32 %v2124, %v2412
  %v2414 = vpop.f32.mrb[0].mxu0
  %2415 = vmatprep.mubr.bf16.mxu0 %v1201
  %2416 = vmatmul.mubr.bf16.gmra.mrb[0].mxu0 %v1200
  %v2417 = vpop.f32.mrb[0].mxu0
  %v2418 = vadd.f32 %v2129, %v2417
  %v2419 = vpop.f32.mrb[0].mxu0
  %v2420 = vpop.f32.mrb[0].mxu0
  %v2421 = vadd.f32 %v2132, %v2420
  %v2422 = vpop.f32.mrb[0].mxu0
  %2423 = vmatprep.mubr.bf16.mxu0 %v1209
  %2424 = vmatmul.mubr.bf16.gmra.mrb[0].mxu0 %v1208
  %v2425 = vpop.f32.mrb[0].mxu0
  %v2426 = vadd.f32 %v2137, %v2425
  %v2427 = vpop.f32.mrb[0].mxu0
  %v2428 = vpop.f32.mrb[0].mxu0
  %v2429 = vadd.f32 %v2140, %v2428
  %v2430 = vpop.f32.mrb[0].mxu0
  %2431 = vmatprep.mubr.bf16.mxu0 %v1217
  %2432 = vmatmul.mubr.bf16.gmra.mrb[0].mxu0 %v1216
  %v2433 = vpop.f32.mrb[0].mxu0
  %v2434 = vadd.f32 %v2145, %v2433
  %v2435 = vpop.f32.mrb[0].mxu0
  %v2436 = vpop.f32.mrb[0].mxu0
  %v2437 = vadd.f32 %v2148, %v2436
  %v2438 = vpop.f32.mrb[0].mxu0
  %2439 = vmatprep.mubr.bf16.mxu0 %v1225
  %2440 = vmatmul.mubr.bf16.gmra.mrb[0].mxu0 %v1224
  %v2441 = vpop.f32.mrb[0].mxu0
  %v2442 = vadd.f32 %v2153, %v2441
  %v2443 = vpop.f32.mrb[0].mxu0
  %v2444 = vpop.f32.mrb[0].mxu0
  %v2445 = vadd.f32 %v2156, %v2444
  %v2446 = vpop.f32.mrb[0].mxu0
  %2447 = vmatprep.mubr.bf16.mxu0 %v1233
  %2448 = vmatmul.mubr.bf16.gmra.mrb[0].mxu0 %v1232
  %v2449 = vpop.f32.mrb[0].mxu0
  %v2450 = vadd.f32 %v2161, %v2449
  %v2451 = vpop.f32.mrb[0].mxu0
  %v2452 = vpop.f32.mrb[0].mxu0
  %v2453 = vadd.f32 %v2164, %v2452
  %v2454 = vpop.f32.mrb[0].mxu0
  %2455 = vmatprep.mubr.bf16.mxu0 %v1241
  %2456 = vmatmul.mubr.bf16.gmra.mrb[0].mxu0 %v1240
  %v2457 = vpop.f32.mrb[0].mxu0
  %v2458 = vadd.f32 %v2169, %v2457
  %v2459 = vpop.f32.mrb[0].mxu0
  %v2460 = vpop.f32.mrb[0].mxu0
  %v2461 = vadd.f32 %v2172, %v2460
  %v2462 = vpop.f32.mrb[0].mxu0
  %2463 = vmatprep.mubr.bf16.mxu0 %v1249
  %2464 = vmatmul.mubr.bf16.gmra.mrb[0].mxu0 %v1248
  %v2465 = vpop.f32.mrb[0].mxu0
  %v2466 = vadd.f32 %v2177, %v2465
  %v2467 = vpop.f32.mrb[0].mxu0
  %v2468 = vpop.f32.mrb[0].mxu0
  %v2469 = vadd.f32 %v2180, %v2468
  %v2470 = vpop.f32.mrb[0].mxu0
  %2471 = vmatprep.mubr.bf16.mxu0 %v1257
  %2472 = vmatmul.mubr.bf16.gmra.mrb[0].mxu0 %v1256
  %v2473 = vpop.f32.mrb[0].mxu0
  %v2474 = vadd.f32 %v2185, %v2473
  %v2475 = vpop.f32.mrb[0].mxu0
  %v2476 = vpop.f32.mrb[0].mxu0
  %v2477 = vadd.f32 %v2188, %v2476
  %v2478 = vpop.f32.mrb[0].mxu0
  %2479 = vmatprep.mubr.bf16.mxu0 %v1265
  %2480 = vmatmul.mubr.bf16.gmra.mrb[0].mxu0 %v1264
  %v2481 = vpop.f32.mrb[0].mxu0
  %v2482 = vadd.f32 %v2193, %v2481
  %v2483 = vpop.f32.mrb[0].mxu0
  %v2484 = vpop.f32.mrb[0].mxu0
  %v2485 = vadd.f32 %v2196, %v2484
  %v2486 = vpop.f32.mrb[0].mxu0
  %2487 = vmatprep.mubr.bf16.mxu0 %v1273
  %2488 = vmatmul.mubr.bf16.gmra.mrb[0].mxu0 %v1272
  %v2489 = vpop.f32.mrb[0].mxu0
  %v2490 = vadd.f32 %v2201, %v2489
  %v2491 = vpop.f32.mrb[0].mxu0
  %v2492 = vpop.f32.mrb[0].mxu0
  %v2493 = vadd.f32 %v2204, %v2492
  %v2494 = vpop.f32.mrb[0].mxu0
  %2495 = vmatprep.mubr.bf16.mxu0 %v1281
  %2496 = vmatmul.mubr.bf16.gmra.mrb[0].mxu0 %v1280
  %v2497 = vpop.f32.mrb[0].mxu0
  %v2498 = vadd.f32 %v2209, %v2497
  %v2499 = vpop.f32.mrb[0].mxu0
  %v2500 = vpop.f32.mrb[0].mxu0
  %v2501 = vadd.f32 %v2212, %v2500
  %v2502 = vpop.f32.mrb[0].mxu0
  %2503 = vmatprep.mubr.bf16.mxu0 %v1289
  %2504 = vmatmul.mubr.bf16.gmra.mrb[0].mxu0 %v1288
  %v2505 = vpop.f32.mrb[0].mxu0
  %v2506 = vadd.f32 %v2217, %v2505
  %v2507 = vpop.f32.mrb[0].mxu0
  %v2508 = vpop.f32.mrb[0].mxu0
  %v2509 = vadd.f32 %v2220, %v2508
  %v2510 = vpop.f32.mrb[0].mxu0
  %2511 = vmatprep.mubr.bf16.mxu0 %v1297
  %2512 = vmatmul.mubr.bf16.gmra.mrb[0].mxu0 %v1296
  %v2513 = vpop.f32.mrb[0].mxu0
  %v2514 = vadd.f32 %v2225, %v2513
  %v2515 = vpop.f32.mrb[0].mxu0
  %v2516 = vpop.f32.mrb[0].mxu0
  %v2517 = vadd.f32 %v2228, %v2516
  %v2518 = vpop.f32.mrb[0].mxu0
  %2519 = vmatprep.mubr.bf16.mxu0 %v1305
  %2520 = vmatmul.mubr.bf16.gmra.mrb[0].mxu0 %v1304
  %v2521 = vpop.f32.mrb[0].mxu0
  %v2522 = vadd.f32 %v2233, %v2521
  %v2523 = vpop.f32.mrb[0].mxu0
  %v2524 = vpop.f32.mrb[0].mxu0
  %v2525 = vadd.f32 %v2236, %v2524
  %v2526 = vpop.f32.mrb[0].mxu0
  %2527 = vmatprep.mubr.bf16.mxu0 %v1313
  %2528 = vmatmul.mubr.bf16.gmra.mrb[0].mxu0 %v1312
  %v2529 = vpop.f32.mrb[0].mxu0
  %v2530 = vadd.f32 %v2241, %v2529
  %v2531 = vpop.f32.mrb[0].mxu0
  %v2532 = vpop.f32.mrb[0].mxu0
  %v2533 = vadd.f32 %v2244, %v2532
  %v2534 = vpop.f32.mrb[0].mxu0
  %2535 = vmatprep.mubr.bf16.mxu0 %v1321
  %2536 = vmatmul.mubr.bf16.gmra.mrb[0].mxu0 %v1320
  %v2537 = vpop.f32.mrb[0].mxu0
  %v2538 = vadd.f32 %v2249, %v2537
  %v2539 = vpop.f32.mrb[0].mxu0
  %v2540 = vpop.f32.mrb[0].mxu0
  %v2541 = vadd.f32 %v2252, %v2540
  %v2542 = vpop.f32.mrb[0].mxu0
  %2543 = vmatprep.mubr.bf16.mxu0 %v1329
  %2544 = vmatmul.mubr.bf16.gmra.mrb[0].mxu0 %v1328
  %v2545 = vpop.f32.mrb[0].mxu0
  %v2546 = vadd.f32 %v2257, %v2545
  %v2547 = vpop.f32.mrb[0].mxu0
  %v2548 = vpop.f32.mrb[0].mxu0
  %v2549 = vadd.f32 %v2260, %v2548
  %v2550 = vpop.f32.mrb[0].mxu0
  %2551 = vmatprep.mubr.bf16.mxu0 %v1337
  %2552 = vmatmul.mubr.bf16.gmra.mrb[0].mxu0 %v1336
  %v2553 = vpop.f32.mrb[0].mxu0
  %v2554 = vadd.f32 %v2265, %v2553
  %v2555 = vpop.f32.mrb[0].mxu0
  %v2556 = vpop.f32.mrb[0].mxu0
  %v2557 = vadd.f32 %v2268, %v2556
  %v2558 = vpop.f32.mrb[0].mxu0
  %2559 = vmatprep.mubr.bf16.mxu0 %v1345
  %2560 = vmatmul.mubr.bf16.gmra.mrb[0].mxu0 %v1344
  %v2561 = vpop.f32.mrb[0].mxu0
  %v2562 = vadd.f32 %v2273, %v2561
  %v2563 = vpop.f32.mrb[0].mxu0
  %v2564 = vpop.f32.mrb[0].mxu0
  %v2565 = vadd.f32 %v2276, %v2564
  %v2566 = vpop.f32.mrb[0].mxu0
  %2567 = vmatprep.mubr.bf16.mxu0 %v1353
  %2568 = vmatmul.mubr.bf16.gmra.mrb[0].mxu0 %v1352
  %v2569 = vpop.f32.mrb[0].mxu0
  %v2570 = vadd.f32 %v2281, %v2569
  %v2571 = vpop.f32.mrb[0].mxu0
  %v2572 = vpop.f32.mrb[0].mxu0
  %v2573 = vadd.f32 %v2284, %v2572
  %v2574 = vpop.f32.mrb[0].mxu0
  %2575 = vmatprep.mubr.bf16.mxu0 %v1361
  %2576 = vmatmul.mubr.bf16.gmra.mrb[0].mxu0 %v1360
  %v2577 = vpop.f32.mrb[0].mxu0
  %v2578 = vadd.f32 %v2289, %v2577
  %v2579 = vpop.f32.mrb[0].mxu0
  %v2580 = vpop.f32.mrb[0].mxu0
  %v2581 = vadd.f32 %v2292, %v2580
  %v2582 = vpop.f32.mrb[0].mxu0
  %2583 = vmatprep.mubr.bf16.mxu0 %v1369
  %2584 = vmatmul.mubr.bf16.gmra.mrb[0].mxu0 %v1368
  %v2585 = vpop.f32.mrb[0].mxu0
  %v2586 = vadd.f32 %v2297, %v2585
  %v2587 = vpop.f32.mrb[0].mxu0
  %v2588 = vpop.f32.mrb[0].mxu0
  %v2589 = vadd.f32 %v2300, %v2588
  %v2590 = vpop.f32.mrb[0].mxu0
  %2591 = vmatprep.mubr.bf16.mxu0 %v1377
  %2592 = vmatmul.mubr.bf16.gmra.mrb[0].mxu0 %v1376
  %v2593 = vpop.f32.mrb[0].mxu0
  %v2594 = vadd.f32 %v2305, %v2593
  %v2595 = vpop.f32.mrb[0].mxu0
  %v2596 = vpop.f32.mrb[0].mxu0
  %v2597 = vadd.f32 %v2308, %v2596
  %v2598 = vpop.f32.mrb[0].mxu0
  %2599 = vmatprep.mubr.bf16.mxu0 %v1385
  %2600 = vmatmul.mubr.bf16.gmra.mrb[0].mxu0 %v1384
  %v2601 = vpop.f32.mrb[0].mxu0
  %v2602 = vadd.f32 %v2313, %v2601
  %v2603 = vpop.f32.mrb[0].mxu0
  %v2604 = vpop.f32.mrb[0].mxu0
  %v2605 = vadd.f32 %v2316, %v2604
  %v2606 = vpop.f32.mrb[0].mxu0
  %2607 = vmatprep.mubr.bf16.mxu0 %v1393
  %2608 = vmatmul.mubr.bf16.gmra.mrb[0].mxu0 %v1392
  %v2609 = vpop.f32.mrb[0].mxu0
  %v2610 = vadd.f32 %v2321, %v2609
  %v2611 = vpop.f32.mrb[0].mxu0
  %v2612 = vpop.f32.mrb[0].mxu0
  %v2613 = vadd.f32 %v2324, %v2612
  %v2614 = vpop.f32.mrb[0].mxu0
  %2615 = vmatprep.mubr.bf16.mxu0 %v1401
  %2616 = vmatmul.mubr.bf16.gmra.mrb[0].mxu0 %v1400
  %v2617 = vpop.f32.mrb[0].mxu0
  %v2618 = vadd.f32 %v2329, %v2617
  %v2619 = vpop.f32.mrb[0].mxu0
  %v2620 = vpop.f32.mrb[0].mxu0
  %v2621 = vadd.f32 %v2332, %v2620
  %v2622 = vpop.f32.mrb[0].mxu0
  %2623 = vmatprep.mubr.bf16.mxu0 %v1409
  %2624 = vmatmul.mubr.bf16.gmra.mrb[0].mxu0 %v1408
  %v2625 = vpop.f32.mrb[0].mxu0
  %v2626 = vadd.f32 %v2337, %v2625
  %v2627 = vpop.f32.mrb[0].mxu0
  %v2628 = vpop.f32.mrb[0].mxu0
  %v2629 = vadd.f32 %v2340, %v2628
  %v2630 = vpop.f32.mrb[0].mxu0
  %2631 = vmatprep.mubr.bf16.mxu0 %v1417
  %2632 = vmatmul.mubr.bf16.gmra.mrb[0].mxu0 %v1416
  %v2633 = vpop.f32.mrb[0].mxu0
  %v2634 = vadd.f32 %v2345, %v2633
  %v2635 = vpop.f32.mrb[0].mxu0
  %v2636 = vpop.f32.mrb[0].mxu0
  %v2637 = vadd.f32 %v2348, %v2636
  %v2638 = vpop.f32.mrb[0].mxu0
  %2639 = vmatprep.mubr.bf16.mxu0 %v1425
  %2640 = vmatmul.mubr.bf16.gmra.mrb[0].mxu0 %v1424
  %v2641 = vpop.f32.mrb[0].mxu0
  %v2642 = vadd.f32 %v2353, %v2641
  %v2643 = vpop.f32.mrb[0].mxu0
  %v2644 = vpop.f32.mrb[0].mxu0
  %v2645 = vadd.f32 %v2356, %v2644
  %v2646 = vpop.f32.mrb[0].mxu0
  %2647 = vdwg.mxu0
  %2648 = vmatprep.subr.bf16.mxu0 0
  %2649 = vmatpush1.bf16.msra.mxu0 %v1974
  %2650 = vmatprep.subr.bf16.mxu0 0
  %2651 = vmatpush1.bf16.msra.mxu0 %v1975
  %2652 = vmatprep.subr.bf16.mxu0 0
  %2653 = vmatpush1.bf16.msra.mxu0 %v1976
  %2654 = vmatprep.subr.bf16.mxu0 0
  %2655 = vmatpush1.bf16.msra.mxu0 %v1977
  %2656 = vmatprep.subr.bf16.mxu0 0
  %2657 = vmatpush1.bf16.msra.mxu0 %v1978
  %2658 = vmatprep.subr.bf16.mxu0 0
  %2659 = vmatpush1.bf16.msra.mxu0 %v1979
  %2660 = vmatprep.subr.bf16.mxu0 0
  %2661 = vmatpush1.bf16.msra.mxu0 %v1980
  %2662 = vmatprep.subr.bf16.mxu0 0
  %2663 = vmatpush1.bf16.msra.mxu0 %v1981
  %2664 = vmatprep.subr.bf16.mxu0 0
  %2665 = vmatpush1.bf16.msra.mxu0 %v1982
  %2666 = vmatprep.subr.bf16.mxu0 0
  %2667 = vmatpush1.bf16.msra.mxu0 %v1983
  %2668 = vmatprep.subr.bf16.mxu0 0
  %2669 = vmatpush1.bf16.msra.mxu0 %v1984
  %2670 = vmatprep.subr.bf16.mxu0 0
  %2671 = vmatpush1.bf16.msra.mxu0 %v1985
  %2672 = vmatprep.subr.bf16.mxu0 0
  %2673 = vmatpush1.bf16.msra.mxu0 %v1986
  %2674 = vmatprep.subr.bf16.mxu0 0
  %2675 = vmatpush1.bf16.msra.mxu0 %v1987
  %2676 = vmatprep.subr.bf16.mxu0 0
  %2677 = vmatpush1.bf16.msra.mxu0 %v1988
  %2678 = vmatprep.subr.bf16.mxu0 0
  %2679 = vmatpush1.bf16.msra.mxu0 %v1989
  %2680 = vmatprep.mubr.bf16.mxu0 %v1179
  %2681 = vmatmul.mubr.bf16.gmra.mrb[0].mxu0 %v1178
  %v2682 = vpop.f32.mrb[0].mxu0
  %v2683 = vadd.f32 %v2394, %v2682
  %v2684 = vpop.f32.mrb[0].mxu0
  %v2685 = vpop.f32.mrb[0].mxu0
  %v2686 = vadd.f32 %v2397, %v2685
  %v2687 = vpop.f32.mrb[0].mxu0
  %2688 = vmatprep.mubr.bf16.mxu0 %v1187
  %2689 = vmatmul.mubr.bf16.gmra.mrb[0].mxu0 %v1186
  %v2690 = vpop.f32.mrb[0].mxu0
  %v2691 = vadd.f32 %v2402, %v2690
  %v2692 = vpop.f32.mrb[0].mxu0
  %v2693 = vpop.f32.mrb[0].mxu0
  %v2694 = vadd.f32 %v2405, %v2693
  %v2695 = vpop.f32.mrb[0].mxu0
  %2696 = vmatprep.mubr.bf16.mxu0 %v1195
  %2697 = vmatmul.mubr.bf16.gmra.mrb[0].mxu0 %v1194
  %v2698 = vpop.f32.mrb[0].mxu0
  %v2699 = vadd.f32 %v2410, %v2698
  %v2700 = vpop.f32.mrb[0].mxu0
  %v2701 = vpop.f32.mrb[0].mxu0
  %v2702 = vadd.f32 %v2413, %v2701
  %v2703 = vpop.f32.mrb[0].mxu0
  %2704 = vmatprep.mubr.bf16.mxu0 %v1203
  %2705 = vmatmul.mubr.bf16.gmra.mrb[0].mxu0 %v1202
  %v2706 = vpop.f32.mrb[0].mxu0
  %v2707 = vadd.f32 %v2418, %v2706
  %v2708 = vpop.f32.mrb[0].mxu0
  %v2709 = vpop.f32.mrb[0].mxu0
  %v2710 = vadd.f32 %v2421, %v2709
  %v2711 = vpop.f32.mrb[0].mxu0
  %2712 = vmatprep.mubr.bf16.mxu0 %v1211
  %2713 = vmatmul.mubr.bf16.gmra.mrb[0].mxu0 %v1210
  %v2714 = vpop.f32.mrb[0].mxu0
  %v2715 = vadd.f32 %v2426, %v2714
  %v2716 = vpop.f32.mrb[0].mxu0
  %v2717 = vpop.f32.mrb[0].mxu0
  %v2718 = vadd.f32 %v2429, %v2717
  %v2719 = vpop.f32.mrb[0].mxu0
  %2720 = vmatprep.mubr.bf16.mxu0 %v1219
  %2721 = vmatmul.mubr.bf16.gmra.mrb[0].mxu0 %v1218
  %v2722 = vpop.f32.mrb[0].mxu0
  %v2723 = vadd.f32 %v2434, %v2722
  %v2724 = vpop.f32.mrb[0].mxu0
  %v2725 = vpop.f32.mrb[0].mxu0
  %v2726 = vadd.f32 %v2437, %v2725
  %v2727 = vpop.f32.mrb[0].mxu0
  %2728 = vmatprep.mubr.bf16.mxu0 %v1227
  %2729 = vmatmul.mubr.bf16.gmra.mrb[0].mxu0 %v1226
  %v2730 = vpop.f32.mrb[0].mxu0
  %v2731 = vadd.f32 %v2442, %v2730
  %v2732 = vpop.f32.mrb[0].mxu0
  %v2733 = vpop.f32.mrb[0].mxu0
  %v2734 = vadd.f32 %v2445, %v2733
  %v2735 = vpop.f32.mrb[0].mxu0
  %2736 = vmatprep.mubr.bf16.mxu0 %v1235
  %2737 = vmatmul.mubr.bf16.gmra.mrb[0].mxu0 %v1234
  %v2738 = vpop.f32.mrb[0].mxu0
  %v2739 = vadd.f32 %v2450, %v2738
  %v2740 = vpop.f32.mrb[0].mxu0
  %v2741 = vpop.f32.mrb[0].mxu0
  %v2742 = vadd.f32 %v2453, %v2741
  %v2743 = vpop.f32.mrb[0].mxu0
  %2744 = vmatprep.mubr.bf16.mxu0 %v1243
  %2745 = vmatmul.mubr.bf16.gmra.mrb[0].mxu0 %v1242
  %v2746 = vpop.f32.mrb[0].mxu0
  %v2747 = vadd.f32 %v2458, %v2746
  %v2748 = vpop.f32.mrb[0].mxu0
  %v2749 = vpop.f32.mrb[0].mxu0
  %v2750 = vadd.f32 %v2461, %v2749
  %v2751 = vpop.f32.mrb[0].mxu0
  %2752 = vmatprep.mubr.bf16.mxu0 %v1251
  %2753 = vmatmul.mubr.bf16.gmra.mrb[0].mxu0 %v1250
  %v2754 = vpop.f32.mrb[0].mxu0
  %v2755 = vadd.f32 %v2466, %v2754
  %v2756 = vpop.f32.mrb[0].mxu0
  %v2757 = vpop.f32.mrb[0].mxu0
  %v2758 = vadd.f32 %v2469, %v2757
  %v2759 = vpop.f32.mrb[0].mxu0
  %2760 = vmatprep.mubr.bf16.mxu0 %v1259
  %2761 = vmatmul.mubr.bf16.gmra.mrb[0].mxu0 %v1258
  %v2762 = vpop.f32.mrb[0].mxu0
  %v2763 = vadd.f32 %v2474, %v2762
  %v2764 = vpop.f32.mrb[0].mxu0
  %v2765 = vpop.f32.mrb[0].mxu0
  %v2766 = vadd.f32 %v2477, %v2765
  %v2767 = vpop.f32.mrb[0].mxu0
  %2768 = vmatprep.mubr.bf16.mxu0 %v1267
  %2769 = vmatmul.mubr.bf16.gmra.mrb[0].mxu0 %v1266
  %v2770 = vpop.f32.mrb[0].mxu0
  %v2771 = vadd.f32 %v2482, %v2770
  %v2772 = vpop.f32.mrb[0].mxu0
  %v2773 = vpop.f32.mrb[0].mxu0
  %v2774 = vadd.f32 %v2485, %v2773
  %v2775 = vpop.f32.mrb[0].mxu0
  %2776 = vmatprep.mubr.bf16.mxu0 %v1275
  %2777 = vmatmul.mubr.bf16.gmra.mrb[0].mxu0 %v1274
  %v2778 = vpop.f32.mrb[0].mxu0
  %v2779 = vadd.f32 %v2490, %v2778
  %v2780 = vpop.f32.mrb[0].mxu0
  %v2781 = vpop.f32.mrb[0].mxu0
  %v2782 = vadd.f32 %v2493, %v2781
  %v2783 = vpop.f32.mrb[0].mxu0
  %2784 = vmatprep.mubr.bf16.mxu0 %v1283
  %2785 = vmatmul.mubr.bf16.gmra.mrb[0].mxu0 %v1282
  %v2786 = vpop.f32.mrb[0].mxu0
  %v2787 = vadd.f32 %v2498, %v2786
  %v2788 = vpop.f32.mrb[0].mxu0
  %v2789 = vpop.f32.mrb[0].mxu0
  %v2790 = vadd.f32 %v2501, %v2789
  %v2791 = vpop.f32.mrb[0].mxu0
  %2792 = vmatprep.mubr.bf16.mxu0 %v1291
  %2793 = vmatmul.mubr.bf16.gmra.mrb[0].mxu0 %v1290
  %v2794 = vpop.f32.mrb[0].mxu0
  %v2795 = vadd.f32 %v2506, %v2794
  %v2796 = vpop.f32.mrb[0].mxu0
  %v2797 = vpop.f32.mrb[0].mxu0
  %v2798 = vadd.f32 %v2509, %v2797
  %v2799 = vpop.f32.mrb[0].mxu0
  %2800 = vmatprep.mubr.bf16.mxu0 %v1299
  %2801 = vmatmul.mubr.bf16.gmra.mrb[0].mxu0 %v1298
  %v2802 = vpop.f32.mrb[0].mxu0
  %v2803 = vadd.f32 %v2514, %v2802
  %v2804 = vpop.f32.mrb[0].mxu0
  %v2805 = vpop.f32.mrb[0].mxu0
  %v2806 = vadd.f32 %v2517, %v2805
  %v2807 = vpop.f32.mrb[0].mxu0
  %2808 = vmatprep.mubr.bf16.mxu0 %v1307
  %2809 = vmatmul.mubr.bf16.gmra.mrb[0].mxu0 %v1306
  %v2810 = vpop.f32.mrb[0].mxu0
  %v2811 = vadd.f32 %v2522, %v2810
  %v2812 = vpop.f32.mrb[0].mxu0
  %v2813 = vpop.f32.mrb[0].mxu0
  %v2814 = vadd.f32 %v2525, %v2813
  %v2815 = vpop.f32.mrb[0].mxu0
  %2816 = vmatprep.mubr.bf16.mxu0 %v1315
  %2817 = vmatmul.mubr.bf16.gmra.mrb[0].mxu0 %v1314
  %v2818 = vpop.f32.mrb[0].mxu0
  %v2819 = vadd.f32 %v2530, %v2818
  %v2820 = vpop.f32.mrb[0].mxu0
  %v2821 = vpop.f32.mrb[0].mxu0
  %v2822 = vadd.f32 %v2533, %v2821
  %v2823 = vpop.f32.mrb[0].mxu0
  %2824 = vmatprep.mubr.bf16.mxu0 %v1323
  %2825 = vmatmul.mubr.bf16.gmra.mrb[0].mxu0 %v1322
  %v2826 = vpop.f32.mrb[0].mxu0
  %v2827 = vadd.f32 %v2538, %v2826
  %v2828 = vpop.f32.mrb[0].mxu0
  %v2829 = vpop.f32.mrb[0].mxu0
  %v2830 = vadd.f32 %v2541, %v2829
  %v2831 = vpop.f32.mrb[0].mxu0
  %2832 = vmatprep.mubr.bf16.mxu0 %v1331
  %2833 = vmatmul.mubr.bf16.gmra.mrb[0].mxu0 %v1330
  %v2834 = vpop.f32.mrb[0].mxu0
  %v2835 = vadd.f32 %v2546, %v2834
  %v2836 = vpop.f32.mrb[0].mxu0
  %v2837 = vpop.f32.mrb[0].mxu0
  %v2838 = vadd.f32 %v2549, %v2837
  %v2839 = vpop.f32.mrb[0].mxu0
  %2840 = vmatprep.mubr.bf16.mxu0 %v1339
  %2841 = vmatmul.mubr.bf16.gmra.mrb[0].mxu0 %v1338
  %v2842 = vpop.f32.mrb[0].mxu0
  %v2843 = vadd.f32 %v2554, %v2842
  %v2844 = vpop.f32.mrb[0].mxu0
  %v2845 = vpop.f32.mrb[0].mxu0
  %v2846 = vadd.f32 %v2557, %v2845
  %v2847 = vpop.f32.mrb[0].mxu0
  %2848 = vmatprep.mubr.bf16.mxu0 %v1347
  %2849 = vmatmul.mubr.bf16.gmra.mrb[0].mxu0 %v1346
  %v2850 = vpop.f32.mrb[0].mxu0
  %v2851 = vadd.f32 %v2562, %v2850
  %v2852 = vpop.f32.mrb[0].mxu0
  %v2853 = vpop.f32.mrb[0].mxu0
  %v2854 = vadd.f32 %v2565, %v2853
  %v2855 = vpop.f32.mrb[0].mxu0
  %2856 = vmatprep.mubr.bf16.mxu0 %v1355
  %2857 = vmatmul.mubr.bf16.gmra.mrb[0].mxu0 %v1354
  %v2858 = vpop.f32.mrb[0].mxu0
  %v2859 = vadd.f32 %v2570, %v2858
  %v2860 = vpop.f32.mrb[0].mxu0
  %v2861 = vpop.f32.mrb[0].mxu0
  %v2862 = vadd.f32 %v2573, %v2861
  %v2863 = vpop.f32.mrb[0].mxu0
  %2864 = vmatprep.mubr.bf16.mxu0 %v1363
  %2865 = vmatmul.mubr.bf16.gmra.mrb[0].mxu0 %v1362
  %v2866 = vpop.f32.mrb[0].mxu0
  %v2867 = vadd.f32 %v2578, %v2866
  %v2868 = vpop.f32.mrb[0].mxu0
  %v2869 = vpop.f32.mrb[0].mxu0
  %v2870 = vadd.f32 %v2581, %v2869
  %v2871 = vpop.f32.mrb[0].mxu0
  %2872 = vmatprep.mubr.bf16.mxu0 %v1371
  %2873 = vmatmul.mubr.bf16.gmra.mrb[0].mxu0 %v1370
  %v2874 = vpop.f32.mrb[0].mxu0
  %v2875 = vadd.f32 %v2586, %v2874
  %v2876 = vpop.f32.mrb[0].mxu0
  %v2877 = vpop.f32.mrb[0].mxu0
  %v2878 = vadd.f32 %v2589, %v2877
  %v2879 = vpop.f32.mrb[0].mxu0
  %2880 = vmatprep.mubr.bf16.mxu0 %v1379
  %2881 = vmatmul.mubr.bf16.gmra.mrb[0].mxu0 %v1378
  %v2882 = vpop.f32.mrb[0].mxu0
  %v2883 = vadd.f32 %v2594, %v2882
  %v2884 = vpop.f32.mrb[0].mxu0
  %v2885 = vpop.f32.mrb[0].mxu0
  %v2886 = vadd.f32 %v2597, %v2885
  %v2887 = vpop.f32.mrb[0].mxu0
  %2888 = vmatprep.mubr.bf16.mxu0 %v1387
  %2889 = vmatmul.mubr.bf16.gmra.mrb[0].mxu0 %v1386
  %v2890 = vpop.f32.mrb[0].mxu0
  %v2891 = vadd.f32 %v2602, %v2890
  %v2892 = vpop.f32.mrb[0].mxu0
  %v2893 = vpop.f32.mrb[0].mxu0
  %v2894 = vadd.f32 %v2605, %v2893
  %v2895 = vpop.f32.mrb[0].mxu0
  %2896 = vmatprep.mubr.bf16.mxu0 %v1395
  %2897 = vmatmul.mubr.bf16.gmra.mrb[0].mxu0 %v1394
  %v2898 = vpop.f32.mrb[0].mxu0
  %v2899 = vadd.f32 %v2610, %v2898
  %v2900 = vpop.f32.mrb[0].mxu0
  %v2901 = vpop.f32.mrb[0].mxu0
  %v2902 = vadd.f32 %v2613, %v2901
  %v2903 = vpop.f32.mrb[0].mxu0
  %2904 = vmatprep.mubr.bf16.mxu0 %v1403
  %2905 = vmatmul.mubr.bf16.gmra.mrb[0].mxu0 %v1402
  %v2906 = vpop.f32.mrb[0].mxu0
  %v2907 = vadd.f32 %v2618, %v2906
  %v2908 = vpop.f32.mrb[0].mxu0
  %v2909 = vpop.f32.mrb[0].mxu0
  %v2910 = vadd.f32 %v2621, %v2909
  %v2911 = vpop.f32.mrb[0].mxu0
  %2912 = vmatprep.mubr.bf16.mxu0 %v1411
  %2913 = vmatmul.mubr.bf16.gmra.mrb[0].mxu0 %v1410
  %v2914 = vpop.f32.mrb[0].mxu0
  %v2915 = vadd.f32 %v2626, %v2914
  %v2916 = vpop.f32.mrb[0].mxu0
  %v2917 = vpop.f32.mrb[0].mxu0
  %v2918 = vadd.f32 %v2629, %v2917
  %v2919 = vpop.f32.mrb[0].mxu0
  %2920 = vmatprep.mubr.bf16.mxu0 %v1419
  %2921 = vmatmul.mubr.bf16.gmra.mrb[0].mxu0 %v1418
  %v2922 = vpop.f32.mrb[0].mxu0
  %v2923 = vadd.f32 %v2634, %v2922
  %v2924 = vpop.f32.mrb[0].mxu0
  %v2925 = vpop.f32.mrb[0].mxu0
  %v2926 = vadd.f32 %v2637, %v2925
  %v2927 = vpop.f32.mrb[0].mxu0
  %2928 = vmatprep.mubr.bf16.mxu0 %v1427
  %2929 = vmatmul.mubr.bf16.gmra.mrb[0].mxu0 %v1426
  %v2930 = vpop.f32.mrb[0].mxu0
  %v2931 = vadd.f32 %v2642, %v2930
  %v2932 = vpop.f32.mrb[0].mxu0
  %v2933 = vpop.f32.mrb[0].mxu0
  %v2934 = vadd.f32 %v2645, %v2933
  %v2935 = vpop.f32.mrb[0].mxu0
  %2936 = vdwg.mxu0
  %2937 = vmatprep.subr.bf16.mxu0 0
  %2938 = vmatpush1.bf16.msra.mxu0 %v1990
  %2939 = vmatprep.subr.bf16.mxu0 0
  %2940 = vmatpush1.bf16.msra.mxu0 %v1991
  %2941 = vmatprep.subr.bf16.mxu0 0
  %2942 = vmatpush1.bf16.msra.mxu0 %v1992
  %2943 = vmatprep.subr.bf16.mxu0 0
  %2944 = vmatpush1.bf16.msra.mxu0 %v1993
  %2945 = vmatprep.subr.bf16.mxu0 0
  %2946 = vmatpush1.bf16.msra.mxu0 %v1994
  %2947 = vmatprep.subr.bf16.mxu0 0
  %2948 = vmatpush1.bf16.msra.mxu0 %v1995
  %2949 = vmatprep.subr.bf16.mxu0 0
  %2950 = vmatpush1.bf16.msra.mxu0 %v1996
  %2951 = vmatprep.subr.bf16.mxu0 0
  %2952 = vmatpush1.bf16.msra.mxu0 %v1997
  %2953 = vmatprep.subr.bf16.mxu0 0
  %2954 = vmatpush1.bf16.msra.mxu0 %v1998
  %2955 = vmatprep.subr.bf16.mxu0 0
  %2956 = vmatpush1.bf16.msra.mxu0 %v1999
  %2957 = vmatprep.subr.bf16.mxu0 0
  %2958 = vmatpush1.bf16.msra.mxu0 %v2000
  %2959 = vmatprep.subr.bf16.mxu0 0
  %2960 = vmatpush1.bf16.msra.mxu0 %v2001
  %2961 = vmatprep.subr.bf16.mxu0 0
  %2962 = vmatpush1.bf16.msra.mxu0 %v2002
  %2963 = vmatprep.subr.bf16.mxu0 0
  %2964 = vmatpush1.bf16.msra.mxu0 %v2003
  %2965 = vmatprep.subr.bf16.mxu0 0
  %2966 = vmatpush1.bf16.msra.mxu0 %v2004
  %2967 = vmatprep.subr.bf16.mxu0 0
  %2968 = vmatpush1.bf16.msra.mxu0 %v2005
  %2969 = vmatprep.mubr.bf16.mxu0 %v1181
  %2970 = vmatmul.mubr.bf16.gmra.mrb[0].mxu0 %v1180
  %v2971 = vpop.f32.mrb[0].mxu0
  %v2972 = vadd.f32 %v2683, %v2971
  %v2973 = vpop.f32.mrb[0].mxu0
  %v2974 = vpop.f32.mrb[0].mxu0
  %v2975 = vadd.f32 %v2686, %v2974
  %v2976 = vpop.f32.mrb[0].mxu0
  %2977 = vmatprep.mubr.bf16.mxu0 %v1189
  %2978 = vmatmul.mubr.bf16.gmra.mrb[0].mxu0 %v1188
  %v2979 = vpop.f32.mrb[0].mxu0
  %v2980 = vadd.f32 %v2691, %v2979
  %v2981 = vpop.f32.mrb[0].mxu0
  %v2982 = vpop.f32.mrb[0].mxu0
  %v2983 = vadd.f32 %v2694, %v2982
  %v2984 = vpop.f32.mrb[0].mxu0
  %2985 = vmatprep.mubr.bf16.mxu0 %v1197
  %2986 = vmatmul.mubr.bf16.gmra.mrb[0].mxu0 %v1196
  %v2987 = vpop.f32.mrb[0].mxu0
  %v2988 = vadd.f32 %v2699, %v2987
  %v2989 = vpop.f32.mrb[0].mxu0
  %v2990 = vpop.f32.mrb[0].mxu0
  %v2991 = vadd.f32 %v2702, %v2990
  %v2992 = vpop.f32.mrb[0].mxu0
  %2993 = vmatprep.mubr.bf16.mxu0 %v1205
  %2994 = vmatmul.mubr.bf16.gmra.mrb[0].mxu0 %v1204
  %v2995 = vpop.f32.mrb[0].mxu0
  %v2996 = vadd.f32 %v2707, %v2995
  %v2997 = vpop.f32.mrb[0].mxu0
  %v2998 = vpop.f32.mrb[0].mxu0
  %v2999 = vadd.f32 %v2710, %v2998
  %v3000 = vpop.f32.mrb[0].mxu0
  %3001 = vmatprep.mubr.bf16.mxu0 %v1213
  %3002 = vmatmul.mubr.bf16.gmra.mrb[0].mxu0 %v1212
  %v3003 = vpop.f32.mrb[0].mxu0
  %v3004 = vadd.f32 %v2715, %v3003
  %v3005 = vpop.f32.mrb[0].mxu0
  %v3006 = vpop.f32.mrb[0].mxu0
  %v3007 = vadd.f32 %v2718, %v3006
  %v3008 = vpop.f32.mrb[0].mxu0
  %3009 = vmatprep.mubr.bf16.mxu0 %v1221
  %3010 = vmatmul.mubr.bf16.gmra.mrb[0].mxu0 %v1220
  %v3011 = vpop.f32.mrb[0].mxu0
  %v3012 = vadd.f32 %v2723, %v3011
  %v3013 = vpop.f32.mrb[0].mxu0
  %v3014 = vpop.f32.mrb[0].mxu0
  %v3015 = vadd.f32 %v2726, %v3014
  %v3016 = vpop.f32.mrb[0].mxu0
  %3017 = vmatprep.mubr.bf16.mxu0 %v1229
  %3018 = vmatmul.mubr.bf16.gmra.mrb[0].mxu0 %v1228
  %v3019 = vpop.f32.mrb[0].mxu0
  %v3020 = vadd.f32 %v2731, %v3019
  %v3021 = vpop.f32.mrb[0].mxu0
  %v3022 = vpop.f32.mrb[0].mxu0
  %v3023 = vadd.f32 %v2734, %v3022
  %v3024 = vpop.f32.mrb[0].mxu0
  %3025 = vmatprep.mubr.bf16.mxu0 %v1237
  %3026 = vmatmul.mubr.bf16.gmra.mrb[0].mxu0 %v1236
  %v3027 = vpop.f32.mrb[0].mxu0
  %v3028 = vadd.f32 %v2739, %v3027
  %v3029 = vpop.f32.mrb[0].mxu0
  %v3030 = vpop.f32.mrb[0].mxu0
  %v3031 = vadd.f32 %v2742, %v3030
  %v3032 = vpop.f32.mrb[0].mxu0
  %3033 = vmatprep.mubr.bf16.mxu0 %v1245
  %3034 = vmatmul.mubr.bf16.gmra.mrb[0].mxu0 %v1244
  %v3035 = vpop.f32.mrb[0].mxu0
  %v3036 = vadd.f32 %v2747, %v3035
  %v3037 = vpop.f32.mrb[0].mxu0
  %v3038 = vpop.f32.mrb[0].mxu0
  %v3039 = vadd.f32 %v2750, %v3038
  %v3040 = vpop.f32.mrb[0].mxu0
  %3041 = vmatprep.mubr.bf16.mxu0 %v1253
  %3042 = vmatmul.mubr.bf16.gmra.mrb[0].mxu0 %v1252
  %v3043 = vpop.f32.mrb[0].mxu0
  %v3044 = vadd.f32 %v2755, %v3043
  %v3045 = vpop.f32.mrb[0].mxu0
  %v3046 = vpop.f32.mrb[0].mxu0
  %v3047 = vadd.f32 %v2758, %v3046
  %v3048 = vpop.f32.mrb[0].mxu0
  %3049 = vmatprep.mubr.bf16.mxu0 %v1261
  %3050 = vmatmul.mubr.bf16.gmra.mrb[0].mxu0 %v1260
  %v3051 = vpop.f32.mrb[0].mxu0
  %v3052 = vadd.f32 %v2763, %v3051
  %v3053 = vpop.f32.mrb[0].mxu0
  %v3054 = vpop.f32.mrb[0].mxu0
  %v3055 = vadd.f32 %v2766, %v3054
  %v3056 = vpop.f32.mrb[0].mxu0
  %3057 = vmatprep.mubr.bf16.mxu0 %v1269
  %3058 = vmatmul.mubr.bf16.gmra.mrb[0].mxu0 %v1268
  %v3059 = vpop.f32.mrb[0].mxu0
  %v3060 = vadd.f32 %v2771, %v3059
  %v3061 = vpop.f32.mrb[0].mxu0
  %v3062 = vpop.f32.mrb[0].mxu0
  %v3063 = vadd.f32 %v2774, %v3062
  %v3064 = vpop.f32.mrb[0].mxu0
  %3065 = vmatprep.mubr.bf16.mxu0 %v1277
  %3066 = vmatmul.mubr.bf16.gmra.mrb[0].mxu0 %v1276
  %v3067 = vpop.f32.mrb[0].mxu0
  %v3068 = vadd.f32 %v2779, %v3067
  %v3069 = vpop.f32.mrb[0].mxu0
  %v3070 = vpop.f32.mrb[0].mxu0
  %v3071 = vadd.f32 %v2782, %v3070
  %v3072 = vpop.f32.mrb[0].mxu0
  %3073 = vmatprep.mubr.bf16.mxu0 %v1285
  %3074 = vmatmul.mubr.bf16.gmra.mrb[0].mxu0 %v1284
  %v3075 = vpop.f32.mrb[0].mxu0
  %v3076 = vadd.f32 %v2787, %v3075
  %v3077 = vpop.f32.mrb[0].mxu0
  %v3078 = vpop.f32.mrb[0].mxu0
  %v3079 = vadd.f32 %v2790, %v3078
  %v3080 = vpop.f32.mrb[0].mxu0
  %3081 = vmatprep.mubr.bf16.mxu0 %v1293
  %3082 = vmatmul.mubr.bf16.gmra.mrb[0].mxu0 %v1292
  %v3083 = vpop.f32.mrb[0].mxu0
  %v3084 = vadd.f32 %v2795, %v3083
  %v3085 = vpop.f32.mrb[0].mxu0
  %v3086 = vpop.f32.mrb[0].mxu0
  %v3087 = vadd.f32 %v2798, %v3086
  %v3088 = vpop.f32.mrb[0].mxu0
  %3089 = vmatprep.mubr.bf16.mxu0 %v1301
  %3090 = vmatmul.mubr.bf16.gmra.mrb[0].mxu0 %v1300
  %v3091 = vpop.f32.mrb[0].mxu0
  %v3092 = vadd.f32 %v2803, %v3091
  %v3093 = vpop.f32.mrb[0].mxu0
  %v3094 = vpop.f32.mrb[0].mxu0
  %v3095 = vadd.f32 %v2806, %v3094
  %v3096 = vpop.f32.mrb[0].mxu0
  %3097 = vmatprep.mubr.bf16.mxu0 %v1309
  %3098 = vmatmul.mubr.bf16.gmra.mrb[0].mxu0 %v1308
  %v3099 = vpop.f32.mrb[0].mxu0
  %v3100 = vadd.f32 %v2811, %v3099
  %v3101 = vpop.f32.mrb[0].mxu0
  %v3102 = vpop.f32.mrb[0].mxu0
  %v3103 = vadd.f32 %v2814, %v3102
  %v3104 = vpop.f32.mrb[0].mxu0
  %3105 = vmatprep.mubr.bf16.mxu0 %v1317
  %3106 = vmatmul.mubr.bf16.gmra.mrb[0].mxu0 %v1316
  %v3107 = vpop.f32.mrb[0].mxu0
  %v3108 = vadd.f32 %v2819, %v3107
  %v3109 = vpop.f32.mrb[0].mxu0
  %v3110 = vpop.f32.mrb[0].mxu0
  %v3111 = vadd.f32 %v2822, %v3110
  %v3112 = vpop.f32.mrb[0].mxu0
  %3113 = vmatprep.mubr.bf16.mxu0 %v1325
  %3114 = vmatmul.mubr.bf16.gmra.mrb[0].mxu0 %v1324
  %v3115 = vpop.f32.mrb[0].mxu0
  %v3116 = vadd.f32 %v2827, %v3115
  %v3117 = vpop.f32.mrb[0].mxu0
  %v3118 = vpop.f32.mrb[0].mxu0
  %v3119 = vadd.f32 %v2830, %v3118
  %v3120 = vpop.f32.mrb[0].mxu0
  %3121 = vmatprep.mubr.bf16.mxu0 %v1333
  %3122 = vmatmul.mubr.bf16.gmra.mrb[0].mxu0 %v1332
  %v3123 = vpop.f32.mrb[0].mxu0
  %v3124 = vadd.f32 %v2835, %v3123
  %v3125 = vpop.f32.mrb[0].mxu0
  %v3126 = vpop.f32.mrb[0].mxu0
  %v3127 = vadd.f32 %v2838, %v3126
  %v3128 = vpop.f32.mrb[0].mxu0
  %3129 = vmatprep.mubr.bf16.mxu0 %v1341
  %3130 = vmatmul.mubr.bf16.gmra.mrb[0].mxu0 %v1340
  %v3131 = vpop.f32.mrb[0].mxu0
  %v3132 = vadd.f32 %v2843, %v3131
  %v3133 = vpop.f32.mrb[0].mxu0
  %v3134 = vpop.f32.mrb[0].mxu0
  %v3135 = vadd.f32 %v2846, %v3134
  %v3136 = vpop.f32.mrb[0].mxu0
  %3137 = vmatprep.mubr.bf16.mxu0 %v1349
  %3138 = vmatmul.mubr.bf16.gmra.mrb[0].mxu0 %v1348
  %v3139 = vpop.f32.mrb[0].mxu0
  %v3140 = vadd.f32 %v2851, %v3139
  %v3141 = vpop.f32.mrb[0].mxu0
  %v3142 = vpop.f32.mrb[0].mxu0
  %v3143 = vadd.f32 %v2854, %v3142
  %v3144 = vpop.f32.mrb[0].mxu0
  %3145 = vmatprep.mubr.bf16.mxu0 %v1357
  %3146 = vmatmul.mubr.bf16.gmra.mrb[0].mxu0 %v1356
  %v3147 = vpop.f32.mrb[0].mxu0
  %v3148 = vadd.f32 %v2859, %v3147
  %v3149 = vpop.f32.mrb[0].mxu0
  %v3150 = vpop.f32.mrb[0].mxu0
  %v3151 = vadd.f32 %v2862, %v3150
  %v3152 = vpop.f32.mrb[0].mxu0
  %3153 = vmatprep.mubr.bf16.mxu0 %v1365
  %3154 = vmatmul.mubr.bf16.gmra.mrb[0].mxu0 %v1364
  %v3155 = vpop.f32.mrb[0].mxu0
  %v3156 = vadd.f32 %v2867, %v3155
  %v3157 = vpop.f32.mrb[0].mxu0
  %v3158 = vpop.f32.mrb[0].mxu0
  %v3159 = vadd.f32 %v2870, %v3158
  %v3160 = vpop.f32.mrb[0].mxu0
  %3161 = vmatprep.mubr.bf16.mxu0 %v1373
  %3162 = vmatmul.mubr.bf16.gmra.mrb[0].mxu0 %v1372
  %v3163 = vpop.f32.mrb[0].mxu0
  %v3164 = vadd.f32 %v2875, %v3163
  %v3165 = vpop.f32.mrb[0].mxu0
  %v3166 = vpop.f32.mrb[0].mxu0
  %v3167 = vadd.f32 %v2878, %v3166
  %v3168 = vpop.f32.mrb[0].mxu0
  %3169 = vmatprep.mubr.bf16.mxu0 %v1381
  %3170 = vmatmul.mubr.bf16.gmra.mrb[0].mxu0 %v1380
  %v3171 = vpop.f32.mrb[0].mxu0
  %v3172 = vadd.f32 %v2883, %v3171
  %v3173 = vpop.f32.mrb[0].mxu0
  %v3174 = vpop.f32.mrb[0].mxu0
  %v3175 = vadd.f32 %v2886, %v3174
  %v3176 = vpop.f32.mrb[0].mxu0
  %3177 = vmatprep.mubr.bf16.mxu0 %v1389
  %3178 = vmatmul.mubr.bf16.gmra.mrb[0].mxu0 %v1388
  %v3179 = vpop.f32.mrb[0].mxu0
  %v3180 = vadd.f32 %v2891, %v3179
  %v3181 = vpop.f32.mrb[0].mxu0
  %v3182 = vpop.f32.mrb[0].mxu0
  %v3183 = vadd.f32 %v2894, %v3182
  %v3184 = vpop.f32.mrb[0].mxu0
  %3185 = vmatprep.mubr.bf16.mxu0 %v1397
  %3186 = vmatmul.mubr.bf16.gmra.mrb[0].mxu0 %v1396
  %v3187 = vpop.f32.mrb[0].mxu0
  %v3188 = vadd.f32 %v2899, %v3187
  %v3189 = vpop.f32.mrb[0].mxu0
  %v3190 = vpop.f32.mrb[0].mxu0
  %v3191 = vadd.f32 %v2902, %v3190
  %v3192 = vpop.f32.mrb[0].mxu0
  %3193 = vmatprep.mubr.bf16.mxu0 %v1405
  %3194 = vmatmul.mubr.bf16.gmra.mrb[0].mxu0 %v1404
  %v3195 = vpop.f32.mrb[0].mxu0
  %v3196 = vadd.f32 %v2907, %v3195
  %v3197 = vpop.f32.mrb[0].mxu0
  %v3198 = vpop.f32.mrb[0].mxu0
  %v3199 = vadd.f32 %v2910, %v3198
  %v3200 = vpop.f32.mrb[0].mxu0
  %3201 = vmatprep.mubr.bf16.mxu0 %v1413
  %3202 = vmatmul.mubr.bf16.gmra.mrb[0].mxu0 %v1412
  %v3203 = vpop.f32.mrb[0].mxu0
  %v3204 = vadd.f32 %v2915, %v3203
  %v3205 = vpop.f32.mrb[0].mxu0
  %v3206 = vpop.f32.mrb[0].mxu0
  %v3207 = vadd.f32 %v2918, %v3206
  %v3208 = vpop.f32.mrb[0].mxu0
  %3209 = vmatprep.mubr.bf16.mxu0 %v1421
  %3210 = vmatmul.mubr.bf16.gmra.mrb[0].mxu0 %v1420
  %v3211 = vpop.f32.mrb[0].mxu0
  %v3212 = vadd.f32 %v2923, %v3211
  %v3213 = vpop.f32.mrb[0].mxu0
  %v3214 = vpop.f32.mrb[0].mxu0
  %v3215 = vadd.f32 %v2926, %v3214
  %v3216 = vpop.f32.mrb[0].mxu0
  %3217 = vmatprep.mubr.bf16.mxu0 %v1429
  %3218 = vmatmul.mubr.bf16.gmra.mrb[0].mxu0 %v1428
  %v3219 = vpop.f32.mrb[0].mxu0
  %v3220 = vadd.f32 %v2931, %v3219
  %v3221 = vpop.f32.mrb[0].mxu0
  %v3222 = vpop.f32.mrb[0].mxu0
  %v3223 = vadd.f32 %v2934, %v3222
  %v3224 = vpop.f32.mrb[0].mxu0
  %3225 = vdwg.mxu0
  %v3226 = vmax.f32 %v2972, 0.0
  %v3227 = vmax.f32 %v2975, 0.0
  %v3228 = vmax.f32 %v2980, 0.0
  %v3229 = vmax.f32 %v2983, 0.0
  %v3230 = vmax.f32 %v2988, 0.0
  %v3231 = vmax.f32 %v2991, 0.0
  %v3232 = vmax.f32 %v2996, 0.0
  %v3233 = vmax.f32 %v2999, 0.0
  %v3234 = vmax.f32 %v3004, 0.0
  %v3235 = vmax.f32 %v3007, 0.0
  %v3236 = vmax.f32 %v3012, 0.0
  %v3237 = vmax.f32 %v3015, 0.0
  %v3238 = vmax.f32 %v3020, 0.0
  %v3239 = vmax.f32 %v3023, 0.0
  %v3240 = vmax.f32 %v3028, 0.0
  %v3241 = vmax.f32 %v3031, 0.0
  %v3242 = vmax.f32 %v3036, 0.0
  %v3243 = vmax.f32 %v3039, 0.0
  %v3244 = vmax.f32 %v3044, 0.0
  %v3245 = vmax.f32 %v3047, 0.0
  %v3246 = vmax.f32 %v3052, 0.0
  %v3247 = vmax.f32 %v3055, 0.0
  %v3248 = vmax.f32 %v3060, 0.0
  %v3249 = vmax.f32 %v3063, 0.0
  %v3250 = vmax.f32 %v3068, 0.0
  %v3251 = vmax.f32 %v3071, 0.0
  %v3252 = vmax.f32 %v3076, 0.0
  %v3253 = vmax.f32 %v3079, 0.0
  %v3254 = vmax.f32 %v3084, 0.0
  %v3255 = vmax.f32 %v3087, 0.0
  %v3256 = vmax.f32 %v3092, 0.0
  %v3257 = vmax.f32 %v3095, 0.0
  %v3258 = vmax.f32 %v3100, 0.0
  %v3259 = vmax.f32 %v3103, 0.0
  %v3260 = vmax.f32 %v3108, 0.0
  %v3261 = vmax.f32 %v3111, 0.0
  %v3262 = vmax.f32 %v3116, 0.0
  %v3263 = vmax.f32 %v3119, 0.0
  %v3264 = vmax.f32 %v3124, 0.0
  %v3265 = vmax.f32 %v3127, 0.0
  %v3266 = vmax.f32 %v3132, 0.0
  %v3267 = vmax.f32 %v3135, 0.0
  %v3268 = vmax.f32 %v3140, 0.0
  %v3269 = vmax.f32 %v3143, 0.0
  %v3270 = vmax.f32 %v3148, 0.0
  %v3271 = vmax.f32 %v3151, 0.0
  %v3272 = vmax.f32 %v3156, 0.0
  %v3273 = vmax.f32 %v3159, 0.0
  %v3274 = vmax.f32 %v3164, 0.0
  %v3275 = vmax.f32 %v3167, 0.0
  %v3276 = vmax.f32 %v3172, 0.0
  %v3277 = vmax.f32 %v3175, 0.0
  %v3278 = vmax.f32 %v3180, 0.0
  %v3279 = vmax.f32 %v3183, 0.0
  %v3280 = vmax.f32 %v3188, 0.0
  %v3281 = vmax.f32 %v3191, 0.0
  %v3282 = vmax.f32 %v3196, 0.0
  %v3283 = vmax.f32 %v3199, 0.0
  %v3284 = vmax.f32 %v3204, 0.0
  %v3285 = vmax.f32 %v3207, 0.0
  %v3286 = vmax.f32 %v3212, 0.0
  %v3287 = vmax.f32 %v3215, 0.0
  %v3288 = vmax.f32 %v3220, 0.0
  %v3289 = vmax.f32 %v3223, 0.0
  %v3290 = vpack.c.bf16 %v3227, %v3226
  %v3291 = vpack.c.bf16 %v3229, %v3228
  %v3292 = vpack.c.bf16 %v3231, %v3230
  %v3293 = vpack.c.bf16 %v3233, %v3232
  %v3294 = vpack.c.bf16 %v3235, %v3234
  %v3295 = vpack.c.bf16 %v3237, %v3236
  %v3296 = vpack.c.bf16 %v3239, %v3238
  %v3297 = vpack.c.bf16 %v3241, %v3240
  %v3298 = vpack.c.bf16 %v3243, %v3242
  %v3299 = vpack.c.bf16 %v3245, %v3244
  %v3300 = vpack.c.bf16 %v3247, %v3246
  %v3301 = vpack.c.bf16 %v3249, %v3248
  %v3302 = vpack.c.bf16 %v3251, %v3250
  %v3303 = vpack.c.bf16 %v3253, %v3252
  %v3304 = vpack.c.bf16 %v3255, %v3254
  %v3305 = vpack.c.bf16 %v3257, %v3256
  %v3306 = vpack.c.bf16 %v3259, %v3258
  %v3307 = vpack.c.bf16 %v3261, %v3260
  %v3308 = vpack.c.bf16 %v3263, %v3262
  %v3309 = vpack.c.bf16 %v3265, %v3264
  %v3310 = vpack.c.bf16 %v3267, %v3266
  %v3311 = vpack.c.bf16 %v3269, %v3268
  %v3312 = vpack.c.bf16 %v3271, %v3270
  %v3313 = vpack.c.bf16 %v3273, %v3272
  %v3314 = vpack.c.bf16 %v3275, %v3274
  %v3315 = vpack.c.bf16 %v3277, %v3276
  %v3316 = vpack.c.bf16 %v3279, %v3278
  %v3317 = vpack.c.bf16 %v3281, %v3280
  %v3318 = vpack.c.bf16 %v3283, %v3282
  %v3319 = vpack.c.bf16 %v3285, %v3284
  %v3320 = vpack.c.bf16 %v3287, %v3286
  %v3321 = vpack.c.bf16 %v3289, %v3288
  %v3354 = vunpack.c.l.b16 %v3290
  %v3355 = vunpack.c.h.b16 %v3290
  %v3356 = vunpack.c.l.b16 %v3291
  %v3357 = vunpack.c.h.b16 %v3291
  %v3358 = vunpack.c.l.b16 %v3292
  %v3359 = vunpack.c.h.b16 %v3292
  %v3360 = vunpack.c.l.b16 %v3293
  %v3361 = vunpack.c.h.b16 %v3293
  %v3362 = vunpack.c.l.b16 %v3294
  %v3363 = vunpack.c.h.b16 %v3294
  %v3364 = vunpack.c.l.b16 %v3295
  %v3365 = vunpack.c.h.b16 %v3295
  %v3366 = vunpack.c.l.b16 %v3296
  %v3367 = vunpack.c.h.b16 %v3296
  %v3368 = vunpack.c.l.b16 %v3297
  %v3369 = vunpack.c.h.b16 %v3297
  %v3370 = vunpack.c.l.b16 %v3298
  %v3371 = vunpack.c.h.b16 %v3298
  %v3372 = vunpack.c.l.b16 %v3299
  %v3373 = vunpack.c.h.b16 %v3299
  %v3374 = vunpack.c.l.b16 %v3300
  %v3375 = vunpack.c.h.b16 %v3300
  %v3376 = vunpack.c.l.b16 %v3301
  %v3377 = vunpack.c.h.b16 %v3301
  %v3378 = vunpack.c.l.b16 %v3302
  %v3379 = vunpack.c.h.b16 %v3302
  %v3380 = vunpack.c.l.b16 %v3303
  %v3381 = vunpack.c.h.b16 %v3303
  %v3382 = vunpack.c.l.b16 %v3304
  %v3383 = vunpack.c.h.b16 %v3304
  %v3384 = vunpack.c.l.b16 %v3305
  %v3385 = vunpack.c.h.b16 %v3305
  %v3386 = vunpack.c.l.b16 %v3306
  %v3387 = vunpack.c.h.b16 %v3306
  %v3388 = vunpack.c.l.b16 %v3307
  %v3389 = vunpack.c.h.b16 %v3307
  %v3390 = vunpack.c.l.b16 %v3308
  %v3391 = vunpack.c.h.b16 %v3308
  %v3392 = vunpack.c.l.b16 %v3309
  %v3393 = vunpack.c.h.b16 %v3309
  %v3394 = vunpack.c.l.b16 %v3310
  %v3395 = vunpack.c.h.b16 %v3310
  %v3396 = vunpack.c.l.b16 %v3311
  %v3397 = vunpack.c.h.b16 %v3311
  %v3398 = vunpack.c.l.b16 %v3312
  %v3399 = vunpack.c.h.b16 %v3312
  %v3400 = vunpack.c.l.b16 %v3313
  %v3401 = vunpack.c.h.b16 %v3313
  %v3402 = vunpack.c.l.b16 %v3314
  %v3403 = vunpack.c.h.b16 %v3314
  %v3404 = vunpack.c.l.b16 %v3315
  %v3405 = vunpack.c.h.b16 %v3315
  %v3406 = vunpack.c.l.b16 %v3316
  %v3407 = vunpack.c.h.b16 %v3316
  %v3408 = vunpack.c.l.b16 %v3317
  %v3409 = vunpack.c.h.b16 %v3317
  %v3410 = vunpack.c.l.b16 %v3318
  %v3411 = vunpack.c.h.b16 %v3318
  %v3412 = vunpack.c.l.b16 %v3319
  %v3413 = vunpack.c.h.b16 %v3319
  %v3414 = vunpack.c.l.b16 %v3320
  %v3415 = vunpack.c.h.b16 %v3320
  %v3416 = vunpack.c.l.b16 %v3321
  %v3417 = vunpack.c.h.b16 %v3321
  %v3418 = vpack.c.b16 %v3354, %v3354
  %v3419 = vpack.c.b16 %v3355, %v3355
  %v3420 = vpack.c.b16 %v3356, %v3356
  %v3421 = vpack.c.b16 %v3357, %v3357
  %v3422 = vpack.c.b16 %v3358, %v3358
  %v3423 = vpack.c.b16 %v3359, %v3359
  %v3424 = vpack.c.b16 %v3360, %v3360
  %v3425 = vpack.c.b16 %v3361, %v3361
  %v3426 = vpack.c.b16 %v3362, %v3362
  %v3427 = vpack.c.b16 %v3363, %v3363
  %v3428 = vpack.c.b16 %v3364, %v3364
  %v3429 = vpack.c.b16 %v3365, %v3365
  %v3430 = vpack.c.b16 %v3366, %v3366
  %v3431 = vpack.c.b16 %v3367, %v3367
  %v3432 = vpack.c.b16 %v3368, %v3368
  %v3433 = vpack.c.b16 %v3369, %v3369
  %v3434 = vpack.c.b16 %v3370, %v3370
  %v3435 = vpack.c.b16 %v3371, %v3371
  %v3436 = vpack.c.b16 %v3372, %v3372
  %v3437 = vpack.c.b16 %v3373, %v3373
  %v3438 = vpack.c.b16 %v3374, %v3374
  %v3439 = vpack.c.b16 %v3375, %v3375
  %v3440 = vpack.c.b16 %v3376, %v3376
  %v3441 = vpack.c.b16 %v3377, %v3377
  %v3442 = vpack.c.b16 %v3378, %v3378
  %v3443 = vpack.c.b16 %v3379, %v3379
  %v3444 = vpack.c.b16 %v3380, %v3380
  %v3445 = vpack.c.b16 %v3381, %v3381
  %v3446 = vpack.c.b16 %v3382, %v3382
  %v3447 = vpack.c.b16 %v3383, %v3383
  %v3448 = vpack.c.b16 %v3384, %v3384
  %v3449 = vpack.c.b16 %v3385, %v3385
  %v3450 = vpack.c.b16 %v3386, %v3386
  %v3451 = vpack.c.b16 %v3387, %v3387
  %v3452 = vpack.c.b16 %v3388, %v3388
  %v3453 = vpack.c.b16 %v3389, %v3389
  %v3454 = vpack.c.b16 %v3390, %v3390
  %v3455 = vpack.c.b16 %v3391, %v3391
  %v3456 = vpack.c.b16 %v3392, %v3392
  %v3457 = vpack.c.b16 %v3393, %v3393
  %v3458 = vpack.c.b16 %v3394, %v3394
  %v3459 = vpack.c.b16 %v3395, %v3395
  %v3460 = vpack.c.b16 %v3396, %v3396
  %v3461 = vpack.c.b16 %v3397, %v3397
  %v3462 = vpack.c.b16 %v3398, %v3398
  %v3463 = vpack.c.b16 %v3399, %v3399
  %v3464 = vpack.c.b16 %v3400, %v3400
  %v3465 = vpack.c.b16 %v3401, %v3401
  %v3466 = vpack.c.b16 %v3402, %v3402
  %v3467 = vpack.c.b16 %v3403, %v3403
  %v3468 = vpack.c.b16 %v3404, %v3404
  %v3469 = vpack.c.b16 %v3405, %v3405
  %v3470 = vpack.c.b16 %v3406, %v3406
  %v3471 = vpack.c.b16 %v3407, %v3407
  %v3472 = vpack.c.b16 %v3408, %v3408
  %v3473 = vpack.c.b16 %v3409, %v3409
  %v3474 = vpack.c.b16 %v3410, %v3410
  %v3475 = vpack.c.b16 %v3411, %v3411
  %v3476 = vpack.c.b16 %v3412, %v3412
  %v3477 = vpack.c.b16 %v3413, %v3413
  %v3478 = vpack.c.b16 %v3414, %v3414
  %v3479 = vpack.c.b16 %v3415, %v3415
  %v3480 = vpack.c.b16 %v3416, %v3416
  %v3481 = vpack.c.b16 %v3417, %v3417
  %3546 = vst [vmem:[%s3] sm:$0xf] %v3418
  %3547 = vst [vmem:[%s3 + $0x4] sm:$0xf] %v3419
  %3548 = vst [vmem:[%s3 + $0x8] sm:$0xf] %v3420
  %3549 = vst [vmem:[%s3 + $0xc] sm:$0xf] %v3421
  %3550 = vst [vmem:[%s3 + $0x10] sm:$0xf] %v3422
  %3551 = vst [vmem:[%s3 + $0x14] sm:$0xf] %v3423
  %3552 = vst [vmem:[%s3 + $0x18] sm:$0xf] %v3424
  %3553 = vst [vmem:[%s3 + $0x1c] sm:$0xf] %v3425
  %3554 = vst [vmem:[%s3 + $0x20] sm:$0xf] %v3426
  %3555 = vst [vmem:[%s3 + $0x24] sm:$0xf] %v3427
  %3556 = vst [vmem:[%s3 + $0x28] sm:$0xf] %v3428
  %3557 = vst [vmem:[%s3 + $0x2c] sm:$0xf] %v3429
  %3558 = vst [vmem:[%s3 + $0x30] sm:$0xf] %v3430
  %3559 = vst [vmem:[%s3 + $0x34] sm:$0xf] %v3431
  %3560 = vst [vmem:[%s3 + $0x38] sm:$0xf] %v3432
  %3561 = vst [vmem:[%s3 + $0x3c] sm:$0xf] %v3433
  %3562 = vst [vmem:[%s3 + $0x40] sm:$0xf] %v3434
  %3563 = vst [vmem:[%s3 + $0x44] sm:$0xf] %v3435
  %3564 = vst [vmem:[%s3 + $0x48] sm:$0xf] %v3436
  %3565 = vst [vmem:[%s3 + $0x4c] sm:$0xf] %v3437
  %3566 = vst [vmem:[%s3 + $0x50] sm:$0xf] %v3438
  %3567 = vst [vmem:[%s3 + $0x54] sm:$0xf] %v3439
  %3568 = vst [vmem:[%s3 + $0x58] sm:$0xf] %v3440
  %3569 = vst [vmem:[%s3 + $0x5c] sm:$0xf] %v3441
  %3570 = vst [vmem:[%s3 + $0x60] sm:$0xf] %v3442
  %3571 = vst [vmem:[%s3 + $0x64] sm:$0xf] %v3443
  %3572 = vst [vmem:[%s3 + $0x68] sm:$0xf] %v3444
  %3573 = vst [vmem:[%s3 + $0x6c] sm:$0xf] %v3445
  %3574 = vst [vmem:[%s3 + $0x70] sm:$0xf] %v3446
  %3575 = vst [vmem:[%s3 + $0x74] sm:$0xf] %v3447
  %3576 = vst [vmem:[%s3 + $0x78] sm:$0xf] %v3448
  %3577 = vst [vmem:[%s3 + $0x7c] sm:$0xf] %v3449
  %3578 = vst [vmem:[%s3 + $0x80] sm:$0xf] %v3450
  %3579 = vst [vmem:[%s3 + $0x84] sm:$0xf] %v3451
  %3580 = vst [vmem:[%s3 + $0x88] sm:$0xf] %v3452
  %3581 = vst [vmem:[%s3 + $0x8c] sm:$0xf] %v3453
  %3582 = vst [vmem:[%s3 + $0x90] sm:$0xf] %v3454
  %3583 = vst [vmem:[%s3 + $0x94] sm:$0xf] %v3455
  %3584 = vst [vmem:[%s3 + $0x98] sm:$0xf] %v3456
  %3585 = vst [vmem:[%s3 + $0x9c] sm:$0xf] %v3457
  %3586 = vst [vmem:[%s3 + $0xa0] sm:$0xf] %v3458
  %3587 = vst [vmem:[%s3 + $0xa4] sm:$0xf] %v3459
  %3588 = vst [vmem:[%s3 + $0xa8] sm:$0xf] %v3460
  %3589 = vst [vmem:[%s3 + $0xac] sm:$0xf] %v3461
  %3590 = vst [vmem:[%s3 + $0xb0] sm:$0xf] %v3462
  %3591 = vst [vmem:[%s3 + $0xb4] sm:$0xf] %v3463
  %3592 = vst [vmem:[%s3 + $0xb8] sm:$0xf] %v3464
  %3593 = vst [vmem:[%s3 + $0xbc] sm:$0xf] %v3465
  %3594 = vst [vmem:[%s3 + $0xc0] sm:$0xf] %v3466
  %3595 = vst [vmem:[%s3 + $0xc4] sm:$0xf] %v3467
  %3596 = vst [vmem:[%s3 + $0xc8] sm:$0xf] %v3468
  %3597 = vst [vmem:[%s3 + $0xcc] sm:$0xf] %v3469
  %3598 = vst [vmem:[%s3 + $0xd0] sm:$0xf] %v3470
  %3599 = vst [vmem:[%s3 + $0xd4] sm:$0xf] %v3471
  %3600 = vst [vmem:[%s3 + $0xd8] sm:$0xf] %v3472
  %3601 = vst [vmem:[%s3 + $0xdc] sm:$0xf] %v3473
  %3602 = vst [vmem:[%s3 + $0xe0] sm:$0xf] %v3474
  %3603 = vst [vmem:[%s3 + $0xe4] sm:$0xf] %v3475
  %3604 = vst [vmem:[%s3 + $0xe8] sm:$0xf] %v3476
  %3605 = vst [vmem:[%s3 + $0xec] sm:$0xf] %v3477
  %3606 = vst [vmem:[%s3 + $0xf0] sm:$0xf] %v3478
  %3607 = vst [vmem:[%s3 + $0xf4] sm:$0xf] %v3479
  %3608 = vst [vmem:[%s3 + $0xf8] sm:$0xf] %v3480
  %3609 = vst [vmem:[%s3 + $0xfc] sm:$0xf] %v3481
  // Predicated region
  $region14: #{discriminator_forward.5} parent=0 // pred_check
    _
  $region15: #{discriminator_forward.5} parent=0 // pred_check_branch
    %3611 = sbr.rel (0) target = $region17
  $region16: #{discriminator_forward.5} parent=0 // pred_region
    _
  $region17: #{discriminator_forward.5} parent=0 // pred_fallthru
    _
  // Predicated region
  $region18: #{discriminator_forward.5} parent=0 // pred_check
    _
  $region19: #{discriminator_forward.5} parent=0 // pred_check_branch
    %3613 = sbr.rel (0) target = $region21
  $region20: #{discriminator_forward.5} parent=0 // pred_region
    _
  $region21: #{discriminator_forward.5} parent=0 // pred_fallthru
    _

// kernel: discriminator_forward.7
$region0: #{discriminator_forward.7}
  #allocation0 [shape = 'u32[]', space=smem, size = 0x4, offset = 0x4, fixed_abs, tag = 'smem constant byte address 0x4 - core index']
  #allocation1 [shape = 'u32[144,128]{1,0:T(1,128)}', space=vmem, size = 0x12000, scoped, tag = 'internal scratch']
  #allocation2 [shape = 'f32[1,1]{1,0:T(1,128)S(1)}', space=vmem, size = 0x200, scoped, tag = 'scoped memory for discriminator_forward.7']
  %s0 = inlined_call_operand.vmem [shape: bf16[2,16384], index: 0, kind: input, shape index: {}]
  %s1 = inlined_call_operand.vmem [shape: f32[1,16384], index: 1, kind: input, shape index: {}]
  %s2 = inlined_call_operand.<no memory space> [shape: f32[1,1], index: 2, kind: input, shape index: {}]
  %s3 = inlined_call_operand.vmem [shape: f32[2,1], index: 3, kind: output, shape index: {}]
  %s4 = sld [smem:[#allocation0]]
  $region22: #{discriminator_forward.7} parent=0
    _
  %s6 = ssub.s32 1, %s4
  %s7 = scalar_select 0, %s6, %s4
  %v8 = vstv %s2
  %9 = vst [vmem:[#allocation2] sm:$0x1] %v8
  // Predicated region
  $region2: #{discriminator_forward.7} parent=0 // pred_check
    _
  $region3: #{discriminator_forward.7} parent=0 // pred_check_branch
    %11 = sbr.rel (0) target = $region5
  $region4: #{discriminator_forward.7} parent=0 // pred_region
    _
  $region5: #{discriminator_forward.7} parent=0 // pred_fallthru
    _
  // Predicated region
  $region6: #{discriminator_forward.7} parent=0 // pred_check
    _
  $region7: #{discriminator_forward.7} parent=0 // pred_check_branch
    %13 = sbr.rel (0) target = $region9
  $region8: #{discriminator_forward.7} parent=0 // pred_region
    _
  $region9: #{discriminator_forward.7} parent=0 // pred_fallthru
    _
  // Predicated region
  $region10: #{discriminator_forward.7} parent=0 // pred_check
    _
  $region11: #{discriminator_forward.7} parent=0 // pred_check_branch
    %15 = sbr.rel (0) target = $region13
  $region12: #{discriminator_forward.7} parent=0 // pred_region
    _
  $region13: #{discriminator_forward.7} parent=0 // pred_fallthru
    _
  %v16 = vld [vmem:[%s0] sm:$0xff]
  %v17 = vld [vmem:[%s0 + $0x8] sm:$0xff]
  %v18 = vld [vmem:[%s0 + $0x10] sm:$0xff]
  %v19 = vld [vmem:[%s0 + $0x18] sm:$0xff]
  %v20 = vld [vmem:[%s0 + $0x20] sm:$0xff]
  %v21 = vld [vmem:[%s0 + $0x28] sm:$0xff]
  %v22 = vld [vmem:[%s0 + $0x30] sm:$0xff]
  %v23 = vld [vmem:[%s0 + $0x38] sm:$0xff]
  %v24 = vld [vmem:[%s0 + $0x40] sm:$0xff]
  %v25 = vld [vmem:[%s0 + $0x48] sm:$0xff]
  %v26 = vld [vmem:[%s0 + $0x50] sm:$0xff]
  %v27 = vld [vmem:[%s0 + $0x58] sm:$0xff]
  %v28 = vld [vmem:[%s0 + $0x60] sm:$0xff]
  %v29 = vld [vmem:[%s0 + $0x68] sm:$0xff]
  %v30 = vld [vmem:[%s0 + $0x70] sm:$0xff]
  %v31 = vld [vmem:[%s0 + $0x78] sm:$0xff]
  %v32 = vunpack.c.l.bf16 %v16
  %v33 = vunpack.c.h.bf16 %v16
  %v34 = vunpack.c.l.bf16 %v17
  %v35 = vunpack.c.h.bf16 %v17
  %v36 = vunpack.c.l.bf16 %v18
  %v37 = vunpack.c.h.bf16 %v18
  %v38 = vunpack.c.l.bf16 %v19
  %v39 = vunpack.c.h.bf16 %v19
  %v40 = vunpack.c.l.bf16 %v20
  %v41 = vunpack.c.h.bf16 %v20
  %v42 = vunpack.c.l.bf16 %v21
  %v43 = vunpack.c.h.bf16 %v21
  %v44 = vunpack.c.l.bf16 %v22
  %v45 = vunpack.c.h.bf16 %v22
  %v46 = vunpack.c.l.bf16 %v23
  %v47 = vunpack.c.h.bf16 %v23
  %v48 = vunpack.c.l.bf16 %v24
  %v49 = vunpack.c.h.bf16 %v24
  %v50 = vunpack.c.l.bf16 %v25
  %v51 = vunpack.c.h.bf16 %v25
  %v52 = vunpack.c.l.bf16 %v26
  %v53 = vunpack.c.h.bf16 %v26
  %v54 = vunpack.c.l.bf16 %v27
  %v55 = vunpack.c.h.bf16 %v27
  %v56 = vunpack.c.l.bf16 %v28
  %v57 = vunpack.c.h.bf16 %v28
  %v58 = vunpack.c.l.bf16 %v29
  %v59 = vunpack.c.h.bf16 %v29
  %v60 = vunpack.c.l.bf16 %v30
  %v61 = vunpack.c.h.bf16 %v30
  %v62 = vunpack.c.l.bf16 %v31
  %v63 = vunpack.c.h.bf16 %v31
  %v64 = vld [vmem:[%s1] sm:$0xff]
  %v65 = vld [vmem:[%s1 + $0x8] sm:$0xff]
  %v66 = vld [vmem:[%s1 + $0x10] sm:$0xff]
  %v67 = vld [vmem:[%s1 + $0x18] sm:$0xff]
  %v68 = vld [vmem:[%s1 + $0x20] sm:$0xff]
  %v69 = vld [vmem:[%s1 + $0x28] sm:$0xff]
  %v70 = vld [vmem:[%s1 + $0x30] sm:$0xff]
  %v71 = vld [vmem:[%s1 + $0x38] sm:$0xff]
  %v72 = vld [vmem:[%s1 + $0x40] sm:$0xff]
  %v73 = vld [vmem:[%s1 + $0x48] sm:$0xff]
  %v74 = vld [vmem:[%s1 + $0x50] sm:$0xff]
  %v75 = vld [vmem:[%s1 + $0x58] sm:$0xff]
  %v76 = vld [vmem:[%s1 + $0x60] sm:$0xff]
  %v77 = vld [vmem:[%s1 + $0x68] sm:$0xff]
  %v78 = vld [vmem:[%s1 + $0x70] sm:$0xff]
  %v79 = vld [vmem:[%s1 + $0x78] sm:$0xff]
  %v96 = vlaneseq
  %v97 = vshrl.u32 %v96, 7
  %v98 = vsub.s32 0, %v97
  %v99 = vrot.slane %v64, %v98
  %v100 = vlaneseq
  %v101 = vshrl.u32 %v100, 7
  %v102 = vsub.s32 1, %v101
  %v103 = vrot.slane %v64, %v102
  %v104 = vlaneseq
  %v105 = vshrl.u32 %v104, 7
  %v106 = vsub.s32 2, %v105
  %v107 = vrot.slane %v64, %v106
  %v108 = vlaneseq
  %v109 = vshrl.u32 %v108, 7
  %v110 = vsub.s32 3, %v109
  %v111 = vrot.slane %v64, %v110
  %v112 = vlaneseq
  %v113 = vshrl.u32 %v112, 7
  %v114 = vsub.s32 4, %v113
  %v115 = vrot.slane %v64, %v114
  %v116 = vlaneseq
  %v117 = vshrl.u32 %v116, 7
  %v118 = vsub.s32 5, %v117
  %v119 = vrot.slane %v64, %v118
  %v120 = vlaneseq
  %v121 = vshrl.u32 %v120, 7
  %v122 = vsub.s32 6, %v121
  %v123 = vrot.slane %v64, %v122
  %v124 = vlaneseq
  %v125 = vshrl.u32 %v124, 7
  %v126 = vsub.s32 7, %v125
  %v127 = vrot.slane %v64, %v126
  %v128 = vlaneseq
  %v129 = vshrl.u32 %v128, 7
  %v130 = vsub.s32 0, %v129
  %v131 = vrot.slane %v65, %v130
  %v132 = vlaneseq
  %v133 = vshrl.u32 %v132, 7
  %v134 = vsub.s32 1, %v133
  %v135 = vrot.slane %v65, %v134
  %v136 = vlaneseq
  %v137 = vshrl.u32 %v136, 7
  %v138 = vsub.s32 2, %v137
  %v139 = vrot.slane %v65, %v138
  %v140 = vlaneseq
  %v141 = vshrl.u32 %v140, 7
  %v142 = vsub.s32 3, %v141
  %v143 = vrot.slane %v65, %v142
  %v144 = vlaneseq
  %v145 = vshrl.u32 %v144, 7
  %v146 = vsub.s32 4, %v145
  %v147 = vrot.slane %v65, %v146
  %v148 = vlaneseq
  %v149 = vshrl.u32 %v148, 7
  %v150 = vsub.s32 5, %v149
  %v151 = vrot.slane %v65, %v150
  %v152 = vlaneseq
  %v153 = vshrl.u32 %v152, 7
  %v154 = vsub.s32 6, %v153
  %v155 = vrot.slane %v65, %v154
  %v156 = vlaneseq
  %v157 = vshrl.u32 %v156, 7
  %v158 = vsub.s32 7, %v157
  %v159 = vrot.slane %v65, %v158
  %v160 = vlaneseq
  %v161 = vshrl.u32 %v160, 7
  %v162 = vsub.s32 0, %v161
  %v163 = vrot.slane %v66, %v162
  %v164 = vlaneseq
  %v165 = vshrl.u32 %v164, 7
  %v166 = vsub.s32 1, %v165
  %v167 = vrot.slane %v66, %v166
  %v168 = vlaneseq
  %v169 = vshrl.u32 %v168, 7
  %v170 = vsub.s32 2, %v169
  %v171 = vrot.slane %v66, %v170
  %v172 = vlaneseq
  %v173 = vshrl.u32 %v172, 7
  %v174 = vsub.s32 3, %v173
  %v175 = vrot.slane %v66, %v174
  %v176 = vlaneseq
  %v177 = vshrl.u32 %v176, 7
  %v178 = vsub.s32 4, %v177
  %v179 = vrot.slane %v66, %v178
  %v180 = vlaneseq
  %v181 = vshrl.u32 %v180, 7
  %v182 = vsub.s32 5, %v181
  %v183 = vrot.slane %v66, %v182
  %v184 = vlaneseq
  %v185 = vshrl.u32 %v184, 7
  %v186 = vsub.s32 6, %v185
  %v187 = vrot.slane %v66, %v186
  %v188 = vlaneseq
  %v189 = vshrl.u32 %v188, 7
  %v190 = vsub.s32 7, %v189
  %v191 = vrot.slane %v66, %v190
  %v192 = vlaneseq
  %v193 = vshrl.u32 %v192, 7
  %v194 = vsub.s32 0, %v193
  %v195 = vrot.slane %v67, %v194
  %v196 = vlaneseq
  %v197 = vshrl.u32 %v196, 7
  %v198 = vsub.s32 1, %v197
  %v199 = vrot.slane %v67, %v198
  %v200 = vlaneseq
  %v201 = vshrl.u32 %v200, 7
  %v202 = vsub.s32 2, %v201
  %v203 = vrot.slane %v67, %v202
  %v204 = vlaneseq
  %v205 = vshrl.u32 %v204, 7
  %v206 = vsub.s32 3, %v205
  %v207 = vrot.slane %v67, %v206
  %v208 = vlaneseq
  %v209 = vshrl.u32 %v208, 7
  %v210 = vsub.s32 4, %v209
  %v211 = vrot.slane %v67, %v210
  %v212 = vlaneseq
  %v213 = vshrl.u32 %v212, 7
  %v214 = vsub.s32 5, %v213
  %v215 = vrot.slane %v67, %v214
  %v216 = vlaneseq
  %v217 = vshrl.u32 %v216, 7
  %v218 = vsub.s32 6, %v217
  %v219 = vrot.slane %v67, %v218
  %v220 = vlaneseq
  %v221 = vshrl.u32 %v220, 7
  %v222 = vsub.s32 7, %v221
  %v223 = vrot.slane %v67, %v222
  %v224 = vlaneseq
  %v225 = vshrl.u32 %v224, 7
  %v226 = vsub.s32 0, %v225
  %v227 = vrot.slane %v68, %v226
  %v228 = vlaneseq
  %v229 = vshrl.u32 %v228, 7
  %v230 = vsub.s32 1, %v229
  %v231 = vrot.slane %v68, %v230
  %v232 = vlaneseq
  %v233 = vshrl.u32 %v232, 7
  %v234 = vsub.s32 2, %v233
  %v235 = vrot.slane %v68, %v234
  %v236 = vlaneseq
  %v237 = vshrl.u32 %v236, 7
  %v238 = vsub.s32 3, %v237
  %v239 = vrot.slane %v68, %v238
  %v240 = vlaneseq
  %v241 = vshrl.u32 %v240, 7
  %v242 = vsub.s32 4, %v241
  %v243 = vrot.slane %v68, %v242
  %v244 = vlaneseq
  %v245 = vshrl.u32 %v244, 7
  %v246 = vsub.s32 5, %v245
  %v247 = vrot.slane %v68, %v246
  %v248 = vlaneseq
  %v249 = vshrl.u32 %v248, 7
  %v250 = vsub.s32 6, %v249
  %v251 = vrot.slane %v68, %v250
  %v252 = vlaneseq
  %v253 = vshrl.u32 %v252, 7
  %v254 = vsub.s32 7, %v253
  %v255 = vrot.slane %v68, %v254
  %v256 = vlaneseq
  %v257 = vshrl.u32 %v256, 7
  %v258 = vsub.s32 0, %v257
  %v259 = vrot.slane %v69, %v258
  %v260 = vlaneseq
  %v261 = vshrl.u32 %v260, 7
  %v262 = vsub.s32 1, %v261
  %v263 = vrot.slane %v69, %v262
  %v264 = vlaneseq
  %v265 = vshrl.u32 %v264, 7
  %v266 = vsub.s32 2, %v265
  %v267 = vrot.slane %v69, %v266
  %v268 = vlaneseq
  %v269 = vshrl.u32 %v268, 7
  %v270 = vsub.s32 3, %v269
  %v271 = vrot.slane %v69, %v270
  %v272 = vlaneseq
  %v273 = vshrl.u32 %v272, 7
  %v274 = vsub.s32 4, %v273
  %v275 = vrot.slane %v69, %v274
  %v276 = vlaneseq
  %v277 = vshrl.u32 %v276, 7
  %v278 = vsub.s32 5, %v277
  %v279 = vrot.slane %v69, %v278
  %v280 = vlaneseq
  %v281 = vshrl.u32 %v280, 7
  %v282 = vsub.s32 6, %v281
  %v283 = vrot.slane %v69, %v282
  %v284 = vlaneseq
  %v285 = vshrl.u32 %v284, 7
  %v286 = vsub.s32 7, %v285
  %v287 = vrot.slane %v69, %v286
  %v288 = vlaneseq
  %v289 = vshrl.u32 %v288, 7
  %v290 = vsub.s32 0, %v289
  %v291 = vrot.slane %v70, %v290
  %v292 = vlaneseq
  %v293 = vshrl.u32 %v292, 7
  %v294 = vsub.s32 1, %v293
  %v295 = vrot.slane %v70, %v294
  %v296 = vlaneseq
  %v297 = vshrl.u32 %v296, 7
  %v298 = vsub.s32 2, %v297
  %v299 = vrot.slane %v70, %v298
  %v300 = vlaneseq
  %v301 = vshrl.u32 %v300, 7
  %v302 = vsub.s32 3, %v301
  %v303 = vrot.slane %v70, %v302
  %v304 = vlaneseq
  %v305 = vshrl.u32 %v304, 7
  %v306 = vsub.s32 4, %v305
  %v307 = vrot.slane %v70, %v306
  %v308 = vlaneseq
  %v309 = vshrl.u32 %v308, 7
  %v310 = vsub.s32 5, %v309
  %v311 = vrot.slane %v70, %v310
  %v312 = vlaneseq
  %v313 = vshrl.u32 %v312, 7
  %v314 = vsub.s32 6, %v313
  %v315 = vrot.slane %v70, %v314
  %v316 = vlaneseq
  %v317 = vshrl.u32 %v316, 7
  %v318 = vsub.s32 7, %v317
  %v319 = vrot.slane %v70, %v318
  %v320 = vlaneseq
  %v321 = vshrl.u32 %v320, 7
  %v322 = vsub.s32 0, %v321
  %v323 = vrot.slane %v71, %v322
  %v324 = vlaneseq
  %v325 = vshrl.u32 %v324, 7
  %v326 = vsub.s32 1, %v325
  %v327 = vrot.slane %v71, %v326
  %v328 = vlaneseq
  %v329 = vshrl.u32 %v328, 7
  %v330 = vsub.s32 2, %v329
  %v331 = vrot.slane %v71, %v330
  %v332 = vlaneseq
  %v333 = vshrl.u32 %v332, 7
  %v334 = vsub.s32 3, %v333
  %v335 = vrot.slane %v71, %v334
  %v336 = vlaneseq
  %v337 = vshrl.u32 %v336, 7
  %v338 = vsub.s32 4, %v337
  %v339 = vrot.slane %v71, %v338
  %v340 = vlaneseq
  %v341 = vshrl.u32 %v340, 7
  %v342 = vsub.s32 5, %v341
  %v343 = vrot.slane %v71, %v342
  %v344 = vlaneseq
  %v345 = vshrl.u32 %v344, 7
  %v346 = vsub.s32 6, %v345
  %v347 = vrot.slane %v71, %v346
  %v348 = vlaneseq
  %v349 = vshrl.u32 %v348, 7
  %v350 = vsub.s32 7, %v349
  %v351 = vrot.slane %v71, %v350
  %v352 = vlaneseq
  %v353 = vshrl.u32 %v352, 7
  %v354 = vsub.s32 0, %v353
  %v355 = vrot.slane %v72, %v354
  %v356 = vlaneseq
  %v357 = vshrl.u32 %v356, 7
  %v358 = vsub.s32 1, %v357
  %v359 = vrot.slane %v72, %v358
  %v360 = vlaneseq
  %v361 = vshrl.u32 %v360, 7
  %v362 = vsub.s32 2, %v361
  %v363 = vrot.slane %v72, %v362
  %v364 = vlaneseq
  %v365 = vshrl.u32 %v364, 7
  %v366 = vsub.s32 3, %v365
  %v367 = vrot.slane %v72, %v366
  %v368 = vlaneseq
  %v369 = vshrl.u32 %v368, 7
  %v370 = vsub.s32 4, %v369
  %v371 = vrot.slane %v72, %v370
  %v372 = vlaneseq
  %v373 = vshrl.u32 %v372, 7
  %v374 = vsub.s32 5, %v373
  %v375 = vrot.slane %v72, %v374
  %v376 = vlaneseq
  %v377 = vshrl.u32 %v376, 7
  %v378 = vsub.s32 6, %v377
  %v379 = vrot.slane %v72, %v378
  %v380 = vlaneseq
  %v381 = vshrl.u32 %v380, 7
  %v382 = vsub.s32 7, %v381
  %v383 = vrot.slane %v72, %v382
  %v384 = vlaneseq
  %v385 = vshrl.u32 %v384, 7
  %v386 = vsub.s32 0, %v385
  %v387 = vrot.slane %v73, %v386
  %v388 = vlaneseq
  %v389 = vshrl.u32 %v388, 7
  %v390 = vsub.s32 1, %v389
  %v391 = vrot.slane %v73, %v390
  %v392 = vlaneseq
  %v393 = vshrl.u32 %v392, 7
  %v394 = vsub.s32 2, %v393
  %v395 = vrot.slane %v73, %v394
  %v396 = vlaneseq
  %v397 = vshrl.u32 %v396, 7
  %v398 = vsub.s32 3, %v397
  %v399 = vrot.slane %v73, %v398
  %v400 = vlaneseq
  %v401 = vshrl.u32 %v400, 7
  %v402 = vsub.s32 4, %v401
  %v403 = vrot.slane %v73, %v402
  %v404 = vlaneseq
  %v405 = vshrl.u32 %v404, 7
  %v406 = vsub.s32 5, %v405
  %v407 = vrot.slane %v73, %v406
  %v408 = vlaneseq
  %v409 = vshrl.u32 %v408, 7
  %v410 = vsub.s32 6, %v409
  %v411 = vrot.slane %v73, %v410
  %v412 = vlaneseq
  %v413 = vshrl.u32 %v412, 7
  %v414 = vsub.s32 7, %v413
  %v415 = vrot.slane %v73, %v414
  %v416 = vlaneseq
  %v417 = vshrl.u32 %v416, 7
  %v418 = vsub.s32 0, %v417
  %v419 = vrot.slane %v74, %v418
  %v420 = vlaneseq
  %v421 = vshrl.u32 %v420, 7
  %v422 = vsub.s32 1, %v421
  %v423 = vrot.slane %v74, %v422
  %v424 = vlaneseq
  %v425 = vshrl.u32 %v424, 7
  %v426 = vsub.s32 2, %v425
  %v427 = vrot.slane %v74, %v426
  %v428 = vlaneseq
  %v429 = vshrl.u32 %v428, 7
  %v430 = vsub.s32 3, %v429
  %v431 = vrot.slane %v74, %v430
  %v432 = vlaneseq
  %v433 = vshrl.u32 %v432, 7
  %v434 = vsub.s32 4, %v433
  %v435 = vrot.slane %v74, %v434
  %v436 = vlaneseq
  %v437 = vshrl.u32 %v436, 7
  %v438 = vsub.s32 5, %v437
  %v439 = vrot.slane %v74, %v438
  %v440 = vlaneseq
  %v441 = vshrl.u32 %v440, 7
  %v442 = vsub.s32 6, %v441
  %v443 = vrot.slane %v74, %v442
  %v444 = vlaneseq
  %v445 = vshrl.u32 %v444, 7
  %v446 = vsub.s32 7, %v445
  %v447 = vrot.slane %v74, %v446
  %v448 = vlaneseq
  %v449 = vshrl.u32 %v448, 7
  %v450 = vsub.s32 0, %v449
  %v451 = vrot.slane %v75, %v450
  %v452 = vlaneseq
  %v453 = vshrl.u32 %v452, 7
  %v454 = vsub.s32 1, %v453
  %v455 = vrot.slane %v75, %v454
  %v456 = vlaneseq
  %v457 = vshrl.u32 %v456, 7
  %v458 = vsub.s32 2, %v457
  %v459 = vrot.slane %v75, %v458
  %v460 = vlaneseq
  %v461 = vshrl.u32 %v460, 7
  %v462 = vsub.s32 3, %v461
  %v463 = vrot.slane %v75, %v462
  %v464 = vlaneseq
  %v465 = vshrl.u32 %v464, 7
  %v466 = vsub.s32 4, %v465
  %v467 = vrot.slane %v75, %v466
  %v468 = vlaneseq
  %v469 = vshrl.u32 %v468, 7
  %v470 = vsub.s32 5, %v469
  %v471 = vrot.slane %v75, %v470
  %v472 = vlaneseq
  %v473 = vshrl.u32 %v472, 7
  %v474 = vsub.s32 6, %v473
  %v475 = vrot.slane %v75, %v474
  %v476 = vlaneseq
  %v477 = vshrl.u32 %v476, 7
  %v478 = vsub.s32 7, %v477
  %v479 = vrot.slane %v75, %v478
  %v480 = vlaneseq
  %v481 = vshrl.u32 %v480, 7
  %v482 = vsub.s32 0, %v481
  %v483 = vrot.slane %v76, %v482
  %v484 = vlaneseq
  %v485 = vshrl.u32 %v484, 7
  %v486 = vsub.s32 1, %v485
  %v487 = vrot.slane %v76, %v486
  %v488 = vlaneseq
  %v489 = vshrl.u32 %v488, 7
  %v490 = vsub.s32 2, %v489
  %v491 = vrot.slane %v76, %v490
  %v492 = vlaneseq
  %v493 = vshrl.u32 %v492, 7
  %v494 = vsub.s32 3, %v493
  %v495 = vrot.slane %v76, %v494
  %v496 = vlaneseq
  %v497 = vshrl.u32 %v496, 7
  %v498 = vsub.s32 4, %v497
  %v499 = vrot.slane %v76, %v498
  %v500 = vlaneseq
  %v501 = vshrl.u32 %v500, 7
  %v502 = vsub.s32 5, %v501
  %v503 = vrot.slane %v76, %v502
  %v504 = vlaneseq
  %v505 = vshrl.u32 %v504, 7
  %v506 = vsub.s32 6, %v505
  %v507 = vrot.slane %v76, %v506
  %v508 = vlaneseq
  %v509 = vshrl.u32 %v508, 7
  %v510 = vsub.s32 7, %v509
  %v511 = vrot.slane %v76, %v510
  %v512 = vlaneseq
  %v513 = vshrl.u32 %v512, 7
  %v514 = vsub.s32 0, %v513
  %v515 = vrot.slane %v77, %v514
  %v516 = vlaneseq
  %v517 = vshrl.u32 %v516, 7
  %v518 = vsub.s32 1, %v517
  %v519 = vrot.slane %v77, %v518
  %v520 = vlaneseq
  %v521 = vshrl.u32 %v520, 7
  %v522 = vsub.s32 2, %v521
  %v523 = vrot.slane %v77, %v522
  %v524 = vlaneseq
  %v525 = vshrl.u32 %v524, 7
  %v526 = vsub.s32 3, %v525
  %v527 = vrot.slane %v77, %v526
  %v528 = vlaneseq
  %v529 = vshrl.u32 %v528, 7
  %v530 = vsub.s32 4, %v529
  %v531 = vrot.slane %v77, %v530
  %v532 = vlaneseq
  %v533 = vshrl.u32 %v532, 7
  %v534 = vsub.s32 5, %v533
  %v535 = vrot.slane %v77, %v534
  %v536 = vlaneseq
  %v537 = vshrl.u32 %v536, 7
  %v538 = vsub.s32 6, %v537
  %v539 = vrot.slane %v77, %v538
  %v540 = vlaneseq
  %v541 = vshrl.u32 %v540, 7
  %v542 = vsub.s32 7, %v541
  %v543 = vrot.slane %v77, %v542
  %v544 = vlaneseq
  %v545 = vshrl.u32 %v544, 7
  %v546 = vsub.s32 0, %v545
  %v547 = vrot.slane %v78, %v546
  %v548 = vlaneseq
  %v549 = vshrl.u32 %v548, 7
  %v550 = vsub.s32 1, %v549
  %v551 = vrot.slane %v78, %v550
  %v552 = vlaneseq
  %v553 = vshrl.u32 %v552, 7
  %v554 = vsub.s32 2, %v553
  %v555 = vrot.slane %v78, %v554
  %v556 = vlaneseq
  %v557 = vshrl.u32 %v556, 7
  %v558 = vsub.s32 3, %v557
  %v559 = vrot.slane %v78, %v558
  %v560 = vlaneseq
  %v561 = vshrl.u32 %v560, 7
  %v562 = vsub.s32 4, %v561
  %v563 = vrot.slane %v78, %v562
  %v564 = vlaneseq
  %v565 = vshrl.u32 %v564, 7
  %v566 = vsub.s32 5, %v565
  %v567 = vrot.slane %v78, %v566
  %v568 = vlaneseq
  %v569 = vshrl.u32 %v568, 7
  %v570 = vsub.s32 6, %v569
  %v571 = vrot.slane %v78, %v570
  %v572 = vlaneseq
  %v573 = vshrl.u32 %v572, 7
  %v574 = vsub.s32 7, %v573
  %v575 = vrot.slane %v78, %v574
  %v576 = vlaneseq
  %v577 = vshrl.u32 %v576, 7
  %v578 = vsub.s32 0, %v577
  %v579 = vrot.slane %v79, %v578
  %v580 = vlaneseq
  %v581 = vshrl.u32 %v580, 7
  %v582 = vsub.s32 1, %v581
  %v583 = vrot.slane %v79, %v582
  %v584 = vlaneseq
  %v585 = vshrl.u32 %v584, 7
  %v586 = vsub.s32 2, %v585
  %v587 = vrot.slane %v79, %v586
  %v588 = vlaneseq
  %v589 = vshrl.u32 %v588, 7
  %v590 = vsub.s32 3, %v589
  %v591 = vrot.slane %v79, %v590
  %v592 = vlaneseq
  %v593 = vshrl.u32 %v592, 7
  %v594 = vsub.s32 4, %v593
  %v595 = vrot.slane %v79, %v594
  %v596 = vlaneseq
  %v597 = vshrl.u32 %v596, 7
  %v598 = vsub.s32 5, %v597
  %v599 = vrot.slane %v79, %v598
  %v600 = vlaneseq
  %v601 = vshrl.u32 %v600, 7
  %v602 = vsub.s32 6, %v601
  %v603 = vrot.slane %v79, %v602
  %v604 = vlaneseq
  %v605 = vshrl.u32 %v604, 7
  %v606 = vsub.s32 7, %v605
  %v607 = vrot.slane %v79, %v606
  %v608 = vcombine.low %v99, %v103
  %v609 = vcombine.low %v107, %v111
  %v611 = vunpack.c.l.s4 1983009808
  %v612 = vunpack.c.0.s8 %v611
  %v613 = vlaneseq
  %v614 = vshrl.u32 %v613, 7
  %v615 = vsub.s32 %v612, %v614
  %v616 = vrot.slane %v608, %v615
  %v618 = vunpack.c.l.s4 1983009808
  %v619 = vunpack.c.0.s8 %v618
  %v620 = vlaneseq
  %v621 = vshrl.u32 %v620, 7
  %v622 = vsub.s32 %v619, %v621
  %v623 = vrot.slane %v609, %v622
  %v624 = vcombine.low %v616, %v623
  %v625 = vcombine.low %v115, %v119
  %v626 = vcombine.low %v123, %v127
  %v628 = vunpack.c.l.s4 1983009808
  %v629 = vunpack.c.0.s8 %v628
  %v630 = vlaneseq
  %v631 = vshrl.u32 %v630, 7
  %v632 = vsub.s32 %v629, %v631
  %v633 = vrot.slane %v625, %v632
  %v635 = vunpack.c.l.s4 1983009808
  %v636 = vunpack.c.0.s8 %v635
  %v637 = vlaneseq
  %v638 = vshrl.u32 %v637, 7
  %v639 = vsub.s32 %v636, %v638
  %v640 = vrot.slane %v626, %v639
  %v641 = vcombine.low %v633, %v640
  %v642 = vcombine.low %v131, %v135
  %v643 = vcombine.low %v139, %v143
  %v645 = vunpack.c.l.s4 1983009808
  %v646 = vunpack.c.0.s8 %v645
  %v647 = vlaneseq
  %v648 = vshrl.u32 %v647, 7
  %v649 = vsub.s32 %v646, %v648
  %v650 = vrot.slane %v642, %v649
  %v652 = vunpack.c.l.s4 1983009808
  %v653 = vunpack.c.0.s8 %v652
  %v654 = vlaneseq
  %v655 = vshrl.u32 %v654, 7
  %v656 = vsub.s32 %v653, %v655
  %v657 = vrot.slane %v643, %v656
  %v658 = vcombine.low %v650, %v657
  %v659 = vcombine.low %v147, %v151
  %v660 = vcombine.low %v155, %v159
  %v662 = vunpack.c.l.s4 1983009808
  %v663 = vunpack.c.0.s8 %v662
  %v664 = vlaneseq
  %v665 = vshrl.u32 %v664, 7
  %v666 = vsub.s32 %v663, %v665
  %v667 = vrot.slane %v659, %v666
  %v669 = vunpack.c.l.s4 1983009808
  %v670 = vunpack.c.0.s8 %v669
  %v671 = vlaneseq
  %v672 = vshrl.u32 %v671, 7
  %v673 = vsub.s32 %v670, %v672
  %v674 = vrot.slane %v660, %v673
  %v675 = vcombine.low %v667, %v674
  %v676 = vcombine.low %v163, %v167
  %v677 = vcombine.low %v171, %v175
  %v679 = vunpack.c.l.s4 1983009808
  %v680 = vunpack.c.0.s8 %v679
  %v681 = vlaneseq
  %v682 = vshrl.u32 %v681, 7
  %v683 = vsub.s32 %v680, %v682
  %v684 = vrot.slane %v676, %v683
  %v686 = vunpack.c.l.s4 1983009808
  %v687 = vunpack.c.0.s8 %v686
  %v688 = vlaneseq
  %v689 = vshrl.u32 %v688, 7
  %v690 = vsub.s32 %v687, %v689
  %v691 = vrot.slane %v677, %v690
  %v692 = vcombine.low %v684, %v691
  %v693 = vcombine.low %v179, %v183
  %v694 = vcombine.low %v187, %v191
  %v696 = vunpack.c.l.s4 1983009808
  %v697 = vunpack.c.0.s8 %v696
  %v698 = vlaneseq
  %v699 = vshrl.u32 %v698, 7
  %v700 = vsub.s32 %v697, %v699
  %v701 = vrot.slane %v693, %v700
  %v703 = vunpack.c.l.s4 1983009808
  %v704 = vunpack.c.0.s8 %v703
  %v705 = vlaneseq
  %v706 = vshrl.u32 %v705, 7
  %v707 = vsub.s32 %v704, %v706
  %v708 = vrot.slane %v694, %v707
  %v709 = vcombine.low %v701, %v708
  %v710 = vcombine.low %v195, %v199
  %v711 = vcombine.low %v203, %v207
  %v713 = vunpack.c.l.s4 1983009808
  %v714 = vunpack.c.0.s8 %v713
  %v715 = vlaneseq
  %v716 = vshrl.u32 %v715, 7
  %v717 = vsub.s32 %v714, %v716
  %v718 = vrot.slane %v710, %v717
  %v720 = vunpack.c.l.s4 1983009808
  %v721 = vunpack.c.0.s8 %v720
  %v722 = vlaneseq
  %v723 = vshrl.u32 %v722, 7
  %v724 = vsub.s32 %v721, %v723
  %v725 = vrot.slane %v711, %v724
  %v726 = vcombine.low %v718, %v725
  %v727 = vcombine.low %v211, %v215
  %v728 = vcombine.low %v219, %v223
  %v730 = vunpack.c.l.s4 1983009808
  %v731 = vunpack.c.0.s8 %v730
  %v732 = vlaneseq
  %v733 = vshrl.u32 %v732, 7
  %v734 = vsub.s32 %v731, %v733
  %v735 = vrot.slane %v727, %v734
  %v737 = vunpack.c.l.s4 1983009808
  %v738 = vunpack.c.0.s8 %v737
  %v739 = vlaneseq
  %v740 = vshrl.u32 %v739, 7
  %v741 = vsub.s32 %v738, %v740
  %v742 = vrot.slane %v728, %v741
  %v743 = vcombine.low %v735, %v742
  %v744 = vcombine.low %v227, %v231
  %v745 = vcombine.low %v235, %v239
  %v747 = vunpack.c.l.s4 1983009808
  %v748 = vunpack.c.0.s8 %v747
  %v749 = vlaneseq
  %v750 = vshrl.u32 %v749, 7
  %v751 = vsub.s32 %v748, %v750
  %v752 = vrot.slane %v744, %v751
  %v754 = vunpack.c.l.s4 1983009808
  %v755 = vunpack.c.0.s8 %v754
  %v756 = vlaneseq
  %v757 = vshrl.u32 %v756, 7
  %v758 = vsub.s32 %v755, %v757
  %v759 = vrot.slane %v745, %v758
  %v760 = vcombine.low %v752, %v759
  %v761 = vcombine.low %v243, %v247
  %v762 = vcombine.low %v251, %v255
  %v764 = vunpack.c.l.s4 1983009808
  %v765 = vunpack.c.0.s8 %v764
  %v766 = vlaneseq
  %v767 = vshrl.u32 %v766, 7
  %v768 = vsub.s32 %v765, %v767
  %v769 = vrot.slane %v761, %v768
  %v771 = vunpack.c.l.s4 1983009808
  %v772 = vunpack.c.0.s8 %v771
  %v773 = vlaneseq
  %v774 = vshrl.u32 %v773, 7
  %v775 = vsub.s32 %v772, %v774
  %v776 = vrot.slane %v762, %v775
  %v777 = vcombine.low %v769, %v776
  %v778 = vcombine.low %v259, %v263
  %v779 = vcombine.low %v267, %v271
  %v781 = vunpack.c.l.s4 1983009808
  %v782 = vunpack.c.0.s8 %v781
  %v783 = vlaneseq
  %v784 = vshrl.u32 %v783, 7
  %v785 = vsub.s32 %v782, %v784
  %v786 = vrot.slane %v778, %v785
  %v788 = vunpack.c.l.s4 1983009808
  %v789 = vunpack.c.0.s8 %v788
  %v790 = vlaneseq
  %v791 = vshrl.u32 %v790, 7
  %v792 = vsub.s32 %v789, %v791
  %v793 = vrot.slane %v779, %v792
  %v794 = vcombine.low %v786, %v793
  %v795 = vcombine.low %v275, %v279
  %v796 = vcombine.low %v283, %v287
  %v798 = vunpack.c.l.s4 1983009808
  %v799 = vunpack.c.0.s8 %v798
  %v800 = vlaneseq
  %v801 = vshrl.u32 %v800, 7
  %v802 = vsub.s32 %v799, %v801
  %v803 = vrot.slane %v795, %v802
  %v805 = vunpack.c.l.s4 1983009808
  %v806 = vunpack.c.0.s8 %v805
  %v807 = vlaneseq
  %v808 = vshrl.u32 %v807, 7
  %v809 = vsub.s32 %v806, %v808
  %v810 = vrot.slane %v796, %v809
  %v811 = vcombine.low %v803, %v810
  %v812 = vcombine.low %v291, %v295
  %v813 = vcombine.low %v299, %v303
  %v815 = vunpack.c.l.s4 1983009808
  %v816 = vunpack.c.0.s8 %v815
  %v817 = vlaneseq
  %v818 = vshrl.u32 %v817, 7
  %v819 = vsub.s32 %v816, %v818
  %v820 = vrot.slane %v812, %v819
  %v822 = vunpack.c.l.s4 1983009808
  %v823 = vunpack.c.0.s8 %v822
  %v824 = vlaneseq
  %v825 = vshrl.u32 %v824, 7
  %v826 = vsub.s32 %v823, %v825
  %v827 = vrot.slane %v813, %v826
  %v828 = vcombine.low %v820, %v827
  %v829 = vcombine.low %v307, %v311
  %v830 = vcombine.low %v315, %v319
  %v832 = vunpack.c.l.s4 1983009808
  %v833 = vunpack.c.0.s8 %v832
  %v834 = vlaneseq
  %v835 = vshrl.u32 %v834, 7
  %v836 = vsub.s32 %v833, %v835
  %v837 = vrot.slane %v829, %v836
  %v839 = vunpack.c.l.s4 1983009808
  %v840 = vunpack.c.0.s8 %v839
  %v841 = vlaneseq
  %v842 = vshrl.u32 %v841, 7
  %v843 = vsub.s32 %v840, %v842
  %v844 = vrot.slane %v830, %v843
  %v845 = vcombine.low %v837, %v844
  %v846 = vcombine.low %v323, %v327
  %v847 = vcombine.low %v331, %v335
  %v849 = vunpack.c.l.s4 1983009808
  %v850 = vunpack.c.0.s8 %v849
  %v851 = vlaneseq
  %v852 = vshrl.u32 %v851, 7
  %v853 = vsub.s32 %v850, %v852
  %v854 = vrot.slane %v846, %v853
  %v856 = vunpack.c.l.s4 1983009808
  %v857 = vunpack.c.0.s8 %v856
  %v858 = vlaneseq
  %v859 = vshrl.u32 %v858, 7
  %v860 = vsub.s32 %v857, %v859
  %v861 = vrot.slane %v847, %v860
  %v862 = vcombine.low %v854, %v861
  %v863 = vcombine.low %v339, %v343
  %v864 = vcombine.low %v347, %v351
  %v866 = vunpack.c.l.s4 1983009808
  %v867 = vunpack.c.0.s8 %v866
  %v868 = vlaneseq
  %v869 = vshrl.u32 %v868, 7
  %v870 = vsub.s32 %v867, %v869
  %v871 = vrot.slane %v863, %v870
  %v873 = vunpack.c.l.s4 1983009808
  %v874 = vunpack.c.0.s8 %v873
  %v875 = vlaneseq
  %v876 = vshrl.u32 %v875, 7
  %v877 = vsub.s32 %v874, %v876
  %v878 = vrot.slane %v864, %v877
  %v879 = vcombine.low %v871, %v878
  %v880 = vcombine.low %v355, %v359
  %v881 = vcombine.low %v363, %v367
  %v883 = vunpack.c.l.s4 1983009808
  %v884 = vunpack.c.0.s8 %v883
  %v885 = vlaneseq
  %v886 = vshrl.u32 %v885, 7
  %v887 = vsub.s32 %v884, %v886
  %v888 = vrot.slane %v880, %v887
  %v890 = vunpack.c.l.s4 1983009808
  %v891 = vunpack.c.0.s8 %v890
  %v892 = vlaneseq
  %v893 = vshrl.u32 %v892, 7
  %v894 = vsub.s32 %v891, %v893
  %v895 = vrot.slane %v881, %v894
  %v896 = vcombine.low %v888, %v895
  %v897 = vcombine.low %v371, %v375
  %v898 = vcombine.low %v379, %v383
  %v900 = vunpack.c.l.s4 1983009808
  %v901 = vunpack.c.0.s8 %v900
  %v902 = vlaneseq
  %v903 = vshrl.u32 %v902, 7
  %v904 = vsub.s32 %v901, %v903
  %v905 = vrot.slane %v897, %v904
  %v907 = vunpack.c.l.s4 1983009808
  %v908 = vunpack.c.0.s8 %v907
  %v909 = vlaneseq
  %v910 = vshrl.u32 %v909, 7
  %v911 = vsub.s32 %v908, %v910
  %v912 = vrot.slane %v898, %v911
  %v913 = vcombine.low %v905, %v912
  %v914 = vcombine.low %v387, %v391
  %v915 = vcombine.low %v395, %v399
  %v917 = vunpack.c.l.s4 1983009808
  %v918 = vunpack.c.0.s8 %v917
  %v919 = vlaneseq
  %v920 = vshrl.u32 %v919, 7
  %v921 = vsub.s32 %v918, %v920
  %v922 = vrot.slane %v914, %v921
  %v924 = vunpack.c.l.s4 1983009808
  %v925 = vunpack.c.0.s8 %v924
  %v926 = vlaneseq
  %v927 = vshrl.u32 %v926, 7
  %v928 = vsub.s32 %v925, %v927
  %v929 = vrot.slane %v915, %v928
  %v930 = vcombine.low %v922, %v929
  %v931 = vcombine.low %v403, %v407
  %v932 = vcombine.low %v411, %v415
  %v934 = vunpack.c.l.s4 1983009808
  %v935 = vunpack.c.0.s8 %v934
  %v936 = vlaneseq
  %v937 = vshrl.u32 %v936, 7
  %v938 = vsub.s32 %v935, %v937
  %v939 = vrot.slane %v931, %v938
  %v941 = vunpack.c.l.s4 1983009808
  %v942 = vunpack.c.0.s8 %v941
  %v943 = vlaneseq
  %v944 = vshrl.u32 %v943, 7
  %v945 = vsub.s32 %v942, %v944
  %v946 = vrot.slane %v932, %v945
  %v947 = vcombine.low %v939, %v946
  %v948 = vcombine.low %v419, %v423
  %v949 = vcombine.low %v427, %v431
  %v951 = vunpack.c.l.s4 1983009808
  %v952 = vunpack.c.0.s8 %v951
  %v953 = vlaneseq
  %v954 = vshrl.u32 %v953, 7
  %v955 = vsub.s32 %v952, %v954
  %v956 = vrot.slane %v948, %v955
  %v958 = vunpack.c.l.s4 1983009808
  %v959 = vunpack.c.0.s8 %v958
  %v960 = vlaneseq
  %v961 = vshrl.u32 %v960, 7
  %v962 = vsub.s32 %v959, %v961
  %v963 = vrot.slane %v949, %v962
  %v964 = vcombine.low %v956, %v963
  %v965 = vcombine.low %v435, %v439
  %v966 = vcombine.low %v443, %v447
  %v968 = vunpack.c.l.s4 1983009808
  %v969 = vunpack.c.0.s8 %v968
  %v970 = vlaneseq
  %v971 = vshrl.u32 %v970, 7
  %v972 = vsub.s32 %v969, %v971
  %v973 = vrot.slane %v965, %v972
  %v975 = vunpack.c.l.s4 1983009808
  %v976 = vunpack.c.0.s8 %v975
  %v977 = vlaneseq
  %v978 = vshrl.u32 %v977, 7
  %v979 = vsub.s32 %v976, %v978
  %v980 = vrot.slane %v966, %v979
  %v981 = vcombine.low %v973, %v980
  %v982 = vcombine.low %v451, %v455
  %v983 = vcombine.low %v459, %v463
  %v985 = vunpack.c.l.s4 1983009808
  %v986 = vunpack.c.0.s8 %v985
  %v987 = vlaneseq
  %v988 = vshrl.u32 %v987, 7
  %v989 = vsub.s32 %v986, %v988
  %v990 = vrot.slane %v982, %v989
  %v992 = vunpack.c.l.s4 1983009808
  %v993 = vunpack.c.0.s8 %v992
  %v994 = vlaneseq
  %v995 = vshrl.u32 %v994, 7
  %v996 = vsub.s32 %v993, %v995
  %v997 = vrot.slane %v983, %v996
  %v998 = vcombine.low %v990, %v997
  %v999 = vcombine.low %v467, %v471
  %v1000 = vcombine.low %v475, %v479
  %v1002 = vunpack.c.l.s4 1983009808
  %v1003 = vunpack.c.0.s8 %v1002
  %v1004 = vlaneseq
  %v1005 = vshrl.u32 %v1004, 7
  %v1006 = vsub.s32 %v1003, %v1005
  %v1007 = vrot.slane %v999, %v1006
  %v1009 = vunpack.c.l.s4 1983009808
  %v1010 = vunpack.c.0.s8 %v1009
  %v1011 = vlaneseq
  %v1012 = vshrl.u32 %v1011, 7
  %v1013 = vsub.s32 %v1010, %v1012
  %v1014 = vrot.slane %v1000, %v1013
  %v1015 = vcombine.low %v1007, %v1014
  %v1016 = vcombine.low %v483, %v487
  %v1017 = vcombine.low %v491, %v495
  %v1019 = vunpack.c.l.s4 1983009808
  %v1020 = vunpack.c.0.s8 %v1019
  %v1021 = vlaneseq
  %v1022 = vshrl.u32 %v1021, 7
  %v1023 = vsub.s32 %v1020, %v1022
  %v1024 = vrot.slane %v1016, %v1023
  %v1026 = vunpack.c.l.s4 1983009808
  %v1027 = vunpack.c.0.s8 %v1026
  %v1028 = vlaneseq
  %v1029 = vshrl.u32 %v1028, 7
  %v1030 = vsub.s32 %v1027, %v1029
  %v1031 = vrot.slane %v1017, %v1030
  %v1032 = vcombine.low %v1024, %v1031
  %v1033 = vcombine.low %v499, %v503
  %v1034 = vcombine.low %v507, %v511
  %v1036 = vunpack.c.l.s4 1983009808
  %v1037 = vunpack.c.0.s8 %v1036
  %v1038 = vlaneseq
  %v1039 = vshrl.u32 %v1038, 7
  %v1040 = vsub.s32 %v1037, %v1039
  %v1041 = vrot.slane %v1033, %v1040
  %v1043 = vunpack.c.l.s4 1983009808
  %v1044 = vunpack.c.0.s8 %v1043
  %v1045 = vlaneseq
  %v1046 = vshrl.u32 %v1045, 7
  %v1047 = vsub.s32 %v1044, %v1046
  %v1048 = vrot.slane %v1034, %v1047
  %v1049 = vcombine.low %v1041, %v1048
  %v1050 = vcombine.low %v515, %v519
  %v1051 = vcombine.low %v523, %v527
  %v1053 = vunpack.c.l.s4 1983009808
  %v1054 = vunpack.c.0.s8 %v1053
  %v1055 = vlaneseq
  %v1056 = vshrl.u32 %v1055, 7
  %v1057 = vsub.s32 %v1054, %v1056
  %v1058 = vrot.slane %v1050, %v1057
  %v1060 = vunpack.c.l.s4 1983009808
  %v1061 = vunpack.c.0.s8 %v1060
  %v1062 = vlaneseq
  %v1063 = vshrl.u32 %v1062, 7
  %v1064 = vsub.s32 %v1061, %v1063
  %v1065 = vrot.slane %v1051, %v1064
  %v1066 = vcombine.low %v1058, %v1065
  %v1067 = vcombine.low %v531, %v535
  %v1068 = vcombine.low %v539, %v543
  %v1070 = vunpack.c.l.s4 1983009808
  %v1071 = vunpack.c.0.s8 %v1070
  %v1072 = vlaneseq
  %v1073 = vshrl.u32 %v1072, 7
  %v1074 = vsub.s32 %v1071, %v1073
  %v1075 = vrot.slane %v1067, %v1074
  %v1077 = vunpack.c.l.s4 1983009808
  %v1078 = vunpack.c.0.s8 %v1077
  %v1079 = vlaneseq
  %v1080 = vshrl.u32 %v1079, 7
  %v1081 = vsub.s32 %v1078, %v1080
  %v1082 = vrot.slane %v1068, %v1081
  %v1083 = vcombine.low %v1075, %v1082
  %v1084 = vcombine.low %v547, %v551
  %v1085 = vcombine.low %v555, %v559
  %v1087 = vunpack.c.l.s4 1983009808
  %v1088 = vunpack.c.0.s8 %v1087
  %v1089 = vlaneseq
  %v1090 = vshrl.u32 %v1089, 7
  %v1091 = vsub.s32 %v1088, %v1090
  %v1092 = vrot.slane %v1084, %v1091
  %v1094 = vunpack.c.l.s4 1983009808
  %v1095 = vunpack.c.0.s8 %v1094
  %v1096 = vlaneseq
  %v1097 = vshrl.u32 %v1096, 7
  %v1098 = vsub.s32 %v1095, %v1097
  %v1099 = vrot.slane %v1085, %v1098
  %v1100 = vcombine.low %v1092, %v1099
  %v1101 = vcombine.low %v563, %v567
  %v1102 = vcombine.low %v571, %v575
  %v1104 = vunpack.c.l.s4 1983009808
  %v1105 = vunpack.c.0.s8 %v1104
  %v1106 = vlaneseq
  %v1107 = vshrl.u32 %v1106, 7
  %v1108 = vsub.s32 %v1105, %v1107
  %v1109 = vrot.slane %v1101, %v1108
  %v1111 = vunpack.c.l.s4 1983009808
  %v1112 = vunpack.c.0.s8 %v1111
  %v1113 = vlaneseq
  %v1114 = vshrl.u32 %v1113, 7
  %v1115 = vsub.s32 %v1112, %v1114
  %v1116 = vrot.slane %v1102, %v1115
  %v1117 = vcombine.low %v1109, %v1116
  %v1118 = vcombine.low %v579, %v583
  %v1119 = vcombine.low %v587, %v591
  %v1121 = vunpack.c.l.s4 1983009808
  %v1122 = vunpack.c.0.s8 %v1121
  %v1123 = vlaneseq
  %v1124 = vshrl.u32 %v1123, 7
  %v1125 = vsub.s32 %v1122, %v1124
  %v1126 = vrot.slane %v1118, %v1125
  %v1128 = vunpack.c.l.s4 1983009808
  %v1129 = vunpack.c.0.s8 %v1128
  %v1130 = vlaneseq
  %v1131 = vshrl.u32 %v1130, 7
  %v1132 = vsub.s32 %v1129, %v1131
  %v1133 = vrot.slane %v1119, %v1132
  %v1134 = vcombine.low %v1126, %v1133
  %v1135 = vcombine.low %v595, %v599
  %v1136 = vcombine.low %v603, %v607
  %v1138 = vunpack.c.l.s4 1983009808
  %v1139 = vunpack.c.0.s8 %v1138
  %v1140 = vlaneseq
  %v1141 = vshrl.u32 %v1140, 7
  %v1142 = vsub.s32 %v1139, %v1141
  %v1143 = vrot.slane %v1135, %v1142
  %v1145 = vunpack.c.l.s4 1983009808
  %v1146 = vunpack.c.0.s8 %v1145
  %v1147 = vlaneseq
  %v1148 = vshrl.u32 %v1147, 7
  %v1149 = vsub.s32 %v1146, %v1148
  %v1150 = vrot.slane %v1136, %v1149
  %v1151 = vcombine.low %v1143, %v1150
  %v1184 = vmul.f32 %v32, %v624
  %v1185 = vmul.f32 %v33, %v641
  %v1186 = vmul.f32 %v34, %v658
  %v1187 = vmul.f32 %v35, %v675
  %v1188 = vmul.f32 %v36, %v692
  %v1189 = vmul.f32 %v37, %v709
  %v1190 = vmul.f32 %v38, %v726
  %v1191 = vmul.f32 %v39, %v743
  %v1192 = vmul.f32 %v40, %v760
  %v1193 = vmul.f32 %v41, %v777
  %v1194 = vmul.f32 %v42, %v794
  %v1195 = vmul.f32 %v43, %v811
  %v1196 = vmul.f32 %v44, %v828
  %v1197 = vmul.f32 %v45, %v845
  %v1198 = vmul.f32 %v46, %v862
  %v1199 = vmul.f32 %v47, %v879
  %v1200 = vmul.f32 %v48, %v896
  %v1201 = vmul.f32 %v49, %v913
  %v1202 = vmul.f32 %v50, %v930
  %v1203 = vmul.f32 %v51, %v947
  %v1204 = vmul.f32 %v52, %v964
  %v1205 = vmul.f32 %v53, %v981
  %v1206 = vmul.f32 %v54, %v998
  %v1207 = vmul.f32 %v55, %v1015
  %v1208 = vmul.f32 %v56, %v1032
  %v1209 = vmul.f32 %v57, %v1049
  %v1210 = vmul.f32 %v58, %v1066
  %v1211 = vmul.f32 %v59, %v1083
  %v1212 = vmul.f32 %v60, %v1100
  %v1213 = vmul.f32 %v61, %v1117
  %v1214 = vmul.f32 %v62, %v1134
  %v1215 = vmul.f32 %v63, %v1151
  %v1248 = vcombine.high %v1184, %v1184
  %v1250 = vunpack.c.l.s4 1983009808
  %v1251 = vunpack.c.0.s8 %v1250
  %v1252 = vlaneseq
  %v1253 = vshrl.u32 %v1252, 7
  %v1254 = vsub.s32 %v1251, %v1253
  %v1255 = vrot.slane %v1184, %v1254
  %v1257 = vunpack.c.l.s4 1983009808
  %v1258 = vunpack.c.0.s8 %v1257
  %v1259 = vlaneseq
  %v1260 = vshrl.u32 %v1259, 7
  %v1261 = vsub.s32 %v1258, %v1260
  %v1262 = vrot.slane %v1248, %v1261
  %v1263 = vcombine.high %v1255, %v1255
  %v1264 = vcombine.high %v1262, %v1262
  %v1265 = vcombine.high %v1185, %v1185
  %v1267 = vunpack.c.l.s4 1983009808
  %v1268 = vunpack.c.0.s8 %v1267
  %v1269 = vlaneseq
  %v1270 = vshrl.u32 %v1269, 7
  %v1271 = vsub.s32 %v1268, %v1270
  %v1272 = vrot.slane %v1185, %v1271
  %v1274 = vunpack.c.l.s4 1983009808
  %v1275 = vunpack.c.0.s8 %v1274
  %v1276 = vlaneseq
  %v1277 = vshrl.u32 %v1276, 7
  %v1278 = vsub.s32 %v1275, %v1277
  %v1279 = vrot.slane %v1265, %v1278
  %v1280 = vcombine.high %v1272, %v1272
  %v1281 = vcombine.high %v1279, %v1279
  %v1282 = vcombine.high %v1186, %v1186
  %v1284 = vunpack.c.l.s4 1983009808
  %v1285 = vunpack.c.0.s8 %v1284
  %v1286 = vlaneseq
  %v1287 = vshrl.u32 %v1286, 7
  %v1288 = vsub.s32 %v1285, %v1287
  %v1289 = vrot.slane %v1186, %v1288
  %v1291 = vunpack.c.l.s4 1983009808
  %v1292 = vunpack.c.0.s8 %v1291
  %v1293 = vlaneseq
  %v1294 = vshrl.u32 %v1293, 7
  %v1295 = vsub.s32 %v1292, %v1294
  %v1296 = vrot.slane %v1282, %v1295
  %v1297 = vcombine.high %v1289, %v1289
  %v1298 = vcombine.high %v1296, %v1296
  %v1299 = vcombine.high %v1187, %v1187
  %v1301 = vunpack.c.l.s4 1983009808
  %v1302 = vunpack.c.0.s8 %v1301
  %v1303 = vlaneseq
  %v1304 = vshrl.u32 %v1303, 7
  %v1305 = vsub.s32 %v1302, %v1304
  %v1306 = vrot.slane %v1187, %v1305
  %v1308 = vunpack.c.l.s4 1983009808
  %v1309 = vunpack.c.0.s8 %v1308
  %v1310 = vlaneseq
  %v1311 = vshrl.u32 %v1310, 7
  %v1312 = vsub.s32 %v1309, %v1311
  %v1313 = vrot.slane %v1299, %v1312
  %v1314 = vcombine.high %v1306, %v1306
  %v1315 = vcombine.high %v1313, %v1313
  %v1316 = vcombine.high %v1188, %v1188
  %v1318 = vunpack.c.l.s4 1983009808
  %v1319 = vunpack.c.0.s8 %v1318
  %v1320 = vlaneseq
  %v1321 = vshrl.u32 %v1320, 7
  %v1322 = vsub.s32 %v1319, %v1321
  %v1323 = vrot.slane %v1188, %v1322
  %v1325 = vunpack.c.l.s4 1983009808
  %v1326 = vunpack.c.0.s8 %v1325
  %v1327 = vlaneseq
  %v1328 = vshrl.u32 %v1327, 7
  %v1329 = vsub.s32 %v1326, %v1328
  %v1330 = vrot.slane %v1316, %v1329
  %v1331 = vcombine.high %v1323, %v1323
  %v1332 = vcombine.high %v1330, %v1330
  %v1333 = vcombine.high %v1189, %v1189
  %v1335 = vunpack.c.l.s4 1983009808
  %v1336 = vunpack.c.0.s8 %v1335
  %v1337 = vlaneseq
  %v1338 = vshrl.u32 %v1337, 7
  %v1339 = vsub.s32 %v1336, %v1338
  %v1340 = vrot.slane %v1189, %v1339
  %v1342 = vunpack.c.l.s4 1983009808
  %v1343 = vunpack.c.0.s8 %v1342
  %v1344 = vlaneseq
  %v1345 = vshrl.u32 %v1344, 7
  %v1346 = vsub.s32 %v1343, %v1345
  %v1347 = vrot.slane %v1333, %v1346
  %v1348 = vcombine.high %v1340, %v1340
  %v1349 = vcombine.high %v1347, %v1347
  %v1350 = vcombine.high %v1190, %v1190
  %v1352 = vunpack.c.l.s4 1983009808
  %v1353 = vunpack.c.0.s8 %v1352
  %v1354 = vlaneseq
  %v1355 = vshrl.u32 %v1354, 7
  %v1356 = vsub.s32 %v1353, %v1355
  %v1357 = vrot.slane %v1190, %v1356
  %v1359 = vunpack.c.l.s4 1983009808
  %v1360 = vunpack.c.0.s8 %v1359
  %v1361 = vlaneseq
  %v1362 = vshrl.u32 %v1361, 7
  %v1363 = vsub.s32 %v1360, %v1362
  %v1364 = vrot.slane %v1350, %v1363
  %v1365 = vcombine.high %v1357, %v1357
  %v1366 = vcombine.high %v1364, %v1364
  %v1367 = vcombine.high %v1191, %v1191
  %v1369 = vunpack.c.l.s4 1983009808
  %v1370 = vunpack.c.0.s8 %v1369
  %v1371 = vlaneseq
  %v1372 = vshrl.u32 %v1371, 7
  %v1373 = vsub.s32 %v1370, %v1372
  %v1374 = vrot.slane %v1191, %v1373
  %v1376 = vunpack.c.l.s4 1983009808
  %v1377 = vunpack.c.0.s8 %v1376
  %v1378 = vlaneseq
  %v1379 = vshrl.u32 %v1378, 7
  %v1380 = vsub.s32 %v1377, %v1379
  %v1381 = vrot.slane %v1367, %v1380
  %v1382 = vcombine.high %v1374, %v1374
  %v1383 = vcombine.high %v1381, %v1381
  %v1384 = vcombine.high %v1192, %v1192
  %v1386 = vunpack.c.l.s4 1983009808
  %v1387 = vunpack.c.0.s8 %v1386
  %v1388 = vlaneseq
  %v1389 = vshrl.u32 %v1388, 7
  %v1390 = vsub.s32 %v1387, %v1389
  %v1391 = vrot.slane %v1192, %v1390
  %v1393 = vunpack.c.l.s4 1983009808
  %v1394 = vunpack.c.0.s8 %v1393
  %v1395 = vlaneseq
  %v1396 = vshrl.u32 %v1395, 7
  %v1397 = vsub.s32 %v1394, %v1396
  %v1398 = vrot.slane %v1384, %v1397
  %v1399 = vcombine.high %v1391, %v1391
  %v1400 = vcombine.high %v1398, %v1398
  %v1401 = vcombine.high %v1193, %v1193
  %v1403 = vunpack.c.l.s4 1983009808
  %v1404 = vunpack.c.0.s8 %v1403
  %v1405 = vlaneseq
  %v1406 = vshrl.u32 %v1405, 7
  %v1407 = vsub.s32 %v1404, %v1406
  %v1408 = vrot.slane %v1193, %v1407
  %v1410 = vunpack.c.l.s4 1983009808
  %v1411 = vunpack.c.0.s8 %v1410
  %v1412 = vlaneseq
  %v1413 = vshrl.u32 %v1412, 7
  %v1414 = vsub.s32 %v1411, %v1413
  %v1415 = vrot.slane %v1401, %v1414
  %v1416 = vcombine.high %v1408, %v1408
  %v1417 = vcombine.high %v1415, %v1415
  %v1418 = vcombine.high %v1194, %v1194
  %v1420 = vunpack.c.l.s4 1983009808
  %v1421 = vunpack.c.0.s8 %v1420
  %v1422 = vlaneseq
  %v1423 = vshrl.u32 %v1422, 7
  %v1424 = vsub.s32 %v1421, %v1423
  %v1425 = vrot.slane %v1194, %v1424
  %v1427 = vunpack.c.l.s4 1983009808
  %v1428 = vunpack.c.0.s8 %v1427
  %v1429 = vlaneseq
  %v1430 = vshrl.u32 %v1429, 7
  %v1431 = vsub.s32 %v1428, %v1430
  %v1432 = vrot.slane %v1418, %v1431
  %v1433 = vcombine.high %v1425, %v1425
  %v1434 = vcombine.high %v1432, %v1432
  %v1435 = vcombine.high %v1195, %v1195
  %v1437 = vunpack.c.l.s4 1983009808
  %v1438 = vunpack.c.0.s8 %v1437
  %v1439 = vlaneseq
  %v1440 = vshrl.u32 %v1439, 7
  %v1441 = vsub.s32 %v1438, %v1440
  %v1442 = vrot.slane %v1195, %v1441
  %v1444 = vunpack.c.l.s4 1983009808
  %v1445 = vunpack.c.0.s8 %v1444
  %v1446 = vlaneseq
  %v1447 = vshrl.u32 %v1446, 7
  %v1448 = vsub.s32 %v1445, %v1447
  %v1449 = vrot.slane %v1435, %v1448
  %v1450 = vcombine.high %v1442, %v1442
  %v1451 = vcombine.high %v1449, %v1449
  %v1452 = vcombine.high %v1196, %v1196
  %v1454 = vunpack.c.l.s4 1983009808
  %v1455 = vunpack.c.0.s8 %v1454
  %v1456 = vlaneseq
  %v1457 = vshrl.u32 %v1456, 7
  %v1458 = vsub.s32 %v1455, %v1457
  %v1459 = vrot.slane %v1196, %v1458
  %v1461 = vunpack.c.l.s4 1983009808
  %v1462 = vunpack.c.0.s8 %v1461
  %v1463 = vlaneseq
  %v1464 = vshrl.u32 %v1463, 7
  %v1465 = vsub.s32 %v1462, %v1464
  %v1466 = vrot.slane %v1452, %v1465
  %v1467 = vcombine.high %v1459, %v1459
  %v1468 = vcombine.high %v1466, %v1466
  %v1469 = vcombine.high %v1197, %v1197
  %v1471 = vunpack.c.l.s4 1983009808
  %v1472 = vunpack.c.0.s8 %v1471
  %v1473 = vlaneseq
  %v1474 = vshrl.u32 %v1473, 7
  %v1475 = vsub.s32 %v1472, %v1474
  %v1476 = vrot.slane %v1197, %v1475
  %v1478 = vunpack.c.l.s4 1983009808
  %v1479 = vunpack.c.0.s8 %v1478
  %v1480 = vlaneseq
  %v1481 = vshrl.u32 %v1480, 7
  %v1482 = vsub.s32 %v1479, %v1481
  %v1483 = vrot.slane %v1469, %v1482
  %v1484 = vcombine.high %v1476, %v1476
  %v1485 = vcombine.high %v1483, %v1483
  %v1486 = vcombine.high %v1198, %v1198
  %v1488 = vunpack.c.l.s4 1983009808
  %v1489 = vunpack.c.0.s8 %v1488
  %v1490 = vlaneseq
  %v1491 = vshrl.u32 %v1490, 7
  %v1492 = vsub.s32 %v1489, %v1491
  %v1493 = vrot.slane %v1198, %v1492
  %v1495 = vunpack.c.l.s4 1983009808
  %v1496 = vunpack.c.0.s8 %v1495
  %v1497 = vlaneseq
  %v1498 = vshrl.u32 %v1497, 7
  %v1499 = vsub.s32 %v1496, %v1498
  %v1500 = vrot.slane %v1486, %v1499
  %v1501 = vcombine.high %v1493, %v1493
  %v1502 = vcombine.high %v1500, %v1500
  %v1503 = vcombine.high %v1199, %v1199
  %v1505 = vunpack.c.l.s4 1983009808
  %v1506 = vunpack.c.0.s8 %v1505
  %v1507 = vlaneseq
  %v1508 = vshrl.u32 %v1507, 7
  %v1509 = vsub.s32 %v1506, %v1508
  %v1510 = vrot.slane %v1199, %v1509
  %v1512 = vunpack.c.l.s4 1983009808
  %v1513 = vunpack.c.0.s8 %v1512
  %v1514 = vlaneseq
  %v1515 = vshrl.u32 %v1514, 7
  %v1516 = vsub.s32 %v1513, %v1515
  %v1517 = vrot.slane %v1503, %v1516
  %v1518 = vcombine.high %v1510, %v1510
  %v1519 = vcombine.high %v1517, %v1517
  %v1520 = vcombine.high %v1200, %v1200
  %v1522 = vunpack.c.l.s4 1983009808
  %v1523 = vunpack.c.0.s8 %v1522
  %v1524 = vlaneseq
  %v1525 = vshrl.u32 %v1524, 7
  %v1526 = vsub.s32 %v1523, %v1525
  %v1527 = vrot.slane %v1200, %v1526
  %v1529 = vunpack.c.l.s4 1983009808
  %v1530 = vunpack.c.0.s8 %v1529
  %v1531 = vlaneseq
  %v1532 = vshrl.u32 %v1531, 7
  %v1533 = vsub.s32 %v1530, %v1532
  %v1534 = vrot.slane %v1520, %v1533
  %v1535 = vcombine.high %v1527, %v1527
  %v1536 = vcombine.high %v1534, %v1534
  %v1537 = vcombine.high %v1201, %v1201
  %v1539 = vunpack.c.l.s4 1983009808
  %v1540 = vunpack.c.0.s8 %v1539
  %v1541 = vlaneseq
  %v1542 = vshrl.u32 %v1541, 7
  %v1543 = vsub.s32 %v1540, %v1542
  %v1544 = vrot.slane %v1201, %v1543
  %v1546 = vunpack.c.l.s4 1983009808
  %v1547 = vunpack.c.0.s8 %v1546
  %v1548 = vlaneseq
  %v1549 = vshrl.u32 %v1548, 7
  %v1550 = vsub.s32 %v1547, %v1549
  %v1551 = vrot.slane %v1537, %v1550
  %v1552 = vcombine.high %v1544, %v1544
  %v1553 = vcombine.high %v1551, %v1551
  %v1554 = vcombine.high %v1202, %v1202
  %v1556 = vunpack.c.l.s4 1983009808
  %v1557 = vunpack.c.0.s8 %v1556
  %v1558 = vlaneseq
  %v1559 = vshrl.u32 %v1558, 7
  %v1560 = vsub.s32 %v1557, %v1559
  %v1561 = vrot.slane %v1202, %v1560
  %v1563 = vunpack.c.l.s4 1983009808
  %v1564 = vunpack.c.0.s8 %v1563
  %v1565 = vlaneseq
  %v1566 = vshrl.u32 %v1565, 7
  %v1567 = vsub.s32 %v1564, %v1566
  %v1568 = vrot.slane %v1554, %v1567
  %v1569 = vcombine.high %v1561, %v1561
  %v1570 = vcombine.high %v1568, %v1568
  %v1571 = vcombine.high %v1203, %v1203
  %v1573 = vunpack.c.l.s4 1983009808
  %v1574 = vunpack.c.0.s8 %v1573
  %v1575 = vlaneseq
  %v1576 = vshrl.u32 %v1575, 7
  %v1577 = vsub.s32 %v1574, %v1576
  %v1578 = vrot.slane %v1203, %v1577
  %v1580 = vunpack.c.l.s4 1983009808
  %v1581 = vunpack.c.0.s8 %v1580
  %v1582 = vlaneseq
  %v1583 = vshrl.u32 %v1582, 7
  %v1584 = vsub.s32 %v1581, %v1583
  %v1585 = vrot.slane %v1571, %v1584
  %v1586 = vcombine.high %v1578, %v1578
  %v1587 = vcombine.high %v1585, %v1585
  %v1588 = vcombine.high %v1204, %v1204
  %v1590 = vunpack.c.l.s4 1983009808
  %v1591 = vunpack.c.0.s8 %v1590
  %v1592 = vlaneseq
  %v1593 = vshrl.u32 %v1592, 7
  %v1594 = vsub.s32 %v1591, %v1593
  %v1595 = vrot.slane %v1204, %v1594
  %v1597 = vunpack.c.l.s4 1983009808
  %v1598 = vunpack.c.0.s8 %v1597
  %v1599 = vlaneseq
  %v1600 = vshrl.u32 %v1599, 7
  %v1601 = vsub.s32 %v1598, %v1600
  %v1602 = vrot.slane %v1588, %v1601
  %v1603 = vcombine.high %v1595, %v1595
  %v1604 = vcombine.high %v1602, %v1602
  %v1605 = vcombine.high %v1205, %v1205
  %v1607 = vunpack.c.l.s4 1983009808
  %v1608 = vunpack.c.0.s8 %v1607
  %v1609 = vlaneseq
  %v1610 = vshrl.u32 %v1609, 7
  %v1611 = vsub.s32 %v1608, %v1610
  %v1612 = vrot.slane %v1205, %v1611
  %v1614 = vunpack.c.l.s4 1983009808
  %v1615 = vunpack.c.0.s8 %v1614
  %v1616 = vlaneseq
  %v1617 = vshrl.u32 %v1616, 7
  %v1618 = vsub.s32 %v1615, %v1617
  %v1619 = vrot.slane %v1605, %v1618
  %v1620 = vcombine.high %v1612, %v1612
  %v1621 = vcombine.high %v1619, %v1619
  %v1622 = vcombine.high %v1206, %v1206
  %v1624 = vunpack.c.l.s4 1983009808
  %v1625 = vunpack.c.0.s8 %v1624
  %v1626 = vlaneseq
  %v1627 = vshrl.u32 %v1626, 7
  %v1628 = vsub.s32 %v1625, %v1627
  %v1629 = vrot.slane %v1206, %v1628
  %v1631 = vunpack.c.l.s4 1983009808
  %v1632 = vunpack.c.0.s8 %v1631
  %v1633 = vlaneseq
  %v1634 = vshrl.u32 %v1633, 7
  %v1635 = vsub.s32 %v1632, %v1634
  %v1636 = vrot.slane %v1622, %v1635
  %v1637 = vcombine.high %v1629, %v1629
  %v1638 = vcombine.high %v1636, %v1636
  %v1639 = vcombine.high %v1207, %v1207
  %v1641 = vunpack.c.l.s4 1983009808
  %v1642 = vunpack.c.0.s8 %v1641
  %v1643 = vlaneseq
  %v1644 = vshrl.u32 %v1643, 7
  %v1645 = vsub.s32 %v1642, %v1644
  %v1646 = vrot.slane %v1207, %v1645
  %v1648 = vunpack.c.l.s4 1983009808
  %v1649 = vunpack.c.0.s8 %v1648
  %v1650 = vlaneseq
  %v1651 = vshrl.u32 %v1650, 7
  %v1652 = vsub.s32 %v1649, %v1651
  %v1653 = vrot.slane %v1639, %v1652
  %v1654 = vcombine.high %v1646, %v1646
  %v1655 = vcombine.high %v1653, %v1653
  %v1656 = vcombine.high %v1208, %v1208
  %v1658 = vunpack.c.l.s4 1983009808
  %v1659 = vunpack.c.0.s8 %v1658
  %v1660 = vlaneseq
  %v1661 = vshrl.u32 %v1660, 7
  %v1662 = vsub.s32 %v1659, %v1661
  %v1663 = vrot.slane %v1208, %v1662
  %v1665 = vunpack.c.l.s4 1983009808
  %v1666 = vunpack.c.0.s8 %v1665
  %v1667 = vlaneseq
  %v1668 = vshrl.u32 %v1667, 7
  %v1669 = vsub.s32 %v1666, %v1668
  %v1670 = vrot.slane %v1656, %v1669
  %v1671 = vcombine.high %v1663, %v1663
  %v1672 = vcombine.high %v1670, %v1670
  %v1673 = vcombine.high %v1209, %v1209
  %v1675 = vunpack.c.l.s4 1983009808
  %v1676 = vunpack.c.0.s8 %v1675
  %v1677 = vlaneseq
  %v1678 = vshrl.u32 %v1677, 7
  %v1679 = vsub.s32 %v1676, %v1678
  %v1680 = vrot.slane %v1209, %v1679
  %v1682 = vunpack.c.l.s4 1983009808
  %v1683 = vunpack.c.0.s8 %v1682
  %v1684 = vlaneseq
  %v1685 = vshrl.u32 %v1684, 7
  %v1686 = vsub.s32 %v1683, %v1685
  %v1687 = vrot.slane %v1673, %v1686
  %v1688 = vcombine.high %v1680, %v1680
  %v1689 = vcombine.high %v1687, %v1687
  %v1690 = vcombine.high %v1210, %v1210
  %v1692 = vunpack.c.l.s4 1983009808
  %v1693 = vunpack.c.0.s8 %v1692
  %v1694 = vlaneseq
  %v1695 = vshrl.u32 %v1694, 7
  %v1696 = vsub.s32 %v1693, %v1695
  %v1697 = vrot.slane %v1210, %v1696
  %v1699 = vunpack.c.l.s4 1983009808
  %v1700 = vunpack.c.0.s8 %v1699
  %v1701 = vlaneseq
  %v1702 = vshrl.u32 %v1701, 7
  %v1703 = vsub.s32 %v1700, %v1702
  %v1704 = vrot.slane %v1690, %v1703
  %v1705 = vcombine.high %v1697, %v1697
  %v1706 = vcombine.high %v1704, %v1704
  %v1707 = vcombine.high %v1211, %v1211
  %v1709 = vunpack.c.l.s4 1983009808
  %v1710 = vunpack.c.0.s8 %v1709
  %v1711 = vlaneseq
  %v1712 = vshrl.u32 %v1711, 7
  %v1713 = vsub.s32 %v1710, %v1712
  %v1714 = vrot.slane %v1211, %v1713
  %v1716 = vunpack.c.l.s4 1983009808
  %v1717 = vunpack.c.0.s8 %v1716
  %v1718 = vlaneseq
  %v1719 = vshrl.u32 %v1718, 7
  %v1720 = vsub.s32 %v1717, %v1719
  %v1721 = vrot.slane %v1707, %v1720
  %v1722 = vcombine.high %v1714, %v1714
  %v1723 = vcombine.high %v1721, %v1721
  %v1724 = vcombine.high %v1212, %v1212
  %v1726 = vunpack.c.l.s4 1983009808
  %v1727 = vunpack.c.0.s8 %v1726
  %v1728 = vlaneseq
  %v1729 = vshrl.u32 %v1728, 7
  %v1730 = vsub.s32 %v1727, %v1729
  %v1731 = vrot.slane %v1212, %v1730
  %v1733 = vunpack.c.l.s4 1983009808
  %v1734 = vunpack.c.0.s8 %v1733
  %v1735 = vlaneseq
  %v1736 = vshrl.u32 %v1735, 7
  %v1737 = vsub.s32 %v1734, %v1736
  %v1738 = vrot.slane %v1724, %v1737
  %v1739 = vcombine.high %v1731, %v1731
  %v1740 = vcombine.high %v1738, %v1738
  %v1741 = vcombine.high %v1213, %v1213
  %v1743 = vunpack.c.l.s4 1983009808
  %v1744 = vunpack.c.0.s8 %v1743
  %v1745 = vlaneseq
  %v1746 = vshrl.u32 %v1745, 7
  %v1747 = vsub.s32 %v1744, %v1746
  %v1748 = vrot.slane %v1213, %v1747
  %v1750 = vunpack.c.l.s4 1983009808
  %v1751 = vunpack.c.0.s8 %v1750
  %v1752 = vlaneseq
  %v1753 = vshrl.u32 %v1752, 7
  %v1754 = vsub.s32 %v1751, %v1753
  %v1755 = vrot.slane %v1741, %v1754
  %v1756 = vcombine.high %v1748, %v1748
  %v1757 = vcombine.high %v1755, %v1755
  %v1758 = vcombine.high %v1214, %v1214
  %v1760 = vunpack.c.l.s4 1983009808
  %v1761 = vunpack.c.0.s8 %v1760
  %v1762 = vlaneseq
  %v1763 = vshrl.u32 %v1762, 7
  %v1764 = vsub.s32 %v1761, %v1763
  %v1765 = vrot.slane %v1214, %v1764
  %v1767 = vunpack.c.l.s4 1983009808
  %v1768 = vunpack.c.0.s8 %v1767
  %v1769 = vlaneseq
  %v1770 = vshrl.u32 %v1769, 7
  %v1771 = vsub.s32 %v1768, %v1770
  %v1772 = vrot.slane %v1758, %v1771
  %v1773 = vcombine.high %v1765, %v1765
  %v1774 = vcombine.high %v1772, %v1772
  %v1775 = vcombine.high %v1215, %v1215
  %v1777 = vunpack.c.l.s4 1983009808
  %v1778 = vunpack.c.0.s8 %v1777
  %v1779 = vlaneseq
  %v1780 = vshrl.u32 %v1779, 7
  %v1781 = vsub.s32 %v1778, %v1780
  %v1782 = vrot.slane %v1215, %v1781
  %v1784 = vunpack.c.l.s4 1983009808
  %v1785 = vunpack.c.0.s8 %v1784
  %v1786 = vlaneseq
  %v1787 = vshrl.u32 %v1786, 7
  %v1788 = vsub.s32 %v1785, %v1787
  %v1789 = vrot.slane %v1775, %v1788
  %v1790 = vcombine.high %v1782, %v1782
  %v1791 = vcombine.high %v1789, %v1789
  %vm1920 = vcmask 1041408
  %v1921 = vsel %vm1920, %v1255, 0.0
  %v1922 = vsel %vm1920, %v1263, 0.0
  %v1923 = vadd.f32 %v1921, %v1922
  %v1924 = vsel %vm1920, %v1262, 0.0
  %v1925 = vadd.f32 %v1923, %v1924
  %v1926 = vsel %vm1920, %v1264, 0.0
  %v1927 = vadd.f32 %v1925, %v1926
  %v1928 = vsel %vm1920, %v1272, 0.0
  %v1929 = vadd.f32 %v1927, %v1928
  %v1930 = vsel %vm1920, %v1280, 0.0
  %v1931 = vadd.f32 %v1929, %v1930
  %v1932 = vsel %vm1920, %v1279, 0.0
  %v1933 = vadd.f32 %v1931, %v1932
  %v1934 = vsel %vm1920, %v1281, 0.0
  %v1935 = vadd.f32 %v1933, %v1934
  %v1936 = vsel %vm1920, %v1289, 0.0
  %v1937 = vadd.f32 %v1935, %v1936
  %v1938 = vsel %vm1920, %v1297, 0.0
  %v1939 = vadd.f32 %v1937, %v1938
  %v1940 = vsel %vm1920, %v1296, 0.0
  %v1941 = vadd.f32 %v1939, %v1940
  %v1942 = vsel %vm1920, %v1298, 0.0
  %v1943 = vadd.f32 %v1941, %v1942
  %v1944 = vsel %vm1920, %v1306, 0.0
  %v1945 = vadd.f32 %v1943, %v1944
  %v1946 = vsel %vm1920, %v1314, 0.0
  %v1947 = vadd.f32 %v1945, %v1946
  %v1948 = vsel %vm1920, %v1313, 0.0
  %v1949 = vadd.f32 %v1947, %v1948
  %v1950 = vsel %vm1920, %v1315, 0.0
  %v1951 = vadd.f32 %v1949, %v1950
  %v1952 = vsel %vm1920, %v1323, 0.0
  %v1953 = vadd.f32 %v1951, %v1952
  %v1954 = vsel %vm1920, %v1331, 0.0
  %v1955 = vadd.f32 %v1953, %v1954
  %v1956 = vsel %vm1920, %v1330, 0.0
  %v1957 = vadd.f32 %v1955, %v1956
  %v1958 = vsel %vm1920, %v1332, 0.0
  %v1959 = vadd.f32 %v1957, %v1958
  %v1960 = vsel %vm1920, %v1340, 0.0
  %v1961 = vadd.f32 %v1959, %v1960
  %v1962 = vsel %vm1920, %v1348, 0.0
  %v1963 = vadd.f32 %v1961, %v1962
  %v1964 = vsel %vm1920, %v1347, 0.0
  %v1965 = vadd.f32 %v1963, %v1964
  %v1966 = vsel %vm1920, %v1349, 0.0
  %v1967 = vadd.f32 %v1965, %v1966
  %v1968 = vsel %vm1920, %v1357, 0.0
  %v1969 = vadd.f32 %v1967, %v1968
  %v1970 = vsel %vm1920, %v1365, 0.0
  %v1971 = vadd.f32 %v1969, %v1970
  %v1972 = vsel %vm1920, %v1364, 0.0
  %v1973 = vadd.f32 %v1971, %v1972
  %v1974 = vsel %vm1920, %v1366, 0.0
  %v1975 = vadd.f32 %v1973, %v1974
  %v1976 = vsel %vm1920, %v1374, 0.0
  %v1977 = vadd.f32 %v1975, %v1976
  %v1978 = vsel %vm1920, %v1382, 0.0
  %v1979 = vadd.f32 %v1977, %v1978
  %v1980 = vsel %vm1920, %v1381, 0.0
  %v1981 = vadd.f32 %v1979, %v1980
  %v1982 = vsel %vm1920, %v1383, 0.0
  %v1983 = vadd.f32 %v1981, %v1982
  %v1984 = vsel %vm1920, %v1391, 0.0
  %v1985 = vadd.f32 %v1983, %v1984
  %v1986 = vsel %vm1920, %v1399, 0.0
  %v1987 = vadd.f32 %v1985, %v1986
  %v1988 = vsel %vm1920, %v1398, 0.0
  %v1989 = vadd.f32 %v1987, %v1988
  %v1990 = vsel %vm1920, %v1400, 0.0
  %v1991 = vadd.f32 %v1989, %v1990
  %v1992 = vsel %vm1920, %v1408, 0.0
  %v1993 = vadd.f32 %v1991, %v1992
  %v1994 = vsel %vm1920, %v1416, 0.0
  %v1995 = vadd.f32 %v1993, %v1994
  %v1996 = vsel %vm1920, %v1415, 0.0
  %v1997 = vadd.f32 %v1995, %v1996
  %v1998 = vsel %vm1920, %v1417, 0.0
  %v1999 = vadd.f32 %v1997, %v1998
  %v2000 = vsel %vm1920, %v1425, 0.0
  %v2001 = vadd.f32 %v1999, %v2000
  %v2002 = vsel %vm1920, %v1433, 0.0
  %v2003 = vadd.f32 %v2001, %v2002
  %v2004 = vsel %vm1920, %v1432, 0.0
  %v2005 = vadd.f32 %v2003, %v2004
  %v2006 = vsel %vm1920, %v1434, 0.0
  %v2007 = vadd.f32 %v2005, %v2006
  %v2008 = vsel %vm1920, %v1442, 0.0
  %v2009 = vadd.f32 %v2007, %v2008
  %v2010 = vsel %vm1920, %v1450, 0.0
  %v2011 = vadd.f32 %v2009, %v2010
  %v2012 = vsel %vm1920, %v1449, 0.0
  %v2013 = vadd.f32 %v2011, %v2012
  %v2014 = vsel %vm1920, %v1451, 0.0
  %v2015 = vadd.f32 %v2013, %v2014
  %v2016 = vsel %vm1920, %v1459, 0.0
  %v2017 = vadd.f32 %v2015, %v2016
  %v2018 = vsel %vm1920, %v1467, 0.0
  %v2019 = vadd.f32 %v2017, %v2018
  %v2020 = vsel %vm1920, %v1466, 0.0
  %v2021 = vadd.f32 %v2019, %v2020
  %v2022 = vsel %vm1920, %v1468, 0.0
  %v2023 = vadd.f32 %v2021, %v2022
  %v2024 = vsel %vm1920, %v1476, 0.0
  %v2025 = vadd.f32 %v2023, %v2024
  %v2026 = vsel %vm1920, %v1484, 0.0
  %v2027 = vadd.f32 %v2025, %v2026
  %v2028 = vsel %vm1920, %v1483, 0.0
  %v2029 = vadd.f32 %v2027, %v2028
  %v2030 = vsel %vm1920, %v1485, 0.0
  %v2031 = vadd.f32 %v2029, %v2030
  %v2032 = vsel %vm1920, %v1493, 0.0
  %v2033 = vadd.f32 %v2031, %v2032
  %v2034 = vsel %vm1920, %v1501, 0.0
  %v2035 = vadd.f32 %v2033, %v2034
  %v2036 = vsel %vm1920, %v1500, 0.0
  %v2037 = vadd.f32 %v2035, %v2036
  %v2038 = vsel %vm1920, %v1502, 0.0
  %v2039 = vadd.f32 %v2037, %v2038
  %v2040 = vsel %vm1920, %v1510, 0.0
  %v2041 = vadd.f32 %v2039, %v2040
  %v2042 = vsel %vm1920, %v1518, 0.0
  %v2043 = vadd.f32 %v2041, %v2042
  %v2044 = vsel %vm1920, %v1517, 0.0
  %v2045 = vadd.f32 %v2043, %v2044
  %v2046 = vsel %vm1920, %v1519, 0.0
  %v2047 = vadd.f32 %v2045, %v2046
  %v2048 = vsel %vm1920, %v1527, 0.0
  %v2049 = vadd.f32 %v2047, %v2048
  %v2050 = vsel %vm1920, %v1535, 0.0
  %v2051 = vadd.f32 %v2049, %v2050
  %v2052 = vsel %vm1920, %v1534, 0.0
  %v2053 = vadd.f32 %v2051, %v2052
  %v2054 = vsel %vm1920, %v1536, 0.0
  %v2055 = vadd.f32 %v2053, %v2054
  %v2056 = vsel %vm1920, %v1544, 0.0
  %v2057 = vadd.f32 %v2055, %v2056
  %v2058 = vsel %vm1920, %v1552, 0.0
  %v2059 = vadd.f32 %v2057, %v2058
  %v2060 = vsel %vm1920, %v1551, 0.0
  %v2061 = vadd.f32 %v2059, %v2060
  %v2062 = vsel %vm1920, %v1553, 0.0
  %v2063 = vadd.f32 %v2061, %v2062
  %v2064 = vsel %vm1920, %v1561, 0.0
  %v2065 = vadd.f32 %v2063, %v2064
  %v2066 = vsel %vm1920, %v1569, 0.0
  %v2067 = vadd.f32 %v2065, %v2066
  %v2068 = vsel %vm1920, %v1568, 0.0
  %v2069 = vadd.f32 %v2067, %v2068
  %v2070 = vsel %vm1920, %v1570, 0.0
  %v2071 = vadd.f32 %v2069, %v2070
  %v2072 = vsel %vm1920, %v1578, 0.0
  %v2073 = vadd.f32 %v2071, %v2072
  %v2074 = vsel %vm1920, %v1586, 0.0
  %v2075 = vadd.f32 %v2073, %v2074
  %v2076 = vsel %vm1920, %v1585, 0.0
  %v2077 = vadd.f32 %v2075, %v2076
  %v2078 = vsel %vm1920, %v1587, 0.0
  %v2079 = vadd.f32 %v2077, %v2078
  %v2080 = vsel %vm1920, %v1595, 0.0
  %v2081 = vadd.f32 %v2079, %v2080
  %v2082 = vsel %vm1920, %v1603, 0.0
  %v2083 = vadd.f32 %v2081, %v2082
  %v2084 = vsel %vm1920, %v1602, 0.0
  %v2085 = vadd.f32 %v2083, %v2084
  %v2086 = vsel %vm1920, %v1604, 0.0
  %v2087 = vadd.f32 %v2085, %v2086
  %v2088 = vsel %vm1920, %v1612, 0.0
  %v2089 = vadd.f32 %v2087, %v2088
  %v2090 = vsel %vm1920, %v1620, 0.0
  %v2091 = vadd.f32 %v2089, %v2090
  %v2092 = vsel %vm1920, %v1619, 0.0
  %v2093 = vadd.f32 %v2091, %v2092
  %v2094 = vsel %vm1920, %v1621, 0.0
  %v2095 = vadd.f32 %v2093, %v2094
  %v2096 = vsel %vm1920, %v1629, 0.0
  %v2097 = vadd.f32 %v2095, %v2096
  %v2098 = vsel %vm1920, %v1637, 0.0
  %v2099 = vadd.f32 %v2097, %v2098
  %v2100 = vsel %vm1920, %v1636, 0.0
  %v2101 = vadd.f32 %v2099, %v2100
  %v2102 = vsel %vm1920, %v1638, 0.0
  %v2103 = vadd.f32 %v2101, %v2102
  %v2104 = vsel %vm1920, %v1646, 0.0
  %v2105 = vadd.f32 %v2103, %v2104
  %v2106 = vsel %vm1920, %v1654, 0.0
  %v2107 = vadd.f32 %v2105, %v2106
  %v2108 = vsel %vm1920, %v1653, 0.0
  %v2109 = vadd.f32 %v2107, %v2108
  %v2110 = vsel %vm1920, %v1655, 0.0
  %v2111 = vadd.f32 %v2109, %v2110
  %v2112 = vsel %vm1920, %v1663, 0.0
  %v2113 = vadd.f32 %v2111, %v2112
  %v2114 = vsel %vm1920, %v1671, 0.0
  %v2115 = vadd.f32 %v2113, %v2114
  %v2116 = vsel %vm1920, %v1670, 0.0
  %v2117 = vadd.f32 %v2115, %v2116
  %v2118 = vsel %vm1920, %v1672, 0.0
  %v2119 = vadd.f32 %v2117, %v2118
  %v2120 = vsel %vm1920, %v1680, 0.0
  %v2121 = vadd.f32 %v2119, %v2120
  %v2122 = vsel %vm1920, %v1688, 0.0
  %v2123 = vadd.f32 %v2121, %v2122
  %v2124 = vsel %vm1920, %v1687, 0.0
  %v2125 = vadd.f32 %v2123, %v2124
  %v2126 = vsel %vm1920, %v1689, 0.0
  %v2127 = vadd.f32 %v2125, %v2126
  %v2128 = vsel %vm1920, %v1697, 0.0
  %v2129 = vadd.f32 %v2127, %v2128
  %v2130 = vsel %vm1920, %v1705, 0.0
  %v2131 = vadd.f32 %v2129, %v2130
  %v2132 = vsel %vm1920, %v1704, 0.0
  %v2133 = vadd.f32 %v2131, %v2132
  %v2134 = vsel %vm1920, %v1706, 0.0
  %v2135 = vadd.f32 %v2133, %v2134
  %v2136 = vsel %vm1920, %v1714, 0.0
  %v2137 = vadd.f32 %v2135, %v2136
  %v2138 = vsel %vm1920, %v1722, 0.0
  %v2139 = vadd.f32 %v2137, %v2138
  %v2140 = vsel %vm1920, %v1721, 0.0
  %v2141 = vadd.f32 %v2139, %v2140
  %v2142 = vsel %vm1920, %v1723, 0.0
  %v2143 = vadd.f32 %v2141, %v2142
  %v2144 = vsel %vm1920, %v1731, 0.0
  %v2145 = vadd.f32 %v2143, %v2144
  %v2146 = vsel %vm1920, %v1739, 0.0
  %v2147 = vadd.f32 %v2145, %v2146
  %v2148 = vsel %vm1920, %v1738, 0.0
  %v2149 = vadd.f32 %v2147, %v2148
  %v2150 = vsel %vm1920, %v1740, 0.0
  %v2151 = vadd.f32 %v2149, %v2150
  %v2152 = vsel %vm1920, %v1748, 0.0
  %v2153 = vadd.f32 %v2151, %v2152
  %v2154 = vsel %vm1920, %v1756, 0.0
  %v2155 = vadd.f32 %v2153, %v2154
  %v2156 = vsel %vm1920, %v1755, 0.0
  %v2157 = vadd.f32 %v2155, %v2156
  %v2158 = vsel %vm1920, %v1757, 0.0
  %v2159 = vadd.f32 %v2157, %v2158
  %v2160 = vsel %vm1920, %v1765, 0.0
  %v2161 = vadd.f32 %v2159, %v2160
  %v2162 = vsel %vm1920, %v1773, 0.0
  %v2163 = vadd.f32 %v2161, %v2162
  %v2164 = vsel %vm1920, %v1772, 0.0
  %v2165 = vadd.f32 %v2163, %v2164
  %v2166 = vsel %vm1920, %v1774, 0.0
  %v2167 = vadd.f32 %v2165, %v2166
  %v2168 = vsel %vm1920, %v1782, 0.0
  %v2169 = vadd.f32 %v2167, %v2168
  %v2170 = vsel %vm1920, %v1790, 0.0
  %v2171 = vadd.f32 %v2169, %v2170
  %v2172 = vsel %vm1920, %v1789, 0.0
  %v2173 = vadd.f32 %v2171, %v2172
  %v2174 = vsel %vm1920, %v1791, 0.0
  %v2175 = vadd.f32 %v2173, %v2174
  %2176 = vadd.xlane.f32.xlu0 %v2175
  %v2177 = vpop.xlane.xlu0 %2176
  %v2178 = vld [vmem:[#allocation2] sm:$0x1]
  %v2180 = vlaneseq
  %v2181 = vshrl.u32 %v2180, 7
  %v2182 = vsub.s32 0, %v2181
  %v2183 = vrot.slane %v2178, %v2182
  %v2185 = vadd.f32 %v2177, %v2183
  %v2186 = vand.u32 2147483647, %v2185
  %v2187 = vsub.f32 0.0, %v2186
  %v2188 = vmul.f32 %v2187, 1.442695
  %v2189 = vpow.pop %v2188
  %vm2190 = vcmp.ge.f32.partialorder %v2185, 0.0
  %v2191 = vadd.f32 %v2189, 1.0
  %v2192 = vrcp.pop %v2191
  %v2193 = vmul.f32 1.0, %v2192
  %v2194 = vmul.f32 %v2189, %v2192
  %v2195 = vsel %vm2190, %v2193, %v2194
  %vm2196 = vcmask 1024
  %2197 = vst.msk [vmem:[%s3] sm:$0x3] %vm2196, %v2195
  // Predicated region
  $region14: #{discriminator_forward.7} parent=0 // pred_check
    _
  $region15: #{discriminator_forward.7} parent=0 // pred_check_branch
    %2199 = sbr.rel (0) target = $region17
  $region16: #{discriminator_forward.7} parent=0 // pred_region
    _
  $region17: #{discriminator_forward.7} parent=0 // pred_fallthru
    _
  // Predicated region
  $region18: #{discriminator_forward.7} parent=0 // pred_check
    _
  $region19: #{discriminator_forward.7} parent=0 // pred_check_branch
    %2201 = sbr.rel (0) target = $region21
  $region20: #{discriminator_forward.7} parent=0 // pred_region
    _
  $region21: #{discriminator_forward.7} parent=0 // pred_fallthru
    _

// kernel: discriminator_forward.6
$region0: #{discriminator_forward.6}
  #allocation0 [shape = 'u32[]', space=smem, size = 0x4, offset = 0x4, fixed_abs, tag = 'smem constant byte address 0x4 - core index']
  #allocation1 [shape = 'u32[144,128]{1,0:T(1,128)}', space=vmem, size = 0x12000, scoped, tag = 'internal scratch']
  %s0 = inlined_call_operand.vmem [shape: bf16[128,2048], index: 0, kind: input, shape index: {}]
  %s1 = inlined_call_operand.vmem [shape: bf16[2048,256], index: 1, kind: input, shape index: {}]
  %s2 = inlined_call_operand.vmem [shape: f32[1,256], index: 2, kind: input, shape index: {}]
  %s3 = inlined_call_operand.vmem [shape: bf16[128,256], index: 3, kind: output, shape index: {}]
  %s4 = sld [smem:[#allocation0]]
  $region123: #{discriminator_forward.6} parent=0
    _
  %s6 = ssub.s32 1, %s4
  %s7 = scalar_select 0, %s6, %s4
  $region1: #{discriminator_forward.6} parent=0
    #allocation2 [shape = 'u8[1048576]{0}', space=vmem, size = 0x100000, scoped, tag = 'input window, operand 1']
    #allocation3 [shape = 'u8[65536]{0}', space=vmem, size = 0x10000, scoped, tag = 'output window, operand 0']
    loop: start=0, step=1, limit=4
    $region2: #{discriminator_forward.6} parent=1 // loop_pre_header
      _
    $region3: #{discriminator_forward.6} parent=1 // loop_header
      %s9 = sphi 0, %s13
      %p10 = scmp.ge.s32.totalorder %s9, 4
      %s16 = sphi 0, %s28
      %s17 = sphi 0, %s24
      %s18 = sphi 0, %s16
      %s19 = sphi 0, %s17
      %s20 = sphi 0, %s18
      %s21 = sphi 0, %s19
      %s31 = sphi 0, %s33
      %s34 = sphi 0, %s31
      %s35 = sphi 0, %s34
      %s51 = sphi 0, %s35
      %s57 = sphi 0, %s59
      %s60 = sphi 0, %s57
      %s61 = sphi 0, %s60
      %s77 = sphi 0, %s61
      %s83 = sphi 0, %s85
      %s86 = sphi 0, %s83
      %s87 = sphi 0, %s86
      %s103 = sphi 0, %s87
      %s111 = sphi 0, %s113
      %s114 = sphi 0, %s111
      %s115 = sphi 0, %s114
      %s131 = sphi 0, %s115
    $region4: #{discriminator_forward.6} parent=1 // loop_header_branch
      %12 = sbr.rel (%p10) target = $region8
    $region5: #{discriminator_forward.6} parent=1 // loop_body
      %s14 = ssub.s32 %s9, 1
      %s15 = ssub.s32 %s9, 2
      %s22 = sadd.s32 1, %s17
      %p23 = scmp.ge.s32.totalorder %s22, 2
      %s24 = scalar_select %p23, 0, %s22
      %s25 = sadd.s32 1, %s16
      %s26 = scalar_select %p23, %s25, %s16
      %p27 = scmp.ge.s32.totalorder %s26, 1
      %s28 = scalar_select %p27, 0, %s26
      %s29 = ssub.s32 %s16, %s28
      %p30 = scmp.eq.s32.totalorder %s29, 0
      %s32 = sadd.s32 %s31, 1
      %s33 = scalar_select %p30, %s31, %s32
      %p36 = pneg %p30
      %p37 = scmp.eq.s32.totalorder %s9, 1
      %p38 = por %p36, %p37
      %p39 = scmp.ne.s32.totalorder %s31, %s34
      %p40 = scmp.eq.s32.totalorder %s9, 0
      %p41 = por %p39, %p40
      %p42 = scmp.ne.s32.totalorder %s31, %s34
      %p43 = scmp.eq.s32.totalorder %s14, 1
      %p44 = por %p42, %p43
      %p45 = scmp.ne.s32.totalorder %s34, %s35
      %p46 = scmp.eq.s32.totalorder %s14, 0
      %p47 = por %p45, %p46
      %p48 = scmp.ne.s32.totalorder %s34, %s35
      %p49 = scmp.eq.s32.totalorder %s15, 1
      %p50 = por %p48, %p49
      %p52 = scmp.ne.s32.totalorder %s35, %s51
      %p53 = scmp.eq.s32.totalorder %s15, 0
      %p54 = por %p52, %p53
      %s55 = ssub.s32 %s17, %s24
      %p56 = scmp.eq.s32.totalorder %s55, 0
      %s58 = sadd.s32 %s57, 1
      %s59 = scalar_select %p56, %s57, %s58
      %p62 = pneg %p56
      %p63 = scmp.eq.s32.totalorder %s9, 1
      %p64 = por %p62, %p63
      %p65 = scmp.ne.s32.totalorder %s57, %s60
      %p66 = scmp.eq.s32.totalorder %s9, 0
      %p67 = por %p65, %p66
      %p68 = scmp.ne.s32.totalorder %s57, %s60
      %p69 = scmp.eq.s32.totalorder %s14, 1
      %p70 = por %p68, %p69
      %p71 = scmp.ne.s32.totalorder %s60, %s61
      %p72 = scmp.eq.s32.totalorder %s14, 0
      %p73 = por %p71, %p72
      %p74 = scmp.ne.s32.totalorder %s60, %s61
      %p75 = scmp.eq.s32.totalorder %s15, 1
      %p76 = por %p74, %p75
      %p78 = scmp.ne.s32.totalorder %s61, %s77
      %p79 = scmp.eq.s32.totalorder %s15, 0
      %p80 = por %p78, %p79
      %s81 = ssub.s32 %s17, %s24
      %p82 = scmp.eq.s32.totalorder %s81, 0
      %s84 = sadd.s32 %s83, 1
      %s85 = scalar_select %p82, %s83, %s84
      %p88 = pneg %p82
      %p89 = scmp.eq.s32.totalorder %s9, 1
      %p90 = por %p88, %p89
      %p91 = scmp.ne.s32.totalorder %s83, %s86
      %p92 = scmp.eq.s32.totalorder %s9, 0
      %p93 = por %p91, %p92
      %p94 = scmp.ne.s32.totalorder %s83, %s86
      %p95 = scmp.eq.s32.totalorder %s14, 1
      %p96 = por %p94, %p95
      %p97 = scmp.ne.s32.totalorder %s86, %s87
      %p98 = scmp.eq.s32.totalorder %s14, 0
      %p99 = por %p97, %p98
      %p100 = scmp.ne.s32.totalorder %s86, %s87
      %p101 = scmp.eq.s32.totalorder %s15, 1
      %p102 = por %p100, %p101
      %p104 = scmp.ne.s32.totalorder %s87, %s103
      %p105 = scmp.eq.s32.totalorder %s15, 0
      %p106 = por %p104, %p105
      %s107 = ssub.s32 %s16, %s28
      %s108 = ssub.s32 %s17, %s24
      %s109 = sor.u32 %s107, %s108
      %p110 = scmp.eq.s32.totalorder %s109, 0
      %s112 = sadd.s32 %s111, 1
      %s113 = scalar_select %p110, %s111, %s112
      %p116 = pneg %p110
      %p117 = scmp.eq.s32.totalorder %s9, 1
      %p118 = por %p116, %p117
      %p119 = scmp.ne.s32.totalorder %s111, %s114
      %p120 = scmp.eq.s32.totalorder %s9, 0
      %p121 = por %p119, %p120
      %p122 = scmp.ne.s32.totalorder %s111, %s114
      %p123 = scmp.eq.s32.totalorder %s14, 1
      %p124 = por %p122, %p123
      %p125 = scmp.ne.s32.totalorder %s114, %s115
      %p126 = scmp.eq.s32.totalorder %s14, 0
      %p127 = por %p125, %p126
      %p128 = scmp.ne.s32.totalorder %s114, %s115
      %p129 = scmp.eq.s32.totalorder %s15, 1
      %p130 = por %p128, %p129
      %p132 = scmp.ne.s32.totalorder %s115, %s131
      %p133 = scmp.eq.s32.totalorder %s15, 0
      %p134 = por %p132, %p133
      %p135 = scmp.le.s32.totalorder 1, %s9
      %p136 = scmp.lt.s32.totalorder %s9, 3
      %p137 = pnand %p135, %p136
      %p138 = pneg %p137
      // Predicated region
      $region9: #{discriminator_forward.6} parent=5 // pred_check
        _
      $region10: #{discriminator_forward.6} parent=5 // pred_check_branch
        %140 = sbr.rel (%p137) target = $region12
      $region11: #{discriminator_forward.6} parent=5 // pred_region
        %s141 = ssub.s32 %s9, 1
        // Predicated region
        $region13: #{discriminator_forward.6} parent=11 // pred_check
          %p142 = pneg %p47
        $region14: #{discriminator_forward.6} parent=11 // pred_check_branch
          %144 = sbr.rel (%p142) target = $region16
        $region15: #{discriminator_forward.6} parent=11 // pred_region
          %s145 = smul.u32 16, %s18
          %p146 = scmp.lt.s32.totalorder %s145, 15
          %s147 = scalar_select %p146, %s145, 15
          %s148 = smul.addr %s147, 16
          %s149 = smul.addr %s148, 4
          %s150 = scalar_lea.vmem %s0, %s149
          %s151 = smul.u32 16, %s18
        $region16: #{discriminator_forward.6} parent=11 // pred_fallthru
          _
      $region12: #{discriminator_forward.6} parent=5 // pred_fallthru
        _
      %p152 = scmp.lt.s32.totalorder %s9, 2
      // Predicated region
      $region17: #{discriminator_forward.6} parent=5 // pred_check
        %p153 = pneg %p152
      $region18: #{discriminator_forward.6} parent=5 // pred_check_branch
        %155 = sbr.rel (%p153) target = $region20
      $region19: #{discriminator_forward.6} parent=5 // pred_region
        // Predicated region
        $region21: #{discriminator_forward.6} parent=19 // pred_check
          %p156 = pneg %p67
        $region22: #{discriminator_forward.6} parent=19 // pred_check_branch
          %158 = sbr.rel (%p156) target = $region24
        $region23: #{discriminator_forward.6} parent=19 // pred_region
          %s159 = sand.u32 %s57, 1
          %s160 = sand.u32 %s57, 1
          %s161 = smul.addr %s160, 1024
          %s162 = scalar_lea.vmem [#allocation2], %s161
          %s163 = smul.addr %s17, 4
          %s164 = scalar_lea.vmem %s1, %s163
          // Predicated region
          $region25: #{discriminator_forward.6} parent=23 // pred_check
            _
          $region26: #{discriminator_forward.6} parent=23 // pred_check_branch
            %166 = sbr.rel (0) target = $region28
          $region27: #{discriminator_forward.6} parent=23 // pred_region
            // Predicated region
            $region29: #{discriminator_forward.6} parent=27 // pred_check
              _
            $region30: #{discriminator_forward.6} parent=27 // pred_check_branch
              %168 = sbr.rel target = $region32
            $region31: #{discriminator_forward.6} parent=27 // pred_region
              // Predicated region
              $region44: #{discriminator_forward.6} parent=31 // pred_check
                _
              $region45: #{discriminator_forward.6} parent=31 // pred_check_branch
                %693 = sbr.rel (0) target = $region47
              $region46: #{discriminator_forward.6} parent=31 // pred_region
                loop: start=0, step=1, limit=1
                $region48: #{discriminator_forward.6} parent=46 // loop_pre_header
                  _
                $region49: #{discriminator_forward.6} parent=46 // loop_header
                  %s695 = sphi 0, %s699
                  %p696 = scmp.ge.s32.totalorder %s695, 1
                  %s700 = sphi %s164, %s164
                  %s701 = sphi %s162, %s162
                $region50: #{discriminator_forward.6} parent=46 // loop_header_branch
                  %698 = sbr.rel (%p696) target = $region54
                $region51: #{discriminator_forward.6} parent=46 // loop_body
                  _
                $region52: #{discriminator_forward.6} parent=46 // loop_footer
                  %s699 = sadd.s32 1, %s695
                $region53: #{discriminator_forward.6} parent=46 // loop_footer_branch
                  %694 = sbr.rel target = $region49
                $region54: #{discriminator_forward.6} parent=46 // loop_exit
                  _
                loop: start=0, step=1, limit=1
                $region55: #{discriminator_forward.6} parent=46 // loop_pre_header
                  _
                $region56: #{discriminator_forward.6} parent=46 // loop_header
                  %s704 = sphi 0, %s708
                  %p705 = scmp.ge.s32.totalorder %s704, 1
                  %s709 = sphi %s164, %s164
                  %s710 = sphi %s162, %s162
                $region57: #{discriminator_forward.6} parent=46 // loop_header_branch
                  %707 = sbr.rel (%p705) target = $region61
                $region58: #{discriminator_forward.6} parent=46 // loop_body
                  %v711 = vld [vmem:[%s709] sm:$0xf]
                  %712 = vst [vmem:[%s710] sm:$0xf] %v711
                  %v713 = vld [vmem:[%s709 + $0x8] sm:$0xf]
                  %714 = vst [vmem:[%s710 + $0x4] sm:$0xf] %v713
                  %v715 = vld [vmem:[%s709 + $0x10] sm:$0xf]
                  %716 = vst [vmem:[%s710 + $0x8] sm:$0xf] %v715
                  %v717 = vld [vmem:[%s709 + $0x18] sm:$0xf]
                  %718 = vst [vmem:[%s710 + $0xc] sm:$0xf] %v717
                  %v719 = vld [vmem:[%s709 + $0x20] sm:$0xf]
                  %720 = vst [vmem:[%s710 + $0x10] sm:$0xf] %v719
                  %v721 = vld [vmem:[%s709 + $0x28] sm:$0xf]
                  %722 = vst [vmem:[%s710 + $0x14] sm:$0xf] %v721
                  %v723 = vld [vmem:[%s709 + $0x30] sm:$0xf]
                  %724 = vst [vmem:[%s710 + $0x18] sm:$0xf] %v723
                  %v725 = vld [vmem:[%s709 + $0x38] sm:$0xf]
                  %726 = vst [vmem:[%s710 + $0x1c] sm:$0xf] %v725
                  %v727 = vld [vmem:[%s709 + $0x40] sm:$0xf]
                  %728 = vst [vmem:[%s710 + $0x20] sm:$0xf] %v727
                  %v729 = vld [vmem:[%s709 + $0x48] sm:$0xf]
                  %730 = vst [vmem:[%s710 + $0x24] sm:$0xf] %v729
                  %v731 = vld [vmem:[%s709 + $0x50] sm:$0xf]
                  %732 = vst [vmem:[%s710 + $0x28] sm:$0xf] %v731
                  %v733 = vld [vmem:[%s709 + $0x58] sm:$0xf]
                  %734 = vst [vmem:[%s710 + $0x2c] sm:$0xf] %v733
                  %v735 = vld [vmem:[%s709 + $0x60] sm:$0xf]
                  %736 = vst [vmem:[%s710 + $0x30] sm:$0xf] %v735
                  %v737 = vld [vmem:[%s709 + $0x68] sm:$0xf]
                  %738 = vst [vmem:[%s710 + $0x34] sm:$0xf] %v737
                  %v739 = vld [vmem:[%s709 + $0x70] sm:$0xf]
                  %740 = vst [vmem:[%s710 + $0x38] sm:$0xf] %v739
                  %v741 = vld [vmem:[%s709 + $0x78] sm:$0xf]
                  %742 = vst [vmem:[%s710 + $0x3c] sm:$0xf] %v741
                  %v743 = vld [vmem:[%s709 + $0x80] sm:$0xf]
                  %744 = vst [vmem:[%s710 + $0x40] sm:$0xf] %v743
                  %v745 = vld [vmem:[%s709 + $0x88] sm:$0xf]
                  %746 = vst [vmem:[%s710 + $0x44] sm:$0xf] %v745
                  %v747 = vld [vmem:[%s709 + $0x90] sm:$0xf]
                  %748 = vst [vmem:[%s710 + $0x48] sm:$0xf] %v747
                  %v749 = vld [vmem:[%s709 + $0x98] sm:$0xf]
                  %750 = vst [vmem:[%s710 + $0x4c] sm:$0xf] %v749
                  %v751 = vld [vmem:[%s709 + $0xa0] sm:$0xf]
                  %752 = vst [vmem:[%s710 + $0x50] sm:$0xf] %v751
                  %v753 = vld [vmem:[%s709 + $0xa8] sm:$0xf]
                  %754 = vst [vmem:[%s710 + $0x54] sm:$0xf] %v753
                  %v755 = vld [vmem:[%s709 + $0xb0] sm:$0xf]
                  %756 = vst [vmem:[%s710 + $0x58] sm:$0xf] %v755
                  %v757 = vld [vmem:[%s709 + $0xb8] sm:$0xf]
                  %758 = vst [vmem:[%s710 + $0x5c] sm:$0xf] %v757
                  %v759 = vld [vmem:[%s709 + $0xc0] sm:$0xf]
                  %760 = vst [vmem:[%s710 + $0x60] sm:$0xf] %v759
                  %v761 = vld [vmem:[%s709 + $0xc8] sm:$0xf]
                  %762 = vst [vmem:[%s710 + $0x64] sm:$0xf] %v761
                  %v763 = vld [vmem:[%s709 + $0xd0] sm:$0xf]
                  %764 = vst [vmem:[%s710 + $0x68] sm:$0xf] %v763
                  %v765 = vld [vmem:[%s709 + $0xd8] sm:$0xf]
                  %766 = vst [vmem:[%s710 + $0x6c] sm:$0xf] %v765
                  %v767 = vld [vmem:[%s709 + $0xe0] sm:$0xf]
                  %768 = vst [vmem:[%s710 + $0x70] sm:$0xf] %v767
                  %v769 = vld [vmem:[%s709 + $0xe8] sm:$0xf]
                  %770 = vst [vmem:[%s710 + $0x74] sm:$0xf] %v769
                  %v771 = vld [vmem:[%s709 + $0xf0] sm:$0xf]
                  %772 = vst [vmem:[%s710 + $0x78] sm:$0xf] %v771
                  %v773 = vld [vmem:[%s709 + $0xf8] sm:$0xf]
                  %774 = vst [vmem:[%s710 + $0x7c] sm:$0xf] %v773
                  %v775 = vld [vmem:[%s709 + $0x100] sm:$0xf]
                  %776 = vst [vmem:[%s710 + $0x80] sm:$0xf] %v775
                  %v777 = vld [vmem:[%s709 + $0x108] sm:$0xf]
                  %778 = vst [vmem:[%s710 + $0x84] sm:$0xf] %v777
                  %v779 = vld [vmem:[%s709 + $0x110] sm:$0xf]
                  %780 = vst [vmem:[%s710 + $0x88] sm:$0xf] %v779
                  %v781 = vld [vmem:[%s709 + $0x118] sm:$0xf]
                  %782 = vst [vmem:[%s710 + $0x8c] sm:$0xf] %v781
                  %v783 = vld [vmem:[%s709 + $0x120] sm:$0xf]
                  %784 = vst [vmem:[%s710 + $0x90] sm:$0xf] %v783
                  %v785 = vld [vmem:[%s709 + $0x128] sm:$0xf]
                  %786 = vst [vmem:[%s710 + $0x94] sm:$0xf] %v785
                  %v787 = vld [vmem:[%s709 + $0x130] sm:$0xf]
                  %788 = vst [vmem:[%s710 + $0x98] sm:$0xf] %v787
                  %v789 = vld [vmem:[%s709 + $0x138] sm:$0xf]
                  %790 = vst [vmem:[%s710 + $0x9c] sm:$0xf] %v789
                  %v791 = vld [vmem:[%s709 + $0x140] sm:$0xf]
                  %792 = vst [vmem:[%s710 + $0xa0] sm:$0xf] %v791
                  %v793 = vld [vmem:[%s709 + $0x148] sm:$0xf]
                  %794 = vst [vmem:[%s710 + $0xa4] sm:$0xf] %v793
                  %v795 = vld [vmem:[%s709 + $0x150] sm:$0xf]
                  %796 = vst [vmem:[%s710 + $0xa8] sm:$0xf] %v795
                  %v797 = vld [vmem:[%s709 + $0x158] sm:$0xf]
                  %798 = vst [vmem:[%s710 + $0xac] sm:$0xf] %v797
                  %v799 = vld [vmem:[%s709 + $0x160] sm:$0xf]
                  %800 = vst [vmem:[%s710 + $0xb0] sm:$0xf] %v799
                  %v801 = vld [vmem:[%s709 + $0x168] sm:$0xf]
                  %802 = vst [vmem:[%s710 + $0xb4] sm:$0xf] %v801
                  %v803 = vld [vmem:[%s709 + $0x170] sm:$0xf]
                  %804 = vst [vmem:[%s710 + $0xb8] sm:$0xf] %v803
                  %v805 = vld [vmem:[%s709 + $0x178] sm:$0xf]
                  %806 = vst [vmem:[%s710 + $0xbc] sm:$0xf] %v805
                  %v807 = vld [vmem:[%s709 + $0x180] sm:$0xf]
                  %808 = vst [vmem:[%s710 + $0xc0] sm:$0xf] %v807
                  %v809 = vld [vmem:[%s709 + $0x188] sm:$0xf]
                  %810 = vst [vmem:[%s710 + $0xc4] sm:$0xf] %v809
                  %v811 = vld [vmem:[%s709 + $0x190] sm:$0xf]
                  %812 = vst [vmem:[%s710 + $0xc8] sm:$0xf] %v811
                  %v813 = vld [vmem:[%s709 + $0x198] sm:$0xf]
                  %814 = vst [vmem:[%s710 + $0xcc] sm:$0xf] %v813
                  %v815 = vld [vmem:[%s709 + $0x1a0] sm:$0xf]
                  %816 = vst [vmem:[%s710 + $0xd0] sm:$0xf] %v815
                  %v817 = vld [vmem:[%s709 + $0x1a8] sm:$0xf]
                  %818 = vst [vmem:[%s710 + $0xd4] sm:$0xf] %v817
                  %v819 = vld [vmem:[%s709 + $0x1b0] sm:$0xf]
                  %820 = vst [vmem:[%s710 + $0xd8] sm:$0xf] %v819
                  %v821 = vld [vmem:[%s709 + $0x1b8] sm:$0xf]
                  %822 = vst [vmem:[%s710 + $0xdc] sm:$0xf] %v821
                  %v823 = vld [vmem:[%s709 + $0x1c0] sm:$0xf]
                  %824 = vst [vmem:[%s710 + $0xe0] sm:$0xf] %v823
                  %v825 = vld [vmem:[%s709 + $0x1c8] sm:$0xf]
                  %826 = vst [vmem:[%s710 + $0xe4] sm:$0xf] %v825
                  %v827 = vld [vmem:[%s709 + $0x1d0] sm:$0xf]
                  %828 = vst [vmem:[%s710 + $0xe8] sm:$0xf] %v827
                  %v829 = vld [vmem:[%s709 + $0x1d8] sm:$0xf]
                  %830 = vst [vmem:[%s710 + $0xec] sm:$0xf] %v829
                  %v831 = vld [vmem:[%s709 + $0x1e0] sm:$0xf]
                  %832 = vst [vmem:[%s710 + $0xf0] sm:$0xf] %v831
                  %v833 = vld [vmem:[%s709 + $0x1e8] sm:$0xf]
                  %834 = vst [vmem:[%s710 + $0xf4] sm:$0xf] %v833
                  %v835 = vld [vmem:[%s709 + $0x1f0] sm:$0xf]
                  %836 = vst [vmem:[%s710 + $0xf8] sm:$0xf] %v835
                  %v837 = vld [vmem:[%s709 + $0x1f8] sm:$0xf]
                  %838 = vst [vmem:[%s710 + $0xfc] sm:$0xf] %v837
                  %v839 = vld [vmem:[%s709 + $0x200] sm:$0xf]
                  %840 = vst [vmem:[%s710 + $0x100] sm:$0xf] %v839
                  %v841 = vld [vmem:[%s709 + $0x208] sm:$0xf]
                  %842 = vst [vmem:[%s710 + $0x104] sm:$0xf] %v841
                  %v843 = vld [vmem:[%s709 + $0x210] sm:$0xf]
                  %844 = vst [vmem:[%s710 + $0x108] sm:$0xf] %v843
                  %v845 = vld [vmem:[%s709 + $0x218] sm:$0xf]
                  %846 = vst [vmem:[%s710 + $0x10c] sm:$0xf] %v845
                  %v847 = vld [vmem:[%s709 + $0x220] sm:$0xf]
                  %848 = vst [vmem:[%s710 + $0x110] sm:$0xf] %v847
                  %v849 = vld [vmem:[%s709 + $0x228] sm:$0xf]
                  %850 = vst [vmem:[%s710 + $0x114] sm:$0xf] %v849
                  %v851 = vld [vmem:[%s709 + $0x230] sm:$0xf]
                  %852 = vst [vmem:[%s710 + $0x118] sm:$0xf] %v851
                  %v853 = vld [vmem:[%s709 + $0x238] sm:$0xf]
                  %854 = vst [vmem:[%s710 + $0x11c] sm:$0xf] %v853
                  %v855 = vld [vmem:[%s709 + $0x240] sm:$0xf]
                  %856 = vst [vmem:[%s710 + $0x120] sm:$0xf] %v855
                  %v857 = vld [vmem:[%s709 + $0x248] sm:$0xf]
                  %858 = vst [vmem:[%s710 + $0x124] sm:$0xf] %v857
                  %v859 = vld [vmem:[%s709 + $0x250] sm:$0xf]
                  %860 = vst [vmem:[%s710 + $0x128] sm:$0xf] %v859
                  %v861 = vld [vmem:[%s709 + $0x258] sm:$0xf]
                  %862 = vst [vmem:[%s710 + $0x12c] sm:$0xf] %v861
                  %v863 = vld [vmem:[%s709 + $0x260] sm:$0xf]
                  %864 = vst [vmem:[%s710 + $0x130] sm:$0xf] %v863
                  %v865 = vld [vmem:[%s709 + $0x268] sm:$0xf]
                  %866 = vst [vmem:[%s710 + $0x134] sm:$0xf] %v865
                  %v867 = vld [vmem:[%s709 + $0x270] sm:$0xf]
                  %868 = vst [vmem:[%s710 + $0x138] sm:$0xf] %v867
                  %v869 = vld [vmem:[%s709 + $0x278] sm:$0xf]
                  %870 = vst [vmem:[%s710 + $0x13c] sm:$0xf] %v869
                  %v871 = vld [vmem:[%s709 + $0x280] sm:$0xf]
                  %872 = vst [vmem:[%s710 + $0x140] sm:$0xf] %v871
                  %v873 = vld [vmem:[%s709 + $0x288] sm:$0xf]
                  %874 = vst [vmem:[%s710 + $0x144] sm:$0xf] %v873
                  %v875 = vld [vmem:[%s709 + $0x290] sm:$0xf]
                  %876 = vst [vmem:[%s710 + $0x148] sm:$0xf] %v875
                  %v877 = vld [vmem:[%s709 + $0x298] sm:$0xf]
                  %878 = vst [vmem:[%s710 + $0x14c] sm:$0xf] %v877
                  %v879 = vld [vmem:[%s709 + $0x2a0] sm:$0xf]
                  %880 = vst [vmem:[%s710 + $0x150] sm:$0xf] %v879
                  %v881 = vld [vmem:[%s709 + $0x2a8] sm:$0xf]
                  %882 = vst [vmem:[%s710 + $0x154] sm:$0xf] %v881
                  %v883 = vld [vmem:[%s709 + $0x2b0] sm:$0xf]
                  %884 = vst [vmem:[%s710 + $0x158] sm:$0xf] %v883
                  %v885 = vld [vmem:[%s709 + $0x2b8] sm:$0xf]
                  %886 = vst [vmem:[%s710 + $0x15c] sm:$0xf] %v885
                  %v887 = vld [vmem:[%s709 + $0x2c0] sm:$0xf]
                  %888 = vst [vmem:[%s710 + $0x160] sm:$0xf] %v887
                  %v889 = vld [vmem:[%s709 + $0x2c8] sm:$0xf]
                  %890 = vst [vmem:[%s710 + $0x164] sm:$0xf] %v889
                  %v891 = vld [vmem:[%s709 + $0x2d0] sm:$0xf]
                  %892 = vst [vmem:[%s710 + $0x168] sm:$0xf] %v891
                  %v893 = vld [vmem:[%s709 + $0x2d8] sm:$0xf]
                  %894 = vst [vmem:[%s710 + $0x16c] sm:$0xf] %v893
                  %v895 = vld [vmem:[%s709 + $0x2e0] sm:$0xf]
                  %896 = vst [vmem:[%s710 + $0x170] sm:$0xf] %v895
                  %v897 = vld [vmem:[%s709 + $0x2e8] sm:$0xf]
                  %898 = vst [vmem:[%s710 + $0x174] sm:$0xf] %v897
                  %v899 = vld [vmem:[%s709 + $0x2f0] sm:$0xf]
                  %900 = vst [vmem:[%s710 + $0x178] sm:$0xf] %v899
                  %v901 = vld [vmem:[%s709 + $0x2f8] sm:$0xf]
                  %902 = vst [vmem:[%s710 + $0x17c] sm:$0xf] %v901
                  %v903 = vld [vmem:[%s709 + $0x300] sm:$0xf]
                  %904 = vst [vmem:[%s710 + $0x180] sm:$0xf] %v903
                  %v905 = vld [vmem:[%s709 + $0x308] sm:$0xf]
                  %906 = vst [vmem:[%s710 + $0x184] sm:$0xf] %v905
                  %v907 = vld [vmem:[%s709 + $0x310] sm:$0xf]
                  %908 = vst [vmem:[%s710 + $0x188] sm:$0xf] %v907
                  %v909 = vld [vmem:[%s709 + $0x318] sm:$0xf]
                  %910 = vst [vmem:[%s710 + $0x18c] sm:$0xf] %v909
                  %v911 = vld [vmem:[%s709 + $0x320] sm:$0xf]
                  %912 = vst [vmem:[%s710 + $0x190] sm:$0xf] %v911
                  %v913 = vld [vmem:[%s709 + $0x328] sm:$0xf]
                  %914 = vst [vmem:[%s710 + $0x194] sm:$0xf] %v913
                  %v915 = vld [vmem:[%s709 + $0x330] sm:$0xf]
                  %916 = vst [vmem:[%s710 + $0x198] sm:$0xf] %v915
                  %v917 = vld [vmem:[%s709 + $0x338] sm:$0xf]
                  %918 = vst [vmem:[%s710 + $0x19c] sm:$0xf] %v917
                  %v919 = vld [vmem:[%s709 + $0x340] sm:$0xf]
                  %920 = vst [vmem:[%s710 + $0x1a0] sm:$0xf] %v919
                  %v921 = vld [vmem:[%s709 + $0x348] sm:$0xf]
                  %922 = vst [vmem:[%s710 + $0x1a4] sm:$0xf] %v921
                  %v923 = vld [vmem:[%s709 + $0x350] sm:$0xf]
                  %924 = vst [vmem:[%s710 + $0x1a8] sm:$0xf] %v923
                  %v925 = vld [vmem:[%s709 + $0x358] sm:$0xf]
                  %926 = vst [vmem:[%s710 + $0x1ac] sm:$0xf] %v925
                  %v927 = vld [vmem:[%s709 + $0x360] sm:$0xf]
                  %928 = vst [vmem:[%s710 + $0x1b0] sm:$0xf] %v927
                  %v929 = vld [vmem:[%s709 + $0x368] sm:$0xf]
                  %930 = vst [vmem:[%s710 + $0x1b4] sm:$0xf] %v929
                  %v931 = vld [vmem:[%s709 + $0x370] sm:$0xf]
                  %932 = vst [vmem:[%s710 + $0x1b8] sm:$0xf] %v931
                  %v933 = vld [vmem:[%s709 + $0x378] sm:$0xf]
                  %934 = vst [vmem:[%s710 + $0x1bc] sm:$0xf] %v933
                  %v935 = vld [vmem:[%s709 + $0x380] sm:$0xf]
                  %936 = vst [vmem:[%s710 + $0x1c0] sm:$0xf] %v935
                  %v937 = vld [vmem:[%s709 + $0x388] sm:$0xf]
                  %938 = vst [vmem:[%s710 + $0x1c4] sm:$0xf] %v937
                  %v939 = vld [vmem:[%s709 + $0x390] sm:$0xf]
                  %940 = vst [vmem:[%s710 + $0x1c8] sm:$0xf] %v939
                  %v941 = vld [vmem:[%s709 + $0x398] sm:$0xf]
                  %942 = vst [vmem:[%s710 + $0x1cc] sm:$0xf] %v941
                  %v943 = vld [vmem:[%s709 + $0x3a0] sm:$0xf]
                  %944 = vst [vmem:[%s710 + $0x1d0] sm:$0xf] %v943
                  %v945 = vld [vmem:[%s709 + $0x3a8] sm:$0xf]
                  %946 = vst [vmem:[%s710 + $0x1d4] sm:$0xf] %v945
                  %v947 = vld [vmem:[%s709 + $0x3b0] sm:$0xf]
                  %948 = vst [vmem:[%s710 + $0x1d8] sm:$0xf] %v947
                  %v949 = vld [vmem:[%s709 + $0x3b8] sm:$0xf]
                  %950 = vst [vmem:[%s710 + $0x1dc] sm:$0xf] %v949
                  %v951 = vld [vmem:[%s709 + $0x3c0] sm:$0xf]
                  %952 = vst [vmem:[%s710 + $0x1e0] sm:$0xf] %v951
                  %v953 = vld [vmem:[%s709 + $0x3c8] sm:$0xf]
                  %954 = vst [vmem:[%s710 + $0x1e4] sm:$0xf] %v953
                  %v955 = vld [vmem:[%s709 + $0x3d0] sm:$0xf]
                  %956 = vst [vmem:[%s710 + $0x1e8] sm:$0xf] %v955
                  %v957 = vld [vmem:[%s709 + $0x3d8] sm:$0xf]
                  %958 = vst [vmem:[%s710 + $0x1ec] sm:$0xf] %v957
                  %v959 = vld [vmem:[%s709 + $0x3e0] sm:$0xf]
                  %960 = vst [vmem:[%s710 + $0x1f0] sm:$0xf] %v959
                  %v961 = vld [vmem:[%s709 + $0x3e8] sm:$0xf]
                  %962 = vst [vmem:[%s710 + $0x1f4] sm:$0xf] %v961
                  %v963 = vld [vmem:[%s709 + $0x3f0] sm:$0xf]
                  %964 = vst [vmem:[%s710 + $0x1f8] sm:$0xf] %v963
                  %v965 = vld [vmem:[%s709 + $0x3f8] sm:$0xf]
                  %966 = vst [vmem:[%s710 + $0x1fc] sm:$0xf] %v965
                  %v967 = vld [vmem:[%s709 + $0x400] sm:$0xf]
                  %968 = vst [vmem:[%s710 + $0x200] sm:$0xf] %v967
                  %v969 = vld [vmem:[%s709 + $0x408] sm:$0xf]
                  %970 = vst [vmem:[%s710 + $0x204] sm:$0xf] %v969
                  %v971 = vld [vmem:[%s709 + $0x410] sm:$0xf]
                  %972 = vst [vmem:[%s710 + $0x208] sm:$0xf] %v971
                  %v973 = vld [vmem:[%s709 + $0x418] sm:$0xf]
                  %974 = vst [vmem:[%s710 + $0x20c] sm:$0xf] %v973
                  %v975 = vld [vmem:[%s709 + $0x420] sm:$0xf]
                  %976 = vst [vmem:[%s710 + $0x210] sm:$0xf] %v975
                  %v977 = vld [vmem:[%s709 + $0x428] sm:$0xf]
                  %978 = vst [vmem:[%s710 + $0x214] sm:$0xf] %v977
                  %v979 = vld [vmem:[%s709 + $0x430] sm:$0xf]
                  %980 = vst [vmem:[%s710 + $0x218] sm:$0xf] %v979
                  %v981 = vld [vmem:[%s709 + $0x438] sm:$0xf]
                  %982 = vst [vmem:[%s710 + $0x21c] sm:$0xf] %v981
                  %v983 = vld [vmem:[%s709 + $0x440] sm:$0xf]
                  %984 = vst [vmem:[%s710 + $0x220] sm:$0xf] %v983
                  %v985 = vld [vmem:[%s709 + $0x448] sm:$0xf]
                  %986 = vst [vmem:[%s710 + $0x224] sm:$0xf] %v985
                  %v987 = vld [vmem:[%s709 + $0x450] sm:$0xf]
                  %988 = vst [vmem:[%s710 + $0x228] sm:$0xf] %v987
                  %v989 = vld [vmem:[%s709 + $0x458] sm:$0xf]
                  %990 = vst [vmem:[%s710 + $0x22c] sm:$0xf] %v989
                  %v991 = vld [vmem:[%s709 + $0x460] sm:$0xf]
                  %992 = vst [vmem:[%s710 + $0x230] sm:$0xf] %v991
                  %v993 = vld [vmem:[%s709 + $0x468] sm:$0xf]
                  %994 = vst [vmem:[%s710 + $0x234] sm:$0xf] %v993
                  %v995 = vld [vmem:[%s709 + $0x470] sm:$0xf]
                  %996 = vst [vmem:[%s710 + $0x238] sm:$0xf] %v995
                  %v997 = vld [vmem:[%s709 + $0x478] sm:$0xf]
                  %998 = vst [vmem:[%s710 + $0x23c] sm:$0xf] %v997
                  %v999 = vld [vmem:[%s709 + $0x480] sm:$0xf]
                  %1000 = vst [vmem:[%s710 + $0x240] sm:$0xf] %v999
                  %v1001 = vld [vmem:[%s709 + $0x488] sm:$0xf]
                  %1002 = vst [vmem:[%s710 + $0x244] sm:$0xf] %v1001
                  %v1003 = vld [vmem:[%s709 + $0x490] sm:$0xf]
                  %1004 = vst [vmem:[%s710 + $0x248] sm:$0xf] %v1003
                  %v1005 = vld [vmem:[%s709 + $0x498] sm:$0xf]
                  %1006 = vst [vmem:[%s710 + $0x24c] sm:$0xf] %v1005
                  %v1007 = vld [vmem:[%s709 + $0x4a0] sm:$0xf]
                  %1008 = vst [vmem:[%s710 + $0x250] sm:$0xf] %v1007
                  %v1009 = vld [vmem:[%s709 + $0x4a8] sm:$0xf]
                  %1010 = vst [vmem:[%s710 + $0x254] sm:$0xf] %v1009
                  %v1011 = vld [vmem:[%s709 + $0x4b0] sm:$0xf]
                  %1012 = vst [vmem:[%s710 + $0x258] sm:$0xf] %v1011
                  %v1013 = vld [vmem:[%s709 + $0x4b8] sm:$0xf]
                  %1014 = vst [vmem:[%s710 + $0x25c] sm:$0xf] %v1013
                  %v1015 = vld [vmem:[%s709 + $0x4c0] sm:$0xf]
                  %1016 = vst [vmem:[%s710 + $0x260] sm:$0xf] %v1015
                  %v1017 = vld [vmem:[%s709 + $0x4c8] sm:$0xf]
                  %1018 = vst [vmem:[%s710 + $0x264] sm:$0xf] %v1017
                  %v1019 = vld [vmem:[%s709 + $0x4d0] sm:$0xf]
                  %1020 = vst [vmem:[%s710 + $0x268] sm:$0xf] %v1019
                  %v1021 = vld [vmem:[%s709 + $0x4d8] sm:$0xf]
                  %1022 = vst [vmem:[%s710 + $0x26c] sm:$0xf] %v1021
                  %v1023 = vld [vmem:[%s709 + $0x4e0] sm:$0xf]
                  %1024 = vst [vmem:[%s710 + $0x270] sm:$0xf] %v1023
                  %v1025 = vld [vmem:[%s709 + $0x4e8] sm:$0xf]
                  %1026 = vst [vmem:[%s710 + $0x274] sm:$0xf] %v1025
                  %v1027 = vld [vmem:[%s709 + $0x4f0] sm:$0xf]
                  %1028 = vst [vmem:[%s710 + $0x278] sm:$0xf] %v1027
                  %v1029 = vld [vmem:[%s709 + $0x4f8] sm:$0xf]
                  %1030 = vst [vmem:[%s710 + $0x27c] sm:$0xf] %v1029
                  %v1031 = vld [vmem:[%s709 + $0x500] sm:$0xf]
                  %1032 = vst [vmem:[%s710 + $0x280] sm:$0xf] %v1031
                  %v1033 = vld [vmem:[%s709 + $0x508] sm:$0xf]
                  %1034 = vst [vmem:[%s710 + $0x284] sm:$0xf] %v1033
                  %v1035 = vld [vmem:[%s709 + $0x510] sm:$0xf]
                  %1036 = vst [vmem:[%s710 + $0x288] sm:$0xf] %v1035
                  %v1037 = vld [vmem:[%s709 + $0x518] sm:$0xf]
                  %1038 = vst [vmem:[%s710 + $0x28c] sm:$0xf] %v1037
                  %v1039 = vld [vmem:[%s709 + $0x520] sm:$0xf]
                  %1040 = vst [vmem:[%s710 + $0x290] sm:$0xf] %v1039
                  %v1041 = vld [vmem:[%s709 + $0x528] sm:$0xf]
                  %1042 = vst [vmem:[%s710 + $0x294] sm:$0xf] %v1041
                  %v1043 = vld [vmem:[%s709 + $0x530] sm:$0xf]
                  %1044 = vst [vmem:[%s710 + $0x298] sm:$0xf] %v1043
                  %v1045 = vld [vmem:[%s709 + $0x538] sm:$0xf]
                  %1046 = vst [vmem:[%s710 + $0x29c] sm:$0xf] %v1045
                  %v1047 = vld [vmem:[%s709 + $0x540] sm:$0xf]
                  %1048 = vst [vmem:[%s710 + $0x2a0] sm:$0xf] %v1047
                  %v1049 = vld [vmem:[%s709 + $0x548] sm:$0xf]
                  %1050 = vst [vmem:[%s710 + $0x2a4] sm:$0xf] %v1049
                  %v1051 = vld [vmem:[%s709 + $0x550] sm:$0xf]
                  %1052 = vst [vmem:[%s710 + $0x2a8] sm:$0xf] %v1051
                  %v1053 = vld [vmem:[%s709 + $0x558] sm:$0xf]
                  %1054 = vst [vmem:[%s710 + $0x2ac] sm:$0xf] %v1053
                  %v1055 = vld [vmem:[%s709 + $0x560] sm:$0xf]
                  %1056 = vst [vmem:[%s710 + $0x2b0] sm:$0xf] %v1055
                  %v1057 = vld [vmem:[%s709 + $0x568] sm:$0xf]
                  %1058 = vst [vmem:[%s710 + $0x2b4] sm:$0xf] %v1057
                  %v1059 = vld [vmem:[%s709 + $0x570] sm:$0xf]
                  %1060 = vst [vmem:[%s710 + $0x2b8] sm:$0xf] %v1059
                  %v1061 = vld [vmem:[%s709 + $0x578] sm:$0xf]
                  %1062 = vst [vmem:[%s710 + $0x2bc] sm:$0xf] %v1061
                  %v1063 = vld [vmem:[%s709 + $0x580] sm:$0xf]
                  %1064 = vst [vmem:[%s710 + $0x2c0] sm:$0xf] %v1063
                  %v1065 = vld [vmem:[%s709 + $0x588] sm:$0xf]
                  %1066 = vst [vmem:[%s710 + $0x2c4] sm:$0xf] %v1065
                  %v1067 = vld [vmem:[%s709 + $0x590] sm:$0xf]
                  %1068 = vst [vmem:[%s710 + $0x2c8] sm:$0xf] %v1067
                  %v1069 = vld [vmem:[%s709 + $0x598] sm:$0xf]
                  %1070 = vst [vmem:[%s710 + $0x2cc] sm:$0xf] %v1069
                  %v1071 = vld [vmem:[%s709 + $0x5a0] sm:$0xf]
                  %1072 = vst [vmem:[%s710 + $0x2d0] sm:$0xf] %v1071
                  %v1073 = vld [vmem:[%s709 + $0x5a8] sm:$0xf]
                  %1074 = vst [vmem:[%s710 + $0x2d4] sm:$0xf] %v1073
                  %v1075 = vld [vmem:[%s709 + $0x5b0] sm:$0xf]
                  %1076 = vst [vmem:[%s710 + $0x2d8] sm:$0xf] %v1075
                  %v1077 = vld [vmem:[%s709 + $0x5b8] sm:$0xf]
                  %1078 = vst [vmem:[%s710 + $0x2dc] sm:$0xf] %v1077
                  %v1079 = vld [vmem:[%s709 + $0x5c0] sm:$0xf]
                  %1080 = vst [vmem:[%s710 + $0x2e0] sm:$0xf] %v1079
                  %v1081 = vld [vmem:[%s709 + $0x5c8] sm:$0xf]
                  %1082 = vst [vmem:[%s710 + $0x2e4] sm:$0xf] %v1081
                  %v1083 = vld [vmem:[%s709 + $0x5d0] sm:$0xf]
                  %1084 = vst [vmem:[%s710 + $0x2e8] sm:$0xf] %v1083
                  %v1085 = vld [vmem:[%s709 + $0x5d8] sm:$0xf]
                  %1086 = vst [vmem:[%s710 + $0x2ec] sm:$0xf] %v1085
                  %v1087 = vld [vmem:[%s709 + $0x5e0] sm:$0xf]
                  %1088 = vst [vmem:[%s710 + $0x2f0] sm:$0xf] %v1087
                  %v1089 = vld [vmem:[%s709 + $0x5e8] sm:$0xf]
                  %1090 = vst [vmem:[%s710 + $0x2f4] sm:$0xf] %v1089
                  %v1091 = vld [vmem:[%s709 + $0x5f0] sm:$0xf]
                  %1092 = vst [vmem:[%s710 + $0x2f8] sm:$0xf] %v1091
                  %v1093 = vld [vmem:[%s709 + $0x5f8] sm:$0xf]
                  %1094 = vst [vmem:[%s710 + $0x2fc] sm:$0xf] %v1093
                  %v1095 = vld [vmem:[%s709 + $0x600] sm:$0xf]
                  %1096 = vst [vmem:[%s710 + $0x300] sm:$0xf] %v1095
                  %v1097 = vld [vmem:[%s709 + $0x608] sm:$0xf]
                  %1098 = vst [vmem:[%s710 + $0x304] sm:$0xf] %v1097
                  %v1099 = vld [vmem:[%s709 + $0x610] sm:$0xf]
                  %1100 = vst [vmem:[%s710 + $0x308] sm:$0xf] %v1099
                  %v1101 = vld [vmem:[%s709 + $0x618] sm:$0xf]
                  %1102 = vst [vmem:[%s710 + $0x30c] sm:$0xf] %v1101
                  %v1103 = vld [vmem:[%s709 + $0x620] sm:$0xf]
                  %1104 = vst [vmem:[%s710 + $0x310] sm:$0xf] %v1103
                  %v1105 = vld [vmem:[%s709 + $0x628] sm:$0xf]
                  %1106 = vst [vmem:[%s710 + $0x314] sm:$0xf] %v1105
                  %v1107 = vld [vmem:[%s709 + $0x630] sm:$0xf]
                  %1108 = vst [vmem:[%s710 + $0x318] sm:$0xf] %v1107
                  %v1109 = vld [vmem:[%s709 + $0x638] sm:$0xf]
                  %1110 = vst [vmem:[%s710 + $0x31c] sm:$0xf] %v1109
                  %v1111 = vld [vmem:[%s709 + $0x640] sm:$0xf]
                  %1112 = vst [vmem:[%s710 + $0x320] sm:$0xf] %v1111
                  %v1113 = vld [vmem:[%s709 + $0x648] sm:$0xf]
                  %1114 = vst [vmem:[%s710 + $0x324] sm:$0xf] %v1113
                  %v1115 = vld [vmem:[%s709 + $0x650] sm:$0xf]
                  %1116 = vst [vmem:[%s710 + $0x328] sm:$0xf] %v1115
                  %v1117 = vld [vmem:[%s709 + $0x658] sm:$0xf]
                  %1118 = vst [vmem:[%s710 + $0x32c] sm:$0xf] %v1117
                  %v1119 = vld [vmem:[%s709 + $0x660] sm:$0xf]
                  %1120 = vst [vmem:[%s710 + $0x330] sm:$0xf] %v1119
                  %v1121 = vld [vmem:[%s709 + $0x668] sm:$0xf]
                  %1122 = vst [vmem:[%s710 + $0x334] sm:$0xf] %v1121
                  %v1123 = vld [vmem:[%s709 + $0x670] sm:$0xf]
                  %1124 = vst [vmem:[%s710 + $0x338] sm:$0xf] %v1123
                  %v1125 = vld [vmem:[%s709 + $0x678] sm:$0xf]
                  %1126 = vst [vmem:[%s710 + $0x33c] sm:$0xf] %v1125
                  %v1127 = vld [vmem:[%s709 + $0x680] sm:$0xf]
                  %1128 = vst [vmem:[%s710 + $0x340] sm:$0xf] %v1127
                  %v1129 = vld [vmem:[%s709 + $0x688] sm:$0xf]
                  %1130 = vst [vmem:[%s710 + $0x344] sm:$0xf] %v1129
                  %v1131 = vld [vmem:[%s709 + $0x690] sm:$0xf]
                  %1132 = vst [vmem:[%s710 + $0x348] sm:$0xf] %v1131
                  %v1133 = vld [vmem:[%s709 + $0x698] sm:$0xf]
                  %1134 = vst [vmem:[%s710 + $0x34c] sm:$0xf] %v1133
                  %v1135 = vld [vmem:[%s709 + $0x6a0] sm:$0xf]
                  %1136 = vst [vmem:[%s710 + $0x350] sm:$0xf] %v1135
                  %v1137 = vld [vmem:[%s709 + $0x6a8] sm:$0xf]
                  %1138 = vst [vmem:[%s710 + $0x354] sm:$0xf] %v1137
                  %v1139 = vld [vmem:[%s709 + $0x6b0] sm:$0xf]
                  %1140 = vst [vmem:[%s710 + $0x358] sm:$0xf] %v1139
                  %v1141 = vld [vmem:[%s709 + $0x6b8] sm:$0xf]
                  %1142 = vst [vmem:[%s710 + $0x35c] sm:$0xf] %v1141
                  %v1143 = vld [vmem:[%s709 + $0x6c0] sm:$0xf]
                  %1144 = vst [vmem:[%s710 + $0x360] sm:$0xf] %v1143
                  %v1145 = vld [vmem:[%s709 + $0x6c8] sm:$0xf]
                  %1146 = vst [vmem:[%s710 + $0x364] sm:$0xf] %v1145
                  %v1147 = vld [vmem:[%s709 + $0x6d0] sm:$0xf]
                  %1148 = vst [vmem:[%s710 + $0x368] sm:$0xf] %v1147
                  %v1149 = vld [vmem:[%s709 + $0x6d8] sm:$0xf]
                  %1150 = vst [vmem:[%s710 + $0x36c] sm:$0xf] %v1149
                  %v1151 = vld [vmem:[%s709 + $0x6e0] sm:$0xf]
                  %1152 = vst [vmem:[%s710 + $0x370] sm:$0xf] %v1151
                  %v1153 = vld [vmem:[%s709 + $0x6e8] sm:$0xf]
                  %1154 = vst [vmem:[%s710 + $0x374] sm:$0xf] %v1153
                  %v1155 = vld [vmem:[%s709 + $0x6f0] sm:$0xf]
                  %1156 = vst [vmem:[%s710 + $0x378] sm:$0xf] %v1155
                  %v1157 = vld [vmem:[%s709 + $0x6f8] sm:$0xf]
                  %1158 = vst [vmem:[%s710 + $0x37c] sm:$0xf] %v1157
                  %v1159 = vld [vmem:[%s709 + $0x700] sm:$0xf]
                  %1160 = vst [vmem:[%s710 + $0x380] sm:$0xf] %v1159
                  %v1161 = vld [vmem:[%s709 + $0x708] sm:$0xf]
                  %1162 = vst [vmem:[%s710 + $0x384] sm:$0xf] %v1161
                  %v1163 = vld [vmem:[%s709 + $0x710] sm:$0xf]
                  %1164 = vst [vmem:[%s710 + $0x388] sm:$0xf] %v1163
                  %v1165 = vld [vmem:[%s709 + $0x718] sm:$0xf]
                  %1166 = vst [vmem:[%s710 + $0x38c] sm:$0xf] %v1165
                  %v1167 = vld [vmem:[%s709 + $0x720] sm:$0xf]
                  %1168 = vst [vmem:[%s710 + $0x390] sm:$0xf] %v1167
                  %v1169 = vld [vmem:[%s709 + $0x728] sm:$0xf]
                  %1170 = vst [vmem:[%s710 + $0x394] sm:$0xf] %v1169
                  %v1171 = vld [vmem:[%s709 + $0x730] sm:$0xf]
                  %1172 = vst [vmem:[%s710 + $0x398] sm:$0xf] %v1171
                  %v1173 = vld [vmem:[%s709 + $0x738] sm:$0xf]
                  %1174 = vst [vmem:[%s710 + $0x39c] sm:$0xf] %v1173
                  %v1175 = vld [vmem:[%s709 + $0x740] sm:$0xf]
                  %1176 = vst [vmem:[%s710 + $0x3a0] sm:$0xf] %v1175
                  %v1177 = vld [vmem:[%s709 + $0x748] sm:$0xf]
                  %1178 = vst [vmem:[%s710 + $0x3a4] sm:$0xf] %v1177
                  %v1179 = vld [vmem:[%s709 + $0x750] sm:$0xf]
                  %1180 = vst [vmem:[%s710 + $0x3a8] sm:$0xf] %v1179
                  %v1181 = vld [vmem:[%s709 + $0x758] sm:$0xf]
                  %1182 = vst [vmem:[%s710 + $0x3ac] sm:$0xf] %v1181
                  %v1183 = vld [vmem:[%s709 + $0x760] sm:$0xf]
                  %1184 = vst [vmem:[%s710 + $0x3b0] sm:$0xf] %v1183
                  %v1185 = vld [vmem:[%s709 + $0x768] sm:$0xf]
                  %1186 = vst [vmem:[%s710 + $0x3b4] sm:$0xf] %v1185
                  %v1187 = vld [vmem:[%s709 + $0x770] sm:$0xf]
                  %1188 = vst [vmem:[%s710 + $0x3b8] sm:$0xf] %v1187
                  %v1189 = vld [vmem:[%s709 + $0x778] sm:$0xf]
                  %1190 = vst [vmem:[%s710 + $0x3bc] sm:$0xf] %v1189
                  %v1191 = vld [vmem:[%s709 + $0x780] sm:$0xf]
                  %1192 = vst [vmem:[%s710 + $0x3c0] sm:$0xf] %v1191
                  %v1193 = vld [vmem:[%s709 + $0x788] sm:$0xf]
                  %1194 = vst [vmem:[%s710 + $0x3c4] sm:$0xf] %v1193
                  %v1195 = vld [vmem:[%s709 + $0x790] sm:$0xf]
                  %1196 = vst [vmem:[%s710 + $0x3c8] sm:$0xf] %v1195
                  %v1197 = vld [vmem:[%s709 + $0x798] sm:$0xf]
                  %1198 = vst [vmem:[%s710 + $0x3cc] sm:$0xf] %v1197
                  %v1199 = vld [vmem:[%s709 + $0x7a0] sm:$0xf]
                  %1200 = vst [vmem:[%s710 + $0x3d0] sm:$0xf] %v1199
                  %v1201 = vld [vmem:[%s709 + $0x7a8] sm:$0xf]
                  %1202 = vst [vmem:[%s710 + $0x3d4] sm:$0xf] %v1201
                  %v1203 = vld [vmem:[%s709 + $0x7b0] sm:$0xf]
                  %1204 = vst [vmem:[%s710 + $0x3d8] sm:$0xf] %v1203
                  %v1205 = vld [vmem:[%s709 + $0x7b8] sm:$0xf]
                  %1206 = vst [vmem:[%s710 + $0x3dc] sm:$0xf] %v1205
                  %v1207 = vld [vmem:[%s709 + $0x7c0] sm:$0xf]
                  %1208 = vst [vmem:[%s710 + $0x3e0] sm:$0xf] %v1207
                  %v1209 = vld [vmem:[%s709 + $0x7c8] sm:$0xf]
                  %1210 = vst [vmem:[%s710 + $0x3e4] sm:$0xf] %v1209
                  %v1211 = vld [vmem:[%s709 + $0x7d0] sm:$0xf]
                  %1212 = vst [vmem:[%s710 + $0x3e8] sm:$0xf] %v1211
                  %v1213 = vld [vmem:[%s709 + $0x7d8] sm:$0xf]
                  %1214 = vst [vmem:[%s710 + $0x3ec] sm:$0xf] %v1213
                  %v1215 = vld [vmem:[%s709 + $0x7e0] sm:$0xf]
                  %1216 = vst [vmem:[%s710 + $0x3f0] sm:$0xf] %v1215
                  %v1217 = vld [vmem:[%s709 + $0x7e8] sm:$0xf]
                  %1218 = vst [vmem:[%s710 + $0x3f4] sm:$0xf] %v1217
                  %v1219 = vld [vmem:[%s709 + $0x7f0] sm:$0xf]
                  %1220 = vst [vmem:[%s710 + $0x3f8] sm:$0xf] %v1219
                  %v1221 = vld [vmem:[%s709 + $0x7f8] sm:$0xf]
                  %1222 = vst [vmem:[%s710 + $0x3fc] sm:$0xf] %v1221
                $region59: #{discriminator_forward.6} parent=46 // loop_footer
                  %s708 = sadd.s32 1, %s704
                $region60: #{discriminator_forward.6} parent=46 // loop_footer_branch
                  %703 = sbr.rel target = $region56
                $region61: #{discriminator_forward.6} parent=46 // loop_exit
                  _
              $region47: #{discriminator_forward.6} parent=31 // pred_fallthru
                _
            $region32: #{discriminator_forward.6} parent=27 // pred_fallthru
              _
            // Predicated region
            $region33: #{discriminator_forward.6} parent=27 // pred_check
              _
            $region34: #{discriminator_forward.6} parent=27 // pred_check_branch
              %170 = sbr.rel (0) target = $region36
            $region35: #{discriminator_forward.6} parent=27 // pred_region
              loop: start=0, step=1, limit=1
              $region37: #{discriminator_forward.6} parent=35 // loop_pre_header
                _
              $region38: #{discriminator_forward.6} parent=35 // loop_header
                %s173 = sphi 0, %s177
                %p174 = scmp.ge.s32.totalorder %s173, 1
                %s178 = sphi %s164, %s164
                %s179 = sphi %s162, %s162
              $region39: #{discriminator_forward.6} parent=35 // loop_header_branch
                %176 = sbr.rel (%p174) target = $region43
              $region40: #{discriminator_forward.6} parent=35 // loop_body
                %v180 = vld [vmem:[%s178] sm:$0xf]
                %181 = vst [vmem:[%s179] sm:$0xf] %v180
                %v182 = vld [vmem:[%s178 + $0x8] sm:$0xf]
                %183 = vst [vmem:[%s179 + $0x4] sm:$0xf] %v182
                %v184 = vld [vmem:[%s178 + $0x10] sm:$0xf]
                %185 = vst [vmem:[%s179 + $0x8] sm:$0xf] %v184
                %v186 = vld [vmem:[%s178 + $0x18] sm:$0xf]
                %187 = vst [vmem:[%s179 + $0xc] sm:$0xf] %v186
                %v188 = vld [vmem:[%s178 + $0x20] sm:$0xf]
                %189 = vst [vmem:[%s179 + $0x10] sm:$0xf] %v188
                %v190 = vld [vmem:[%s178 + $0x28] sm:$0xf]
                %191 = vst [vmem:[%s179 + $0x14] sm:$0xf] %v190
                %v192 = vld [vmem:[%s178 + $0x30] sm:$0xf]
                %193 = vst [vmem:[%s179 + $0x18] sm:$0xf] %v192
                %v194 = vld [vmem:[%s178 + $0x38] sm:$0xf]
                %195 = vst [vmem:[%s179 + $0x1c] sm:$0xf] %v194
                %v196 = vld [vmem:[%s178 + $0x40] sm:$0xf]
                %197 = vst [vmem:[%s179 + $0x20] sm:$0xf] %v196
                %v198 = vld [vmem:[%s178 + $0x48] sm:$0xf]
                %199 = vst [vmem:[%s179 + $0x24] sm:$0xf] %v198
                %v200 = vld [vmem:[%s178 + $0x50] sm:$0xf]
                %201 = vst [vmem:[%s179 + $0x28] sm:$0xf] %v200
                %v202 = vld [vmem:[%s178 + $0x58] sm:$0xf]
                %203 = vst [vmem:[%s179 + $0x2c] sm:$0xf] %v202
                %v204 = vld [vmem:[%s178 + $0x60] sm:$0xf]
                %205 = vst [vmem:[%s179 + $0x30] sm:$0xf] %v204
                %v206 = vld [vmem:[%s178 + $0x68] sm:$0xf]
                %207 = vst [vmem:[%s179 + $0x34] sm:$0xf] %v206
                %v208 = vld [vmem:[%s178 + $0x70] sm:$0xf]
                %209 = vst [vmem:[%s179 + $0x38] sm:$0xf] %v208
                %v210 = vld [vmem:[%s178 + $0x78] sm:$0xf]
                %211 = vst [vmem:[%s179 + $0x3c] sm:$0xf] %v210
                %v212 = vld [vmem:[%s178 + $0x80] sm:$0xf]
                %213 = vst [vmem:[%s179 + $0x40] sm:$0xf] %v212
                %v214 = vld [vmem:[%s178 + $0x88] sm:$0xf]
                %215 = vst [vmem:[%s179 + $0x44] sm:$0xf] %v214
                %v216 = vld [vmem:[%s178 + $0x90] sm:$0xf]
                %217 = vst [vmem:[%s179 + $0x48] sm:$0xf] %v216
                %v218 = vld [vmem:[%s178 + $0x98] sm:$0xf]
                %219 = vst [vmem:[%s179 + $0x4c] sm:$0xf] %v218
                %v220 = vld [vmem:[%s178 + $0xa0] sm:$0xf]
                %221 = vst [vmem:[%s179 + $0x50] sm:$0xf] %v220
                %v222 = vld [vmem:[%s178 + $0xa8] sm:$0xf]
                %223 = vst [vmem:[%s179 + $0x54] sm:$0xf] %v222
                %v224 = vld [vmem:[%s178 + $0xb0] sm:$0xf]
                %225 = vst [vmem:[%s179 + $0x58] sm:$0xf] %v224
                %v226 = vld [vmem:[%s178 + $0xb8] sm:$0xf]
                %227 = vst [vmem:[%s179 + $0x5c] sm:$0xf] %v226
                %v228 = vld [vmem:[%s178 + $0xc0] sm:$0xf]
                %229 = vst [vmem:[%s179 + $0x60] sm:$0xf] %v228
                %v230 = vld [vmem:[%s178 + $0xc8] sm:$0xf]
                %231 = vst [vmem:[%s179 + $0x64] sm:$0xf] %v230
                %v232 = vld [vmem:[%s178 + $0xd0] sm:$0xf]
                %233 = vst [vmem:[%s179 + $0x68] sm:$0xf] %v232
                %v234 = vld [vmem:[%s178 + $0xd8] sm:$0xf]
                %235 = vst [vmem:[%s179 + $0x6c] sm:$0xf] %v234
                %v236 = vld [vmem:[%s178 + $0xe0] sm:$0xf]
                %237 = vst [vmem:[%s179 + $0x70] sm:$0xf] %v236
                %v238 = vld [vmem:[%s178 + $0xe8] sm:$0xf]
                %239 = vst [vmem:[%s179 + $0x74] sm:$0xf] %v238
                %v240 = vld [vmem:[%s178 + $0xf0] sm:$0xf]
                %241 = vst [vmem:[%s179 + $0x78] sm:$0xf] %v240
                %v242 = vld [vmem:[%s178 + $0xf8] sm:$0xf]
                %243 = vst [vmem:[%s179 + $0x7c] sm:$0xf] %v242
                %v244 = vld [vmem:[%s178 + $0x100] sm:$0xf]
                %245 = vst [vmem:[%s179 + $0x80] sm:$0xf] %v244
                %v246 = vld [vmem:[%s178 + $0x108] sm:$0xf]
                %247 = vst [vmem:[%s179 + $0x84] sm:$0xf] %v246
                %v248 = vld [vmem:[%s178 + $0x110] sm:$0xf]
                %249 = vst [vmem:[%s179 + $0x88] sm:$0xf] %v248
                %v250 = vld [vmem:[%s178 + $0x118] sm:$0xf]
                %251 = vst [vmem:[%s179 + $0x8c] sm:$0xf] %v250
                %v252 = vld [vmem:[%s178 + $0x120] sm:$0xf]
                %253 = vst [vmem:[%s179 + $0x90] sm:$0xf] %v252
                %v254 = vld [vmem:[%s178 + $0x128] sm:$0xf]
                %255 = vst [vmem:[%s179 + $0x94] sm:$0xf] %v254
                %v256 = vld [vmem:[%s178 + $0x130] sm:$0xf]
                %257 = vst [vmem:[%s179 + $0x98] sm:$0xf] %v256
                %v258 = vld [vmem:[%s178 + $0x138] sm:$0xf]
                %259 = vst [vmem:[%s179 + $0x9c] sm:$0xf] %v258
                %v260 = vld [vmem:[%s178 + $0x140] sm:$0xf]
                %261 = vst [vmem:[%s179 + $0xa0] sm:$0xf] %v260
                %v262 = vld [vmem:[%s178 + $0x148] sm:$0xf]
                %263 = vst [vmem:[%s179 + $0xa4] sm:$0xf] %v262
                %v264 = vld [vmem:[%s178 + $0x150] sm:$0xf]
                %265 = vst [vmem:[%s179 + $0xa8] sm:$0xf] %v264
                %v266 = vld [vmem:[%s178 + $0x158] sm:$0xf]
                %267 = vst [vmem:[%s179 + $0xac] sm:$0xf] %v266
                %v268 = vld [vmem:[%s178 + $0x160] sm:$0xf]
                %269 = vst [vmem:[%s179 + $0xb0] sm:$0xf] %v268
                %v270 = vld [vmem:[%s178 + $0x168] sm:$0xf]
                %271 = vst [vmem:[%s179 + $0xb4] sm:$0xf] %v270
                %v272 = vld [vmem:[%s178 + $0x170] sm:$0xf]
                %273 = vst [vmem:[%s179 + $0xb8] sm:$0xf] %v272
                %v274 = vld [vmem:[%s178 + $0x178] sm:$0xf]
                %275 = vst [vmem:[%s179 + $0xbc] sm:$0xf] %v274
                %v276 = vld [vmem:[%s178 + $0x180] sm:$0xf]
                %277 = vst [vmem:[%s179 + $0xc0] sm:$0xf] %v276
                %v278 = vld [vmem:[%s178 + $0x188] sm:$0xf]
                %279 = vst [vmem:[%s179 + $0xc4] sm:$0xf] %v278
                %v280 = vld [vmem:[%s178 + $0x190] sm:$0xf]
                %281 = vst [vmem:[%s179 + $0xc8] sm:$0xf] %v280
                %v282 = vld [vmem:[%s178 + $0x198] sm:$0xf]
                %283 = vst [vmem:[%s179 + $0xcc] sm:$0xf] %v282
                %v284 = vld [vmem:[%s178 + $0x1a0] sm:$0xf]
                %285 = vst [vmem:[%s179 + $0xd0] sm:$0xf] %v284
                %v286 = vld [vmem:[%s178 + $0x1a8] sm:$0xf]
                %287 = vst [vmem:[%s179 + $0xd4] sm:$0xf] %v286
                %v288 = vld [vmem:[%s178 + $0x1b0] sm:$0xf]
                %289 = vst [vmem:[%s179 + $0xd8] sm:$0xf] %v288
                %v290 = vld [vmem:[%s178 + $0x1b8] sm:$0xf]
                %291 = vst [vmem:[%s179 + $0xdc] sm:$0xf] %v290
                %v292 = vld [vmem:[%s178 + $0x1c0] sm:$0xf]
                %293 = vst [vmem:[%s179 + $0xe0] sm:$0xf] %v292
                %v294 = vld [vmem:[%s178 + $0x1c8] sm:$0xf]
                %295 = vst [vmem:[%s179 + $0xe4] sm:$0xf] %v294
                %v296 = vld [vmem:[%s178 + $0x1d0] sm:$0xf]
                %297 = vst [vmem:[%s179 + $0xe8] sm:$0xf] %v296
                %v298 = vld [vmem:[%s178 + $0x1d8] sm:$0xf]
                %299 = vst [vmem:[%s179 + $0xec] sm:$0xf] %v298
                %v300 = vld [vmem:[%s178 + $0x1e0] sm:$0xf]
                %301 = vst [vmem:[%s179 + $0xf0] sm:$0xf] %v300
                %v302 = vld [vmem:[%s178 + $0x1e8] sm:$0xf]
                %303 = vst [vmem:[%s179 + $0xf4] sm:$0xf] %v302
                %v304 = vld [vmem:[%s178 + $0x1f0] sm:$0xf]
                %305 = vst [vmem:[%s179 + $0xf8] sm:$0xf] %v304
                %v306 = vld [vmem:[%s178 + $0x1f8] sm:$0xf]
                %307 = vst [vmem:[%s179 + $0xfc] sm:$0xf] %v306
                %v308 = vld [vmem:[%s178 + $0x200] sm:$0xf]
                %309 = vst [vmem:[%s179 + $0x100] sm:$0xf] %v308
                %v310 = vld [vmem:[%s178 + $0x208] sm:$0xf]
                %311 = vst [vmem:[%s179 + $0x104] sm:$0xf] %v310
                %v312 = vld [vmem:[%s178 + $0x210] sm:$0xf]
                %313 = vst [vmem:[%s179 + $0x108] sm:$0xf] %v312
                %v314 = vld [vmem:[%s178 + $0x218] sm:$0xf]
                %315 = vst [vmem:[%s179 + $0x10c] sm:$0xf] %v314
                %v316 = vld [vmem:[%s178 + $0x220] sm:$0xf]
                %317 = vst [vmem:[%s179 + $0x110] sm:$0xf] %v316
                %v318 = vld [vmem:[%s178 + $0x228] sm:$0xf]
                %319 = vst [vmem:[%s179 + $0x114] sm:$0xf] %v318
                %v320 = vld [vmem:[%s178 + $0x230] sm:$0xf]
                %321 = vst [vmem:[%s179 + $0x118] sm:$0xf] %v320
                %v322 = vld [vmem:[%s178 + $0x238] sm:$0xf]
                %323 = vst [vmem:[%s179 + $0x11c] sm:$0xf] %v322
                %v324 = vld [vmem:[%s178 + $0x240] sm:$0xf]
                %325 = vst [vmem:[%s179 + $0x120] sm:$0xf] %v324
                %v326 = vld [vmem:[%s178 + $0x248] sm:$0xf]
                %327 = vst [vmem:[%s179 + $0x124] sm:$0xf] %v326
                %v328 = vld [vmem:[%s178 + $0x250] sm:$0xf]
                %329 = vst [vmem:[%s179 + $0x128] sm:$0xf] %v328
                %v330 = vld [vmem:[%s178 + $0x258] sm:$0xf]
                %331 = vst [vmem:[%s179 + $0x12c] sm:$0xf] %v330
                %v332 = vld [vmem:[%s178 + $0x260] sm:$0xf]
                %333 = vst [vmem:[%s179 + $0x130] sm:$0xf] %v332
                %v334 = vld [vmem:[%s178 + $0x268] sm:$0xf]
                %335 = vst [vmem:[%s179 + $0x134] sm:$0xf] %v334
                %v336 = vld [vmem:[%s178 + $0x270] sm:$0xf]
                %337 = vst [vmem:[%s179 + $0x138] sm:$0xf] %v336
                %v338 = vld [vmem:[%s178 + $0x278] sm:$0xf]
                %339 = vst [vmem:[%s179 + $0x13c] sm:$0xf] %v338
                %v340 = vld [vmem:[%s178 + $0x280] sm:$0xf]
                %341 = vst [vmem:[%s179 + $0x140] sm:$0xf] %v340
                %v342 = vld [vmem:[%s178 + $0x288] sm:$0xf]
                %343 = vst [vmem:[%s179 + $0x144] sm:$0xf] %v342
                %v344 = vld [vmem:[%s178 + $0x290] sm:$0xf]
                %345 = vst [vmem:[%s179 + $0x148] sm:$0xf] %v344
                %v346 = vld [vmem:[%s178 + $0x298] sm:$0xf]
                %347 = vst [vmem:[%s179 + $0x14c] sm:$0xf] %v346
                %v348 = vld [vmem:[%s178 + $0x2a0] sm:$0xf]
                %349 = vst [vmem:[%s179 + $0x150] sm:$0xf] %v348
                %v350 = vld [vmem:[%s178 + $0x2a8] sm:$0xf]
                %351 = vst [vmem:[%s179 + $0x154] sm:$0xf] %v350
                %v352 = vld [vmem:[%s178 + $0x2b0] sm:$0xf]
                %353 = vst [vmem:[%s179 + $0x158] sm:$0xf] %v352
                %v354 = vld [vmem:[%s178 + $0x2b8] sm:$0xf]
                %355 = vst [vmem:[%s179 + $0x15c] sm:$0xf] %v354
                %v356 = vld [vmem:[%s178 + $0x2c0] sm:$0xf]
                %357 = vst [vmem:[%s179 + $0x160] sm:$0xf] %v356
                %v358 = vld [vmem:[%s178 + $0x2c8] sm:$0xf]
                %359 = vst [vmem:[%s179 + $0x164] sm:$0xf] %v358
                %v360 = vld [vmem:[%s178 + $0x2d0] sm:$0xf]
                %361 = vst [vmem:[%s179 + $0x168] sm:$0xf] %v360
                %v362 = vld [vmem:[%s178 + $0x2d8] sm:$0xf]
                %363 = vst [vmem:[%s179 + $0x16c] sm:$0xf] %v362
                %v364 = vld [vmem:[%s178 + $0x2e0] sm:$0xf]
                %365 = vst [vmem:[%s179 + $0x170] sm:$0xf] %v364
                %v366 = vld [vmem:[%s178 + $0x2e8] sm:$0xf]
                %367 = vst [vmem:[%s179 + $0x174] sm:$0xf] %v366
                %v368 = vld [vmem:[%s178 + $0x2f0] sm:$0xf]
                %369 = vst [vmem:[%s179 + $0x178] sm:$0xf] %v368
                %v370 = vld [vmem:[%s178 + $0x2f8] sm:$0xf]
                %371 = vst [vmem:[%s179 + $0x17c] sm:$0xf] %v370
                %v372 = vld [vmem:[%s178 + $0x300] sm:$0xf]
                %373 = vst [vmem:[%s179 + $0x180] sm:$0xf] %v372
                %v374 = vld [vmem:[%s178 + $0x308] sm:$0xf]
                %375 = vst [vmem:[%s179 + $0x184] sm:$0xf] %v374
                %v376 = vld [vmem:[%s178 + $0x310] sm:$0xf]
                %377 = vst [vmem:[%s179 + $0x188] sm:$0xf] %v376
                %v378 = vld [vmem:[%s178 + $0x318] sm:$0xf]
                %379 = vst [vmem:[%s179 + $0x18c] sm:$0xf] %v378
                %v380 = vld [vmem:[%s178 + $0x320] sm:$0xf]
                %381 = vst [vmem:[%s179 + $0x190] sm:$0xf] %v380
                %v382 = vld [vmem:[%s178 + $0x328] sm:$0xf]
                %383 = vst [vmem:[%s179 + $0x194] sm:$0xf] %v382
                %v384 = vld [vmem:[%s178 + $0x330] sm:$0xf]
                %385 = vst [vmem:[%s179 + $0x198] sm:$0xf] %v384
                %v386 = vld [vmem:[%s178 + $0x338] sm:$0xf]
                %387 = vst [vmem:[%s179 + $0x19c] sm:$0xf] %v386
                %v388 = vld [vmem:[%s178 + $0x340] sm:$0xf]
                %389 = vst [vmem:[%s179 + $0x1a0] sm:$0xf] %v388
                %v390 = vld [vmem:[%s178 + $0x348] sm:$0xf]
                %391 = vst [vmem:[%s179 + $0x1a4] sm:$0xf] %v390
                %v392 = vld [vmem:[%s178 + $0x350] sm:$0xf]
                %393 = vst [vmem:[%s179 + $0x1a8] sm:$0xf] %v392
                %v394 = vld [vmem:[%s178 + $0x358] sm:$0xf]
                %395 = vst [vmem:[%s179 + $0x1ac] sm:$0xf] %v394
                %v396 = vld [vmem:[%s178 + $0x360] sm:$0xf]
                %397 = vst [vmem:[%s179 + $0x1b0] sm:$0xf] %v396
                %v398 = vld [vmem:[%s178 + $0x368] sm:$0xf]
                %399 = vst [vmem:[%s179 + $0x1b4] sm:$0xf] %v398
                %v400 = vld [vmem:[%s178 + $0x370] sm:$0xf]
                %401 = vst [vmem:[%s179 + $0x1b8] sm:$0xf] %v400
                %v402 = vld [vmem:[%s178 + $0x378] sm:$0xf]
                %403 = vst [vmem:[%s179 + $0x1bc] sm:$0xf] %v402
                %v404 = vld [vmem:[%s178 + $0x380] sm:$0xf]
                %405 = vst [vmem:[%s179 + $0x1c0] sm:$0xf] %v404
                %v406 = vld [vmem:[%s178 + $0x388] sm:$0xf]
                %407 = vst [vmem:[%s179 + $0x1c4] sm:$0xf] %v406
                %v408 = vld [vmem:[%s178 + $0x390] sm:$0xf]
                %409 = vst [vmem:[%s179 + $0x1c8] sm:$0xf] %v408
                %v410 = vld [vmem:[%s178 + $0x398] sm:$0xf]
                %411 = vst [vmem:[%s179 + $0x1cc] sm:$0xf] %v410
                %v412 = vld [vmem:[%s178 + $0x3a0] sm:$0xf]
                %413 = vst [vmem:[%s179 + $0x1d0] sm:$0xf] %v412
                %v414 = vld [vmem:[%s178 + $0x3a8] sm:$0xf]
                %415 = vst [vmem:[%s179 + $0x1d4] sm:$0xf] %v414
                %v416 = vld [vmem:[%s178 + $0x3b0] sm:$0xf]
                %417 = vst [vmem:[%s179 + $0x1d8] sm:$0xf] %v416
                %v418 = vld [vmem:[%s178 + $0x3b8] sm:$0xf]
                %419 = vst [vmem:[%s179 + $0x1dc] sm:$0xf] %v418
                %v420 = vld [vmem:[%s178 + $0x3c0] sm:$0xf]
                %421 = vst [vmem:[%s179 + $0x1e0] sm:$0xf] %v420
                %v422 = vld [vmem:[%s178 + $0x3c8] sm:$0xf]
                %423 = vst [vmem:[%s179 + $0x1e4] sm:$0xf] %v422
                %v424 = vld [vmem:[%s178 + $0x3d0] sm:$0xf]
                %425 = vst [vmem:[%s179 + $0x1e8] sm:$0xf] %v424
                %v426 = vld [vmem:[%s178 + $0x3d8] sm:$0xf]
                %427 = vst [vmem:[%s179 + $0x1ec] sm:$0xf] %v426
                %v428 = vld [vmem:[%s178 + $0x3e0] sm:$0xf]
                %429 = vst [vmem:[%s179 + $0x1f0] sm:$0xf] %v428
                %v430 = vld [vmem:[%s178 + $0x3e8] sm:$0xf]
                %431 = vst [vmem:[%s179 + $0x1f4] sm:$0xf] %v430
                %v432 = vld [vmem:[%s178 + $0x3f0] sm:$0xf]
                %433 = vst [vmem:[%s179 + $0x1f8] sm:$0xf] %v432
                %v434 = vld [vmem:[%s178 + $0x3f8] sm:$0xf]
                %435 = vst [vmem:[%s179 + $0x1fc] sm:$0xf] %v434
                %v436 = vld [vmem:[%s178 + $0x400] sm:$0xf]
                %437 = vst [vmem:[%s179 + $0x200] sm:$0xf] %v436
                %v438 = vld [vmem:[%s178 + $0x408] sm:$0xf]
                %439 = vst [vmem:[%s179 + $0x204] sm:$0xf] %v438
                %v440 = vld [vmem:[%s178 + $0x410] sm:$0xf]
                %441 = vst [vmem:[%s179 + $0x208] sm:$0xf] %v440
                %v442 = vld [vmem:[%s178 + $0x418] sm:$0xf]
                %443 = vst [vmem:[%s179 + $0x20c] sm:$0xf] %v442
                %v444 = vld [vmem:[%s178 + $0x420] sm:$0xf]
                %445 = vst [vmem:[%s179 + $0x210] sm:$0xf] %v444
                %v446 = vld [vmem:[%s178 + $0x428] sm:$0xf]
                %447 = vst [vmem:[%s179 + $0x214] sm:$0xf] %v446
                %v448 = vld [vmem:[%s178 + $0x430] sm:$0xf]
                %449 = vst [vmem:[%s179 + $0x218] sm:$0xf] %v448
                %v450 = vld [vmem:[%s178 + $0x438] sm:$0xf]
                %451 = vst [vmem:[%s179 + $0x21c] sm:$0xf] %v450
                %v452 = vld [vmem:[%s178 + $0x440] sm:$0xf]
                %453 = vst [vmem:[%s179 + $0x220] sm:$0xf] %v452
                %v454 = vld [vmem:[%s178 + $0x448] sm:$0xf]
                %455 = vst [vmem:[%s179 + $0x224] sm:$0xf] %v454
                %v456 = vld [vmem:[%s178 + $0x450] sm:$0xf]
                %457 = vst [vmem:[%s179 + $0x228] sm:$0xf] %v456
                %v458 = vld [vmem:[%s178 + $0x458] sm:$0xf]
                %459 = vst [vmem:[%s179 + $0x22c] sm:$0xf] %v458
                %v460 = vld [vmem:[%s178 + $0x460] sm:$0xf]
                %461 = vst [vmem:[%s179 + $0x230] sm:$0xf] %v460
                %v462 = vld [vmem:[%s178 + $0x468] sm:$0xf]
                %463 = vst [vmem:[%s179 + $0x234] sm:$0xf] %v462
                %v464 = vld [vmem:[%s178 + $0x470] sm:$0xf]
                %465 = vst [vmem:[%s179 + $0x238] sm:$0xf] %v464
                %v466 = vld [vmem:[%s178 + $0x478] sm:$0xf]
                %467 = vst [vmem:[%s179 + $0x23c] sm:$0xf] %v466
                %v468 = vld [vmem:[%s178 + $0x480] sm:$0xf]
                %469 = vst [vmem:[%s179 + $0x240] sm:$0xf] %v468
                %v470 = vld [vmem:[%s178 + $0x488] sm:$0xf]
                %471 = vst [vmem:[%s179 + $0x244] sm:$0xf] %v470
                %v472 = vld [vmem:[%s178 + $0x490] sm:$0xf]
                %473 = vst [vmem:[%s179 + $0x248] sm:$0xf] %v472
                %v474 = vld [vmem:[%s178 + $0x498] sm:$0xf]
                %475 = vst [vmem:[%s179 + $0x24c] sm:$0xf] %v474
                %v476 = vld [vmem:[%s178 + $0x4a0] sm:$0xf]
                %477 = vst [vmem:[%s179 + $0x250] sm:$0xf] %v476
                %v478 = vld [vmem:[%s178 + $0x4a8] sm:$0xf]
                %479 = vst [vmem:[%s179 + $0x254] sm:$0xf] %v478
                %v480 = vld [vmem:[%s178 + $0x4b0] sm:$0xf]
                %481 = vst [vmem:[%s179 + $0x258] sm:$0xf] %v480
                %v482 = vld [vmem:[%s178 + $0x4b8] sm:$0xf]
                %483 = vst [vmem:[%s179 + $0x25c] sm:$0xf] %v482
                %v484 = vld [vmem:[%s178 + $0x4c0] sm:$0xf]
                %485 = vst [vmem:[%s179 + $0x260] sm:$0xf] %v484
                %v486 = vld [vmem:[%s178 + $0x4c8] sm:$0xf]
                %487 = vst [vmem:[%s179 + $0x264] sm:$0xf] %v486
                %v488 = vld [vmem:[%s178 + $0x4d0] sm:$0xf]
                %489 = vst [vmem:[%s179 + $0x268] sm:$0xf] %v488
                %v490 = vld [vmem:[%s178 + $0x4d8] sm:$0xf]
                %491 = vst [vmem:[%s179 + $0x26c] sm:$0xf] %v490
                %v492 = vld [vmem:[%s178 + $0x4e0] sm:$0xf]
                %493 = vst [vmem:[%s179 + $0x270] sm:$0xf] %v492
                %v494 = vld [vmem:[%s178 + $0x4e8] sm:$0xf]
                %495 = vst [vmem:[%s179 + $0x274] sm:$0xf] %v494
                %v496 = vld [vmem:[%s178 + $0x4f0] sm:$0xf]
                %497 = vst [vmem:[%s179 + $0x278] sm:$0xf] %v496
                %v498 = vld [vmem:[%s178 + $0x4f8] sm:$0xf]
                %499 = vst [vmem:[%s179 + $0x27c] sm:$0xf] %v498
                %v500 = vld [vmem:[%s178 + $0x500] sm:$0xf]
                %501 = vst [vmem:[%s179 + $0x280] sm:$0xf] %v500
                %v502 = vld [vmem:[%s178 + $0x508] sm:$0xf]
                %503 = vst [vmem:[%s179 + $0x284] sm:$0xf] %v502
                %v504 = vld [vmem:[%s178 + $0x510] sm:$0xf]
                %505 = vst [vmem:[%s179 + $0x288] sm:$0xf] %v504
                %v506 = vld [vmem:[%s178 + $0x518] sm:$0xf]
                %507 = vst [vmem:[%s179 + $0x28c] sm:$0xf] %v506
                %v508 = vld [vmem:[%s178 + $0x520] sm:$0xf]
                %509 = vst [vmem:[%s179 + $0x290] sm:$0xf] %v508
                %v510 = vld [vmem:[%s178 + $0x528] sm:$0xf]
                %511 = vst [vmem:[%s179 + $0x294] sm:$0xf] %v510
                %v512 = vld [vmem:[%s178 + $0x530] sm:$0xf]
                %513 = vst [vmem:[%s179 + $0x298] sm:$0xf] %v512
                %v514 = vld [vmem:[%s178 + $0x538] sm:$0xf]
                %515 = vst [vmem:[%s179 + $0x29c] sm:$0xf] %v514
                %v516 = vld [vmem:[%s178 + $0x540] sm:$0xf]
                %517 = vst [vmem:[%s179 + $0x2a0] sm:$0xf] %v516
                %v518 = vld [vmem:[%s178 + $0x548] sm:$0xf]
                %519 = vst [vmem:[%s179 + $0x2a4] sm:$0xf] %v518
                %v520 = vld [vmem:[%s178 + $0x550] sm:$0xf]
                %521 = vst [vmem:[%s179 + $0x2a8] sm:$0xf] %v520
                %v522 = vld [vmem:[%s178 + $0x558] sm:$0xf]
                %523 = vst [vmem:[%s179 + $0x2ac] sm:$0xf] %v522
                %v524 = vld [vmem:[%s178 + $0x560] sm:$0xf]
                %525 = vst [vmem:[%s179 + $0x2b0] sm:$0xf] %v524
                %v526 = vld [vmem:[%s178 + $0x568] sm:$0xf]
                %527 = vst [vmem:[%s179 + $0x2b4] sm:$0xf] %v526
                %v528 = vld [vmem:[%s178 + $0x570] sm:$0xf]
                %529 = vst [vmem:[%s179 + $0x2b8] sm:$0xf] %v528
                %v530 = vld [vmem:[%s178 + $0x578] sm:$0xf]
                %531 = vst [vmem:[%s179 + $0x2bc] sm:$0xf] %v530
                %v532 = vld [vmem:[%s178 + $0x580] sm:$0xf]
                %533 = vst [vmem:[%s179 + $0x2c0] sm:$0xf] %v532
                %v534 = vld [vmem:[%s178 + $0x588] sm:$0xf]
                %535 = vst [vmem:[%s179 + $0x2c4] sm:$0xf] %v534
                %v536 = vld [vmem:[%s178 + $0x590] sm:$0xf]
                %537 = vst [vmem:[%s179 + $0x2c8] sm:$0xf] %v536
                %v538 = vld [vmem:[%s178 + $0x598] sm:$0xf]
                %539 = vst [vmem:[%s179 + $0x2cc] sm:$0xf] %v538
                %v540 = vld [vmem:[%s178 + $0x5a0] sm:$0xf]
                %541 = vst [vmem:[%s179 + $0x2d0] sm:$0xf] %v540
                %v542 = vld [vmem:[%s178 + $0x5a8] sm:$0xf]
                %543 = vst [vmem:[%s179 + $0x2d4] sm:$0xf] %v542
                %v544 = vld [vmem:[%s178 + $0x5b0] sm:$0xf]
                %545 = vst [vmem:[%s179 + $0x2d8] sm:$0xf] %v544
                %v546 = vld [vmem:[%s178 + $0x5b8] sm:$0xf]
                %547 = vst [vmem:[%s179 + $0x2dc] sm:$0xf] %v546
                %v548 = vld [vmem:[%s178 + $0x5c0] sm:$0xf]
                %549 = vst [vmem:[%s179 + $0x2e0] sm:$0xf] %v548
                %v550 = vld [vmem:[%s178 + $0x5c8] sm:$0xf]
                %551 = vst [vmem:[%s179 + $0x2e4] sm:$0xf] %v550
                %v552 = vld [vmem:[%s178 + $0x5d0] sm:$0xf]
                %553 = vst [vmem:[%s179 + $0x2e8] sm:$0xf] %v552
                %v554 = vld [vmem:[%s178 + $0x5d8] sm:$0xf]
                %555 = vst [vmem:[%s179 + $0x2ec] sm:$0xf] %v554
                %v556 = vld [vmem:[%s178 + $0x5e0] sm:$0xf]
                %557 = vst [vmem:[%s179 + $0x2f0] sm:$0xf] %v556
                %v558 = vld [vmem:[%s178 + $0x5e8] sm:$0xf]
                %559 = vst [vmem:[%s179 + $0x2f4] sm:$0xf] %v558
                %v560 = vld [vmem:[%s178 + $0x5f0] sm:$0xf]
                %561 = vst [vmem:[%s179 + $0x2f8] sm:$0xf] %v560
                %v562 = vld [vmem:[%s178 + $0x5f8] sm:$0xf]
                %563 = vst [vmem:[%s179 + $0x2fc] sm:$0xf] %v562
                %v564 = vld [vmem:[%s178 + $0x600] sm:$0xf]
                %565 = vst [vmem:[%s179 + $0x300] sm:$0xf] %v564
                %v566 = vld [vmem:[%s178 + $0x608] sm:$0xf]
                %567 = vst [vmem:[%s179 + $0x304] sm:$0xf] %v566
                %v568 = vld [vmem:[%s178 + $0x610] sm:$0xf]
                %569 = vst [vmem:[%s179 + $0x308] sm:$0xf] %v568
                %v570 = vld [vmem:[%s178 + $0x618] sm:$0xf]
                %571 = vst [vmem:[%s179 + $0x30c] sm:$0xf] %v570
                %v572 = vld [vmem:[%s178 + $0x620] sm:$0xf]
                %573 = vst [vmem:[%s179 + $0x310] sm:$0xf] %v572
                %v574 = vld [vmem:[%s178 + $0x628] sm:$0xf]
                %575 = vst [vmem:[%s179 + $0x314] sm:$0xf] %v574
                %v576 = vld [vmem:[%s178 + $0x630] sm:$0xf]
                %577 = vst [vmem:[%s179 + $0x318] sm:$0xf] %v576
                %v578 = vld [vmem:[%s178 + $0x638] sm:$0xf]
                %579 = vst [vmem:[%s179 + $0x31c] sm:$0xf] %v578
                %v580 = vld [vmem:[%s178 + $0x640] sm:$0xf]
                %581 = vst [vmem:[%s179 + $0x320] sm:$0xf] %v580
                %v582 = vld [vmem:[%s178 + $0x648] sm:$0xf]
                %583 = vst [vmem:[%s179 + $0x324] sm:$0xf] %v582
                %v584 = vld [vmem:[%s178 + $0x650] sm:$0xf]
                %585 = vst [vmem:[%s179 + $0x328] sm:$0xf] %v584
                %v586 = vld [vmem:[%s178 + $0x658] sm:$0xf]
                %587 = vst [vmem:[%s179 + $0x32c] sm:$0xf] %v586
                %v588 = vld [vmem:[%s178 + $0x660] sm:$0xf]
                %589 = vst [vmem:[%s179 + $0x330] sm:$0xf] %v588
                %v590 = vld [vmem:[%s178 + $0x668] sm:$0xf]
                %591 = vst [vmem:[%s179 + $0x334] sm:$0xf] %v590
                %v592 = vld [vmem:[%s178 + $0x670] sm:$0xf]
                %593 = vst [vmem:[%s179 + $0x338] sm:$0xf] %v592
                %v594 = vld [vmem:[%s178 + $0x678] sm:$0xf]
                %595 = vst [vmem:[%s179 + $0x33c] sm:$0xf] %v594
                %v596 = vld [vmem:[%s178 + $0x680] sm:$0xf]
                %597 = vst [vmem:[%s179 + $0x340] sm:$0xf] %v596
                %v598 = vld [vmem:[%s178 + $0x688] sm:$0xf]
                %599 = vst [vmem:[%s179 + $0x344] sm:$0xf] %v598
                %v600 = vld [vmem:[%s178 + $0x690] sm:$0xf]
                %601 = vst [vmem:[%s179 + $0x348] sm:$0xf] %v600
                %v602 = vld [vmem:[%s178 + $0x698] sm:$0xf]
                %603 = vst [vmem:[%s179 + $0x34c] sm:$0xf] %v602
                %v604 = vld [vmem:[%s178 + $0x6a0] sm:$0xf]
                %605 = vst [vmem:[%s179 + $0x350] sm:$0xf] %v604
                %v606 = vld [vmem:[%s178 + $0x6a8] sm:$0xf]
                %607 = vst [vmem:[%s179 + $0x354] sm:$0xf] %v606
                %v608 = vld [vmem:[%s178 + $0x6b0] sm:$0xf]
                %609 = vst [vmem:[%s179 + $0x358] sm:$0xf] %v608
                %v610 = vld [vmem:[%s178 + $0x6b8] sm:$0xf]
                %611 = vst [vmem:[%s179 + $0x35c] sm:$0xf] %v610
                %v612 = vld [vmem:[%s178 + $0x6c0] sm:$0xf]
                %613 = vst [vmem:[%s179 + $0x360] sm:$0xf] %v612
                %v614 = vld [vmem:[%s178 + $0x6c8] sm:$0xf]
                %615 = vst [vmem:[%s179 + $0x364] sm:$0xf] %v614
                %v616 = vld [vmem:[%s178 + $0x6d0] sm:$0xf]
                %617 = vst [vmem:[%s179 + $0x368] sm:$0xf] %v616
                %v618 = vld [vmem:[%s178 + $0x6d8] sm:$0xf]
                %619 = vst [vmem:[%s179 + $0x36c] sm:$0xf] %v618
                %v620 = vld [vmem:[%s178 + $0x6e0] sm:$0xf]
                %621 = vst [vmem:[%s179 + $0x370] sm:$0xf] %v620
                %v622 = vld [vmem:[%s178 + $0x6e8] sm:$0xf]
                %623 = vst [vmem:[%s179 + $0x374] sm:$0xf] %v622
                %v624 = vld [vmem:[%s178 + $0x6f0] sm:$0xf]
                %625 = vst [vmem:[%s179 + $0x378] sm:$0xf] %v624
                %v626 = vld [vmem:[%s178 + $0x6f8] sm:$0xf]
                %627 = vst [vmem:[%s179 + $0x37c] sm:$0xf] %v626
                %v628 = vld [vmem:[%s178 + $0x700] sm:$0xf]
                %629 = vst [vmem:[%s179 + $0x380] sm:$0xf] %v628
                %v630 = vld [vmem:[%s178 + $0x708] sm:$0xf]
                %631 = vst [vmem:[%s179 + $0x384] sm:$0xf] %v630
                %v632 = vld [vmem:[%s178 + $0x710] sm:$0xf]
                %633 = vst [vmem:[%s179 + $0x388] sm:$0xf] %v632
                %v634 = vld [vmem:[%s178 + $0x718] sm:$0xf]
                %635 = vst [vmem:[%s179 + $0x38c] sm:$0xf] %v634
                %v636 = vld [vmem:[%s178 + $0x720] sm:$0xf]
                %637 = vst [vmem:[%s179 + $0x390] sm:$0xf] %v636
                %v638 = vld [vmem:[%s178 + $0x728] sm:$0xf]
                %639 = vst [vmem:[%s179 + $0x394] sm:$0xf] %v638
                %v640 = vld [vmem:[%s178 + $0x730] sm:$0xf]
                %641 = vst [vmem:[%s179 + $0x398] sm:$0xf] %v640
                %v642 = vld [vmem:[%s178 + $0x738] sm:$0xf]
                %643 = vst [vmem:[%s179 + $0x39c] sm:$0xf] %v642
                %v644 = vld [vmem:[%s178 + $0x740] sm:$0xf]
                %645 = vst [vmem:[%s179 + $0x3a0] sm:$0xf] %v644
                %v646 = vld [vmem:[%s178 + $0x748] sm:$0xf]
                %647 = vst [vmem:[%s179 + $0x3a4] sm:$0xf] %v646
                %v648 = vld [vmem:[%s178 + $0x750] sm:$0xf]
                %649 = vst [vmem:[%s179 + $0x3a8] sm:$0xf] %v648
                %v650 = vld [vmem:[%s178 + $0x758] sm:$0xf]
                %651 = vst [vmem:[%s179 + $0x3ac] sm:$0xf] %v650
                %v652 = vld [vmem:[%s178 + $0x760] sm:$0xf]
                %653 = vst [vmem:[%s179 + $0x3b0] sm:$0xf] %v652
                %v654 = vld [vmem:[%s178 + $0x768] sm:$0xf]
                %655 = vst [vmem:[%s179 + $0x3b4] sm:$0xf] %v654
                %v656 = vld [vmem:[%s178 + $0x770] sm:$0xf]
                %657 = vst [vmem:[%s179 + $0x3b8] sm:$0xf] %v656
                %v658 = vld [vmem:[%s178 + $0x778] sm:$0xf]
                %659 = vst [vmem:[%s179 + $0x3bc] sm:$0xf] %v658
                %v660 = vld [vmem:[%s178 + $0x780] sm:$0xf]
                %661 = vst [vmem:[%s179 + $0x3c0] sm:$0xf] %v660
                %v662 = vld [vmem:[%s178 + $0x788] sm:$0xf]
                %663 = vst [vmem:[%s179 + $0x3c4] sm:$0xf] %v662
                %v664 = vld [vmem:[%s178 + $0x790] sm:$0xf]
                %665 = vst [vmem:[%s179 + $0x3c8] sm:$0xf] %v664
                %v666 = vld [vmem:[%s178 + $0x798] sm:$0xf]
                %667 = vst [vmem:[%s179 + $0x3cc] sm:$0xf] %v666
                %v668 = vld [vmem:[%s178 + $0x7a0] sm:$0xf]
                %669 = vst [vmem:[%s179 + $0x3d0] sm:$0xf] %v668
                %v670 = vld [vmem:[%s178 + $0x7a8] sm:$0xf]
                %671 = vst [vmem:[%s179 + $0x3d4] sm:$0xf] %v670
                %v672 = vld [vmem:[%s178 + $0x7b0] sm:$0xf]
                %673 = vst [vmem:[%s179 + $0x3d8] sm:$0xf] %v672
                %v674 = vld [vmem:[%s178 + $0x7b8] sm:$0xf]
                %675 = vst [vmem:[%s179 + $0x3dc] sm:$0xf] %v674
                %v676 = vld [vmem:[%s178 + $0x7c0] sm:$0xf]
                %677 = vst [vmem:[%s179 + $0x3e0] sm:$0xf] %v676
                %v678 = vld [vmem:[%s178 + $0x7c8] sm:$0xf]
                %679 = vst [vmem:[%s179 + $0x3e4] sm:$0xf] %v678
                %v680 = vld [vmem:[%s178 + $0x7d0] sm:$0xf]
                %681 = vst [vmem:[%s179 + $0x3e8] sm:$0xf] %v680
                %v682 = vld [vmem:[%s178 + $0x7d8] sm:$0xf]
                %683 = vst [vmem:[%s179 + $0x3ec] sm:$0xf] %v682
                %v684 = vld [vmem:[%s178 + $0x7e0] sm:$0xf]
                %685 = vst [vmem:[%s179 + $0x3f0] sm:$0xf] %v684
                %v686 = vld [vmem:[%s178 + $0x7e8] sm:$0xf]
                %687 = vst [vmem:[%s179 + $0x3f4] sm:$0xf] %v686
                %v688 = vld [vmem:[%s178 + $0x7f0] sm:$0xf]
                %689 = vst [vmem:[%s179 + $0x3f8] sm:$0xf] %v688
                %v690 = vld [vmem:[%s178 + $0x7f8] sm:$0xf]
                %691 = vst [vmem:[%s179 + $0x3fc] sm:$0xf] %v690
              $region41: #{discriminator_forward.6} parent=35 // loop_footer
                %s177 = sadd.s32 1, %s173
              $region42: #{discriminator_forward.6} parent=35 // loop_footer_branch
                %172 = sbr.rel target = $region38
              $region43: #{discriminator_forward.6} parent=35 // loop_exit
                _
            $region36: #{discriminator_forward.6} parent=27 // pred_fallthru
              _
          $region28: #{discriminator_forward.6} parent=23 // pred_fallthru
            _
          %1223 = vnop
        $region24: #{discriminator_forward.6} parent=19 // pred_fallthru
          _
        // Predicated region
        $region62: #{discriminator_forward.6} parent=19 // pred_check
          %p1224 = pneg %p93
        $region63: #{discriminator_forward.6} parent=19 // pred_check_branch
          %1226 = sbr.rel (%p1224) target = $region65
        $region64: #{discriminator_forward.6} parent=19 // pred_region
          %p1227 = scmp.lt.s32.totalorder %s17, 1
          %s1228 = scalar_select %p1227, %s17, 1
          %s1229 = scalar_lea.vmem %s2, %s1228
        $region65: #{discriminator_forward.6} parent=19 // pred_fallthru
          _
      $region20: #{discriminator_forward.6} parent=5 // pred_fallthru
        _
      %p1230 = scmp.le.s32.totalorder 1, %s9
      %p1231 = scmp.lt.s32.totalorder %s9, 3
      %p1232 = pnand %p1230, %p1231
      %p1233 = pneg %p1232
      // Predicated region
      $region66: #{discriminator_forward.6} parent=5 // pred_check
        _
      $region67: #{discriminator_forward.6} parent=5 // pred_check_branch
        %1235 = sbr.rel (%p1232) target = $region69
      $region68: #{discriminator_forward.6} parent=5 // pred_region
        %s1236 = ssub.s32 %s9, 1
        %s1237 = sand.u32 %s60, 1
        %s1238 = sand.u32 %s60, 1
        %s1239 = smul.addr %s1238, 1024
        %s1240 = scalar_lea.vmem [#allocation2], %s1239
        // Predicated region
        $region70: #{discriminator_forward.6} parent=68 // pred_check
          %p1241 = pneg %p73
        $region71: #{discriminator_forward.6} parent=68 // pred_check_branch
          %1243 = sbr.rel (%p1241) target = $region73
        $region72: #{discriminator_forward.6} parent=68 // pred_region
          _
        $region73: #{discriminator_forward.6} parent=68 // pred_fallthru
          _
        %s1244 = smul.u32 16, %s18
        %p1245 = scmp.lt.s32.totalorder %s1244, 15
        %s1246 = scalar_select %p1245, %s1244, 15
        %s1247 = smul.addr %s1246, 16
        %s1248 = smul.addr %s1247, 4
        %s1249 = scalar_lea.vmem %s0, %s1248
        %p1250 = pneg %p47
        %p1251 = pneg %p44
        %s1252 = sand.u32 %s60, 1
        %s1253 = sand.u32 %s60, 1
        %s1254 = smul.addr %s1253, 1024
        %s1255 = scalar_lea.vmem [#allocation2], %s1254
        %p1256 = pneg %p73
        %p1257 = pneg %p70
        %p1258 = scmp.lt.s32.totalorder %s19, 1
        %s1259 = scalar_select %p1258, %s19, 1
        %s1260 = scalar_lea.vmem %s2, %s1259
        %p1261 = pneg %p99
        %p1262 = pneg %p96
        %p1263 = pneg %p127
        %p1264 = pneg %p124
        %s1265 = sand.u32 %s114, 1
        %s1266 = sand.u32 %s114, 1
        %s1267 = smul.addr %s1266, 64
        %s1268 = scalar_lea.vmem [#allocation3], %s1267
        %s1269 = smul.u32 16, %s18
        %p1270 = scmp.lt.s32.totalorder %s1269, 15
        %s1271 = scalar_select %p1270, %s1269, 15
        %s1272 = smul.addr %s1271, 16
        %s1273 = smul.addr %s1272, 4
        %s1274 = scalar_lea.vmem %s0, %s1273
        %s1275 = smul.u32 16, %s18
        %p1276 = scmp.lt.s32.totalorder %s19, 1
        %s1277 = scalar_select %p1276, %s19, 1
        %s1278 = scalar_lea.vmem %s2, %s1277
        %s1279 = smul.u32 16, %s18
        %v1281 = vld [vmem:[%s1274] sm:$0xff]
        %v1282 = vld [vmem:[%s1274 + $0x8] sm:$0xff]
        %v1283 = vld [vmem:[%s1274 + $0x10] sm:$0xff]
        %v1284 = vld [vmem:[%s1274 + $0x18] sm:$0xff]
        %v1285 = vld [vmem:[%s1274 + $0x20] sm:$0xff]
        %v1286 = vld [vmem:[%s1274 + $0x28] sm:$0xff]
        %v1287 = vld [vmem:[%s1274 + $0x30] sm:$0xff]
        %v1288 = vld [vmem:[%s1274 + $0x38] sm:$0xff]
        %v1289 = vld [vmem:[%s1274 + $0x40] sm:$0xff]
        %v1290 = vld [vmem:[%s1274 + $0x48] sm:$0xff]
        %v1291 = vld [vmem:[%s1274 + $0x50] sm:$0xff]
        %v1292 = vld [vmem:[%s1274 + $0x58] sm:$0xff]
        %v1293 = vld [vmem:[%s1274 + $0x60] sm:$0xff]
        %v1294 = vld [vmem:[%s1274 + $0x68] sm:$0xff]
        %v1295 = vld [vmem:[%s1274 + $0x70] sm:$0xff]
        %v1296 = vld [vmem:[%s1274 + $0x78] sm:$0xff]
        %v1297 = vld [vmem:[%s1274 + $0x80] sm:$0xff]
        %v1298 = vld [vmem:[%s1274 + $0x88] sm:$0xff]
        %v1299 = vld [vmem:[%s1274 + $0x90] sm:$0xff]
        %v1300 = vld [vmem:[%s1274 + $0x98] sm:$0xff]
        %v1301 = vld [vmem:[%s1274 + $0xa0] sm:$0xff]
        %v1302 = vld [vmem:[%s1274 + $0xa8] sm:$0xff]
        %v1303 = vld [vmem:[%s1274 + $0xb0] sm:$0xff]
        %v1304 = vld [vmem:[%s1274 + $0xb8] sm:$0xff]
        %v1305 = vld [vmem:[%s1274 + $0xc0] sm:$0xff]
        %v1306 = vld [vmem:[%s1274 + $0xc8] sm:$0xff]
        %v1307 = vld [vmem:[%s1274 + $0xd0] sm:$0xff]
        %v1308 = vld [vmem:[%s1274 + $0xd8] sm:$0xff]
        %v1309 = vld [vmem:[%s1274 + $0xe0] sm:$0xff]
        %v1310 = vld [vmem:[%s1274 + $0xe8] sm:$0xff]
        %v1311 = vld [vmem:[%s1274 + $0xf0] sm:$0xff]
        %v1312 = vld [vmem:[%s1274 + $0xf8] sm:$0xff]
        %v1313 = vld [vmem:[%s1274 + $0x100] sm:$0xff]
        %v1314 = vld [vmem:[%s1274 + $0x108] sm:$0xff]
        %v1315 = vld [vmem:[%s1274 + $0x110] sm:$0xff]
        %v1316 = vld [vmem:[%s1274 + $0x118] sm:$0xff]
        %v1317 = vld [vmem:[%s1274 + $0x120] sm:$0xff]
        %v1318 = vld [vmem:[%s1274 + $0x128] sm:$0xff]
        %v1319 = vld [vmem:[%s1274 + $0x130] sm:$0xff]
        %v1320 = vld [vmem:[%s1274 + $0x138] sm:$0xff]
        %v1321 = vld [vmem:[%s1274 + $0x140] sm:$0xff]
        %v1322 = vld [vmem:[%s1274 + $0x148] sm:$0xff]
        %v1323 = vld [vmem:[%s1274 + $0x150] sm:$0xff]
        %v1324 = vld [vmem:[%s1274 + $0x158] sm:$0xff]
        %v1325 = vld [vmem:[%s1274 + $0x160] sm:$0xff]
        %v1326 = vld [vmem:[%s1274 + $0x168] sm:$0xff]
        %v1327 = vld [vmem:[%s1274 + $0x170] sm:$0xff]
        %v1328 = vld [vmem:[%s1274 + $0x178] sm:$0xff]
        %v1329 = vld [vmem:[%s1274 + $0x180] sm:$0xff]
        %v1330 = vld [vmem:[%s1274 + $0x188] sm:$0xff]
        %v1331 = vld [vmem:[%s1274 + $0x190] sm:$0xff]
        %v1332 = vld [vmem:[%s1274 + $0x198] sm:$0xff]
        %v1333 = vld [vmem:[%s1274 + $0x1a0] sm:$0xff]
        %v1334 = vld [vmem:[%s1274 + $0x1a8] sm:$0xff]
        %v1335 = vld [vmem:[%s1274 + $0x1b0] sm:$0xff]
        %v1336 = vld [vmem:[%s1274 + $0x1b8] sm:$0xff]
        %v1337 = vld [vmem:[%s1274 + $0x1c0] sm:$0xff]
        %v1338 = vld [vmem:[%s1274 + $0x1c8] sm:$0xff]
        %v1339 = vld [vmem:[%s1274 + $0x1d0] sm:$0xff]
        %v1340 = vld [vmem:[%s1274 + $0x1d8] sm:$0xff]
        %v1341 = vld [vmem:[%s1274 + $0x1e0] sm:$0xff]
        %v1342 = vld [vmem:[%s1274 + $0x1e8] sm:$0xff]
        %v1343 = vld [vmem:[%s1274 + $0x1f0] sm:$0xff]
        %v1344 = vld [vmem:[%s1274 + $0x1f8] sm:$0xff]
        %v1345 = vld [vmem:[%s1274 + $0x200] sm:$0xff]
        %v1346 = vld [vmem:[%s1274 + $0x208] sm:$0xff]
        %v1347 = vld [vmem:[%s1274 + $0x210] sm:$0xff]
        %v1348 = vld [vmem:[%s1274 + $0x218] sm:$0xff]
        %v1349 = vld [vmem:[%s1274 + $0x220] sm:$0xff]
        %v1350 = vld [vmem:[%s1274 + $0x228] sm:$0xff]
        %v1351 = vld [vmem:[%s1274 + $0x230] sm:$0xff]
        %v1352 = vld [vmem:[%s1274 + $0x238] sm:$0xff]
        %v1353 = vld [vmem:[%s1274 + $0x240] sm:$0xff]
        %v1354 = vld [vmem:[%s1274 + $0x248] sm:$0xff]
        %v1355 = vld [vmem:[%s1274 + $0x250] sm:$0xff]
        %v1356 = vld [vmem:[%s1274 + $0x258] sm:$0xff]
        %v1357 = vld [vmem:[%s1274 + $0x260] sm:$0xff]
        %v1358 = vld [vmem:[%s1274 + $0x268] sm:$0xff]
        %v1359 = vld [vmem:[%s1274 + $0x270] sm:$0xff]
        %v1360 = vld [vmem:[%s1274 + $0x278] sm:$0xff]
        %v1361 = vld [vmem:[%s1274 + $0x280] sm:$0xff]
        %v1362 = vld [vmem:[%s1274 + $0x288] sm:$0xff]
        %v1363 = vld [vmem:[%s1274 + $0x290] sm:$0xff]
        %v1364 = vld [vmem:[%s1274 + $0x298] sm:$0xff]
        %v1365 = vld [vmem:[%s1274 + $0x2a0] sm:$0xff]
        %v1366 = vld [vmem:[%s1274 + $0x2a8] sm:$0xff]
        %v1367 = vld [vmem:[%s1274 + $0x2b0] sm:$0xff]
        %v1368 = vld [vmem:[%s1274 + $0x2b8] sm:$0xff]
        %v1369 = vld [vmem:[%s1274 + $0x2c0] sm:$0xff]
        %v1370 = vld [vmem:[%s1274 + $0x2c8] sm:$0xff]
        %v1371 = vld [vmem:[%s1274 + $0x2d0] sm:$0xff]
        %v1372 = vld [vmem:[%s1274 + $0x2d8] sm:$0xff]
        %v1373 = vld [vmem:[%s1274 + $0x2e0] sm:$0xff]
        %v1374 = vld [vmem:[%s1274 + $0x2e8] sm:$0xff]
        %v1375 = vld [vmem:[%s1274 + $0x2f0] sm:$0xff]
        %v1376 = vld [vmem:[%s1274 + $0x2f8] sm:$0xff]
        %v1377 = vld [vmem:[%s1274 + $0x300] sm:$0xff]
        %v1378 = vld [vmem:[%s1274 + $0x308] sm:$0xff]
        %v1379 = vld [vmem:[%s1274 + $0x310] sm:$0xff]
        %v1380 = vld [vmem:[%s1274 + $0x318] sm:$0xff]
        %v1381 = vld [vmem:[%s1274 + $0x320] sm:$0xff]
        %v1382 = vld [vmem:[%s1274 + $0x328] sm:$0xff]
        %v1383 = vld [vmem:[%s1274 + $0x330] sm:$0xff]
        %v1384 = vld [vmem:[%s1274 + $0x338] sm:$0xff]
        %v1385 = vld [vmem:[%s1274 + $0x340] sm:$0xff]
        %v1386 = vld [vmem:[%s1274 + $0x348] sm:$0xff]
        %v1387 = vld [vmem:[%s1274 + $0x350] sm:$0xff]
        %v1388 = vld [vmem:[%s1274 + $0x358] sm:$0xff]
        %v1389 = vld [vmem:[%s1274 + $0x360] sm:$0xff]
        %v1390 = vld [vmem:[%s1274 + $0x368] sm:$0xff]
        %v1391 = vld [vmem:[%s1274 + $0x370] sm:$0xff]
        %v1392 = vld [vmem:[%s1274 + $0x378] sm:$0xff]
        %v1393 = vld [vmem:[%s1274 + $0x380] sm:$0xff]
        %v1394 = vld [vmem:[%s1274 + $0x388] sm:$0xff]
        %v1395 = vld [vmem:[%s1274 + $0x390] sm:$0xff]
        %v1396 = vld [vmem:[%s1274 + $0x398] sm:$0xff]
        %v1397 = vld [vmem:[%s1274 + $0x3a0] sm:$0xff]
        %v1398 = vld [vmem:[%s1274 + $0x3a8] sm:$0xff]
        %v1399 = vld [vmem:[%s1274 + $0x3b0] sm:$0xff]
        %v1400 = vld [vmem:[%s1274 + $0x3b8] sm:$0xff]
        %v1401 = vld [vmem:[%s1274 + $0x3c0] sm:$0xff]
        %v1402 = vld [vmem:[%s1274 + $0x3c8] sm:$0xff]
        %v1403 = vld [vmem:[%s1274 + $0x3d0] sm:$0xff]
        %v1404 = vld [vmem:[%s1274 + $0x3d8] sm:$0xff]
        %v1405 = vld [vmem:[%s1274 + $0x3e0] sm:$0xff]
        %v1406 = vld [vmem:[%s1274 + $0x3e8] sm:$0xff]
        %v1407 = vld [vmem:[%s1274 + $0x3f0] sm:$0xff]
        %v1408 = vld [vmem:[%s1274 + $0x3f8] sm:$0xff]
        %v1409 = vld [vmem:[%s1240] sm:$0xf]
        %v1410 = vld [vmem:[%s1240 + $0x4] sm:$0xf]
        %v1411 = vld [vmem:[%s1240 + $0x8] sm:$0xf]
        %v1412 = vld [vmem:[%s1240 + $0xc] sm:$0xf]
        %v1413 = vld [vmem:[%s1240 + $0x10] sm:$0xf]
        %v1414 = vld [vmem:[%s1240 + $0x14] sm:$0xf]
        %v1415 = vld [vmem:[%s1240 + $0x18] sm:$0xf]
        %v1416 = vld [vmem:[%s1240 + $0x1c] sm:$0xf]
        %v1417 = vld [vmem:[%s1240 + $0x20] sm:$0xf]
        %v1418 = vld [vmem:[%s1240 + $0x24] sm:$0xf]
        %v1419 = vld [vmem:[%s1240 + $0x28] sm:$0xf]
        %v1420 = vld [vmem:[%s1240 + $0x2c] sm:$0xf]
        %v1421 = vld [vmem:[%s1240 + $0x30] sm:$0xf]
        %v1422 = vld [vmem:[%s1240 + $0x34] sm:$0xf]
        %v1423 = vld [vmem:[%s1240 + $0x38] sm:$0xf]
        %v1424 = vld [vmem:[%s1240 + $0x3c] sm:$0xf]
        %v1425 = vld [vmem:[%s1240 + $0x40] sm:$0xf]
        %v1426 = vld [vmem:[%s1240 + $0x44] sm:$0xf]
        %v1427 = vld [vmem:[%s1240 + $0x48] sm:$0xf]
        %v1428 = vld [vmem:[%s1240 + $0x4c] sm:$0xf]
        %v1429 = vld [vmem:[%s1240 + $0x50] sm:$0xf]
        %v1430 = vld [vmem:[%s1240 + $0x54] sm:$0xf]
        %v1431 = vld [vmem:[%s1240 + $0x58] sm:$0xf]
        %v1432 = vld [vmem:[%s1240 + $0x5c] sm:$0xf]
        %v1433 = vld [vmem:[%s1240 + $0x60] sm:$0xf]
        %v1434 = vld [vmem:[%s1240 + $0x64] sm:$0xf]
        %v1435 = vld [vmem:[%s1240 + $0x68] sm:$0xf]
        %v1436 = vld [vmem:[%s1240 + $0x6c] sm:$0xf]
        %v1437 = vld [vmem:[%s1240 + $0x70] sm:$0xf]
        %v1438 = vld [vmem:[%s1240 + $0x74] sm:$0xf]
        %v1439 = vld [vmem:[%s1240 + $0x78] sm:$0xf]
        %v1440 = vld [vmem:[%s1240 + $0x7c] sm:$0xf]
        %v1441 = vld [vmem:[%s1240 + $0x80] sm:$0xf]
        %v1442 = vld [vmem:[%s1240 + $0x84] sm:$0xf]
        %v1443 = vld [vmem:[%s1240 + $0x88] sm:$0xf]
        %v1444 = vld [vmem:[%s1240 + $0x8c] sm:$0xf]
        %v1445 = vld [vmem:[%s1240 + $0x90] sm:$0xf]
        %v1446 = vld [vmem:[%s1240 + $0x94] sm:$0xf]
        %v1447 = vld [vmem:[%s1240 + $0x98] sm:$0xf]
        %v1448 = vld [vmem:[%s1240 + $0x9c] sm:$0xf]
        %v1449 = vld [vmem:[%s1240 + $0xa0] sm:$0xf]
        %v1450 = vld [vmem:[%s1240 + $0xa4] sm:$0xf]
        %v1451 = vld [vmem:[%s1240 + $0xa8] sm:$0xf]
        %v1452 = vld [vmem:[%s1240 + $0xac] sm:$0xf]
        %v1453 = vld [vmem:[%s1240 + $0xb0] sm:$0xf]
        %v1454 = vld [vmem:[%s1240 + $0xb4] sm:$0xf]
        %v1455 = vld [vmem:[%s1240 + $0xb8] sm:$0xf]
        %v1456 = vld [vmem:[%s1240 + $0xbc] sm:$0xf]
        %v1457 = vld [vmem:[%s1240 + $0xc0] sm:$0xf]
        %v1458 = vld [vmem:[%s1240 + $0xc4] sm:$0xf]
        %v1459 = vld [vmem:[%s1240 + $0xc8] sm:$0xf]
        %v1460 = vld [vmem:[%s1240 + $0xcc] sm:$0xf]
        %v1461 = vld [vmem:[%s1240 + $0xd0] sm:$0xf]
        %v1462 = vld [vmem:[%s1240 + $0xd4] sm:$0xf]
        %v1463 = vld [vmem:[%s1240 + $0xd8] sm:$0xf]
        %v1464 = vld [vmem:[%s1240 + $0xdc] sm:$0xf]
        %v1465 = vld [vmem:[%s1240 + $0xe0] sm:$0xf]
        %v1466 = vld [vmem:[%s1240 + $0xe4] sm:$0xf]
        %v1467 = vld [vmem:[%s1240 + $0xe8] sm:$0xf]
        %v1468 = vld [vmem:[%s1240 + $0xec] sm:$0xf]
        %v1469 = vld [vmem:[%s1240 + $0xf0] sm:$0xf]
        %v1470 = vld [vmem:[%s1240 + $0xf4] sm:$0xf]
        %v1471 = vld [vmem:[%s1240 + $0xf8] sm:$0xf]
        %v1472 = vld [vmem:[%s1240 + $0xfc] sm:$0xf]
        %v1473 = vld [vmem:[%s1240 + $0x100] sm:$0xf]
        %v1474 = vld [vmem:[%s1240 + $0x104] sm:$0xf]
        %v1475 = vld [vmem:[%s1240 + $0x108] sm:$0xf]
        %v1476 = vld [vmem:[%s1240 + $0x10c] sm:$0xf]
        %v1477 = vld [vmem:[%s1240 + $0x110] sm:$0xf]
        %v1478 = vld [vmem:[%s1240 + $0x114] sm:$0xf]
        %v1479 = vld [vmem:[%s1240 + $0x118] sm:$0xf]
        %v1480 = vld [vmem:[%s1240 + $0x11c] sm:$0xf]
        %v1481 = vld [vmem:[%s1240 + $0x120] sm:$0xf]
        %v1482 = vld [vmem:[%s1240 + $0x124] sm:$0xf]
        %v1483 = vld [vmem:[%s1240 + $0x128] sm:$0xf]
        %v1484 = vld [vmem:[%s1240 + $0x12c] sm:$0xf]
        %v1485 = vld [vmem:[%s1240 + $0x130] sm:$0xf]
        %v1486 = vld [vmem:[%s1240 + $0x134] sm:$0xf]
        %v1487 = vld [vmem:[%s1240 + $0x138] sm:$0xf]
        %v1488 = vld [vmem:[%s1240 + $0x13c] sm:$0xf]
        %v1489 = vld [vmem:[%s1240 + $0x140] sm:$0xf]
        %v1490 = vld [vmem:[%s1240 + $0x144] sm:$0xf]
        %v1491 = vld [vmem:[%s1240 + $0x148] sm:$0xf]
        %v1492 = vld [vmem:[%s1240 + $0x14c] sm:$0xf]
        %v1493 = vld [vmem:[%s1240 + $0x150] sm:$0xf]
        %v1494 = vld [vmem:[%s1240 + $0x154] sm:$0xf]
        %v1495 = vld [vmem:[%s1240 + $0x158] sm:$0xf]
        %v1496 = vld [vmem:[%s1240 + $0x15c] sm:$0xf]
        %v1497 = vld [vmem:[%s1240 + $0x160] sm:$0xf]
        %v1498 = vld [vmem:[%s1240 + $0x164] sm:$0xf]
        %v1499 = vld [vmem:[%s1240 + $0x168] sm:$0xf]
        %v1500 = vld [vmem:[%s1240 + $0x16c] sm:$0xf]
        %v1501 = vld [vmem:[%s1240 + $0x170] sm:$0xf]
        %v1502 = vld [vmem:[%s1240 + $0x174] sm:$0xf]
        %v1503 = vld [vmem:[%s1240 + $0x178] sm:$0xf]
        %v1504 = vld [vmem:[%s1240 + $0x17c] sm:$0xf]
        %v1505 = vld [vmem:[%s1240 + $0x180] sm:$0xf]
        %v1506 = vld [vmem:[%s1240 + $0x184] sm:$0xf]
        %v1507 = vld [vmem:[%s1240 + $0x188] sm:$0xf]
        %v1508 = vld [vmem:[%s1240 + $0x18c] sm:$0xf]
        %v1509 = vld [vmem:[%s1240 + $0x190] sm:$0xf]
        %v1510 = vld [vmem:[%s1240 + $0x194] sm:$0xf]
        %v1511 = vld [vmem:[%s1240 + $0x198] sm:$0xf]
        %v1512 = vld [vmem:[%s1240 + $0x19c] sm:$0xf]
        %v1513 = vld [vmem:[%s1240 + $0x1a0] sm:$0xf]
        %v1514 = vld [vmem:[%s1240 + $0x1a4] sm:$0xf]
        %v1515 = vld [vmem:[%s1240 + $0x1a8] sm:$0xf]
        %v1516 = vld [vmem:[%s1240 + $0x1ac] sm:$0xf]
        %v1517 = vld [vmem:[%s1240 + $0x1b0] sm:$0xf]
        %v1518 = vld [vmem:[%s1240 + $0x1b4] sm:$0xf]
        %v1519 = vld [vmem:[%s1240 + $0x1b8] sm:$0xf]
        %v1520 = vld [vmem:[%s1240 + $0x1bc] sm:$0xf]
        %v1521 = vld [vmem:[%s1240 + $0x1c0] sm:$0xf]
        %v1522 = vld [vmem:[%s1240 + $0x1c4] sm:$0xf]
        %v1523 = vld [vmem:[%s1240 + $0x1c8] sm:$0xf]
        %v1524 = vld [vmem:[%s1240 + $0x1cc] sm:$0xf]
        %v1525 = vld [vmem:[%s1240 + $0x1d0] sm:$0xf]
        %v1526 = vld [vmem:[%s1240 + $0x1d4] sm:$0xf]
        %v1527 = vld [vmem:[%s1240 + $0x1d8] sm:$0xf]
        %v1528 = vld [vmem:[%s1240 + $0x1dc] sm:$0xf]
        %v1529 = vld [vmem:[%s1240 + $0x1e0] sm:$0xf]
        %v1530 = vld [vmem:[%s1240 + $0x1e4] sm:$0xf]
        %v1531 = vld [vmem:[%s1240 + $0x1e8] sm:$0xf]
        %v1532 = vld [vmem:[%s1240 + $0x1ec] sm:$0xf]
        %v1533 = vld [vmem:[%s1240 + $0x1f0] sm:$0xf]
        %v1534 = vld [vmem:[%s1240 + $0x1f4] sm:$0xf]
        %v1535 = vld [vmem:[%s1240 + $0x1f8] sm:$0xf]
        %v1536 = vld [vmem:[%s1240 + $0x1fc] sm:$0xf]
        %v1537 = vld [vmem:[%s1240 + $0x200] sm:$0xf]
        %v1538 = vld [vmem:[%s1240 + $0x204] sm:$0xf]
        %v1539 = vld [vmem:[%s1240 + $0x208] sm:$0xf]
        %v1540 = vld [vmem:[%s1240 + $0x20c] sm:$0xf]
        %v1541 = vld [vmem:[%s1240 + $0x210] sm:$0xf]
        %v1542 = vld [vmem:[%s1240 + $0x214] sm:$0xf]
        %v1543 = vld [vmem:[%s1240 + $0x218] sm:$0xf]
        %v1544 = vld [vmem:[%s1240 + $0x21c] sm:$0xf]
        %v1545 = vld [vmem:[%s1240 + $0x220] sm:$0xf]
        %v1546 = vld [vmem:[%s1240 + $0x224] sm:$0xf]
        %v1547 = vld [vmem:[%s1240 + $0x228] sm:$0xf]
        %v1548 = vld [vmem:[%s1240 + $0x22c] sm:$0xf]
        %v1549 = vld [vmem:[%s1240 + $0x230] sm:$0xf]
        %v1550 = vld [vmem:[%s1240 + $0x234] sm:$0xf]
        %v1551 = vld [vmem:[%s1240 + $0x238] sm:$0xf]
        %v1552 = vld [vmem:[%s1240 + $0x23c] sm:$0xf]
        %v1553 = vld [vmem:[%s1240 + $0x240] sm:$0xf]
        %v1554 = vld [vmem:[%s1240 + $0x244] sm:$0xf]
        %v1555 = vld [vmem:[%s1240 + $0x248] sm:$0xf]
        %v1556 = vld [vmem:[%s1240 + $0x24c] sm:$0xf]
        %v1557 = vld [vmem:[%s1240 + $0x250] sm:$0xf]
        %v1558 = vld [vmem:[%s1240 + $0x254] sm:$0xf]
        %v1559 = vld [vmem:[%s1240 + $0x258] sm:$0xf]
        %v1560 = vld [vmem:[%s1240 + $0x25c] sm:$0xf]
        %v1561 = vld [vmem:[%s1240 + $0x260] sm:$0xf]
        %v1562 = vld [vmem:[%s1240 + $0x264] sm:$0xf]
        %v1563 = vld [vmem:[%s1240 + $0x268] sm:$0xf]
        %v1564 = vld [vmem:[%s1240 + $0x26c] sm:$0xf]
        %v1565 = vld [vmem:[%s1240 + $0x270] sm:$0xf]
        %v1566 = vld [vmem:[%s1240 + $0x274] sm:$0xf]
        %v1567 = vld [vmem:[%s1240 + $0x278] sm:$0xf]
        %v1568 = vld [vmem:[%s1240 + $0x27c] sm:$0xf]
        %v1569 = vld [vmem:[%s1240 + $0x280] sm:$0xf]
        %v1570 = vld [vmem:[%s1240 + $0x284] sm:$0xf]
        %v1571 = vld [vmem:[%s1240 + $0x288] sm:$0xf]
        %v1572 = vld [vmem:[%s1240 + $0x28c] sm:$0xf]
        %v1573 = vld [vmem:[%s1240 + $0x290] sm:$0xf]
        %v1574 = vld [vmem:[%s1240 + $0x294] sm:$0xf]
        %v1575 = vld [vmem:[%s1240 + $0x298] sm:$0xf]
        %v1576 = vld [vmem:[%s1240 + $0x29c] sm:$0xf]
        %v1577 = vld [vmem:[%s1240 + $0x2a0] sm:$0xf]
        %v1578 = vld [vmem:[%s1240 + $0x2a4] sm:$0xf]
        %v1579 = vld [vmem:[%s1240 + $0x2a8] sm:$0xf]
        %v1580 = vld [vmem:[%s1240 + $0x2ac] sm:$0xf]
        %v1581 = vld [vmem:[%s1240 + $0x2b0] sm:$0xf]
        %v1582 = vld [vmem:[%s1240 + $0x2b4] sm:$0xf]
        %v1583 = vld [vmem:[%s1240 + $0x2b8] sm:$0xf]
        %v1584 = vld [vmem:[%s1240 + $0x2bc] sm:$0xf]
        %v1585 = vld [vmem:[%s1240 + $0x2c0] sm:$0xf]
        %v1586 = vld [vmem:[%s1240 + $0x2c4] sm:$0xf]
        %v1587 = vld [vmem:[%s1240 + $0x2c8] sm:$0xf]
        %v1588 = vld [vmem:[%s1240 + $0x2cc] sm:$0xf]
        %v1589 = vld [vmem:[%s1240 + $0x2d0] sm:$0xf]
        %v1590 = vld [vmem:[%s1240 + $0x2d4] sm:$0xf]
        %v1591 = vld [vmem:[%s1240 + $0x2d8] sm:$0xf]
        %v1592 = vld [vmem:[%s1240 + $0x2dc] sm:$0xf]
        %v1593 = vld [vmem:[%s1240 + $0x2e0] sm:$0xf]
        %v1594 = vld [vmem:[%s1240 + $0x2e4] sm:$0xf]
        %v1595 = vld [vmem:[%s1240 + $0x2e8] sm:$0xf]
        %v1596 = vld [vmem:[%s1240 + $0x2ec] sm:$0xf]
        %v1597 = vld [vmem:[%s1240 + $0x2f0] sm:$0xf]
        %v1598 = vld [vmem:[%s1240 + $0x2f4] sm:$0xf]
        %v1599 = vld [vmem:[%s1240 + $0x2f8] sm:$0xf]
        %v1600 = vld [vmem:[%s1240 + $0x2fc] sm:$0xf]
        %v1601 = vld [vmem:[%s1240 + $0x300] sm:$0xf]
        %v1602 = vld [vmem:[%s1240 + $0x304] sm:$0xf]
        %v1603 = vld [vmem:[%s1240 + $0x308] sm:$0xf]
        %v1604 = vld [vmem:[%s1240 + $0x30c] sm:$0xf]
        %v1605 = vld [vmem:[%s1240 + $0x310] sm:$0xf]
        %v1606 = vld [vmem:[%s1240 + $0x314] sm:$0xf]
        %v1607 = vld [vmem:[%s1240 + $0x318] sm:$0xf]
        %v1608 = vld [vmem:[%s1240 + $0x31c] sm:$0xf]
        %v1609 = vld [vmem:[%s1240 + $0x320] sm:$0xf]
        %v1610 = vld [vmem:[%s1240 + $0x324] sm:$0xf]
        %v1611 = vld [vmem:[%s1240 + $0x328] sm:$0xf]
        %v1612 = vld [vmem:[%s1240 + $0x32c] sm:$0xf]
        %v1613 = vld [vmem:[%s1240 + $0x330] sm:$0xf]
        %v1614 = vld [vmem:[%s1240 + $0x334] sm:$0xf]
        %v1615 = vld [vmem:[%s1240 + $0x338] sm:$0xf]
        %v1616 = vld [vmem:[%s1240 + $0x33c] sm:$0xf]
        %v1617 = vld [vmem:[%s1240 + $0x340] sm:$0xf]
        %v1618 = vld [vmem:[%s1240 + $0x344] sm:$0xf]
        %v1619 = vld [vmem:[%s1240 + $0x348] sm:$0xf]
        %v1620 = vld [vmem:[%s1240 + $0x34c] sm:$0xf]
        %v1621 = vld [vmem:[%s1240 + $0x350] sm:$0xf]
        %v1622 = vld [vmem:[%s1240 + $0x354] sm:$0xf]
        %v1623 = vld [vmem:[%s1240 + $0x358] sm:$0xf]
        %v1624 = vld [vmem:[%s1240 + $0x35c] sm:$0xf]
        %v1625 = vld [vmem:[%s1240 + $0x360] sm:$0xf]
        %v1626 = vld [vmem:[%s1240 + $0x364] sm:$0xf]
        %v1627 = vld [vmem:[%s1240 + $0x368] sm:$0xf]
        %v1628 = vld [vmem:[%s1240 + $0x36c] sm:$0xf]
        %v1629 = vld [vmem:[%s1240 + $0x370] sm:$0xf]
        %v1630 = vld [vmem:[%s1240 + $0x374] sm:$0xf]
        %v1631 = vld [vmem:[%s1240 + $0x378] sm:$0xf]
        %v1632 = vld [vmem:[%s1240 + $0x37c] sm:$0xf]
        %v1633 = vld [vmem:[%s1240 + $0x380] sm:$0xf]
        %v1634 = vld [vmem:[%s1240 + $0x384] sm:$0xf]
        %v1635 = vld [vmem:[%s1240 + $0x388] sm:$0xf]
        %v1636 = vld [vmem:[%s1240 + $0x38c] sm:$0xf]
        %v1637 = vld [vmem:[%s1240 + $0x390] sm:$0xf]
        %v1638 = vld [vmem:[%s1240 + $0x394] sm:$0xf]
        %v1639 = vld [vmem:[%s1240 + $0x398] sm:$0xf]
        %v1640 = vld [vmem:[%s1240 + $0x39c] sm:$0xf]
        %v1641 = vld [vmem:[%s1240 + $0x3a0] sm:$0xf]
        %v1642 = vld [vmem:[%s1240 + $0x3a4] sm:$0xf]
        %v1643 = vld [vmem:[%s1240 + $0x3a8] sm:$0xf]
        %v1644 = vld [vmem:[%s1240 + $0x3ac] sm:$0xf]
        %v1645 = vld [vmem:[%s1240 + $0x3b0] sm:$0xf]
        %v1646 = vld [vmem:[%s1240 + $0x3b4] sm:$0xf]
        %v1647 = vld [vmem:[%s1240 + $0x3b8] sm:$0xf]
        %v1648 = vld [vmem:[%s1240 + $0x3bc] sm:$0xf]
        %v1649 = vld [vmem:[%s1240 + $0x3c0] sm:$0xf]
        %v1650 = vld [vmem:[%s1240 + $0x3c4] sm:$0xf]
        %v1651 = vld [vmem:[%s1240 + $0x3c8] sm:$0xf]
        %v1652 = vld [vmem:[%s1240 + $0x3cc] sm:$0xf]
        %v1653 = vld [vmem:[%s1240 + $0x3d0] sm:$0xf]
        %v1654 = vld [vmem:[%s1240 + $0x3d4] sm:$0xf]
        %v1655 = vld [vmem:[%s1240 + $0x3d8] sm:$0xf]
        %v1656 = vld [vmem:[%s1240 + $0x3dc] sm:$0xf]
        %v1657 = vld [vmem:[%s1240 + $0x3e0] sm:$0xf]
        %v1658 = vld [vmem:[%s1240 + $0x3e4] sm:$0xf]
        %v1659 = vld [vmem:[%s1240 + $0x3e8] sm:$0xf]
        %v1660 = vld [vmem:[%s1240 + $0x3ec] sm:$0xf]
        %v1661 = vld [vmem:[%s1240 + $0x3f0] sm:$0xf]
        %v1662 = vld [vmem:[%s1240 + $0x3f4] sm:$0xf]
        %v1663 = vld [vmem:[%s1240 + $0x3f8] sm:$0xf]
        %v1664 = vld [vmem:[%s1240 + $0x3fc] sm:$0xf]
        %v1665 = vld [vmem:[%s1278] sm:$0x1]
        %v1667 = vlaneseq
        %v1668 = vshrl.u32 %v1667, 7
        %v1669 = vsub.s32 0, %v1668
        %v1670 = vrot.slane %v1665, %v1669
        %v1800 = vunpack.c.l.b16 %v1281
        %v1801 = vunpack.c.h.b16 %v1281
        %v1802 = vunpack.c.l.b16 %v1282
        %v1803 = vunpack.c.h.b16 %v1282
        %v1804 = vunpack.c.l.b16 %v1283
        %v1805 = vunpack.c.h.b16 %v1283
        %v1806 = vunpack.c.l.b16 %v1284
        %v1807 = vunpack.c.h.b16 %v1284
        %v1808 = vunpack.c.l.b16 %v1285
        %v1809 = vunpack.c.h.b16 %v1285
        %v1810 = vunpack.c.l.b16 %v1286
        %v1811 = vunpack.c.h.b16 %v1286
        %v1812 = vunpack.c.l.b16 %v1287
        %v1813 = vunpack.c.h.b16 %v1287
        %v1814 = vunpack.c.l.b16 %v1288
        %v1815 = vunpack.c.h.b16 %v1288
        %v1816 = vunpack.c.l.b16 %v1289
        %v1817 = vunpack.c.h.b16 %v1289
        %v1818 = vunpack.c.l.b16 %v1290
        %v1819 = vunpack.c.h.b16 %v1290
        %v1820 = vunpack.c.l.b16 %v1291
        %v1821 = vunpack.c.h.b16 %v1291
        %v1822 = vunpack.c.l.b16 %v1292
        %v1823 = vunpack.c.h.b16 %v1292
        %v1824 = vunpack.c.l.b16 %v1293
        %v1825 = vunpack.c.h.b16 %v1293
        %v1826 = vunpack.c.l.b16 %v1294
        %v1827 = vunpack.c.h.b16 %v1294
        %v1828 = vunpack.c.l.b16 %v1295
        %v1829 = vunpack.c.h.b16 %v1295
        %v1830 = vunpack.c.l.b16 %v1296
        %v1831 = vunpack.c.h.b16 %v1296
        %v1832 = vunpack.c.l.b16 %v1297
        %v1833 = vunpack.c.h.b16 %v1297
        %v1834 = vunpack.c.l.b16 %v1298
        %v1835 = vunpack.c.h.b16 %v1298
        %v1836 = vunpack.c.l.b16 %v1299
        %v1837 = vunpack.c.h.b16 %v1299
        %v1838 = vunpack.c.l.b16 %v1300
        %v1839 = vunpack.c.h.b16 %v1300
        %v1840 = vunpack.c.l.b16 %v1301
        %v1841 = vunpack.c.h.b16 %v1301
        %v1842 = vunpack.c.l.b16 %v1302
        %v1843 = vunpack.c.h.b16 %v1302
        %v1844 = vunpack.c.l.b16 %v1303
        %v1845 = vunpack.c.h.b16 %v1303
        %v1846 = vunpack.c.l.b16 %v1304
        %v1847 = vunpack.c.h.b16 %v1304
        %v1848 = vunpack.c.l.b16 %v1305
        %v1849 = vunpack.c.h.b16 %v1305
        %v1850 = vunpack.c.l.b16 %v1306
        %v1851 = vunpack.c.h.b16 %v1306
        %v1852 = vunpack.c.l.b16 %v1307
        %v1853 = vunpack.c.h.b16 %v1307
        %v1854 = vunpack.c.l.b16 %v1308
        %v1855 = vunpack.c.h.b16 %v1308
        %v1856 = vunpack.c.l.b16 %v1309
        %v1857 = vunpack.c.h.b16 %v1309
        %v1858 = vunpack.c.l.b16 %v1310
        %v1859 = vunpack.c.h.b16 %v1310
        %v1860 = vunpack.c.l.b16 %v1311
        %v1861 = vunpack.c.h.b16 %v1311
        %v1862 = vunpack.c.l.b16 %v1312
        %v1863 = vunpack.c.h.b16 %v1312
        %v1864 = vunpack.c.l.b16 %v1313
        %v1865 = vunpack.c.h.b16 %v1313
        %v1866 = vunpack.c.l.b16 %v1314
        %v1867 = vunpack.c.h.b16 %v1314
        %v1868 = vunpack.c.l.b16 %v1315
        %v1869 = vunpack.c.h.b16 %v1315
        %v1870 = vunpack.c.l.b16 %v1316
        %v1871 = vunpack.c.h.b16 %v1316
        %v1872 = vunpack.c.l.b16 %v1317
        %v1873 = vunpack.c.h.b16 %v1317
        %v1874 = vunpack.c.l.b16 %v1318
        %v1875 = vunpack.c.h.b16 %v1318
        %v1876 = vunpack.c.l.b16 %v1319
        %v1877 = vunpack.c.h.b16 %v1319
        %v1878 = vunpack.c.l.b16 %v1320
        %v1879 = vunpack.c.h.b16 %v1320
        %v1880 = vunpack.c.l.b16 %v1321
        %v1881 = vunpack.c.h.b16 %v1321
        %v1882 = vunpack.c.l.b16 %v1322
        %v1883 = vunpack.c.h.b16 %v1322
        %v1884 = vunpack.c.l.b16 %v1323
        %v1885 = vunpack.c.h.b16 %v1323
        %v1886 = vunpack.c.l.b16 %v1324
        %v1887 = vunpack.c.h.b16 %v1324
        %v1888 = vunpack.c.l.b16 %v1325
        %v1889 = vunpack.c.h.b16 %v1325
        %v1890 = vunpack.c.l.b16 %v1326
        %v1891 = vunpack.c.h.b16 %v1326
        %v1892 = vunpack.c.l.b16 %v1327
        %v1893 = vunpack.c.h.b16 %v1327
        %v1894 = vunpack.c.l.b16 %v1328
        %v1895 = vunpack.c.h.b16 %v1328
        %v1896 = vunpack.c.l.b16 %v1329
        %v1897 = vunpack.c.h.b16 %v1329
        %v1898 = vunpack.c.l.b16 %v1330
        %v1899 = vunpack.c.h.b16 %v1330
        %v1900 = vunpack.c.l.b16 %v1331
        %v1901 = vunpack.c.h.b16 %v1331
        %v1902 = vunpack.c.l.b16 %v1332
        %v1903 = vunpack.c.h.b16 %v1332
        %v1904 = vunpack.c.l.b16 %v1333
        %v1905 = vunpack.c.h.b16 %v1333
        %v1906 = vunpack.c.l.b16 %v1334
        %v1907 = vunpack.c.h.b16 %v1334
        %v1908 = vunpack.c.l.b16 %v1335
        %v1909 = vunpack.c.h.b16 %v1335
        %v1910 = vunpack.c.l.b16 %v1336
        %v1911 = vunpack.c.h.b16 %v1336
        %v1912 = vunpack.c.l.b16 %v1337
        %v1913 = vunpack.c.h.b16 %v1337
        %v1914 = vunpack.c.l.b16 %v1338
        %v1915 = vunpack.c.h.b16 %v1338
        %v1916 = vunpack.c.l.b16 %v1339
        %v1917 = vunpack.c.h.b16 %v1339
        %v1918 = vunpack.c.l.b16 %v1340
        %v1919 = vunpack.c.h.b16 %v1340
        %v1920 = vunpack.c.l.b16 %v1341
        %v1921 = vunpack.c.h.b16 %v1341
        %v1922 = vunpack.c.l.b16 %v1342
        %v1923 = vunpack.c.h.b16 %v1342
        %v1924 = vunpack.c.l.b16 %v1343
        %v1925 = vunpack.c.h.b16 %v1343
        %v1926 = vunpack.c.l.b16 %v1344
        %v1927 = vunpack.c.h.b16 %v1344
        %v1928 = vunpack.c.l.b16 %v1345
        %v1929 = vunpack.c.h.b16 %v1345
        %v1930 = vunpack.c.l.b16 %v1346
        %v1931 = vunpack.c.h.b16 %v1346
        %v1932 = vunpack.c.l.b16 %v1347
        %v1933 = vunpack.c.h.b16 %v1347
        %v1934 = vunpack.c.l.b16 %v1348
        %v1935 = vunpack.c.h.b16 %v1348
        %v1936 = vunpack.c.l.b16 %v1349
        %v1937 = vunpack.c.h.b16 %v1349
        %v1938 = vunpack.c.l.b16 %v1350
        %v1939 = vunpack.c.h.b16 %v1350
        %v1940 = vunpack.c.l.b16 %v1351
        %v1941 = vunpack.c.h.b16 %v1351
        %v1942 = vunpack.c.l.b16 %v1352
        %v1943 = vunpack.c.h.b16 %v1352
        %v1944 = vunpack.c.l.b16 %v1353
        %v1945 = vunpack.c.h.b16 %v1353
        %v1946 = vunpack.c.l.b16 %v1354
        %v1947 = vunpack.c.h.b16 %v1354
        %v1948 = vunpack.c.l.b16 %v1355
        %v1949 = vunpack.c.h.b16 %v1355
        %v1950 = vunpack.c.l.b16 %v1356
        %v1951 = vunpack.c.h.b16 %v1356
        %v1952 = vunpack.c.l.b16 %v1357
        %v1953 = vunpack.c.h.b16 %v1357
        %v1954 = vunpack.c.l.b16 %v1358
        %v1955 = vunpack.c.h.b16 %v1358
        %v1956 = vunpack.c.l.b16 %v1359
        %v1957 = vunpack.c.h.b16 %v1359
        %v1958 = vunpack.c.l.b16 %v1360
        %v1959 = vunpack.c.h.b16 %v1360
        %v1960 = vunpack.c.l.b16 %v1361
        %v1961 = vunpack.c.h.b16 %v1361
        %v1962 = vunpack.c.l.b16 %v1362
        %v1963 = vunpack.c.h.b16 %v1362
        %v1964 = vunpack.c.l.b16 %v1363
        %v1965 = vunpack.c.h.b16 %v1363
        %v1966 = vunpack.c.l.b16 %v1364
        %v1967 = vunpack.c.h.b16 %v1364
        %v1968 = vunpack.c.l.b16 %v1365
        %v1969 = vunpack.c.h.b16 %v1365
        %v1970 = vunpack.c.l.b16 %v1366
        %v1971 = vunpack.c.h.b16 %v1366
        %v1972 = vunpack.c.l.b16 %v1367
        %v1973 = vunpack.c.h.b16 %v1367
        %v1974 = vunpack.c.l.b16 %v1368
        %v1975 = vunpack.c.h.b16 %v1368
        %v1976 = vunpack.c.l.b16 %v1369
        %v1977 = vunpack.c.h.b16 %v1369
        %v1978 = vunpack.c.l.b16 %v1370
        %v1979 = vunpack.c.h.b16 %v1370
        %v1980 = vunpack.c.l.b16 %v1371
        %v1981 = vunpack.c.h.b16 %v1371
        %v1982 = vunpack.c.l.b16 %v1372
        %v1983 = vunpack.c.h.b16 %v1372
        %v1984 = vunpack.c.l.b16 %v1373
        %v1985 = vunpack.c.h.b16 %v1373
        %v1986 = vunpack.c.l.b16 %v1374
        %v1987 = vunpack.c.h.b16 %v1374
        %v1988 = vunpack.c.l.b16 %v1375
        %v1989 = vunpack.c.h.b16 %v1375
        %v1990 = vunpack.c.l.b16 %v1376
        %v1991 = vunpack.c.h.b16 %v1376
        %v1992 = vunpack.c.l.b16 %v1377
        %v1993 = vunpack.c.h.b16 %v1377
        %v1994 = vunpack.c.l.b16 %v1378
        %v1995 = vunpack.c.h.b16 %v1378
        %v1996 = vunpack.c.l.b16 %v1379
        %v1997 = vunpack.c.h.b16 %v1379
        %v1998 = vunpack.c.l.b16 %v1380
        %v1999 = vunpack.c.h.b16 %v1380
        %v2000 = vunpack.c.l.b16 %v1381
        %v2001 = vunpack.c.h.b16 %v1381
        %v2002 = vunpack.c.l.b16 %v1382
        %v2003 = vunpack.c.h.b16 %v1382
        %v2004 = vunpack.c.l.b16 %v1383
        %v2005 = vunpack.c.h.b16 %v1383
        %v2006 = vunpack.c.l.b16 %v1384
        %v2007 = vunpack.c.h.b16 %v1384
        %v2008 = vunpack.c.l.b16 %v1385
        %v2009 = vunpack.c.h.b16 %v1385
        %v2010 = vunpack.c.l.b16 %v1386
        %v2011 = vunpack.c.h.b16 %v1386
        %v2012 = vunpack.c.l.b16 %v1387
        %v2013 = vunpack.c.h.b16 %v1387
        %v2014 = vunpack.c.l.b16 %v1388
        %v2015 = vunpack.c.h.b16 %v1388
        %v2016 = vunpack.c.l.b16 %v1389
        %v2017 = vunpack.c.h.b16 %v1389
        %v2018 = vunpack.c.l.b16 %v1390
        %v2019 = vunpack.c.h.b16 %v1390
        %v2020 = vunpack.c.l.b16 %v1391
        %v2021 = vunpack.c.h.b16 %v1391
        %v2022 = vunpack.c.l.b16 %v1392
        %v2023 = vunpack.c.h.b16 %v1392
        %v2024 = vunpack.c.l.b16 %v1393
        %v2025 = vunpack.c.h.b16 %v1393
        %v2026 = vunpack.c.l.b16 %v1394
        %v2027 = vunpack.c.h.b16 %v1394
        %v2028 = vunpack.c.l.b16 %v1395
        %v2029 = vunpack.c.h.b16 %v1395
        %v2030 = vunpack.c.l.b16 %v1396
        %v2031 = vunpack.c.h.b16 %v1396
        %v2032 = vunpack.c.l.b16 %v1397
        %v2033 = vunpack.c.h.b16 %v1397
        %v2034 = vunpack.c.l.b16 %v1398
        %v2035 = vunpack.c.h.b16 %v1398
        %v2036 = vunpack.c.l.b16 %v1399
        %v2037 = vunpack.c.h.b16 %v1399
        %v2038 = vunpack.c.l.b16 %v1400
        %v2039 = vunpack.c.h.b16 %v1400
        %v2040 = vunpack.c.l.b16 %v1401
        %v2041 = vunpack.c.h.b16 %v1401
        %v2042 = vunpack.c.l.b16 %v1402
        %v2043 = vunpack.c.h.b16 %v1402
        %v2044 = vunpack.c.l.b16 %v1403
        %v2045 = vunpack.c.h.b16 %v1403
        %v2046 = vunpack.c.l.b16 %v1404
        %v2047 = vunpack.c.h.b16 %v1404
        %v2048 = vunpack.c.l.b16 %v1405
        %v2049 = vunpack.c.h.b16 %v1405
        %v2050 = vunpack.c.l.b16 %v1406
        %v2051 = vunpack.c.h.b16 %v1406
        %v2052 = vunpack.c.l.b16 %v1407
        %v2053 = vunpack.c.h.b16 %v1407
        %v2054 = vunpack.c.l.b16 %v1408
        %v2055 = vunpack.c.h.b16 %v1408
        %v2056 = vpack.c.b16 %v1816, %v1800
        %v2057 = vpack.c.b16 %v1817, %v1801
        %v2058 = vpack.c.b16 %v1818, %v1802
        %v2059 = vpack.c.b16 %v1819, %v1803
        %v2060 = vpack.c.b16 %v1820, %v1804
        %v2061 = vpack.c.b16 %v1821, %v1805
        %v2062 = vpack.c.b16 %v1822, %v1806
        %v2063 = vpack.c.b16 %v1823, %v1807
        %v2064 = vpack.c.b16 %v1824, %v1808
        %v2065 = vpack.c.b16 %v1825, %v1809
        %v2066 = vpack.c.b16 %v1826, %v1810
        %v2067 = vpack.c.b16 %v1827, %v1811
        %v2068 = vpack.c.b16 %v1828, %v1812
        %v2069 = vpack.c.b16 %v1829, %v1813
        %v2070 = vpack.c.b16 %v1830, %v1814
        %v2071 = vpack.c.b16 %v1831, %v1815
        %v2072 = vpack.c.b16 %v1848, %v1832
        %v2073 = vpack.c.b16 %v1849, %v1833
        %v2074 = vpack.c.b16 %v1850, %v1834
        %v2075 = vpack.c.b16 %v1851, %v1835
        %v2076 = vpack.c.b16 %v1852, %v1836
        %v2077 = vpack.c.b16 %v1853, %v1837
        %v2078 = vpack.c.b16 %v1854, %v1838
        %v2079 = vpack.c.b16 %v1855, %v1839
        %v2080 = vpack.c.b16 %v1856, %v1840
        %v2081 = vpack.c.b16 %v1857, %v1841
        %v2082 = vpack.c.b16 %v1858, %v1842
        %v2083 = vpack.c.b16 %v1859, %v1843
        %v2084 = vpack.c.b16 %v1860, %v1844
        %v2085 = vpack.c.b16 %v1861, %v1845
        %v2086 = vpack.c.b16 %v1862, %v1846
        %v2087 = vpack.c.b16 %v1863, %v1847
        %v2088 = vpack.c.b16 %v1880, %v1864
        %v2089 = vpack.c.b16 %v1881, %v1865
        %v2090 = vpack.c.b16 %v1882, %v1866
        %v2091 = vpack.c.b16 %v1883, %v1867
        %v2092 = vpack.c.b16 %v1884, %v1868
        %v2093 = vpack.c.b16 %v1885, %v1869
        %v2094 = vpack.c.b16 %v1886, %v1870
        %v2095 = vpack.c.b16 %v1887, %v1871
        %v2096 = vpack.c.b16 %v1888, %v1872
        %v2097 = vpack.c.b16 %v1889, %v1873
        %v2098 = vpack.c.b16 %v1890, %v1874
        %v2099 = vpack.c.b16 %v1891, %v1875
        %v2100 = vpack.c.b16 %v1892, %v1876
        %v2101 = vpack.c.b16 %v1893, %v1877
        %v2102 = vpack.c.b16 %v1894, %v1878
        %v2103 = vpack.c.b16 %v1895, %v1879
        %v2104 = vpack.c.b16 %v1912, %v1896
        %v2105 = vpack.c.b16 %v1913, %v1897
        %v2106 = vpack.c.b16 %v1914, %v1898
        %v2107 = vpack.c.b16 %v1915, %v1899
        %v2108 = vpack.c.b16 %v1916, %v1900
        %v2109 = vpack.c.b16 %v1917, %v1901
        %v2110 = vpack.c.b16 %v1918, %v1902
        %v2111 = vpack.c.b16 %v1919, %v1903
        %v2112 = vpack.c.b16 %v1920, %v1904
        %v2113 = vpack.c.b16 %v1921, %v1905
        %v2114 = vpack.c.b16 %v1922, %v1906
        %v2115 = vpack.c.b16 %v1923, %v1907
        %v2116 = vpack.c.b16 %v1924, %v1908
        %v2117 = vpack.c.b16 %v1925, %v1909
        %v2118 = vpack.c.b16 %v1926, %v1910
        %v2119 = vpack.c.b16 %v1927, %v1911
        %v2120 = vpack.c.b16 %v1944, %v1928
        %v2121 = vpack.c.b16 %v1945, %v1929
        %v2122 = vpack.c.b16 %v1946, %v1930
        %v2123 = vpack.c.b16 %v1947, %v1931
        %v2124 = vpack.c.b16 %v1948, %v1932
        %v2125 = vpack.c.b16 %v1949, %v1933
        %v2126 = vpack.c.b16 %v1950, %v1934
        %v2127 = vpack.c.b16 %v1951, %v1935
        %v2128 = vpack.c.b16 %v1952, %v1936
        %v2129 = vpack.c.b16 %v1953, %v1937
        %v2130 = vpack.c.b16 %v1954, %v1938
        %v2131 = vpack.c.b16 %v1955, %v1939
        %v2132 = vpack.c.b16 %v1956, %v1940
        %v2133 = vpack.c.b16 %v1957, %v1941
        %v2134 = vpack.c.b16 %v1958, %v1942
        %v2135 = vpack.c.b16 %v1959, %v1943
        %v2136 = vpack.c.b16 %v1976, %v1960
        %v2137 = vpack.c.b16 %v1977, %v1961
        %v2138 = vpack.c.b16 %v1978, %v1962
        %v2139 = vpack.c.b16 %v1979, %v1963
        %v2140 = vpack.c.b16 %v1980, %v1964
        %v2141 = vpack.c.b16 %v1981, %v1965
        %v2142 = vpack.c.b16 %v1982, %v1966
        %v2143 = vpack.c.b16 %v1983, %v1967
        %v2144 = vpack.c.b16 %v1984, %v1968
        %v2145 = vpack.c.b16 %v1985, %v1969
        %v2146 = vpack.c.b16 %v1986, %v1970
        %v2147 = vpack.c.b16 %v1987, %v1971
        %v2148 = vpack.c.b16 %v1988, %v1972
        %v2149 = vpack.c.b16 %v1989, %v1973
        %v2150 = vpack.c.b16 %v1990, %v1974
        %v2151 = vpack.c.b16 %v1991, %v1975
        %v2152 = vpack.c.b16 %v2008, %v1992
        %v2153 = vpack.c.b16 %v2009, %v1993
        %v2154 = vpack.c.b16 %v2010, %v1994
        %v2155 = vpack.c.b16 %v2011, %v1995
        %v2156 = vpack.c.b16 %v2012, %v1996
        %v2157 = vpack.c.b16 %v2013, %v1997
        %v2158 = vpack.c.b16 %v2014, %v1998
        %v2159 = vpack.c.b16 %v2015, %v1999
        %v2160 = vpack.c.b16 %v2016, %v2000
        %v2161 = vpack.c.b16 %v2017, %v2001
        %v2162 = vpack.c.b16 %v2018, %v2002
        %v2163 = vpack.c.b16 %v2019, %v2003
        %v2164 = vpack.c.b16 %v2020, %v2004
        %v2165 = vpack.c.b16 %v2021, %v2005
        %v2166 = vpack.c.b16 %v2022, %v2006
        %v2167 = vpack.c.b16 %v2023, %v2007
        %v2168 = vpack.c.b16 %v2040, %v2024
        %v2169 = vpack.c.b16 %v2041, %v2025
        %v2170 = vpack.c.b16 %v2042, %v2026
        %v2171 = vpack.c.b16 %v2043, %v2027
        %v2172 = vpack.c.b16 %v2044, %v2028
        %v2173 = vpack.c.b16 %v2045, %v2029
        %v2174 = vpack.c.b16 %v2046, %v2030
        %v2175 = vpack.c.b16 %v2047, %v2031
        %v2176 = vpack.c.b16 %v2048, %v2032
        %v2177 = vpack.c.b16 %v2049, %v2033
        %v2178 = vpack.c.b16 %v2050, %v2034
        %v2179 = vpack.c.b16 %v2051, %v2035
        %v2180 = vpack.c.b16 %v2052, %v2036
        %v2181 = vpack.c.b16 %v2053, %v2037
        %v2182 = vpack.c.b16 %v2054, %v2038
        %v2183 = vpack.c.b16 %v2055, %v2039
        %v2568 = vunpack.c.l.b16 %v1409
        %v2569 = vunpack.c.l.b16 %v1410
        %v2570 = vunpack.c.l.b16 %v1411
        %v2571 = vunpack.c.l.b16 %v1412
        %v2572 = vunpack.c.l.b16 %v1413
        %v2573 = vunpack.c.l.b16 %v1414
        %v2574 = vunpack.c.l.b16 %v1415
        %v2575 = vunpack.c.l.b16 %v1416
        %v2576 = vunpack.c.l.b16 %v1417
        %v2577 = vunpack.c.l.b16 %v1418
        %v2578 = vunpack.c.l.b16 %v1419
        %v2579 = vunpack.c.l.b16 %v1420
        %v2580 = vunpack.c.l.b16 %v1421
        %v2581 = vunpack.c.l.b16 %v1422
        %v2582 = vunpack.c.l.b16 %v1423
        %v2583 = vunpack.c.l.b16 %v1424
        %v2584 = vunpack.c.l.b16 %v1425
        %v2585 = vunpack.c.l.b16 %v1426
        %v2586 = vunpack.c.l.b16 %v1427
        %v2587 = vunpack.c.l.b16 %v1428
        %v2588 = vunpack.c.l.b16 %v1429
        %v2589 = vunpack.c.l.b16 %v1430
        %v2590 = vunpack.c.l.b16 %v1431
        %v2591 = vunpack.c.l.b16 %v1432
        %v2592 = vunpack.c.l.b16 %v1433
        %v2593 = vunpack.c.l.b16 %v1434
        %v2594 = vunpack.c.l.b16 %v1435
        %v2595 = vunpack.c.l.b16 %v1436
        %v2596 = vunpack.c.l.b16 %v1437
        %v2597 = vunpack.c.l.b16 %v1438
        %v2598 = vunpack.c.l.b16 %v1439
        %v2599 = vunpack.c.l.b16 %v1440
        %v2600 = vunpack.c.l.b16 %v1441
        %v2601 = vunpack.c.l.b16 %v1442
        %v2602 = vunpack.c.l.b16 %v1443
        %v2603 = vunpack.c.l.b16 %v1444
        %v2604 = vunpack.c.l.b16 %v1445
        %v2605 = vunpack.c.l.b16 %v1446
        %v2606 = vunpack.c.l.b16 %v1447
        %v2607 = vunpack.c.l.b16 %v1448
        %v2608 = vunpack.c.l.b16 %v1449
        %v2609 = vunpack.c.l.b16 %v1450
        %v2610 = vunpack.c.l.b16 %v1451
        %v2611 = vunpack.c.l.b16 %v1452
        %v2612 = vunpack.c.l.b16 %v1453
        %v2613 = vunpack.c.l.b16 %v1454
        %v2614 = vunpack.c.l.b16 %v1455
        %v2615 = vunpack.c.l.b16 %v1456
        %v2616 = vunpack.c.l.b16 %v1457
        %v2617 = vunpack.c.l.b16 %v1458
        %v2618 = vunpack.c.l.b16 %v1459
        %v2619 = vunpack.c.l.b16 %v1460
        %v2620 = vunpack.c.l.b16 %v1461
        %v2621 = vunpack.c.l.b16 %v1462
        %v2622 = vunpack.c.l.b16 %v1463
        %v2623 = vunpack.c.l.b16 %v1464
        %v2624 = vunpack.c.l.b16 %v1465
        %v2625 = vunpack.c.l.b16 %v1466
        %v2626 = vunpack.c.l.b16 %v1467
        %v2627 = vunpack.c.l.b16 %v1468
        %v2628 = vunpack.c.l.b16 %v1469
        %v2629 = vunpack.c.l.b16 %v1470
        %v2630 = vunpack.c.l.b16 %v1471
        %v2631 = vunpack.c.l.b16 %v1472
        %v2632 = vunpack.c.l.b16 %v1473
        %v2633 = vunpack.c.l.b16 %v1474
        %v2634 = vunpack.c.l.b16 %v1475
        %v2635 = vunpack.c.l.b16 %v1476
        %v2636 = vunpack.c.l.b16 %v1477
        %v2637 = vunpack.c.l.b16 %v1478
        %v2638 = vunpack.c.l.b16 %v1479
        %v2639 = vunpack.c.l.b16 %v1480
        %v2640 = vunpack.c.l.b16 %v1481
        %v2641 = vunpack.c.l.b16 %v1482
        %v2642 = vunpack.c.l.b16 %v1483
        %v2643 = vunpack.c.l.b16 %v1484
        %v2644 = vunpack.c.l.b16 %v1485
        %v2645 = vunpack.c.l.b16 %v1486
        %v2646 = vunpack.c.l.b16 %v1487
        %v2647 = vunpack.c.l.b16 %v1488
        %v2648 = vunpack.c.l.b16 %v1489
        %v2649 = vunpack.c.l.b16 %v1490
        %v2650 = vunpack.c.l.b16 %v1491
        %v2651 = vunpack.c.l.b16 %v1492
        %v2652 = vunpack.c.l.b16 %v1493
        %v2653 = vunpack.c.l.b16 %v1494
        %v2654 = vunpack.c.l.b16 %v1495
        %v2655 = vunpack.c.l.b16 %v1496
        %v2656 = vunpack.c.l.b16 %v1497
        %v2657 = vunpack.c.l.b16 %v1498
        %v2658 = vunpack.c.l.b16 %v1499
        %v2659 = vunpack.c.l.b16 %v1500
        %v2660 = vunpack.c.l.b16 %v1501
        %v2661 = vunpack.c.l.b16 %v1502
        %v2662 = vunpack.c.l.b16 %v1503
        %v2663 = vunpack.c.l.b16 %v1504
        %v2664 = vunpack.c.l.b16 %v1505
        %v2665 = vunpack.c.l.b16 %v1506
        %v2666 = vunpack.c.l.b16 %v1507
        %v2667 = vunpack.c.l.b16 %v1508
        %v2668 = vunpack.c.l.b16 %v1509
        %v2669 = vunpack.c.l.b16 %v1510
        %v2670 = vunpack.c.l.b16 %v1511
        %v2671 = vunpack.c.l.b16 %v1512
        %v2672 = vunpack.c.l.b16 %v1513
        %v2673 = vunpack.c.l.b16 %v1514
        %v2674 = vunpack.c.l.b16 %v1515
        %v2675 = vunpack.c.l.b16 %v1516
        %v2676 = vunpack.c.l.b16 %v1517
        %v2677 = vunpack.c.l.b16 %v1518
        %v2678 = vunpack.c.l.b16 %v1519
        %v2679 = vunpack.c.l.b16 %v1520
        %v2680 = vunpack.c.l.b16 %v1521
        %v2681 = vunpack.c.l.b16 %v1522
        %v2682 = vunpack.c.l.b16 %v1523
        %v2683 = vunpack.c.l.b16 %v1524
        %v2684 = vunpack.c.l.b16 %v1525
        %v2685 = vunpack.c.l.b16 %v1526
        %v2686 = vunpack.c.l.b16 %v1527
        %v2687 = vunpack.c.l.b16 %v1528
        %v2688 = vunpack.c.l.b16 %v1529
        %v2689 = vunpack.c.l.b16 %v1530
        %v2690 = vunpack.c.l.b16 %v1531
        %v2691 = vunpack.c.l.b16 %v1532
        %v2692 = vunpack.c.l.b16 %v1533
        %v2693 = vunpack.c.l.b16 %v1534
        %v2694 = vunpack.c.l.b16 %v1535
        %v2695 = vunpack.c.l.b16 %v1536
        %v2696 = vunpack.c.l.b16 %v1537
        %v2697 = vunpack.c.l.b16 %v1538
        %v2698 = vunpack.c.l.b16 %v1539
        %v2699 = vunpack.c.l.b16 %v1540
        %v2700 = vunpack.c.l.b16 %v1541
        %v2701 = vunpack.c.l.b16 %v1542
        %v2702 = vunpack.c.l.b16 %v1543
        %v2703 = vunpack.c.l.b16 %v1544
        %v2704 = vunpack.c.l.b16 %v1545
        %v2705 = vunpack.c.l.b16 %v1546
        %v2706 = vunpack.c.l.b16 %v1547
        %v2707 = vunpack.c.l.b16 %v1548
        %v2708 = vunpack.c.l.b16 %v1549
        %v2709 = vunpack.c.l.b16 %v1550
        %v2710 = vunpack.c.l.b16 %v1551
        %v2711 = vunpack.c.l.b16 %v1552
        %v2712 = vunpack.c.l.b16 %v1553
        %v2713 = vunpack.c.l.b16 %v1554
        %v2714 = vunpack.c.l.b16 %v1555
        %v2715 = vunpack.c.l.b16 %v1556
        %v2716 = vunpack.c.l.b16 %v1557
        %v2717 = vunpack.c.l.b16 %v1558
        %v2718 = vunpack.c.l.b16 %v1559
        %v2719 = vunpack.c.l.b16 %v1560
        %v2720 = vunpack.c.l.b16 %v1561
        %v2721 = vunpack.c.l.b16 %v1562
        %v2722 = vunpack.c.l.b16 %v1563
        %v2723 = vunpack.c.l.b16 %v1564
        %v2724 = vunpack.c.l.b16 %v1565
        %v2725 = vunpack.c.l.b16 %v1566
        %v2726 = vunpack.c.l.b16 %v1567
        %v2727 = vunpack.c.l.b16 %v1568
        %v2728 = vunpack.c.l.b16 %v1569
        %v2729 = vunpack.c.l.b16 %v1570
        %v2730 = vunpack.c.l.b16 %v1571
        %v2731 = vunpack.c.l.b16 %v1572
        %v2732 = vunpack.c.l.b16 %v1573
        %v2733 = vunpack.c.l.b16 %v1574
        %v2734 = vunpack.c.l.b16 %v1575
        %v2735 = vunpack.c.l.b16 %v1576
        %v2736 = vunpack.c.l.b16 %v1577
        %v2737 = vunpack.c.l.b16 %v1578
        %v2738 = vunpack.c.l.b16 %v1579
        %v2739 = vunpack.c.l.b16 %v1580
        %v2740 = vunpack.c.l.b16 %v1581
        %v2741 = vunpack.c.l.b16 %v1582
        %v2742 = vunpack.c.l.b16 %v1583
        %v2743 = vunpack.c.l.b16 %v1584
        %v2744 = vunpack.c.l.b16 %v1585
        %v2745 = vunpack.c.l.b16 %v1586
        %v2746 = vunpack.c.l.b16 %v1587
        %v2747 = vunpack.c.l.b16 %v1588
        %v2748 = vunpack.c.l.b16 %v1589
        %v2749 = vunpack.c.l.b16 %v1590
        %v2750 = vunpack.c.l.b16 %v1591
        %v2751 = vunpack.c.l.b16 %v1592
        %v2752 = vunpack.c.l.b16 %v1593
        %v2753 = vunpack.c.l.b16 %v1594
        %v2754 = vunpack.c.l.b16 %v1595
        %v2755 = vunpack.c.l.b16 %v1596
        %v2756 = vunpack.c.l.b16 %v1597
        %v2757 = vunpack.c.l.b16 %v1598
        %v2758 = vunpack.c.l.b16 %v1599
        %v2759 = vunpack.c.l.b16 %v1600
        %v2760 = vunpack.c.l.b16 %v1601
        %v2761 = vunpack.c.l.b16 %v1602
        %v2762 = vunpack.c.l.b16 %v1603
        %v2763 = vunpack.c.l.b16 %v1604
        %v2764 = vunpack.c.l.b16 %v1605
        %v2765 = vunpack.c.l.b16 %v1606
        %v2766 = vunpack.c.l.b16 %v1607
        %v2767 = vunpack.c.l.b16 %v1608
        %v2768 = vunpack.c.l.b16 %v1609
        %v2769 = vunpack.c.l.b16 %v1610
        %v2770 = vunpack.c.l.b16 %v1611
        %v2771 = vunpack.c.l.b16 %v1612
        %v2772 = vunpack.c.l.b16 %v1613
        %v2773 = vunpack.c.l.b16 %v1614
        %v2774 = vunpack.c.l.b16 %v1615
        %v2775 = vunpack.c.l.b16 %v1616
        %v2776 = vunpack.c.l.b16 %v1617
        %v2777 = vunpack.c.l.b16 %v1618
        %v2778 = vunpack.c.l.b16 %v1619
        %v2779 = vunpack.c.l.b16 %v1620
        %v2780 = vunpack.c.l.b16 %v1621
        %v2781 = vunpack.c.l.b16 %v1622
        %v2782 = vunpack.c.l.b16 %v1623
        %v2783 = vunpack.c.l.b16 %v1624
        %v2784 = vunpack.c.l.b16 %v1625
        %v2785 = vunpack.c.l.b16 %v1626
        %v2786 = vunpack.c.l.b16 %v1627
        %v2787 = vunpack.c.l.b16 %v1628
        %v2788 = vunpack.c.l.b16 %v1629
        %v2789 = vunpack.c.l.b16 %v1630
        %v2790 = vunpack.c.l.b16 %v1631
        %v2791 = vunpack.c.l.b16 %v1632
        %v2792 = vunpack.c.l.b16 %v1633
        %v2793 = vunpack.c.l.b16 %v1634
        %v2794 = vunpack.c.l.b16 %v1635
        %v2795 = vunpack.c.l.b16 %v1636
        %v2796 = vunpack.c.l.b16 %v1637
        %v2797 = vunpack.c.l.b16 %v1638
        %v2798 = vunpack.c.l.b16 %v1639
        %v2799 = vunpack.c.l.b16 %v1640
        %v2800 = vunpack.c.l.b16 %v1641
        %v2801 = vunpack.c.l.b16 %v1642
        %v2802 = vunpack.c.l.b16 %v1643
        %v2803 = vunpack.c.l.b16 %v1644
        %v2804 = vunpack.c.l.b16 %v1645
        %v2805 = vunpack.c.l.b16 %v1646
        %v2806 = vunpack.c.l.b16 %v1647
        %v2807 = vunpack.c.l.b16 %v1648
        %v2808 = vunpack.c.l.b16 %v1649
        %v2809 = vunpack.c.l.b16 %v1650
        %v2810 = vunpack.c.l.b16 %v1651
        %v2811 = vunpack.c.l.b16 %v1652
        %v2812 = vunpack.c.l.b16 %v1653
        %v2813 = vunpack.c.l.b16 %v1654
        %v2814 = vunpack.c.l.b16 %v1655
        %v2815 = vunpack.c.l.b16 %v1656
        %v2816 = vunpack.c.l.b16 %v1657
        %v2817 = vunpack.c.l.b16 %v1658
        %v2818 = vunpack.c.l.b16 %v1659
        %v2819 = vunpack.c.l.b16 %v1660
        %v2820 = vunpack.c.l.b16 %v1661
        %v2821 = vunpack.c.l.b16 %v1662
        %v2822 = vunpack.c.l.b16 %v1663
        %v2823 = vunpack.c.l.b16 %v1664
        %v2824 = vpack.c.b16 %v2569, %v2568
        %v2825 = vpack.c.b16 %v2571, %v2570
        %v2826 = vpack.c.b16 %v2573, %v2572
        %v2827 = vpack.c.b16 %v2575, %v2574
        %v2828 = vpack.c.b16 %v2577, %v2576
        %v2829 = vpack.c.b16 %v2579, %v2578
        %v2830 = vpack.c.b16 %v2581, %v2580
        %v2831 = vpack.c.b16 %v2583, %v2582
        %v2832 = vpack.c.b16 %v2585, %v2584
        %v2833 = vpack.c.b16 %v2587, %v2586
        %v2834 = vpack.c.b16 %v2589, %v2588
        %v2835 = vpack.c.b16 %v2591, %v2590
        %v2836 = vpack.c.b16 %v2593, %v2592
        %v2837 = vpack.c.b16 %v2595, %v2594
        %v2838 = vpack.c.b16 %v2597, %v2596
        %v2839 = vpack.c.b16 %v2599, %v2598
        %v2840 = vpack.c.b16 %v2601, %v2600
        %v2841 = vpack.c.b16 %v2603, %v2602
        %v2842 = vpack.c.b16 %v2605, %v2604
        %v2843 = vpack.c.b16 %v2607, %v2606
        %v2844 = vpack.c.b16 %v2609, %v2608
        %v2845 = vpack.c.b16 %v2611, %v2610
        %v2846 = vpack.c.b16 %v2613, %v2612
        %v2847 = vpack.c.b16 %v2615, %v2614
        %v2848 = vpack.c.b16 %v2617, %v2616
        %v2849 = vpack.c.b16 %v2619, %v2618
        %v2850 = vpack.c.b16 %v2621, %v2620
        %v2851 = vpack.c.b16 %v2623, %v2622
        %v2852 = vpack.c.b16 %v2625, %v2624
        %v2853 = vpack.c.b16 %v2627, %v2626
        %v2854 = vpack.c.b16 %v2629, %v2628
        %v2855 = vpack.c.b16 %v2631, %v2630
        %v2856 = vpack.c.b16 %v2633, %v2632
        %v2857 = vpack.c.b16 %v2635, %v2634
        %v2858 = vpack.c.b16 %v2637, %v2636
        %v2859 = vpack.c.b16 %v2639, %v2638
        %v2860 = vpack.c.b16 %v2641, %v2640
        %v2861 = vpack.c.b16 %v2643, %v2642
        %v2862 = vpack.c.b16 %v2645, %v2644
        %v2863 = vpack.c.b16 %v2647, %v2646
        %v2864 = vpack.c.b16 %v2649, %v2648
        %v2865 = vpack.c.b16 %v2651, %v2650
        %v2866 = vpack.c.b16 %v2653, %v2652
        %v2867 = vpack.c.b16 %v2655, %v2654
        %v2868 = vpack.c.b16 %v2657, %v2656
        %v2869 = vpack.c.b16 %v2659, %v2658
        %v2870 = vpack.c.b16 %v2661, %v2660
        %v2871 = vpack.c.b16 %v2663, %v2662
        %v2872 = vpack.c.b16 %v2665, %v2664
        %v2873 = vpack.c.b16 %v2667, %v2666
        %v2874 = vpack.c.b16 %v2669, %v2668
        %v2875 = vpack.c.b16 %v2671, %v2670
        %v2876 = vpack.c.b16 %v2673, %v2672
        %v2877 = vpack.c.b16 %v2675, %v2674
        %v2878 = vpack.c.b16 %v2677, %v2676
        %v2879 = vpack.c.b16 %v2679, %v2678
        %v2880 = vpack.c.b16 %v2681, %v2680
        %v2881 = vpack.c.b16 %v2683, %v2682
        %v2882 = vpack.c.b16 %v2685, %v2684
        %v2883 = vpack.c.b16 %v2687, %v2686
        %v2884 = vpack.c.b16 %v2689, %v2688
        %v2885 = vpack.c.b16 %v2691, %v2690
        %v2886 = vpack.c.b16 %v2693, %v2692
        %v2887 = vpack.c.b16 %v2695, %v2694
        %v2888 = vpack.c.b16 %v2697, %v2696
        %v2889 = vpack.c.b16 %v2699, %v2698
        %v2890 = vpack.c.b16 %v2701, %v2700
        %v2891 = vpack.c.b16 %v2703, %v2702
        %v2892 = vpack.c.b16 %v2705, %v2704
        %v2893 = vpack.c.b16 %v2707, %v2706
        %v2894 = vpack.c.b16 %v2709, %v2708
        %v2895 = vpack.c.b16 %v2711, %v2710
        %v2896 = vpack.c.b16 %v2713, %v2712
        %v2897 = vpack.c.b16 %v2715, %v2714
        %v2898 = vpack.c.b16 %v2717, %v2716
        %v2899 = vpack.c.b16 %v2719, %v2718
        %v2900 = vpack.c.b16 %v2721, %v2720
        %v2901 = vpack.c.b16 %v2723, %v2722
        %v2902 = vpack.c.b16 %v2725, %v2724
        %v2903 = vpack.c.b16 %v2727, %v2726
        %v2904 = vpack.c.b16 %v2729, %v2728
        %v2905 = vpack.c.b16 %v2731, %v2730
        %v2906 = vpack.c.b16 %v2733, %v2732
        %v2907 = vpack.c.b16 %v2735, %v2734
        %v2908 = vpack.c.b16 %v2737, %v2736
        %v2909 = vpack.c.b16 %v2739, %v2738
        %v2910 = vpack.c.b16 %v2741, %v2740
        %v2911 = vpack.c.b16 %v2743, %v2742
        %v2912 = vpack.c.b16 %v2745, %v2744
        %v2913 = vpack.c.b16 %v2747, %v2746
        %v2914 = vpack.c.b16 %v2749, %v2748
        %v2915 = vpack.c.b16 %v2751, %v2750
        %v2916 = vpack.c.b16 %v2753, %v2752
        %v2917 = vpack.c.b16 %v2755, %v2754
        %v2918 = vpack.c.b16 %v2757, %v2756
        %v2919 = vpack.c.b16 %v2759, %v2758
        %v2920 = vpack.c.b16 %v2761, %v2760
        %v2921 = vpack.c.b16 %v2763, %v2762
        %v2922 = vpack.c.b16 %v2765, %v2764
        %v2923 = vpack.c.b16 %v2767, %v2766
        %v2924 = vpack.c.b16 %v2769, %v2768
        %v2925 = vpack.c.b16 %v2771, %v2770
        %v2926 = vpack.c.b16 %v2773, %v2772
        %v2927 = vpack.c.b16 %v2775, %v2774
        %v2928 = vpack.c.b16 %v2777, %v2776
        %v2929 = vpack.c.b16 %v2779, %v2778
        %v2930 = vpack.c.b16 %v2781, %v2780
        %v2931 = vpack.c.b16 %v2783, %v2782
        %v2932 = vpack.c.b16 %v2785, %v2784
        %v2933 = vpack.c.b16 %v2787, %v2786
        %v2934 = vpack.c.b16 %v2789, %v2788
        %v2935 = vpack.c.b16 %v2791, %v2790
        %v2936 = vpack.c.b16 %v2793, %v2792
        %v2937 = vpack.c.b16 %v2795, %v2794
        %v2938 = vpack.c.b16 %v2797, %v2796
        %v2939 = vpack.c.b16 %v2799, %v2798
        %v2940 = vpack.c.b16 %v2801, %v2800
        %v2941 = vpack.c.b16 %v2803, %v2802
        %v2942 = vpack.c.b16 %v2805, %v2804
        %v2943 = vpack.c.b16 %v2807, %v2806
        %v2944 = vpack.c.b16 %v2809, %v2808
        %v2945 = vpack.c.b16 %v2811, %v2810
        %v2946 = vpack.c.b16 %v2813, %v2812
        %v2947 = vpack.c.b16 %v2815, %v2814
        %v2948 = vpack.c.b16 %v2817, %v2816
        %v2949 = vpack.c.b16 %v2819, %v2818
        %v2950 = vpack.c.b16 %v2821, %v2820
        %v2951 = vpack.c.b16 %v2823, %v2822
        %3080 = vmatprep.subr.bf16.mxu0 0
        %3081 = vmatpush1.bf16.msra.mxu0 %v2824
        %3082 = vmatprep.subr.bf16.mxu0 0
        %3083 = vmatpush1.bf16.msra.mxu0 %v2825
        %3084 = vmatprep.subr.bf16.mxu0 0
        %3085 = vmatpush1.bf16.msra.mxu0 %v2826
        %3086 = vmatprep.subr.bf16.mxu0 0
        %3087 = vmatpush1.bf16.msra.mxu0 %v2827
        %3088 = vmatprep.subr.bf16.mxu0 0
        %3089 = vmatpush1.bf16.msra.mxu0 %v2828
        %3090 = vmatprep.subr.bf16.mxu0 0
        %3091 = vmatpush1.bf16.msra.mxu0 %v2829
        %3092 = vmatprep.subr.bf16.mxu0 0
        %3093 = vmatpush1.bf16.msra.mxu0 %v2830
        %3094 = vmatprep.subr.bf16.mxu0 0
        %3095 = vmatpush1.bf16.msra.mxu0 %v2831
        %3096 = vmatprep.subr.bf16.mxu0 0
        %3097 = vmatpush1.bf16.msra.mxu0 %v2832
        %3098 = vmatprep.subr.bf16.mxu0 0
        %3099 = vmatpush1.bf16.msra.mxu0 %v2833
        %3100 = vmatprep.subr.bf16.mxu0 0
        %3101 = vmatpush1.bf16.msra.mxu0 %v2834
        %3102 = vmatprep.subr.bf16.mxu0 0
        %3103 = vmatpush1.bf16.msra.mxu0 %v2835
        %3104 = vmatprep.subr.bf16.mxu0 0
        %3105 = vmatpush1.bf16.msra.mxu0 %v2836
        %3106 = vmatprep.subr.bf16.mxu0 0
        %3107 = vmatpush1.bf16.msra.mxu0 %v2837
        %3108 = vmatprep.subr.bf16.mxu0 0
        %3109 = vmatpush1.bf16.msra.mxu0 %v2838
        %3110 = vmatprep.subr.bf16.mxu0 0
        %3111 = vmatpush1.bf16.msra.mxu0 %v2839
        %3112 = vmatprep.mubr.bf16.mxu0 %v2057
        %3113 = vmatmul.mubr.bf16.gmra.mrb[0].mxu0 %v2056
        %v3114 = vpop.f32.mrb[0].mxu0
        %v3115 = vadd.f32 %v1670, %v3114
        %v3116 = vpop.f32.mrb[0].mxu0
        %v3117 = vpop.f32.mrb[0].mxu0
        %v3118 = vadd.f32 %v1670, %v3117
        %v3119 = vpop.f32.mrb[0].mxu0
        %3120 = vmatprep.mubr.bf16.mxu0 %v2073
        %3121 = vmatmul.mubr.bf16.gmra.mrb[0].mxu0 %v2072
        %v3122 = vpop.f32.mrb[0].mxu0
        %v3123 = vadd.f32 %v1670, %v3122
        %v3124 = vpop.f32.mrb[0].mxu0
        %v3125 = vpop.f32.mrb[0].mxu0
        %v3126 = vadd.f32 %v1670, %v3125
        %v3127 = vpop.f32.mrb[0].mxu0
        %3128 = vmatprep.mubr.bf16.mxu0 %v2089
        %3129 = vmatmul.mubr.bf16.gmra.mrb[0].mxu0 %v2088
        %v3130 = vpop.f32.mrb[0].mxu0
        %v3131 = vadd.f32 %v1670, %v3130
        %v3132 = vpop.f32.mrb[0].mxu0
        %v3133 = vpop.f32.mrb[0].mxu0
        %v3134 = vadd.f32 %v1670, %v3133
        %v3135 = vpop.f32.mrb[0].mxu0
        %3136 = vmatprep.mubr.bf16.mxu0 %v2105
        %3137 = vmatmul.mubr.bf16.gmra.mrb[0].mxu0 %v2104
        %v3138 = vpop.f32.mrb[0].mxu0
        %v3139 = vadd.f32 %v1670, %v3138
        %v3140 = vpop.f32.mrb[0].mxu0
        %v3141 = vpop.f32.mrb[0].mxu0
        %v3142 = vadd.f32 %v1670, %v3141
        %v3143 = vpop.f32.mrb[0].mxu0
        %3144 = vmatprep.mubr.bf16.mxu0 %v2121
        %3145 = vmatmul.mubr.bf16.gmra.mrb[0].mxu0 %v2120
        %v3146 = vpop.f32.mrb[0].mxu0
        %v3147 = vadd.f32 %v1670, %v3146
        %v3148 = vpop.f32.mrb[0].mxu0
        %v3149 = vpop.f32.mrb[0].mxu0
        %v3150 = vadd.f32 %v1670, %v3149
        %v3151 = vpop.f32.mrb[0].mxu0
        %3152 = vmatprep.mubr.bf16.mxu0 %v2137
        %3153 = vmatmul.mubr.bf16.gmra.mrb[0].mxu0 %v2136
        %v3154 = vpop.f32.mrb[0].mxu0
        %v3155 = vadd.f32 %v1670, %v3154
        %v3156 = vpop.f32.mrb[0].mxu0
        %v3157 = vpop.f32.mrb[0].mxu0
        %v3158 = vadd.f32 %v1670, %v3157
        %v3159 = vpop.f32.mrb[0].mxu0
        %3160 = vmatprep.mubr.bf16.mxu0 %v2153
        %3161 = vmatmul.mubr.bf16.gmra.mrb[0].mxu0 %v2152
        %v3162 = vpop.f32.mrb[0].mxu0
        %v3163 = vadd.f32 %v1670, %v3162
        %v3164 = vpop.f32.mrb[0].mxu0
        %v3165 = vpop.f32.mrb[0].mxu0
        %v3166 = vadd.f32 %v1670, %v3165
        %v3167 = vpop.f32.mrb[0].mxu0
        %3168 = vmatprep.mubr.bf16.mxu0 %v2169
        %3169 = vmatmul.mubr.bf16.gmra.mrb[0].mxu0 %v2168
        %v3170 = vpop.f32.mrb[0].mxu0
        %v3171 = vadd.f32 %v1670, %v3170
        %v3172 = vpop.f32.mrb[0].mxu0
        %v3173 = vpop.f32.mrb[0].mxu0
        %v3174 = vadd.f32 %v1670, %v3173
        %v3175 = vpop.f32.mrb[0].mxu0
        %3176 = vdwg.mxu0
        %3177 = vmatprep.subr.bf16.mxu0 0
        %3178 = vmatpush1.bf16.msra.mxu0 %v2840
        %3179 = vmatprep.subr.bf16.mxu0 0
        %3180 = vmatpush1.bf16.msra.mxu0 %v2841
        %3181 = vmatprep.subr.bf16.mxu0 0
        %3182 = vmatpush1.bf16.msra.mxu0 %v2842
        %3183 = vmatprep.subr.bf16.mxu0 0
        %3184 = vmatpush1.bf16.msra.mxu0 %v2843
        %3185 = vmatprep.subr.bf16.mxu0 0
        %3186 = vmatpush1.bf16.msra.mxu0 %v2844
        %3187 = vmatprep.subr.bf16.mxu0 0
        %3188 = vmatpush1.bf16.msra.mxu0 %v2845
        %3189 = vmatprep.subr.bf16.mxu0 0
        %3190 = vmatpush1.bf16.msra.mxu0 %v2846
        %3191 = vmatprep.subr.bf16.mxu0 0
        %3192 = vmatpush1.bf16.msra.mxu0 %v2847
        %3193 = vmatprep.subr.bf16.mxu0 0
        %3194 = vmatpush1.bf16.msra.mxu0 %v2848
        %3195 = vmatprep.subr.bf16.mxu0 0
        %3196 = vmatpush1.bf16.msra.mxu0 %v2849
        %3197 = vmatprep.subr.bf16.mxu0 0
        %3198 = vmatpush1.bf16.msra.mxu0 %v2850
        %3199 = vmatprep.subr.bf16.mxu0 0
        %3200 = vmatpush1.bf16.msra.mxu0 %v2851
        %3201 = vmatprep.subr.bf16.mxu0 0
        %3202 = vmatpush1.bf16.msra.mxu0 %v2852
        %3203 = vmatprep.subr.bf16.mxu0 0
        %3204 = vmatpush1.bf16.msra.mxu0 %v2853
        %3205 = vmatprep.subr.bf16.mxu0 0
        %3206 = vmatpush1.bf16.msra.mxu0 %v2854
        %3207 = vmatprep.subr.bf16.mxu0 0
        %3208 = vmatpush1.bf16.msra.mxu0 %v2855
        %3209 = vmatprep.mubr.bf16.mxu0 %v2059
        %3210 = vmatmul.mubr.bf16.gmra.mrb[0].mxu0 %v2058
        %v3211 = vpop.f32.mrb[0].mxu0
        %v3212 = vadd.f32 %v3115, %v3211
        %v3213 = vpop.f32.mrb[0].mxu0
        %v3214 = vpop.f32.mrb[0].mxu0
        %v3215 = vadd.f32 %v3118, %v3214
        %v3216 = vpop.f32.mrb[0].mxu0
        %3217 = vmatprep.mubr.bf16.mxu0 %v2075
        %3218 = vmatmul.mubr.bf16.gmra.mrb[0].mxu0 %v2074
        %v3219 = vpop.f32.mrb[0].mxu0
        %v3220 = vadd.f32 %v3123, %v3219
        %v3221 = vpop.f32.mrb[0].mxu0
        %v3222 = vpop.f32.mrb[0].mxu0
        %v3223 = vadd.f32 %v3126, %v3222
        %v3224 = vpop.f32.mrb[0].mxu0
        %3225 = vmatprep.mubr.bf16.mxu0 %v2091
        %3226 = vmatmul.mubr.bf16.gmra.mrb[0].mxu0 %v2090
        %v3227 = vpop.f32.mrb[0].mxu0
        %v3228 = vadd.f32 %v3131, %v3227
        %v3229 = vpop.f32.mrb[0].mxu0
        %v3230 = vpop.f32.mrb[0].mxu0
        %v3231 = vadd.f32 %v3134, %v3230
        %v3232 = vpop.f32.mrb[0].mxu0
        %3233 = vmatprep.mubr.bf16.mxu0 %v2107
        %3234 = vmatmul.mubr.bf16.gmra.mrb[0].mxu0 %v2106
        %v3235 = vpop.f32.mrb[0].mxu0
        %v3236 = vadd.f32 %v3139, %v3235
        %v3237 = vpop.f32.mrb[0].mxu0
        %v3238 = vpop.f32.mrb[0].mxu0
        %v3239 = vadd.f32 %v3142, %v3238
        %v3240 = vpop.f32.mrb[0].mxu0
        %3241 = vmatprep.mubr.bf16.mxu0 %v2123
        %3242 = vmatmul.mubr.bf16.gmra.mrb[0].mxu0 %v2122
        %v3243 = vpop.f32.mrb[0].mxu0
        %v3244 = vadd.f32 %v3147, %v3243
        %v3245 = vpop.f32.mrb[0].mxu0
        %v3246 = vpop.f32.mrb[0].mxu0
        %v3247 = vadd.f32 %v3150, %v3246
        %v3248 = vpop.f32.mrb[0].mxu0
        %3249 = vmatprep.mubr.bf16.mxu0 %v2139
        %3250 = vmatmul.mubr.bf16.gmra.mrb[0].mxu0 %v2138
        %v3251 = vpop.f32.mrb[0].mxu0
        %v3252 = vadd.f32 %v3155, %v3251
        %v3253 = vpop.f32.mrb[0].mxu0
        %v3254 = vpop.f32.mrb[0].mxu0
        %v3255 = vadd.f32 %v3158, %v3254
        %v3256 = vpop.f32.mrb[0].mxu0
        %3257 = vmatprep.mubr.bf16.mxu0 %v2155
        %3258 = vmatmul.mubr.bf16.gmra.mrb[0].mxu0 %v2154
        %v3259 = vpop.f32.mrb[0].mxu0
        %v3260 = vadd.f32 %v3163, %v3259
        %v3261 = vpop.f32.mrb[0].mxu0
        %v3262 = vpop.f32.mrb[0].mxu0
        %v3263 = vadd.f32 %v3166, %v3262
        %v3264 = vpop.f32.mrb[0].mxu0
        %3265 = vmatprep.mubr.bf16.mxu0 %v2171
        %3266 = vmatmul.mubr.bf16.gmra.mrb[0].mxu0 %v2170
        %v3267 = vpop.f32.mrb[0].mxu0
        %v3268 = vadd.f32 %v3171, %v3267
        %v3269 = vpop.f32.mrb[0].mxu0
        %v3270 = vpop.f32.mrb[0].mxu0
        %v3271 = vadd.f32 %v3174, %v3270
        %v3272 = vpop.f32.mrb[0].mxu0
        %3273 = vdwg.mxu0
        %3274 = vmatprep.subr.bf16.mxu0 0
        %3275 = vmatpush1.bf16.msra.mxu0 %v2856
        %3276 = vmatprep.subr.bf16.mxu0 0
        %3277 = vmatpush1.bf16.msra.mxu0 %v2857
        %3278 = vmatprep.subr.bf16.mxu0 0
        %3279 = vmatpush1.bf16.msra.mxu0 %v2858
        %3280 = vmatprep.subr.bf16.mxu0 0
        %3281 = vmatpush1.bf16.msra.mxu0 %v2859
        %3282 = vmatprep.subr.bf16.mxu0 0
        %3283 = vmatpush1.bf16.msra.mxu0 %v2860
        %3284 = vmatprep.subr.bf16.mxu0 0
        %3285 = vmatpush1.bf16.msra.mxu0 %v2861
        %3286 = vmatprep.subr.bf16.mxu0 0
        %3287 = vmatpush1.bf16.msra.mxu0 %v2862
        %3288 = vmatprep.subr.bf16.mxu0 0
        %3289 = vmatpush1.bf16.msra.mxu0 %v2863
        %3290 = vmatprep.subr.bf16.mxu0 0
        %3291 = vmatpush1.bf16.msra.mxu0 %v2864
        %3292 = vmatprep.subr.bf16.mxu0 0
        %3293 = vmatpush1.bf16.msra.mxu0 %v2865
        %3294 = vmatprep.subr.bf16.mxu0 0
        %3295 = vmatpush1.bf16.msra.mxu0 %v2866
        %3296 = vmatprep.subr.bf16.mxu0 0
        %3297 = vmatpush1.bf16.msra.mxu0 %v2867
        %3298 = vmatprep.subr.bf16.mxu0 0
        %3299 = vmatpush1.bf16.msra.mxu0 %v2868
        %3300 = vmatprep.subr.bf16.mxu0 0
        %3301 = vmatpush1.bf16.msra.mxu0 %v2869
        %3302 = vmatprep.subr.bf16.mxu0 0
        %3303 = vmatpush1.bf16.msra.mxu0 %v2870
        %3304 = vmatprep.subr.bf16.mxu0 0
        %3305 = vmatpush1.bf16.msra.mxu0 %v2871
        %3306 = vmatprep.mubr.bf16.mxu0 %v2061
        %3307 = vmatmul.mubr.bf16.gmra.mrb[0].mxu0 %v2060
        %v3308 = vpop.f32.mrb[0].mxu0
        %v3309 = vadd.f32 %v3212, %v3308
        %v3310 = vpop.f32.mrb[0].mxu0
        %v3311 = vpop.f32.mrb[0].mxu0
        %v3312 = vadd.f32 %v3215, %v3311
        %v3313 = vpop.f32.mrb[0].mxu0
        %3314 = vmatprep.mubr.bf16.mxu0 %v2077
        %3315 = vmatmul.mubr.bf16.gmra.mrb[0].mxu0 %v2076
        %v3316 = vpop.f32.mrb[0].mxu0
        %v3317 = vadd.f32 %v3220, %v3316
        %v3318 = vpop.f32.mrb[0].mxu0
        %v3319 = vpop.f32.mrb[0].mxu0
        %v3320 = vadd.f32 %v3223, %v3319
        %v3321 = vpop.f32.mrb[0].mxu0
        %3322 = vmatprep.mubr.bf16.mxu0 %v2093
        %3323 = vmatmul.mubr.bf16.gmra.mrb[0].mxu0 %v2092
        %v3324 = vpop.f32.mrb[0].mxu0
        %v3325 = vadd.f32 %v3228, %v3324
        %v3326 = vpop.f32.mrb[0].mxu0
        %v3327 = vpop.f32.mrb[0].mxu0
        %v3328 = vadd.f32 %v3231, %v3327
        %v3329 = vpop.f32.mrb[0].mxu0
        %3330 = vmatprep.mubr.bf16.mxu0 %v2109
        %3331 = vmatmul.mubr.bf16.gmra.mrb[0].mxu0 %v2108
        %v3332 = vpop.f32.mrb[0].mxu0
        %v3333 = vadd.f32 %v3236, %v3332
        %v3334 = vpop.f32.mrb[0].mxu0
        %v3335 = vpop.f32.mrb[0].mxu0
        %v3336 = vadd.f32 %v3239, %v3335
        %v3337 = vpop.f32.mrb[0].mxu0
        %3338 = vmatprep.mubr.bf16.mxu0 %v2125
        %3339 = vmatmul.mubr.bf16.gmra.mrb[0].mxu0 %v2124
        %v3340 = vpop.f32.mrb[0].mxu0
        %v3341 = vadd.f32 %v3244, %v3340
        %v3342 = vpop.f32.mrb[0].mxu0
        %v3343 = vpop.f32.mrb[0].mxu0
        %v3344 = vadd.f32 %v3247, %v3343
        %v3345 = vpop.f32.mrb[0].mxu0
        %3346 = vmatprep.mubr.bf16.mxu0 %v2141
        %3347 = vmatmul.mubr.bf16.gmra.mrb[0].mxu0 %v2140
        %v3348 = vpop.f32.mrb[0].mxu0
        %v3349 = vadd.f32 %v3252, %v3348
        %v3350 = vpop.f32.mrb[0].mxu0
        %v3351 = vpop.f32.mrb[0].mxu0
        %v3352 = vadd.f32 %v3255, %v3351
        %v3353 = vpop.f32.mrb[0].mxu0
        %3354 = vmatprep.mubr.bf16.mxu0 %v2157
        %3355 = vmatmul.mubr.bf16.gmra.mrb[0].mxu0 %v2156
        %v3356 = vpop.f32.mrb[0].mxu0
        %v3357 = vadd.f32 %v3260, %v3356
        %v3358 = vpop.f32.mrb[0].mxu0
        %v3359 = vpop.f32.mrb[0].mxu0
        %v3360 = vadd.f32 %v3263, %v3359
        %v3361 = vpop.f32.mrb[0].mxu0
        %3362 = vmatprep.mubr.bf16.mxu0 %v2173
        %3363 = vmatmul.mubr.bf16.gmra.mrb[0].mxu0 %v2172
        %v3364 = vpop.f32.mrb[0].mxu0
        %v3365 = vadd.f32 %v3268, %v3364
        %v3366 = vpop.f32.mrb[0].mxu0
        %v3367 = vpop.f32.mrb[0].mxu0
        %v3368 = vadd.f32 %v3271, %v3367
        %v3369 = vpop.f32.mrb[0].mxu0
        %3370 = vdwg.mxu0
        %3371 = vmatprep.subr.bf16.mxu0 0
        %3372 = vmatpush1.bf16.msra.mxu0 %v2872
        %3373 = vmatprep.subr.bf16.mxu0 0
        %3374 = vmatpush1.bf16.msra.mxu0 %v2873
        %3375 = vmatprep.subr.bf16.mxu0 0
        %3376 = vmatpush1.bf16.msra.mxu0 %v2874
        %3377 = vmatprep.subr.bf16.mxu0 0
        %3378 = vmatpush1.bf16.msra.mxu0 %v2875
        %3379 = vmatprep.subr.bf16.mxu0 0
        %3380 = vmatpush1.bf16.msra.mxu0 %v2876
        %3381 = vmatprep.subr.bf16.mxu0 0
        %3382 = vmatpush1.bf16.msra.mxu0 %v2877
        %3383 = vmatprep.subr.bf16.mxu0 0
        %3384 = vmatpush1.bf16.msra.mxu0 %v2878
        %3385 = vmatprep.subr.bf16.mxu0 0
        %3386 = vmatpush1.bf16.msra.mxu0 %v2879
        %3387 = vmatprep.subr.bf16.mxu0 0
        %3388 = vmatpush1.bf16.msra.mxu0 %v2880
        %3389 = vmatprep.subr.bf16.mxu0 0
        %3390 = vmatpush1.bf16.msra.mxu0 %v2881
        %3391 = vmatprep.subr.bf16.mxu0 0
        %3392 = vmatpush1.bf16.msra.mxu0 %v2882
        %3393 = vmatprep.subr.bf16.mxu0 0
        %3394 = vmatpush1.bf16.msra.mxu0 %v2883
        %3395 = vmatprep.subr.bf16.mxu0 0
        %3396 = vmatpush1.bf16.msra.mxu0 %v2884
        %3397 = vmatprep.subr.bf16.mxu0 0
        %3398 = vmatpush1.bf16.msra.mxu0 %v2885
        %3399 = vmatprep.subr.bf16.mxu0 0
        %3400 = vmatpush1.bf16.msra.mxu0 %v2886
        %3401 = vmatprep.subr.bf16.mxu0 0
        %3402 = vmatpush1.bf16.msra.mxu0 %v2887
        %3403 = vmatprep.mubr.bf16.mxu0 %v2063
        %3404 = vmatmul.mubr.bf16.gmra.mrb[0].mxu0 %v2062
        %v3405 = vpop.f32.mrb[0].mxu0
        %v3406 = vadd.f32 %v3309, %v3405
        %v3407 = vpop.f32.mrb[0].mxu0
        %v3408 = vpop.f32.mrb[0].mxu0
        %v3409 = vadd.f32 %v3312, %v3408
        %v3410 = vpop.f32.mrb[0].mxu0
        %3411 = vmatprep.mubr.bf16.mxu0 %v2079
        %3412 = vmatmul.mubr.bf16.gmra.mrb[0].mxu0 %v2078
        %v3413 = vpop.f32.mrb[0].mxu0
        %v3414 = vadd.f32 %v3317, %v3413
        %v3415 = vpop.f32.mrb[0].mxu0
        %v3416 = vpop.f32.mrb[0].mxu0
        %v3417 = vadd.f32 %v3320, %v3416
        %v3418 = vpop.f32.mrb[0].mxu0
        %3419 = vmatprep.mubr.bf16.mxu0 %v2095
        %3420 = vmatmul.mubr.bf16.gmra.mrb[0].mxu0 %v2094
        %v3421 = vpop.f32.mrb[0].mxu0
        %v3422 = vadd.f32 %v3325, %v3421
        %v3423 = vpop.f32.mrb[0].mxu0
        %v3424 = vpop.f32.mrb[0].mxu0
        %v3425 = vadd.f32 %v3328, %v3424
        %v3426 = vpop.f32.mrb[0].mxu0
        %3427 = vmatprep.mubr.bf16.mxu0 %v2111
        %3428 = vmatmul.mubr.bf16.gmra.mrb[0].mxu0 %v2110
        %v3429 = vpop.f32.mrb[0].mxu0
        %v3430 = vadd.f32 %v3333, %v3429
        %v3431 = vpop.f32.mrb[0].mxu0
        %v3432 = vpop.f32.mrb[0].mxu0
        %v3433 = vadd.f32 %v3336, %v3432
        %v3434 = vpop.f32.mrb[0].mxu0
        %3435 = vmatprep.mubr.bf16.mxu0 %v2127
        %3436 = vmatmul.mubr.bf16.gmra.mrb[0].mxu0 %v2126
        %v3437 = vpop.f32.mrb[0].mxu0
        %v3438 = vadd.f32 %v3341, %v3437
        %v3439 = vpop.f32.mrb[0].mxu0
        %v3440 = vpop.f32.mrb[0].mxu0
        %v3441 = vadd.f32 %v3344, %v3440
        %v3442 = vpop.f32.mrb[0].mxu0
        %3443 = vmatprep.mubr.bf16.mxu0 %v2143
        %3444 = vmatmul.mubr.bf16.gmra.mrb[0].mxu0 %v2142
        %v3445 = vpop.f32.mrb[0].mxu0
        %v3446 = vadd.f32 %v3349, %v3445
        %v3447 = vpop.f32.mrb[0].mxu0
        %v3448 = vpop.f32.mrb[0].mxu0
        %v3449 = vadd.f32 %v3352, %v3448
        %v3450 = vpop.f32.mrb[0].mxu0
        %3451 = vmatprep.mubr.bf16.mxu0 %v2159
        %3452 = vmatmul.mubr.bf16.gmra.mrb[0].mxu0 %v2158
        %v3453 = vpop.f32.mrb[0].mxu0
        %v3454 = vadd.f32 %v3357, %v3453
        %v3455 = vpop.f32.mrb[0].mxu0
        %v3456 = vpop.f32.mrb[0].mxu0
        %v3457 = vadd.f32 %v3360, %v3456
        %v3458 = vpop.f32.mrb[0].mxu0
        %3459 = vmatprep.mubr.bf16.mxu0 %v2175
        %3460 = vmatmul.mubr.bf16.gmra.mrb[0].mxu0 %v2174
        %v3461 = vpop.f32.mrb[0].mxu0
        %v3462 = vadd.f32 %v3365, %v3461
        %v3463 = vpop.f32.mrb[0].mxu0
        %v3464 = vpop.f32.mrb[0].mxu0
        %v3465 = vadd.f32 %v3368, %v3464
        %v3466 = vpop.f32.mrb[0].mxu0
        %3467 = vdwg.mxu0
        %3468 = vmatprep.subr.bf16.mxu0 0
        %3469 = vmatpush1.bf16.msra.mxu0 %v2888
        %3470 = vmatprep.subr.bf16.mxu0 0
        %3471 = vmatpush1.bf16.msra.mxu0 %v2889
        %3472 = vmatprep.subr.bf16.mxu0 0
        %3473 = vmatpush1.bf16.msra.mxu0 %v2890
        %3474 = vmatprep.subr.bf16.mxu0 0
        %3475 = vmatpush1.bf16.msra.mxu0 %v2891
        %3476 = vmatprep.subr.bf16.mxu0 0
        %3477 = vmatpush1.bf16.msra.mxu0 %v2892
        %3478 = vmatprep.subr.bf16.mxu0 0
        %3479 = vmatpush1.bf16.msra.mxu0 %v2893
        %3480 = vmatprep.subr.bf16.mxu0 0
        %3481 = vmatpush1.bf16.msra.mxu0 %v2894
        %3482 = vmatprep.subr.bf16.mxu0 0
        %3483 = vmatpush1.bf16.msra.mxu0 %v2895
        %3484 = vmatprep.subr.bf16.mxu0 0
        %3485 = vmatpush1.bf16.msra.mxu0 %v2896
        %3486 = vmatprep.subr.bf16.mxu0 0
        %3487 = vmatpush1.bf16.msra.mxu0 %v2897
        %3488 = vmatprep.subr.bf16.mxu0 0
        %3489 = vmatpush1.bf16.msra.mxu0 %v2898
        %3490 = vmatprep.subr.bf16.mxu0 0
        %3491 = vmatpush1.bf16.msra.mxu0 %v2899
        %3492 = vmatprep.subr.bf16.mxu0 0
        %3493 = vmatpush1.bf16.msra.mxu0 %v2900
        %3494 = vmatprep.subr.bf16.mxu0 0
        %3495 = vmatpush1.bf16.msra.mxu0 %v2901
        %3496 = vmatprep.subr.bf16.mxu0 0
        %3497 = vmatpush1.bf16.msra.mxu0 %v2902
        %3498 = vmatprep.subr.bf16.mxu0 0
        %3499 = vmatpush1.bf16.msra.mxu0 %v2903
        %3500 = vmatprep.mubr.bf16.mxu0 %v2065
        %3501 = vmatmul.mubr.bf16.gmra.mrb[0].mxu0 %v2064
        %v3502 = vpop.f32.mrb[0].mxu0
        %v3503 = vadd.f32 %v3406, %v3502
        %v3504 = vpop.f32.mrb[0].mxu0
        %v3505 = vpop.f32.mrb[0].mxu0
        %v3506 = vadd.f32 %v3409, %v3505
        %v3507 = vpop.f32.mrb[0].mxu0
        %3508 = vmatprep.mubr.bf16.mxu0 %v2081
        %3509 = vmatmul.mubr.bf16.gmra.mrb[0].mxu0 %v2080
        %v3510 = vpop.f32.mrb[0].mxu0
        %v3511 = vadd.f32 %v3414, %v3510
        %v3512 = vpop.f32.mrb[0].mxu0
        %v3513 = vpop.f32.mrb[0].mxu0
        %v3514 = vadd.f32 %v3417, %v3513
        %v3515 = vpop.f32.mrb[0].mxu0
        %3516 = vmatprep.mubr.bf16.mxu0 %v2097
        %3517 = vmatmul.mubr.bf16.gmra.mrb[0].mxu0 %v2096
        %v3518 = vpop.f32.mrb[0].mxu0
        %v3519 = vadd.f32 %v3422, %v3518
        %v3520 = vpop.f32.mrb[0].mxu0
        %v3521 = vpop.f32.mrb[0].mxu0
        %v3522 = vadd.f32 %v3425, %v3521
        %v3523 = vpop.f32.mrb[0].mxu0
        %3524 = vmatprep.mubr.bf16.mxu0 %v2113
        %3525 = vmatmul.mubr.bf16.gmra.mrb[0].mxu0 %v2112
        %v3526 = vpop.f32.mrb[0].mxu0
        %v3527 = vadd.f32 %v3430, %v3526
        %v3528 = vpop.f32.mrb[0].mxu0
        %v3529 = vpop.f32.mrb[0].mxu0
        %v3530 = vadd.f32 %v3433, %v3529
        %v3531 = vpop.f32.mrb[0].mxu0
        %3532 = vmatprep.mubr.bf16.mxu0 %v2129
        %3533 = vmatmul.mubr.bf16.gmra.mrb[0].mxu0 %v2128
        %v3534 = vpop.f32.mrb[0].mxu0
        %v3535 = vadd.f32 %v3438, %v3534
        %v3536 = vpop.f32.mrb[0].mxu0
        %v3537 = vpop.f32.mrb[0].mxu0
        %v3538 = vadd.f32 %v3441, %v3537
        %v3539 = vpop.f32.mrb[0].mxu0
        %3540 = vmatprep.mubr.bf16.mxu0 %v2145
        %3541 = vmatmul.mubr.bf16.gmra.mrb[0].mxu0 %v2144
        %v3542 = vpop.f32.mrb[0].mxu0
        %v3543 = vadd.f32 %v3446, %v3542
        %v3544 = vpop.f32.mrb[0].mxu0
        %v3545 = vpop.f32.mrb[0].mxu0
        %v3546 = vadd.f32 %v3449, %v3545
        %v3547 = vpop.f32.mrb[0].mxu0
        %3548 = vmatprep.mubr.bf16.mxu0 %v2161
        %3549 = vmatmul.mubr.bf16.gmra.mrb[0].mxu0 %v2160
        %v3550 = vpop.f32.mrb[0].mxu0
        %v3551 = vadd.f32 %v3454, %v3550
        %v3552 = vpop.f32.mrb[0].mxu0
        %v3553 = vpop.f32.mrb[0].mxu0
        %v3554 = vadd.f32 %v3457, %v3553
        %v3555 = vpop.f32.mrb[0].mxu0
        %3556 = vmatprep.mubr.bf16.mxu0 %v2177
        %3557 = vmatmul.mubr.bf16.gmra.mrb[0].mxu0 %v2176
        %v3558 = vpop.f32.mrb[0].mxu0
        %v3559 = vadd.f32 %v3462, %v3558
        %v3560 = vpop.f32.mrb[0].mxu0
        %v3561 = vpop.f32.mrb[0].mxu0
        %v3562 = vadd.f32 %v3465, %v3561
        %v3563 = vpop.f32.mrb[0].mxu0
        %3564 = vdwg.mxu0
        %3565 = vmatprep.subr.bf16.mxu0 0
        %3566 = vmatpush1.bf16.msra.mxu0 %v2904
        %3567 = vmatprep.subr.bf16.mxu0 0
        %3568 = vmatpush1.bf16.msra.mxu0 %v2905
        %3569 = vmatprep.subr.bf16.mxu0 0
        %3570 = vmatpush1.bf16.msra.mxu0 %v2906
        %3571 = vmatprep.subr.bf16.mxu0 0
        %3572 = vmatpush1.bf16.msra.mxu0 %v2907
        %3573 = vmatprep.subr.bf16.mxu0 0
        %3574 = vmatpush1.bf16.msra.mxu0 %v2908
        %3575 = vmatprep.subr.bf16.mxu0 0
        %3576 = vmatpush1.bf16.msra.mxu0 %v2909
        %3577 = vmatprep.subr.bf16.mxu0 0
        %3578 = vmatpush1.bf16.msra.mxu0 %v2910
        %3579 = vmatprep.subr.bf16.mxu0 0
        %3580 = vmatpush1.bf16.msra.mxu0 %v2911
        %3581 = vmatprep.subr.bf16.mxu0 0
        %3582 = vmatpush1.bf16.msra.mxu0 %v2912
        %3583 = vmatprep.subr.bf16.mxu0 0
        %3584 = vmatpush1.bf16.msra.mxu0 %v2913
        %3585 = vmatprep.subr.bf16.mxu0 0
        %3586 = vmatpush1.bf16.msra.mxu0 %v2914
        %3587 = vmatprep.subr.bf16.mxu0 0
        %3588 = vmatpush1.bf16.msra.mxu0 %v2915
        %3589 = vmatprep.subr.bf16.mxu0 0
        %3590 = vmatpush1.bf16.msra.mxu0 %v2916
        %3591 = vmatprep.subr.bf16.mxu0 0
        %3592 = vmatpush1.bf16.msra.mxu0 %v2917
        %3593 = vmatprep.subr.bf16.mxu0 0
        %3594 = vmatpush1.bf16.msra.mxu0 %v2918
        %3595 = vmatprep.subr.bf16.mxu0 0
        %3596 = vmatpush1.bf16.msra.mxu0 %v2919
        %3597 = vmatprep.mubr.bf16.mxu0 %v2067
        %3598 = vmatmul.mubr.bf16.gmra.mrb[0].mxu0 %v2066
        %v3599 = vpop.f32.mrb[0].mxu0
        %v3600 = vadd.f32 %v3503, %v3599
        %v3601 = vpop.f32.mrb[0].mxu0
        %v3602 = vpop.f32.mrb[0].mxu0
        %v3603 = vadd.f32 %v3506, %v3602
        %v3604 = vpop.f32.mrb[0].mxu0
        %3605 = vmatprep.mubr.bf16.mxu0 %v2083
        %3606 = vmatmul.mubr.bf16.gmra.mrb[0].mxu0 %v2082
        %v3607 = vpop.f32.mrb[0].mxu0
        %v3608 = vadd.f32 %v3511, %v3607
        %v3609 = vpop.f32.mrb[0].mxu0
        %v3610 = vpop.f32.mrb[0].mxu0
        %v3611 = vadd.f32 %v3514, %v3610
        %v3612 = vpop.f32.mrb[0].mxu0
        %3613 = vmatprep.mubr.bf16.mxu0 %v2099
        %3614 = vmatmul.mubr.bf16.gmra.mrb[0].mxu0 %v2098
        %v3615 = vpop.f32.mrb[0].mxu0
        %v3616 = vadd.f32 %v3519, %v3615
        %v3617 = vpop.f32.mrb[0].mxu0
        %v3618 = vpop.f32.mrb[0].mxu0
        %v3619 = vadd.f32 %v3522, %v3618
        %v3620 = vpop.f32.mrb[0].mxu0
        %3621 = vmatprep.mubr.bf16.mxu0 %v2115
        %3622 = vmatmul.mubr.bf16.gmra.mrb[0].mxu0 %v2114
        %v3623 = vpop.f32.mrb[0].mxu0
        %v3624 = vadd.f32 %v3527, %v3623
        %v3625 = vpop.f32.mrb[0].mxu0
        %v3626 = vpop.f32.mrb[0].mxu0
        %v3627 = vadd.f32 %v3530, %v3626
        %v3628 = vpop.f32.mrb[0].mxu0
        %3629 = vmatprep.mubr.bf16.mxu0 %v2131
        %3630 = vmatmul.mubr.bf16.gmra.mrb[0].mxu0 %v2130
        %v3631 = vpop.f32.mrb[0].mxu0
        %v3632 = vadd.f32 %v3535, %v3631
        %v3633 = vpop.f32.mrb[0].mxu0
        %v3634 = vpop.f32.mrb[0].mxu0
        %v3635 = vadd.f32 %v3538, %v3634
        %v3636 = vpop.f32.mrb[0].mxu0
        %3637 = vmatprep.mubr.bf16.mxu0 %v2147
        %3638 = vmatmul.mubr.bf16.gmra.mrb[0].mxu0 %v2146
        %v3639 = vpop.f32.mrb[0].mxu0
        %v3640 = vadd.f32 %v3543, %v3639
        %v3641 = vpop.f32.mrb[0].mxu0
        %v3642 = vpop.f32.mrb[0].mxu0
        %v3643 = vadd.f32 %v3546, %v3642
        %v3644 = vpop.f32.mrb[0].mxu0
        %3645 = vmatprep.mubr.bf16.mxu0 %v2163
        %3646 = vmatmul.mubr.bf16.gmra.mrb[0].mxu0 %v2162
        %v3647 = vpop.f32.mrb[0].mxu0
        %v3648 = vadd.f32 %v3551, %v3647
        %v3649 = vpop.f32.mrb[0].mxu0
        %v3650 = vpop.f32.mrb[0].mxu0
        %v3651 = vadd.f32 %v3554, %v3650
        %v3652 = vpop.f32.mrb[0].mxu0
        %3653 = vmatprep.mubr.bf16.mxu0 %v2179
        %3654 = vmatmul.mubr.bf16.gmra.mrb[0].mxu0 %v2178
        %v3655 = vpop.f32.mrb[0].mxu0
        %v3656 = vadd.f32 %v3559, %v3655
        %v3657 = vpop.f32.mrb[0].mxu0
        %v3658 = vpop.f32.mrb[0].mxu0
        %v3659 = vadd.f32 %v3562, %v3658
        %v3660 = vpop.f32.mrb[0].mxu0
        %3661 = vdwg.mxu0
        %3662 = vmatprep.subr.bf16.mxu0 0
        %3663 = vmatpush1.bf16.msra.mxu0 %v2920
        %3664 = vmatprep.subr.bf16.mxu0 0
        %3665 = vmatpush1.bf16.msra.mxu0 %v2921
        %3666 = vmatprep.subr.bf16.mxu0 0
        %3667 = vmatpush1.bf16.msra.mxu0 %v2922
        %3668 = vmatprep.subr.bf16.mxu0 0
        %3669 = vmatpush1.bf16.msra.mxu0 %v2923
        %3670 = vmatprep.subr.bf16.mxu0 0
        %3671 = vmatpush1.bf16.msra.mxu0 %v2924
        %3672 = vmatprep.subr.bf16.mxu0 0
        %3673 = vmatpush1.bf16.msra.mxu0 %v2925
        %3674 = vmatprep.subr.bf16.mxu0 0
        %3675 = vmatpush1.bf16.msra.mxu0 %v2926
        %3676 = vmatprep.subr.bf16.mxu0 0
        %3677 = vmatpush1.bf16.msra.mxu0 %v2927
        %3678 = vmatprep.subr.bf16.mxu0 0
        %3679 = vmatpush1.bf16.msra.mxu0 %v2928
        %3680 = vmatprep.subr.bf16.mxu0 0
        %3681 = vmatpush1.bf16.msra.mxu0 %v2929
        %3682 = vmatprep.subr.bf16.mxu0 0
        %3683 = vmatpush1.bf16.msra.mxu0 %v2930
        %3684 = vmatprep.subr.bf16.mxu0 0
        %3685 = vmatpush1.bf16.msra.mxu0 %v2931
        %3686 = vmatprep.subr.bf16.mxu0 0
        %3687 = vmatpush1.bf16.msra.mxu0 %v2932
        %3688 = vmatprep.subr.bf16.mxu0 0
        %3689 = vmatpush1.bf16.msra.mxu0 %v2933
        %3690 = vmatprep.subr.bf16.mxu0 0
        %3691 = vmatpush1.bf16.msra.mxu0 %v2934
        %3692 = vmatprep.subr.bf16.mxu0 0
        %3693 = vmatpush1.bf16.msra.mxu0 %v2935
        %3694 = vmatprep.mubr.bf16.mxu0 %v2069
        %3695 = vmatmul.mubr.bf16.gmra.mrb[0].mxu0 %v2068
        %v3696 = vpop.f32.mrb[0].mxu0
        %v3697 = vadd.f32 %v3600, %v3696
        %v3698 = vpop.f32.mrb[0].mxu0
        %v3699 = vpop.f32.mrb[0].mxu0
        %v3700 = vadd.f32 %v3603, %v3699
        %v3701 = vpop.f32.mrb[0].mxu0
        %3702 = vmatprep.mubr.bf16.mxu0 %v2085
        %3703 = vmatmul.mubr.bf16.gmra.mrb[0].mxu0 %v2084
        %v3704 = vpop.f32.mrb[0].mxu0
        %v3705 = vadd.f32 %v3608, %v3704
        %v3706 = vpop.f32.mrb[0].mxu0
        %v3707 = vpop.f32.mrb[0].mxu0
        %v3708 = vadd.f32 %v3611, %v3707
        %v3709 = vpop.f32.mrb[0].mxu0
        %3710 = vmatprep.mubr.bf16.mxu0 %v2101
        %3711 = vmatmul.mubr.bf16.gmra.mrb[0].mxu0 %v2100
        %v3712 = vpop.f32.mrb[0].mxu0
        %v3713 = vadd.f32 %v3616, %v3712
        %v3714 = vpop.f32.mrb[0].mxu0
        %v3715 = vpop.f32.mrb[0].mxu0
        %v3716 = vadd.f32 %v3619, %v3715
        %v3717 = vpop.f32.mrb[0].mxu0
        %3718 = vmatprep.mubr.bf16.mxu0 %v2117
        %3719 = vmatmul.mubr.bf16.gmra.mrb[0].mxu0 %v2116
        %v3720 = vpop.f32.mrb[0].mxu0
        %v3721 = vadd.f32 %v3624, %v3720
        %v3722 = vpop.f32.mrb[0].mxu0
        %v3723 = vpop.f32.mrb[0].mxu0
        %v3724 = vadd.f32 %v3627, %v3723
        %v3725 = vpop.f32.mrb[0].mxu0
        %3726 = vmatprep.mubr.bf16.mxu0 %v2133
        %3727 = vmatmul.mubr.bf16.gmra.mrb[0].mxu0 %v2132
        %v3728 = vpop.f32.mrb[0].mxu0
        %v3729 = vadd.f32 %v3632, %v3728
        %v3730 = vpop.f32.mrb[0].mxu0
        %v3731 = vpop.f32.mrb[0].mxu0
        %v3732 = vadd.f32 %v3635, %v3731
        %v3733 = vpop.f32.mrb[0].mxu0
        %3734 = vmatprep.mubr.bf16.mxu0 %v2149
        %3735 = vmatmul.mubr.bf16.gmra.mrb[0].mxu0 %v2148
        %v3736 = vpop.f32.mrb[0].mxu0
        %v3737 = vadd.f32 %v3640, %v3736
        %v3738 = vpop.f32.mrb[0].mxu0
        %v3739 = vpop.f32.mrb[0].mxu0
        %v3740 = vadd.f32 %v3643, %v3739
        %v3741 = vpop.f32.mrb[0].mxu0
        %3742 = vmatprep.mubr.bf16.mxu0 %v2165
        %3743 = vmatmul.mubr.bf16.gmra.mrb[0].mxu0 %v2164
        %v3744 = vpop.f32.mrb[0].mxu0
        %v3745 = vadd.f32 %v3648, %v3744
        %v3746 = vpop.f32.mrb[0].mxu0
        %v3747 = vpop.f32.mrb[0].mxu0
        %v3748 = vadd.f32 %v3651, %v3747
        %v3749 = vpop.f32.mrb[0].mxu0
        %3750 = vmatprep.mubr.bf16.mxu0 %v2181
        %3751 = vmatmul.mubr.bf16.gmra.mrb[0].mxu0 %v2180
        %v3752 = vpop.f32.mrb[0].mxu0
        %v3753 = vadd.f32 %v3656, %v3752
        %v3754 = vpop.f32.mrb[0].mxu0
        %v3755 = vpop.f32.mrb[0].mxu0
        %v3756 = vadd.f32 %v3659, %v3755
        %v3757 = vpop.f32.mrb[0].mxu0
        %3758 = vdwg.mxu0
        %3759 = vmatprep.subr.bf16.mxu0 0
        %3760 = vmatpush1.bf16.msra.mxu0 %v2936
        %3761 = vmatprep.subr.bf16.mxu0 0
        %3762 = vmatpush1.bf16.msra.mxu0 %v2937
        %3763 = vmatprep.subr.bf16.mxu0 0
        %3764 = vmatpush1.bf16.msra.mxu0 %v2938
        %3765 = vmatprep.subr.bf16.mxu0 0
        %3766 = vmatpush1.bf16.msra.mxu0 %v2939
        %3767 = vmatprep.subr.bf16.mxu0 0
        %3768 = vmatpush1.bf16.msra.mxu0 %v2940
        %3769 = vmatprep.subr.bf16.mxu0 0
        %3770 = vmatpush1.bf16.msra.mxu0 %v2941
        %3771 = vmatprep.subr.bf16.mxu0 0
        %3772 = vmatpush1.bf16.msra.mxu0 %v2942
        %3773 = vmatprep.subr.bf16.mxu0 0
        %3774 = vmatpush1.bf16.msra.mxu0 %v2943
        %3775 = vmatprep.subr.bf16.mxu0 0
        %3776 = vmatpush1.bf16.msra.mxu0 %v2944
        %3777 = vmatprep.subr.bf16.mxu0 0
        %3778 = vmatpush1.bf16.msra.mxu0 %v2945
        %3779 = vmatprep.subr.bf16.mxu0 0
        %3780 = vmatpush1.bf16.msra.mxu0 %v2946
        %3781 = vmatprep.subr.bf16.mxu0 0
        %3782 = vmatpush1.bf16.msra.mxu0 %v2947
        %3783 = vmatprep.subr.bf16.mxu0 0
        %3784 = vmatpush1.bf16.msra.mxu0 %v2948
        %3785 = vmatprep.subr.bf16.mxu0 0
        %3786 = vmatpush1.bf16.msra.mxu0 %v2949
        %3787 = vmatprep.subr.bf16.mxu0 0
        %3788 = vmatpush1.bf16.msra.mxu0 %v2950
        %3789 = vmatprep.subr.bf16.mxu0 0
        %3790 = vmatpush1.bf16.msra.mxu0 %v2951
        %3791 = vmatprep.mubr.bf16.mxu0 %v2071
        %3792 = vmatmul.mubr.bf16.gmra.mrb[0].mxu0 %v2070
        %v3793 = vpop.f32.mrb[0].mxu0
        %v3794 = vadd.f32 %v3697, %v3793
        %v3795 = vpop.f32.mrb[0].mxu0
        %v3796 = vpop.f32.mrb[0].mxu0
        %v3797 = vadd.f32 %v3700, %v3796
        %v3798 = vpop.f32.mrb[0].mxu0
        %3799 = vmatprep.mubr.bf16.mxu0 %v2087
        %3800 = vmatmul.mubr.bf16.gmra.mrb[0].mxu0 %v2086
        %v3801 = vpop.f32.mrb[0].mxu0
        %v3802 = vadd.f32 %v3705, %v3801
        %v3803 = vpop.f32.mrb[0].mxu0
        %v3804 = vpop.f32.mrb[0].mxu0
        %v3805 = vadd.f32 %v3708, %v3804
        %v3806 = vpop.f32.mrb[0].mxu0
        %3807 = vmatprep.mubr.bf16.mxu0 %v2103
        %3808 = vmatmul.mubr.bf16.gmra.mrb[0].mxu0 %v2102
        %v3809 = vpop.f32.mrb[0].mxu0
        %v3810 = vadd.f32 %v3713, %v3809
        %v3811 = vpop.f32.mrb[0].mxu0
        %v3812 = vpop.f32.mrb[0].mxu0
        %v3813 = vadd.f32 %v3716, %v3812
        %v3814 = vpop.f32.mrb[0].mxu0
        %3815 = vmatprep.mubr.bf16.mxu0 %v2119
        %3816 = vmatmul.mubr.bf16.gmra.mrb[0].mxu0 %v2118
        %v3817 = vpop.f32.mrb[0].mxu0
        %v3818 = vadd.f32 %v3721, %v3817
        %v3819 = vpop.f32.mrb[0].mxu0
        %v3820 = vpop.f32.mrb[0].mxu0
        %v3821 = vadd.f32 %v3724, %v3820
        %v3822 = vpop.f32.mrb[0].mxu0
        %3823 = vmatprep.mubr.bf16.mxu0 %v2135
        %3824 = vmatmul.mubr.bf16.gmra.mrb[0].mxu0 %v2134
        %v3825 = vpop.f32.mrb[0].mxu0
        %v3826 = vadd.f32 %v3729, %v3825
        %v3827 = vpop.f32.mrb[0].mxu0
        %v3828 = vpop.f32.mrb[0].mxu0
        %v3829 = vadd.f32 %v3732, %v3828
        %v3830 = vpop.f32.mrb[0].mxu0
        %3831 = vmatprep.mubr.bf16.mxu0 %v2151
        %3832 = vmatmul.mubr.bf16.gmra.mrb[0].mxu0 %v2150
        %v3833 = vpop.f32.mrb[0].mxu0
        %v3834 = vadd.f32 %v3737, %v3833
        %v3835 = vpop.f32.mrb[0].mxu0
        %v3836 = vpop.f32.mrb[0].mxu0
        %v3837 = vadd.f32 %v3740, %v3836
        %v3838 = vpop.f32.mrb[0].mxu0
        %3839 = vmatprep.mubr.bf16.mxu0 %v2167
        %3840 = vmatmul.mubr.bf16.gmra.mrb[0].mxu0 %v2166
        %v3841 = vpop.f32.mrb[0].mxu0
        %v3842 = vadd.f32 %v3745, %v3841
        %v3843 = vpop.f32.mrb[0].mxu0
        %v3844 = vpop.f32.mrb[0].mxu0
        %v3845 = vadd.f32 %v3748, %v3844
        %v3846 = vpop.f32.mrb[0].mxu0
        %3847 = vmatprep.mubr.bf16.mxu0 %v2183
        %3848 = vmatmul.mubr.bf16.gmra.mrb[0].mxu0 %v2182
        %v3849 = vpop.f32.mrb[0].mxu0
        %v3850 = vadd.f32 %v3753, %v3849
        %v3851 = vpop.f32.mrb[0].mxu0
        %v3852 = vpop.f32.mrb[0].mxu0
        %v3853 = vadd.f32 %v3756, %v3852
        %v3854 = vpop.f32.mrb[0].mxu0
        %3855 = vdwg.mxu0
        %v3856 = vmax.f32 %v3794, 0.0
        %v3857 = vmax.f32 %v3797, 0.0
        %v3858 = vmax.f32 %v3802, 0.0
        %v3859 = vmax.f32 %v3805, 0.0
        %v3860 = vmax.f32 %v3810, 0.0
        %v3861 = vmax.f32 %v3813, 0.0
        %v3862 = vmax.f32 %v3818, 0.0
        %v3863 = vmax.f32 %v3821, 0.0
        %v3864 = vmax.f32 %v3826, 0.0
        %v3865 = vmax.f32 %v3829, 0.0
        %v3866 = vmax.f32 %v3834, 0.0
        %v3867 = vmax.f32 %v3837, 0.0
        %v3868 = vmax.f32 %v3842, 0.0
        %v3869 = vmax.f32 %v3845, 0.0
        %v3870 = vmax.f32 %v3850, 0.0
        %v3871 = vmax.f32 %v3853, 0.0
        %v3872 = vpack.c.bf16 %v3857, %v3856
        %v3873 = vpack.c.bf16 %v3859, %v3858
        %v3874 = vpack.c.bf16 %v3861, %v3860
        %v3875 = vpack.c.bf16 %v3863, %v3862
        %v3876 = vpack.c.bf16 %v3865, %v3864
        %v3877 = vpack.c.bf16 %v3867, %v3866
        %v3878 = vpack.c.bf16 %v3869, %v3868
        %v3879 = vpack.c.bf16 %v3871, %v3870
        %v3888 = vunpack.c.l.b16 %v3872
        %v3889 = vunpack.c.h.b16 %v3872
        %v3890 = vunpack.c.l.b16 %v3873
        %v3891 = vunpack.c.h.b16 %v3873
        %v3892 = vunpack.c.l.b16 %v3874
        %v3893 = vunpack.c.h.b16 %v3874
        %v3894 = vunpack.c.l.b16 %v3875
        %v3895 = vunpack.c.h.b16 %v3875
        %v3896 = vunpack.c.l.b16 %v3876
        %v3897 = vunpack.c.h.b16 %v3876
        %v3898 = vunpack.c.l.b16 %v3877
        %v3899 = vunpack.c.h.b16 %v3877
        %v3900 = vunpack.c.l.b16 %v3878
        %v3901 = vunpack.c.h.b16 %v3878
        %v3902 = vunpack.c.l.b16 %v3879
        %v3903 = vunpack.c.h.b16 %v3879
        %v3904 = vpack.c.b16 %v3888, %v3888
        %v3905 = vpack.c.b16 %v3889, %v3889
        %v3906 = vpack.c.b16 %v3890, %v3890
        %v3907 = vpack.c.b16 %v3891, %v3891
        %v3908 = vpack.c.b16 %v3892, %v3892
        %v3909 = vpack.c.b16 %v3893, %v3893
        %v3910 = vpack.c.b16 %v3894, %v3894
        %v3911 = vpack.c.b16 %v3895, %v3895
        %v3912 = vpack.c.b16 %v3896, %v3896
        %v3913 = vpack.c.b16 %v3897, %v3897
        %v3914 = vpack.c.b16 %v3898, %v3898
        %v3915 = vpack.c.b16 %v3899, %v3899
        %v3916 = vpack.c.b16 %v3900, %v3900
        %v3917 = vpack.c.b16 %v3901, %v3901
        %v3918 = vpack.c.b16 %v3902, %v3902
        %v3919 = vpack.c.b16 %v3903, %v3903
        %3936 = vst [vmem:[%s1268] sm:$0xf] %v3904
        %3937 = vst [vmem:[%s1268 + $0x4] sm:$0xf] %v3905
        %3938 = vst [vmem:[%s1268 + $0x8] sm:$0xf] %v3906
        %3939 = vst [vmem:[%s1268 + $0xc] sm:$0xf] %v3907
        %3940 = vst [vmem:[%s1268 + $0x10] sm:$0xf] %v3908
        %3941 = vst [vmem:[%s1268 + $0x14] sm:$0xf] %v3909
        %3942 = vst [vmem:[%s1268 + $0x18] sm:$0xf] %v3910
        %3943 = vst [vmem:[%s1268 + $0x1c] sm:$0xf] %v3911
        %3944 = vst [vmem:[%s1268 + $0x20] sm:$0xf] %v3912
        %3945 = vst [vmem:[%s1268 + $0x24] sm:$0xf] %v3913
        %3946 = vst [vmem:[%s1268 + $0x28] sm:$0xf] %v3914
        %3947 = vst [vmem:[%s1268 + $0x2c] sm:$0xf] %v3915
        %3948 = vst [vmem:[%s1268 + $0x30] sm:$0xf] %v3916
        %3949 = vst [vmem:[%s1268 + $0x34] sm:$0xf] %v3917
        %3950 = vst [vmem:[%s1268 + $0x38] sm:$0xf] %v3918
        %3951 = vst [vmem:[%s1268 + $0x3c] sm:$0xf] %v3919
        %s3952 = sand.u32 %s114, 1
        %s3953 = sand.u32 %s114, 1
        %s3954 = smul.addr %s3953, 64
        %s3955 = scalar_lea.vmem [#allocation3], %s3954
        // Predicated region
        $region74: #{discriminator_forward.6} parent=68 // pred_check
          %p3956 = pneg %p124
        $region75: #{discriminator_forward.6} parent=68 // pred_check_branch
          %3958 = sbr.rel (%p3956) target = $region77
        $region76: #{discriminator_forward.6} parent=68 // pred_region
          %s3959 = smul.u32 16, %s18
          %s3960 = smul.addr %s3959, 2
          %s3961 = sadd.s32 %s19, %s3960
          %s3962 = smul.addr %s3961, 4
          %s3963 = scalar_lea.vmem %s3, %s3962
          // Predicated region
          $region78: #{discriminator_forward.6} parent=76 // pred_check
            _
          $region79: #{discriminator_forward.6} parent=76 // pred_check_branch
            %3965 = sbr.rel (0) target = $region81
          $region80: #{discriminator_forward.6} parent=76 // pred_region
            // Predicated region
            $region82: #{discriminator_forward.6} parent=80 // pred_check
              _
            $region83: #{discriminator_forward.6} parent=80 // pred_check_branch
              %3967 = sbr.rel target = $region85
            $region84: #{discriminator_forward.6} parent=80 // pred_region
              // Predicated region
              $region97: #{discriminator_forward.6} parent=84 // pred_check
                _
              $region98: #{discriminator_forward.6} parent=84 // pred_check_branch
                %4012 = sbr.rel (0) target = $region100
              $region99: #{discriminator_forward.6} parent=84 // pred_region
                loop: start=0, step=1, limit=1
                $region101: #{discriminator_forward.6} parent=99 // loop_pre_header
                  _
                $region102: #{discriminator_forward.6} parent=99 // loop_header
                  %s4014 = sphi 0, %s4018
                  %p4015 = scmp.ge.s32.totalorder %s4014, 1
                  %s4019 = sphi %s3955, %s3955
                  %s4020 = sphi %s3963, %s3963
                $region103: #{discriminator_forward.6} parent=99 // loop_header_branch
                  %4017 = sbr.rel (%p4015) target = $region107
                $region104: #{discriminator_forward.6} parent=99 // loop_body
                  _
                $region105: #{discriminator_forward.6} parent=99 // loop_footer
                  %s4018 = sadd.s32 1, %s4014
                $region106: #{discriminator_forward.6} parent=99 // loop_footer_branch
                  %4013 = sbr.rel target = $region102
                $region107: #{discriminator_forward.6} parent=99 // loop_exit
                  _
                loop: start=0, step=1, limit=1
                $region108: #{discriminator_forward.6} parent=99 // loop_pre_header
                  _
                $region109: #{discriminator_forward.6} parent=99 // loop_header
                  %s4023 = sphi 0, %s4027
                  %p4024 = scmp.ge.s32.totalorder %s4023, 1
                  %s4028 = sphi %s3955, %s3955
                  %s4029 = sphi %s3963, %s3963
                $region110: #{discriminator_forward.6} parent=99 // loop_header_branch
                  %4026 = sbr.rel (%p4024) target = $region114
                $region111: #{discriminator_forward.6} parent=99 // loop_body
                  %v4030 = vld [vmem:[%s4028] sm:$0xf]
                  %4031 = vst [vmem:[%s4029] sm:$0xf] %v4030
                  %v4032 = vld [vmem:[%s4028 + $0x4] sm:$0xf]
                  %4033 = vst [vmem:[%s4029 + $0x8] sm:$0xf] %v4032
                  %v4034 = vld [vmem:[%s4028 + $0x8] sm:$0xf]
                  %4035 = vst [vmem:[%s4029 + $0x10] sm:$0xf] %v4034
                  %v4036 = vld [vmem:[%s4028 + $0xc] sm:$0xf]
                  %4037 = vst [vmem:[%s4029 + $0x18] sm:$0xf] %v4036
                  %v4038 = vld [vmem:[%s4028 + $0x10] sm:$0xf]
                  %4039 = vst [vmem:[%s4029 + $0x20] sm:$0xf] %v4038
                  %v4040 = vld [vmem:[%s4028 + $0x14] sm:$0xf]
                  %4041 = vst [vmem:[%s4029 + $0x28] sm:$0xf] %v4040
                  %v4042 = vld [vmem:[%s4028 + $0x18] sm:$0xf]
                  %4043 = vst [vmem:[%s4029 + $0x30] sm:$0xf] %v4042
                  %v4044 = vld [vmem:[%s4028 + $0x1c] sm:$0xf]
                  %4045 = vst [vmem:[%s4029 + $0x38] sm:$0xf] %v4044
                  %v4046 = vld [vmem:[%s4028 + $0x20] sm:$0xf]
                  %4047 = vst [vmem:[%s4029 + $0x40] sm:$0xf] %v4046
                  %v4048 = vld [vmem:[%s4028 + $0x24] sm:$0xf]
                  %4049 = vst [vmem:[%s4029 + $0x48] sm:$0xf] %v4048
                  %v4050 = vld [vmem:[%s4028 + $0x28] sm:$0xf]
                  %4051 = vst [vmem:[%s4029 + $0x50] sm:$0xf] %v4050
                  %v4052 = vld [vmem:[%s4028 + $0x2c] sm:$0xf]
                  %4053 = vst [vmem:[%s4029 + $0x58] sm:$0xf] %v4052
                  %v4054 = vld [vmem:[%s4028 + $0x30] sm:$0xf]
                  %4055 = vst [vmem:[%s4029 + $0x60] sm:$0xf] %v4054
                  %v4056 = vld [vmem:[%s4028 + $0x34] sm:$0xf]
                  %4057 = vst [vmem:[%s4029 + $0x68] sm:$0xf] %v4056
                  %v4058 = vld [vmem:[%s4028 + $0x38] sm:$0xf]
                  %4059 = vst [vmem:[%s4029 + $0x70] sm:$0xf] %v4058
                  %v4060 = vld [vmem:[%s4028 + $0x3c] sm:$0xf]
                  %4061 = vst [vmem:[%s4029 + $0x78] sm:$0xf] %v4060
                $region112: #{discriminator_forward.6} parent=99 // loop_footer
                  %s4027 = sadd.s32 1, %s4023
                $region113: #{discriminator_forward.6} parent=99 // loop_footer_branch
                  %4022 = sbr.rel target = $region109
                $region114: #{discriminator_forward.6} parent=99 // loop_exit
                  _
              $region100: #{discriminator_forward.6} parent=84 // pred_fallthru
                _
            $region85: #{discriminator_forward.6} parent=80 // pred_fallthru
              _
            // Predicated region
            $region86: #{discriminator_forward.6} parent=80 // pred_check
              _
            $region87: #{discriminator_forward.6} parent=80 // pred_check_branch
              %3969 = sbr.rel (0) target = $region89
            $region88: #{discriminator_forward.6} parent=80 // pred_region
              loop: start=0, step=1, limit=1
              $region90: #{discriminator_forward.6} parent=88 // loop_pre_header
                _
              $region91: #{discriminator_forward.6} parent=88 // loop_header
                %s3972 = sphi 0, %s3976
                %p3973 = scmp.ge.s32.totalorder %s3972, 1
                %s3977 = sphi %s3955, %s3955
                %s3978 = sphi %s3963, %s3963
              $region92: #{discriminator_forward.6} parent=88 // loop_header_branch
                %3975 = sbr.rel (%p3973) target = $region96
              $region93: #{discriminator_forward.6} parent=88 // loop_body
                %v3979 = vld [vmem:[%s3977] sm:$0xf]
                %3980 = vst [vmem:[%s3978] sm:$0xf] %v3979
                %v3981 = vld [vmem:[%s3977 + $0x4] sm:$0xf]
                %3982 = vst [vmem:[%s3978 + $0x8] sm:$0xf] %v3981
                %v3983 = vld [vmem:[%s3977 + $0x8] sm:$0xf]
                %3984 = vst [vmem:[%s3978 + $0x10] sm:$0xf] %v3983
                %v3985 = vld [vmem:[%s3977 + $0xc] sm:$0xf]
                %3986 = vst [vmem:[%s3978 + $0x18] sm:$0xf] %v3985
                %v3987 = vld [vmem:[%s3977 + $0x10] sm:$0xf]
                %3988 = vst [vmem:[%s3978 + $0x20] sm:$0xf] %v3987
                %v3989 = vld [vmem:[%s3977 + $0x14] sm:$0xf]
                %3990 = vst [vmem:[%s3978 + $0x28] sm:$0xf] %v3989
                %v3991 = vld [vmem:[%s3977 + $0x18] sm:$0xf]
                %3992 = vst [vmem:[%s3978 + $0x30] sm:$0xf] %v3991
                %v3993 = vld [vmem:[%s3977 + $0x1c] sm:$0xf]
                %3994 = vst [vmem:[%s3978 + $0x38] sm:$0xf] %v3993
                %v3995 = vld [vmem:[%s3977 + $0x20] sm:$0xf]
                %3996 = vst [vmem:[%s3978 + $0x40] sm:$0xf] %v3995
                %v3997 = vld [vmem:[%s3977 + $0x24] sm:$0xf]
                %3998 = vst [vmem:[%s3978 + $0x48] sm:$0xf] %v3997
                %v3999 = vld [vmem:[%s3977 + $0x28] sm:$0xf]
                %4000 = vst [vmem:[%s3978 + $0x50] sm:$0xf] %v3999
                %v4001 = vld [vmem:[%s3977 + $0x2c] sm:$0xf]
                %4002 = vst [vmem:[%s3978 + $0x58] sm:$0xf] %v4001
                %v4003 = vld [vmem:[%s3977 + $0x30] sm:$0xf]
                %4004 = vst [vmem:[%s3978 + $0x60] sm:$0xf] %v4003
                %v4005 = vld [vmem:[%s3977 + $0x34] sm:$0xf]
                %4006 = vst [vmem:[%s3978 + $0x68] sm:$0xf] %v4005
                %v4007 = vld [vmem:[%s3977 + $0x38] sm:$0xf]
                %4008 = vst [vmem:[%s3978 + $0x70] sm:$0xf] %v4007
                %v4009 = vld [vmem:[%s3977 + $0x3c] sm:$0xf]
                %4010 = vst [vmem:[%s3978 + $0x78] sm:$0xf] %v4009
              $region94: #{discriminator_forward.6} parent=88 // loop_footer
                %s3976 = sadd.s32 1, %s3972
              $region95: #{discriminator_forward.6} parent=88 // loop_footer_branch
                %3971 = sbr.rel target = $region91
              $region96: #{discriminator_forward.6} parent=88 // loop_exit
                _
            $region89: #{discriminator_forward.6} parent=80 // pred_fallthru
              _
          $region81: #{discriminator_forward.6} parent=76 // pred_fallthru
            _
          %4062 = vnop
        $region77: #{discriminator_forward.6} parent=68 // pred_fallthru
          _
      $region69: #{discriminator_forward.6} parent=5 // pred_fallthru
        _
      %p4063 = scmp.le.s32.totalorder 2, %s9
      // Predicated region
      $region115: #{discriminator_forward.6} parent=5 // pred_check
        %p4064 = pneg %p4063
      $region116: #{discriminator_forward.6} parent=5 // pred_check_branch
        %4066 = sbr.rel (%p4064) target = $region118
      $region117: #{discriminator_forward.6} parent=5 // pred_region
        %s4067 = ssub.s32 %s9, 2
        // Predicated region
        $region119: #{discriminator_forward.6} parent=117 // pred_check
          %p4068 = pneg %p130
        $region120: #{discriminator_forward.6} parent=117 // pred_check_branch
          %4070 = sbr.rel (%p4068) target = $region122
        $region121: #{discriminator_forward.6} parent=117 // pred_region
          %s4071 = sand.u32 %s115, 1
          %s4072 = sand.u32 %s115, 1
          %s4073 = smul.addr %s4072, 64
          %s4074 = scalar_lea.vmem [#allocation3], %s4073
        $region122: #{discriminator_forward.6} parent=117 // pred_fallthru
          _
      $region118: #{discriminator_forward.6} parent=5 // pred_fallthru
        _
    $region6: #{discriminator_forward.6} parent=1 // loop_footer
      %s13 = sadd.s32 1, %s9
    $region7: #{discriminator_forward.6} parent=1 // loop_footer_branch
      %8 = sbr.rel target = $region3
    $region8: #{discriminator_forward.6} parent=1 // loop_exit
      _

</llo_original>
